<compile_context>
chip_gen: v6e
topology: v6e:2x2x1
jax: 0.10.0
libtpu: 0.0.40
codegen_flags: <defaults>
</compile_context>

<pallas_src>
import functools

import numpy as np

import jax
import jax.numpy as jnp
from jax.experimental import pallas as pl
from jax.experimental.pallas import tpu as pltpu


def _round_up(n, m):
    return ((n + m - 1) // m) * m


# ----------------------------- fused Pallas kernel -----------------------------

def _ple_kernel(*refs, num_layers, nsp, nsh, hdim, odim, th, cdt):
    """refs = [x, (W1, bias_col, W2, R, S) per layer..., TW1, TB, TW2, out].

    Feature-major layout: every activation is (features, TILE_B) with batch on lanes.
    """
    x_ref = refs[0]
    out_ref = refs[-1]
    prm = refs[1:-1]

    E = nsh + 2 * nsp                 # total experts per layer
    g_sh = 2 * nsp + nsh              # shared-gate width
    g_t = nsp + nsh                   # task-gate width
    ncol1 = E * hdim + g_sh + 2 * g_t  # fused fc1 width: expert hiddens + all gate logits

    def softmax0(z):                  # exact softmax along the (sublane) feature axis
        m = jnp.max(z, axis=0, keepdims=True)
        e = jnp.exp(z - m)
        return e / jnp.sum(e, axis=0, keepdims=True)

    s = x_ref[...].astype(cdt)        # layer state: (K, TILE_B)
    p = 0
    for _ in range(num_layers):
        w1_ref, b_ref, w2_ref, r_ref, s_ref = prm[p:p + 5]
        p += 5
        b = b_ref[...].astype(jnp.float32)

        # Expert fc1 of ALL experts + all three gate layers in one MXU matmul.
        h_all = jnp.dot(w1_ref[...], s, preferred_element_type=jnp.float32) + b[0:ncol1, :]
        h = jnp.maximum(h_all[0:E * hdim, :], 0.0)          # ReLU (dropout = identity)
        glog = h_all[E * hdim:, :]                          # gate logits, pre-softmax
        gall = jnp.concatenate(
            [softmax0(glog[0:g_sh, :]),
             softmax0(glog[g_sh:g_sh + g_t, :]),
             softmax0(glog[g_sh + g_t:, :])], axis=0)       # (n_gate, TILE_B)

        # Expert fc2 (block-diag, replicated once per gate group at fuse time).
        eo = jnp.dot(w2_ref[...], h.astype(cdt),
                     preferred_element_type=jnp.float32) + b[ncol1:, :]
        # Gate-weighted combine, fully on the MXU: expand gates (R), multiply, reduce (S).
        gexp = jnp.dot(r_ref[...], gall.astype(cdt), preferred_element_type=jnp.float32)
        s = jnp.dot(s_ref[...], (gexp * eo).astype(cdt),
                    preferred_element_type=jnp.float32).astype(cdt)
        # s = packed next state: [shared | task1 | task2]  (or [task1 | task2] on the last layer)

    # Fused towers (block-diagonal), lane-dense (2, TILE_B) output slab.
    tw1_ref, tb_ref, tw2_ref = prm[p:p + 3]
    tb = tb_ref[...].astype(jnp.float32)
    tin = s[0:2 * odim, :]
    hh = jnp.maximum(jnp.dot(tw1_ref[...], tin, preferred_element_type=jnp.float32)
                     + tb[0:2 * th, :], 0.0)                # ReLU (dropout = identity)
    z = jnp.dot(tw2_ref[...], hh.astype(cdt), preferred_element_type=jnp.float32) + tb[2 * th:, :]
    out_ref[...] = jax.nn.sigmoid(z)


def make_ple_forward(cfg, tile_b=256, compute_dtype=jnp.float32):
    num_layers = cfg["num_CGC_layers"] + 1
    kernel = functools.partial(
        _ple_kernel,
        num_layers=num_layers,
        nsp=cfg["num_specific_experts"],
        nsh=cfg["num_shared_experts"],
        hdim=cfg["experts_out"],
        odim=cfg["experts_hidden"],
        th=cfg["towers_hidden"],
        cdt=compute_dtype,
    )
    tile_b = _round_up(tile_b, 128)

    def ple_forward(flat_params, x):
        assert len(flat_params) == num_layers * 5 + 3
        B, I = x.shape
        tb = min(tile_b, _round_up(B, 128))     # modest tile; per-tile VMEM use is only a few MB
        B_pad = _round_up(B, tb)

        # Feature-major input: (I, B_pad); padded batch lanes are zeros (sliced off below).
        xt = jnp.transpose(x).astype(compute_dtype)
        if B_pad != B:
            xt = jnp.pad(xt, ((0, 0), (0, B_pad - B)))

        in_specs = [pl.BlockSpec((I, tb), lambda i: (0, i))]          # batch-tiled input
        for a in flat_params:                                          # weights: resident, DMA'd once
            in_specs.append(pl.BlockSpec(a.shape, lambda i: (0, 0)))
        out_specs = pl.BlockSpec((2, tb), lambda i: (0, i))            # lane-dense output tile

        out = pl.pallas_call(
            kernel,
            grid=(B_pad // tb,),
            out_shape=jax.ShapeDtypeStruct((2, B_pad), jnp.float32),
            in_specs=in_specs,
            out_specs=out_specs,
            compiler_params=pltpu.CompilerParams(
                dimension_semantics=("parallel",)),                   # megacore sharding on v7x
        )(xt, *flat_params)
        return [out[0, :B][:, None], out[1, :B][:, None]]

    return jax.jit(ple_forward)


# ----------------------------- parameter init (PyTorch-structured) -----------------------------

def _linear_params(key, fan_in, fan_out):
    kw, kb = jax.random.split(key)
    bound = 1.0 / (fan_in ** 0.5)
    w = jax.random.uniform(kw, (fan_in, fan_out), jnp.float32, -bound, bound)
    b = jax.random.uniform(kb, (1, fan_out), jnp.float32, -bound, bound)
    return w, b


def _init_expert(key, input_size, experts_out, experts_hidden):
    k1, k2 = jax.random.split(key)
    w1, b1 = _linear_params(k1, input_size, experts_out)       # fc1: input -> experts_out
    w2, b2 = _linear_params(k2, experts_out, experts_hidden)   # fc2: experts_out -> experts_hidden
    return {"w1": w1, "b1": b1, "w2": w2, "b2": b2}


def _init_cgc(key, input_size, n_spec, n_shared, experts_out, experts_hidden):
    ks = jax.random.split(key, 6)
    return {
        "experts_shared": [_init_expert(k, input_size, experts_out, experts_hidden)
                           for k in jax.random.split(ks[0], n_shared)],
        "experts_task1": [_init_expert(k, input_size, experts_out, experts_hidden)
                          for k in jax.random.split(ks[1], n_spec)],
        "experts_task2": [_init_expert(k, input_size, experts_out, experts_hidden)
                          for k in jax.random.split(ks[2], n_spec)],
        "gate_task1": _linear_params(ks[3], input_size, n_spec + n_shared),
        "gate_task2": _linear_params(ks[4], input_size, n_spec + n_shared),
        "gate_shared": _linear_params(ks[5], input_size, 2 * n_spec + n_shared),
    }


def _init_tower(key, input_size, output_size, hidden_size):
    k1, k2 = jax.random.split(key)
    w1, b1 = _linear_params(k1, input_size, hidden_size)
    w2, b2 = _linear_params(k2, hidden_size, output_size)
    return {"w1": w1, "b1": b1, "w2": w2, "b2": b2}


def init_ple(key, num_CGC_layers, input_size, num_specific_experts, num_shared_experts,
             experts_out, experts_hidden, towers_hidden):
    # Reference hardcodes input_size=32 for deeper CGC layers and towers take experts_out,
    # so the model is only consistent when both equal 32.
    assert experts_out == 32 and experts_hidden == 32
    keys = jax.random.split(key, num_CGC_layers + 3)
    return {
        "cgc_layer1": _init_cgc(keys[0], input_size, num_specific_experts,
                                num_shared_experts, experts_out, experts_hidden),
        "cgc_layers": [
            _init_cgc(keys[1 + i], 32, num_specific_experts, num_shared_experts,
                      experts_out, experts_hidden)
            for i in range(num_CGC_layers)
        ],
        "tower1": _init_tower(keys[num_CGC_layers + 1], experts_out, 1, towers_hidden),
        "tower2": _init_tower(keys[num_CGC_layers + 2], experts_out, 1, towers_hidden),
    }


# ----------------------------- param fusion (numpy, host-side, cached by caller) -----------------------------

def _t(a):
    return np.asarray(a, np.float32).T


def _v(a):
    return np.asarray(a, np.float32).reshape(-1)


def _fuse_cgc_np(p, nsp, nsh, hdim, odim, in_size, first, last):
    sh, t1, t2 = p["experts_shared"], p["experts_task1"], p["experts_task2"]
    experts = list(sh) + list(t1) + list(t2)        # expert block order: shared, task1, task2
    E = len(experts)
    g_sh, g_t = 2 * nsp + nsh, nsp + nsh
    n_gate = g_sh + 2 * g_t
    ncol1 = E * hdim + n_gate

    # ---- fc1 + gates fused (transposed): H = W1 @ state ----
    K = in_size if first else 3 * odim
    W1 = np.zeros((ncol1, K), np.float32)
    b1 = np.zeros((ncol1, 1), np.float32)
    grp_cols = {0: (0, odim), 1: (odim, 2 * odim), 2: (2 * odim, 3 * odim)}  # [sh | t1 | t2] state
    expert_grp = [0] * nsh + [1] * nsp + [2] * nsp
    for e, ex in enumerate(experts):
        rows = slice(e * hdim, (e + 1) * hdim)
        if first:
            W1[rows, :] = _t(ex["w1"])
        else:
            c0, c1 = grp_cols[expert_grp[e]]
            W1[rows, c0:c1] = _t(ex["w1"])
        b1[rows, 0] = _v(ex["b1"])
    for name, r0, r1, grp in (("gate_shared", E * hdim, E * hdim + g_sh, 0),
                              ("gate_task1", E * hdim + g_sh, E * hdim + g_sh + g_t, 1),
                              ("gate_task2", E * hdim + g_sh + g_t, ncol1, 2)):
        gw, gb = p[name]
        if first:
            W1[r0:r1, :] = _t(gw)
        else:
            c0, c1 = grp_cols[grp]
            W1[r0:r1, c0:c1] = _t(gw)
        b1[r0:r1, 0] = _v(gb)

    # ---- fc2 (transposed, per-expert block-diag) ----
    D = np.zeros((E * odim, E * hdim), np.float32)
    db = np.zeros((E * odim, 1), np.float32)
    for e, ex in enumerate(experts):
        D[e * odim:(e + 1) * odim, e * hdim:(e + 1) * hdim] = _t(ex["w2"])
        db[e * odim:(e + 1) * odim, 0] = _v(ex["b2"])

    # Gate-column -> expert-block order, matching the reference torch.cat + einsum.
    order_t1 = [nsh + j for j in range(nsp)] + list(range(nsh))                 # [task1..., shared...]
    order_t2 = [nsh + nsp + j for j in range(nsp)] + list(range(nsh))           # [task2..., shared...]
    order_sh = ([nsh + j for j in range(nsp)] + [nsh + nsp + j for j in range(nsp)]
                + list(range(nsh)))                                             # [t1..., t2..., shared...]
    if last:
        groups = [(g_sh, order_t1), (g_sh + g_t, order_t2)]                      # -> [out1 | out2]
    else:
        groups = [(0, order_sh), (g_sh, order_t1), (g_sh + g_t, order_t2)]       # -> [sh | out1 | out2]
    G = len(groups)

    W2 = np.concatenate([D] * G, axis=0)             # fc2 replicated per gate group
    b2 = np.concatenate([db] * G, axis=0)
    R = np.zeros((G * E * odim, n_gate), np.float32)  # gate expansion (0/1)
    S = np.zeros((G * odim, G * E * odim), np.float32)  # block reduction to packed state (0/1)
    eye = np.eye(odim, dtype=np.float32)
    for g, (goff, blocks) in enumerate(groups):
        base = g * E * odim
        for j, e in enumerate(blocks):
            R[base + e * odim: base + (e + 1) * odim, goff + j] = 1.0
        for e in range(E):
            S[g * odim:(g + 1) * odim, base + e * odim: base + (e + 1) * odim] = eye
    bcol = np.concatenate([b1, b2], axis=0)
    return [W1, bcol, W2, R, S]


def _fuse_towers_np(t1, t2, odim, th):
    TW1 = np.zeros((2 * th, 2 * odim), np.float32)
    TW1[0:th, 0:odim] = _t(t1["w1"])
    TW1[th:, odim:] = _t(t2["w1"])
    TW2 = np.zeros((2, 2 * th), np.float32)
    TW2[0, 0:th] = _v(t1["w2"])
    TW2[1, th:] = _v(t2["w2"])
    TB = np.zeros((2 * th + 2, 1), np.float32)
    TB[0:th, 0] = _v(t1["b1"])
    TB[th:2 * th, 0] = _v(t2["b1"])
    TB[2 * th, 0] = _v(t1["b2"])[0]
    TB[2 * th + 1, 0] = _v(t2["b2"])[0]
    return [TW1, TB, TW2]


def fuse_ple_params(params, cfg, dtype=jnp.float32):
    nsp, nsh = cfg["num_specific_experts"], cfg["num_shared_experts"]
    hdim, odim, th = cfg["experts_out"], cfg["experts_hidden"], cfg["towers_hidden"]
    n_deep = cfg["num_CGC_layers"]
    flat = _fuse_cgc_np(params["cgc_layer1"], nsp, nsh, hdim, odim,
                        cfg["input_size"], first=True, last=False)
    for i, p in enumerate(params["cgc_layers"]):
        flat += _fuse_cgc_np(p, nsp, nsh, hdim, odim, 3 * odim,
                             first=False, last=(i == n_deep - 1))
    flat += _fuse_towers_np(params["tower1"], params["tower2"], odim, th)
    return tuple(jnp.asarray(a, dtype=dtype) for a in flat)


# ----------------------------- pure-JAX reference (mirrors the PyTorch module) -----------------------------

def _expert_ref(e, x):
    h = jnp.maximum(x @ e["w1"] + e["b1"], 0.0)
    return h @ e["w2"] + e["b2"]


def _softmax_ref(z):
    z = z - jnp.max(z, axis=-1, keepdims=True)
    e = jnp.exp(z)
    return e / jnp.sum(e, axis=-1, keepdims=True)


def _cgc_ref(p, x_sh, x_t1, x_t2, if_last):
    sh = jnp.stack([_expert_ref(e, x_sh) for e in p["experts_shared"]])
    t1 = jnp.stack([_expert_ref(e, x_t1) for e in p["experts_task1"]])
    t2 = jnp.stack([_expert_ref(e, x_t2) for e in p["experts_task2"]])
    sel1 = _softmax_ref(x_t1 @ p["gate_task1"][0] + p["gate_task1"][1])
    out1 = jnp.einsum('abc,ba->bc', jnp.concatenate([t1, sh], axis=0), sel1)
    sel2 = _softmax_ref(x_t2 @ p["gate_task2"][0] + p["gate_task2"][1])
    out2 = jnp.einsum('abc,ba->bc', jnp.concatenate([t2, sh], axis=0), sel2)
    if if_last:
        return [out1, out2]
    sels = _softmax_ref(x_sh @ p["gate_shared"][0] + p["gate_shared"][1])
    outs = jnp.einsum('abc,ba->bc', jnp.concatenate([t1, t2, sh], axis=0), sels)
    return [outs, out1, out2]


def ple_reference(params, x, num_CGC_layers):
    outs = _cgc_ref(params["cgc_layer1"], x, x, x, False)
    for i in range(num_CGC_layers):
        outs = _cgc_ref(params["cgc_layers"][i], outs[0], outs[1], outs[2],
                        if_last=(i == num_CGC_layers - 1))

    def tower(tp, h):
        hh = jnp.maximum(h @ tp["w1"] + tp["b1"], 0.0)
        return jax.nn.sigmoid(hh @ tp["w2"] + tp["b2"])

    return [tower(params["tower1"], outs[0]), tower(params["tower2"], outs[1])]


# ----------------------------- main -----------------------------

if __name__ == "__main__":
    cfg = dict(
        num_CGC_layers=2,
        input_size=16,
        num_specific_experts=2,
        num_shared_experts=1,
        experts_out=32,
        experts_hidden=32,
        towers_hidden=8,
    )
    B = 4

    key = jax.random.PRNGKey(0)
    pkey, xkey = jax.random.split(key)
    params = init_ple(pkey, **cfg)
    x = jax.random.normal(xkey, (B, cfg["input_size"]), jnp.float32)

    # --- f32 path: checked against a plain-JAX transcription of the PyTorch module ---
    flat_f32 = fuse_ple_params(params, cfg, dtype=jnp.float32)
    ple_f32 = make_ple_forward(cfg, compute_dtype=jnp.float32)
    y1, y2 = ple_f32(flat_f32, x)
    jax.block_until_ready((y1, y2))
    assert y1.shape == (B, 1) and y2.shape == (B, 1)
    r1, r2 = ple_reference(params, x, cfg["num_CGC_layers"])
    assert bool(jnp.allclose(y1, r1, atol=1e-2, rtol=0.0))
    assert bool(jnp.allclose(y2, r2, atol=1e-2, rtol=0.0))

    # --- bf16 perf config (weights/activations bf16, f32 MXU accumulation): smoke test ---
    flat_bf16 = fuse_ple_params(params, cfg, dtype=jnp.bfloat16)
    ple_bf16 = make_ple_forward(cfg, compute_dtype=jnp.bfloat16)
    z1, z2 = ple_bf16(flat_bf16, x)
    jax.block_until_ready((z1, z2))
    assert bool(jnp.all(jnp.isfinite(z1))) and bool(jnp.all(jnp.isfinite(z2)))
    assert bool(jnp.all((z1 >= 0.0) & (z1 <= 1.0))) and bool(jnp.all((z2 >= 0.0) & (z2 <= 1.0)))

    # TODO(synk): dropout is omitted (eval-mode identity); training-mode stochastic masking not implemented.
    print("KERNEL_OK")
</pallas_src>

<mosaic_0001>
module attributes {stable_mosaic.version = 11 : i64} {
  func.func @_ple_kernel(%arg0: i32, %arg1: memref<16x128xf32, #tpu.memory_space<vmem>>, %arg2: memref<171x16xf32, #tpu.memory_space<vmem>>, %arg3: memref<651x1xf32, #tpu.memory_space<vmem>>, %arg4: memref<480x160xf32, #tpu.memory_space<vmem>>, %arg5: memref<480x11xf32, #tpu.memory_space<vmem>>, %arg6: memref<96x480xf32, #tpu.memory_space<vmem>>, %arg7: memref<171x96xf32, #tpu.memory_space<vmem>>, %arg8: memref<651x1xf32, #tpu.memory_space<vmem>>, %arg9: memref<480x160xf32, #tpu.memory_space<vmem>>, %arg10: memref<480x11xf32, #tpu.memory_space<vmem>>, %arg11: memref<96x480xf32, #tpu.memory_space<vmem>>, %arg12: memref<171x96xf32, #tpu.memory_space<vmem>>, %arg13: memref<491x1xf32, #tpu.memory_space<vmem>>, %arg14: memref<320x160xf32, #tpu.memory_space<vmem>>, %arg15: memref<320x11xf32, #tpu.memory_space<vmem>>, %arg16: memref<64x320xf32, #tpu.memory_space<vmem>>, %arg17: memref<16x64xf32, #tpu.memory_space<vmem>>, %arg18: memref<18x1xf32, #tpu.memory_space<vmem>>, %arg19: memref<2x16xf32, #tpu.memory_space<vmem>>, %arg20: memref<2x128xf32, #tpu.memory_space<vmem>>) attributes {dimension_semantics = [#tpu.dimension_semantics<parallel>], iteration_bounds = array<i64: 1>, scalar_prefetch = 0 : i64, scratch_operands = 0 : i64, tpu.core_type = #tpu.core_type<tc>, window_params = [{transform_indices = @transform_0, window_bounds = array<i64: 16, 128>}, {pipeline_mode = #tpu.pipeline_mode<synchronous>, transform_indices = @transform_1, window_bounds = array<i64: 171, 16>}, {pipeline_mode = #tpu.pipeline_mode<synchronous>, transform_indices = @transform_2, window_bounds = array<i64: 651, 1>}, {pipeline_mode = #tpu.pipeline_mode<synchronous>, transform_indices = @transform_3, window_bounds = array<i64: 480, 160>}, {pipeline_mode = #tpu.pipeline_mode<synchronous>, transform_indices = @transform_4, window_bounds = array<i64: 480, 11>}, {pipeline_mode = #tpu.pipeline_mode<synchronous>, transform_indices = @transform_5, window_bounds = array<i64: 96, 480>}, {pipeline_mode = #tpu.pipeline_mode<synchronous>, transform_indices = @transform_6, window_bounds = array<i64: 171, 96>}, {pipeline_mode = #tpu.pipeline_mode<synchronous>, transform_indices = @transform_7, window_bounds = array<i64: 651, 1>}, {pipeline_mode = #tpu.pipeline_mode<synchronous>, transform_indices = @transform_8, window_bounds = array<i64: 480, 160>}, {pipeline_mode = #tpu.pipeline_mode<synchronous>, transform_indices = @transform_9, window_bounds = array<i64: 480, 11>}, {pipeline_mode = #tpu.pipeline_mode<synchronous>, transform_indices = @transform_10, window_bounds = array<i64: 96, 480>}, {pipeline_mode = #tpu.pipeline_mode<synchronous>, transform_indices = @transform_11, window_bounds = array<i64: 171, 96>}, {pipeline_mode = #tpu.pipeline_mode<synchronous>, transform_indices = @transform_12, window_bounds = array<i64: 491, 1>}, {pipeline_mode = #tpu.pipeline_mode<synchronous>, transform_indices = @transform_13, window_bounds = array<i64: 320, 160>}, {pipeline_mode = #tpu.pipeline_mode<synchronous>, transform_indices = @transform_14, window_bounds = array<i64: 320, 11>}, {pipeline_mode = #tpu.pipeline_mode<synchronous>, transform_indices = @transform_15, window_bounds = array<i64: 64, 320>}, {pipeline_mode = #tpu.pipeline_mode<synchronous>, transform_indices = @transform_16, window_bounds = array<i64: 16, 64>}, {pipeline_mode = #tpu.pipeline_mode<synchronous>, transform_indices = @transform_17, window_bounds = array<i64: 18, 1>}, {pipeline_mode = #tpu.pipeline_mode<synchronous>, transform_indices = @transform_18, window_bounds = array<i64: 2, 16>}, {transform_indices = @transform_19, window_bounds = array<i64: 2, 128>}]} {
    %c0 = arith.constant 0 : index
    %c0_0 = arith.constant 0 : index
    %0 = vector.load %arg1[%c0, %c0_0] : memref<16x128xf32, #tpu.memory_space<vmem>>, vector<16x128xf32>
    %c0_1 = arith.constant 0 : index
    %c0_2 = arith.constant 0 : index
    %1 = vector.load %arg3[%c0_1, %c0_2] : memref<651x1xf32, #tpu.memory_space<vmem>>, vector<651x1xf32>
    %c0_3 = arith.constant 0 : index
    %c0_4 = arith.constant 0 : index
    %2 = vector.load %arg2[%c0_3, %c0_4] : memref<171x16xf32, #tpu.memory_space<vmem>>, vector<171x16xf32>
    %cst = arith.constant dense<0.000000e+00> : vector<171x128xf32>
    %3 = tpu.matmul %2, %0, %cst {dimension_numbers = #tpu.dot_dimension_numbers<[1], [0], [0], [1], [0, 0, 1, 1], [], []>} : vector<171x16xf32>, vector<16x128xf32>, vector<171x128xf32> -> vector<171x128xf32>
    %4 = vector.extract_strided_slice %1 {offsets = [0, 0], sizes = [171, 1], strides = [1, 1]} : vector<651x1xf32> to vector<171x1xf32>
    %5 = vector.broadcast %4 : vector<171x1xf32> to vector<171x128xf32>
    %6 = arith.addf %3, %5 : vector<171x128xf32>
    %7 = vector.extract_strided_slice %6 {offsets = [0, 0], sizes = [160, 128], strides = [1, 1]} : vector<171x128xf32> to vector<160x128xf32>
    %cst_5 = arith.constant 0.000000e+00 : f32
    %8 = vector.broadcast %cst_5 : f32 to vector<160x128xf32>
    %9 = arith.maximumf %7, %8 : vector<160x128xf32>
    %10 = vector.extract_strided_slice %6 {offsets = [160, 0], sizes = [11, 128], strides = [1, 1]} : vector<171x128xf32> to vector<11x128xf32>
    %11 = vector.extract_strided_slice %10 {offsets = [0, 0], sizes = [5, 128], strides = [1, 1]} : vector<11x128xf32> to vector<5x128xf32>
    %cst_6 = arith.constant dense<0xFF800000> : vector<128xf32>
    %12 = vector.multi_reduction <maximumf>, %11, %cst_6 [0] : vector<5x128xf32> to vector<128xf32>
    %13 = vector.shape_cast %12 : vector<128xf32> to vector<1x128xf32>
    %14 = vector.broadcast %13 : vector<1x128xf32> to vector<5x128xf32>
    %15 = arith.subf %11, %14 : vector<5x128xf32>
    %16 = math.exp %15 : vector<5x128xf32>
    %cst_7 = arith.constant dense<0.000000e+00> : vector<128xf32>
    %17 = vector.multi_reduction <add>, %16, %cst_7 [0] : vector<5x128xf32> to vector<128xf32>
    %18 = vector.shape_cast %17 : vector<128xf32> to vector<1x128xf32>
    %19 = vector.broadcast %18 : vector<1x128xf32> to vector<5x128xf32>
    %20 = arith.divf %16, %19 : vector<5x128xf32>
    %21 = vector.extract_strided_slice %10 {offsets = [5, 0], sizes = [3, 128], strides = [1, 1]} : vector<11x128xf32> to vector<3x128xf32>
    %cst_8 = arith.constant dense<0xFF800000> : vector<128xf32>
    %22 = vector.multi_reduction <maximumf>, %21, %cst_8 [0] : vector<3x128xf32> to vector<128xf32>
    %23 = vector.shape_cast %22 : vector<128xf32> to vector<1x128xf32>
    %24 = vector.broadcast %23 : vector<1x128xf32> to vector<3x128xf32>
    %25 = arith.subf %21, %24 : vector<3x128xf32>
    %26 = math.exp %25 : vector<3x128xf32>
    %cst_9 = arith.constant dense<0.000000e+00> : vector<128xf32>
    %27 = vector.multi_reduction <add>, %26, %cst_9 [0] : vector<3x128xf32> to vector<128xf32>
    %28 = vector.shape_cast %27 : vector<128xf32> to vector<1x128xf32>
    %29 = vector.broadcast %28 : vector<1x128xf32> to vector<3x128xf32>
    %30 = arith.divf %26, %29 : vector<3x128xf32>
    %31 = vector.extract_strided_slice %10 {offsets = [8, 0], sizes = [3, 128], strides = [1, 1]} : vector<11x128xf32> to vector<3x128xf32>
    %cst_10 = arith.constant dense<0xFF800000> : vector<128xf32>
    %32 = vector.multi_reduction <maximumf>, %31, %cst_10 [0] : vector<3x128xf32> to vector<128xf32>
    %33 = vector.shape_cast %32 : vector<128xf32> to vector<1x128xf32>
    %34 = vector.broadcast %33 : vector<1x128xf32> to vector<3x128xf32>
    %35 = arith.subf %31, %34 : vector<3x128xf32>
    %36 = math.exp %35 : vector<3x128xf32>
    %cst_11 = arith.constant dense<0.000000e+00> : vector<128xf32>
    %37 = vector.multi_reduction <add>, %36, %cst_11 [0] : vector<3x128xf32> to vector<128xf32>
    %38 = vector.shape_cast %37 : vector<128xf32> to vector<1x128xf32>
    %39 = vector.broadcast %38 : vector<1x128xf32> to vector<3x128xf32>
    %40 = arith.divf %36, %39 : vector<3x128xf32>
    %41 = tpu.concatenate %20, %30, %40 in 0 : vector<5x128xf32>, vector<3x128xf32>, vector<3x128xf32> -> vector<11x128xf32>
    %c0_12 = arith.constant 0 : index
    %c0_13 = arith.constant 0 : index
    %42 = vector.load %arg4[%c0_12, %c0_13] : memref<480x160xf32, #tpu.memory_space<vmem>>, vector<480x160xf32>
    %cst_14 = arith.constant dense<0.000000e+00> : vector<480x128xf32>
    %43 = tpu.matmul %42, %9, %cst_14 {dimension_numbers = #tpu.dot_dimension_numbers<[1], [0], [0], [1], [0, 0, 1, 1], [], []>} : vector<480x160xf32>, vector<160x128xf32>, vector<480x128xf32> -> vector<480x128xf32>
    %44 = vector.extract_strided_slice %1 {offsets = [171, 0], sizes = [480, 1], strides = [1, 1]} : vector<651x1xf32> to vector<480x1xf32>
    %45 = vector.broadcast %44 : vector<480x1xf32> to vector<480x128xf32>
    %46 = arith.addf %43, %45 : vector<480x128xf32>
    %c0_15 = arith.constant 0 : index
    %c0_16 = arith.constant 0 : index
    %47 = vector.load %arg5[%c0_15, %c0_16] : memref<480x11xf32, #tpu.memory_space<vmem>>, vector<480x11xf32>
    %cst_17 = arith.constant dense<0.000000e+00> : vector<480x128xf32>
    %48 = tpu.matmul %47, %41, %cst_17 {dimension_numbers = #tpu.dot_dimension_numbers<[1], [0], [0], [1], [0, 0, 1, 1], [], []>} : vector<480x11xf32>, vector<11x128xf32>, vector<480x128xf32> -> vector<480x128xf32>
    %c0_18 = arith.constant 0 : index
    %c0_19 = arith.constant 0 : index
    %49 = vector.load %arg6[%c0_18, %c0_19] : memref<96x480xf32, #tpu.memory_space<vmem>>, vector<96x480xf32>
    %50 = arith.mulf %48, %46 : vector<480x128xf32>
    %cst_20 = arith.constant dense<0.000000e+00> : vector<96x128xf32>
    %51 = tpu.matmul %49, %50, %cst_20 {dimension_numbers = #tpu.dot_dimension_numbers<[1], [0], [0], [1], [0, 0, 1, 1], [], []>} : vector<96x480xf32>, vector<480x128xf32>, vector<96x128xf32> -> vector<96x128xf32>
    %c0_21 = arith.constant 0 : index
    %c0_22 = arith.constant 0 : index
    %52 = vector.load %arg8[%c0_21, %c0_22] : memref<651x1xf32, #tpu.memory_space<vmem>>, vector<651x1xf32>
    %c0_23 = arith.constant 0 : index
    %c0_24 = arith.constant 0 : index
    %53 = vector.load %arg7[%c0_23, %c0_24] : memref<171x96xf32, #tpu.memory_space<vmem>>, vector<171x96xf32>
    %cst_25 = arith.constant dense<0.000000e+00> : vector<171x128xf32>
    %54 = tpu.matmul %53, %51, %cst_25 {dimension_numbers = #tpu.dot_dimension_numbers<[1], [0], [0], [1], [0, 0, 1, 1], [], []>} : vector<171x96xf32>, vector<96x128xf32>, vector<171x128xf32> -> vector<171x128xf32>
    %55 = vector.extract_strided_slice %52 {offsets = [0, 0], sizes = [171, 1], strides = [1, 1]} : vector<651x1xf32> to vector<171x1xf32>
    %56 = vector.broadcast %55 : vector<171x1xf32> to vector<171x128xf32>
    %57 = arith.addf %54, %56 : vector<171x128xf32>
    %58 = vector.extract_strided_slice %57 {offsets = [0, 0], sizes = [160, 128], strides = [1, 1]} : vector<171x128xf32> to vector<160x128xf32>
    %cst_26 = arith.constant 0.000000e+00 : f32
    %59 = vector.broadcast %cst_26 : f32 to vector<160x128xf32>
    %60 = arith.maximumf %58, %59 : vector<160x128xf32>
    %61 = vector.extract_strided_slice %57 {offsets = [160, 0], sizes = [11, 128], strides = [1, 1]} : vector<171x128xf32> to vector<11x128xf32>
    %62 = vector.extract_strided_slice %61 {offsets = [0, 0], sizes = [5, 128], strides = [1, 1]} : vector<11x128xf32> to vector<5x128xf32>
    %cst_27 = arith.constant dense<0xFF800000> : vector<128xf32>
    %63 = vector.multi_reduction <maximumf>, %62, %cst_27 [0] : vector<5x128xf32> to vector<128xf32>
    %64 = vector.shape_cast %63 : vector<128xf32> to vector<1x128xf32>
    %65 = vector.broadcast %64 : vector<1x128xf32> to vector<5x128xf32>
    %66 = arith.subf %62, %65 : vector<5x128xf32>
    %67 = math.exp %66 : vector<5x128xf32>
    %cst_28 = arith.constant dense<0.000000e+00> : vector<128xf32>
    %68 = vector.multi_reduction <add>, %67, %cst_28 [0] : vector<5x128xf32> to vector<128xf32>
    %69 = vector.shape_cast %68 : vector<128xf32> to vector<1x128xf32>
    %70 = vector.broadcast %69 : vector<1x128xf32> to vector<5x128xf32>
    %71 = arith.divf %67, %70 : vector<5x128xf32>
    %72 = vector.extract_strided_slice %61 {offsets = [5, 0], sizes = [3, 128], strides = [1, 1]} : vector<11x128xf32> to vector<3x128xf32>
    %cst_29 = arith.constant dense<0xFF800000> : vector<128xf32>
    %73 = vector.multi_reduction <maximumf>, %72, %cst_29 [0] : vector<3x128xf32> to vector<128xf32>
    %74 = vector.shape_cast %73 : vector<128xf32> to vector<1x128xf32>
    %75 = vector.broadcast %74 : vector<1x128xf32> to vector<3x128xf32>
    %76 = arith.subf %72, %75 : vector<3x128xf32>
    %77 = math.exp %76 : vector<3x128xf32>
    %cst_30 = arith.constant dense<0.000000e+00> : vector<128xf32>
    %78 = vector.multi_reduction <add>, %77, %cst_30 [0] : vector<3x128xf32> to vector<128xf32>
    %79 = vector.shape_cast %78 : vector<128xf32> to vector<1x128xf32>
    %80 = vector.broadcast %79 : vector<1x128xf32> to vector<3x128xf32>
    %81 = arith.divf %77, %80 : vector<3x128xf32>
    %82 = vector.extract_strided_slice %61 {offsets = [8, 0], sizes = [3, 128], strides = [1, 1]} : vector<11x128xf32> to vector<3x128xf32>
    %cst_31 = arith.constant dense<0xFF800000> : vector<128xf32>
    %83 = vector.multi_reduction <maximumf>, %82, %cst_31 [0] : vector<3x128xf32> to vector<128xf32>
    %84 = vector.shape_cast %83 : vector<128xf32> to vector<1x128xf32>
    %85 = vector.broadcast %84 : vector<1x128xf32> to vector<3x128xf32>
    %86 = arith.subf %82, %85 : vector<3x128xf32>
    %87 = math.exp %86 : vector<3x128xf32>
    %cst_32 = arith.constant dense<0.000000e+00> : vector<128xf32>
    %88 = vector.multi_reduction <add>, %87, %cst_32 [0] : vector<3x128xf32> to vector<128xf32>
    %89 = vector.shape_cast %88 : vector<128xf32> to vector<1x128xf32>
    %90 = vector.broadcast %89 : vector<1x128xf32> to vector<3x128xf32>
    %91 = arith.divf %87, %90 : vector<3x128xf32>
    %92 = tpu.concatenate %71, %81, %91 in 0 : vector<5x128xf32>, vector<3x128xf32>, vector<3x128xf32> -> vector<11x128xf32>
    %c0_33 = arith.constant 0 : index
    %c0_34 = arith.constant 0 : index
    %93 = vector.load %arg9[%c0_33, %c0_34] : memref<480x160xf32, #tpu.memory_space<vmem>>, vector<480x160xf32>
    %cst_35 = arith.constant dense<0.000000e+00> : vector<480x128xf32>
    %94 = tpu.matmul %93, %60, %cst_35 {dimension_numbers = #tpu.dot_dimension_numbers<[1], [0], [0], [1], [0, 0, 1, 1], [], []>} : vector<480x160xf32>, vector<160x128xf32>, vector<480x128xf32> -> vector<480x128xf32>
    %95 = vector.extract_strided_slice %52 {offsets = [171, 0], sizes = [480, 1], strides = [1, 1]} : vector<651x1xf32> to vector<480x1xf32>
    %96 = vector.broadcast %95 : vector<480x1xf32> to vector<480x128xf32>
    %97 = arith.addf %94, %96 : vector<480x128xf32>
    %c0_36 = arith.constant 0 : index
    %c0_37 = arith.constant 0 : index
    %98 = vector.load %arg10[%c0_36, %c0_37] : memref<480x11xf32, #tpu.memory_space<vmem>>, vector<480x11xf32>
    %cst_38 = arith.constant dense<0.000000e+00> : vector<480x128xf32>
    %99 = tpu.matmul %98, %92, %cst_38 {dimension_numbers = #tpu.dot_dimension_numbers<[1], [0], [0], [1], [0, 0, 1, 1], [], []>} : vector<480x11xf32>, vector<11x128xf32>, vector<480x128xf32> -> vector<480x128xf32>
    %c0_39 = arith.constant 0 : index
    %c0_40 = arith.constant 0 : index
    %100 = vector.load %arg11[%c0_39, %c0_40] : memref<96x480xf32, #tpu.memory_space<vmem>>, vector<96x480xf32>
    %101 = arith.mulf %99, %97 : vector<480x128xf32>
    %cst_41 = arith.constant dense<0.000000e+00> : vector<96x128xf32>
    %102 = tpu.matmul %100, %101, %cst_41 {dimension_numbers = #tpu.dot_dimension_numbers<[1], [0], [0], [1], [0, 0, 1, 1], [], []>} : vector<96x480xf32>, vector<480x128xf32>, vector<96x128xf32> -> vector<96x128xf32>
    %c0_42 = arith.constant 0 : index
    %c0_43 = arith.constant 0 : index
    %103 = vector.load %arg13[%c0_42, %c0_43] : memref<491x1xf32, #tpu.memory_space<vmem>>, vector<491x1xf32>
    %c0_44 = arith.constant 0 : index
    %c0_45 = arith.constant 0 : index
    %104 = vector.load %arg12[%c0_44, %c0_45] : memref<171x96xf32, #tpu.memory_space<vmem>>, vector<171x96xf32>
    %cst_46 = arith.constant dense<0.000000e+00> : vector<171x128xf32>
    %105 = tpu.matmul %104, %102, %cst_46 {dimension_numbers = #tpu.dot_dimension_numbers<[1], [0], [0], [1], [0, 0, 1, 1], [], []>} : vector<171x96xf32>, vector<96x128xf32>, vector<171x128xf32> -> vector<171x128xf32>
    %106 = vector.extract_strided_slice %103 {offsets = [0, 0], sizes = [171, 1], strides = [1, 1]} : vector<491x1xf32> to vector<171x1xf32>
    %107 = vector.broadcast %106 : vector<171x1xf32> to vector<171x128xf32>
    %108 = arith.addf %105, %107 : vector<171x128xf32>
    %109 = vector.extract_strided_slice %108 {offsets = [0, 0], sizes = [160, 128], strides = [1, 1]} : vector<171x128xf32> to vector<160x128xf32>
    %cst_47 = arith.constant 0.000000e+00 : f32
    %110 = vector.broadcast %cst_47 : f32 to vector<160x128xf32>
    %111 = arith.maximumf %109, %110 : vector<160x128xf32>
    %112 = vector.extract_strided_slice %108 {offsets = [160, 0], sizes = [11, 128], strides = [1, 1]} : vector<171x128xf32> to vector<11x128xf32>
    %113 = vector.extract_strided_slice %112 {offsets = [0, 0], sizes = [5, 128], strides = [1, 1]} : vector<11x128xf32> to vector<5x128xf32>
    %cst_48 = arith.constant dense<0xFF800000> : vector<128xf32>
    %114 = vector.multi_reduction <maximumf>, %113, %cst_48 [0] : vector<5x128xf32> to vector<128xf32>
    %115 = vector.shape_cast %114 : vector<128xf32> to vector<1x128xf32>
    %116 = vector.broadcast %115 : vector<1x128xf32> to vector<5x128xf32>
    %117 = arith.subf %113, %116 : vector<5x128xf32>
    %118 = math.exp %117 : vector<5x128xf32>
    %cst_49 = arith.constant dense<0.000000e+00> : vector<128xf32>
    %119 = vector.multi_reduction <add>, %118, %cst_49 [0] : vector<5x128xf32> to vector<128xf32>
    %120 = vector.shape_cast %119 : vector<128xf32> to vector<1x128xf32>
    %121 = vector.broadcast %120 : vector<1x128xf32> to vector<5x128xf32>
    %122 = arith.divf %118, %121 : vector<5x128xf32>
    %123 = vector.extract_strided_slice %112 {offsets = [5, 0], sizes = [3, 128], strides = [1, 1]} : vector<11x128xf32> to vector<3x128xf32>
    %cst_50 = arith.constant dense<0xFF800000> : vector<128xf32>
    %124 = vector.multi_reduction <maximumf>, %123, %cst_50 [0] : vector<3x128xf32> to vector<128xf32>
    %125 = vector.shape_cast %124 : vector<128xf32> to vector<1x128xf32>
    %126 = vector.broadcast %125 : vector<1x128xf32> to vector<3x128xf32>
    %127 = arith.subf %123, %126 : vector<3x128xf32>
    %128 = math.exp %127 : vector<3x128xf32>
    %cst_51 = arith.constant dense<0.000000e+00> : vector<128xf32>
    %129 = vector.multi_reduction <add>, %128, %cst_51 [0] : vector<3x128xf32> to vector<128xf32>
    %130 = vector.shape_cast %129 : vector<128xf32> to vector<1x128xf32>
    %131 = vector.broadcast %130 : vector<1x128xf32> to vector<3x128xf32>
    %132 = arith.divf %128, %131 : vector<3x128xf32>
    %133 = vector.extract_strided_slice %112 {offsets = [8, 0], sizes = [3, 128], strides = [1, 1]} : vector<11x128xf32> to vector<3x128xf32>
    %cst_52 = arith.constant dense<0xFF800000> : vector<128xf32>
    %134 = vector.multi_reduction <maximumf>, %133, %cst_52 [0] : vector<3x128xf32> to vector<128xf32>
    %135 = vector.shape_cast %134 : vector<128xf32> to vector<1x128xf32>
    %136 = vector.broadcast %135 : vector<1x128xf32> to vector<3x128xf32>
    %137 = arith.subf %133, %136 : vector<3x128xf32>
    %138 = math.exp %137 : vector<3x128xf32>
    %cst_53 = arith.constant dense<0.000000e+00> : vector<128xf32>
    %139 = vector.multi_reduction <add>, %138, %cst_53 [0] : vector<3x128xf32> to vector<128xf32>
    %140 = vector.shape_cast %139 : vector<128xf32> to vector<1x128xf32>
    %141 = vector.broadcast %140 : vector<1x128xf32> to vector<3x128xf32>
    %142 = arith.divf %138, %141 : vector<3x128xf32>
    %143 = tpu.concatenate %122, %132, %142 in 0 : vector<5x128xf32>, vector<3x128xf32>, vector<3x128xf32> -> vector<11x128xf32>
    %c0_54 = arith.constant 0 : index
    %c0_55 = arith.constant 0 : index
    %144 = vector.load %arg14[%c0_54, %c0_55] : memref<320x160xf32, #tpu.memory_space<vmem>>, vector<320x160xf32>
    %cst_56 = arith.constant dense<0.000000e+00> : vector<320x128xf32>
    %145 = tpu.matmul %144, %111, %cst_56 {dimension_numbers = #tpu.dot_dimension_numbers<[1], [0], [0], [1], [0, 0, 1, 1], [], []>} : vector<320x160xf32>, vector<160x128xf32>, vector<320x128xf32> -> vector<320x128xf32>
    %146 = vector.extract_strided_slice %103 {offsets = [171, 0], sizes = [320, 1], strides = [1, 1]} : vector<491x1xf32> to vector<320x1xf32>
    %147 = vector.broadcast %146 : vector<320x1xf32> to vector<320x128xf32>
    %148 = arith.addf %145, %147 : vector<320x128xf32>
    %c0_57 = arith.constant 0 : index
    %c0_58 = arith.constant 0 : index
    %149 = vector.load %arg15[%c0_57, %c0_58] : memref<320x11xf32, #tpu.memory_space<vmem>>, vector<320x11xf32>
    %cst_59 = arith.constant dense<0.000000e+00> : vector<320x128xf32>
    %150 = tpu.matmul %149, %143, %cst_59 {dimension_numbers = #tpu.dot_dimension_numbers<[1], [0], [0], [1], [0, 0, 1, 1], [], []>} : vector<320x11xf32>, vector<11x128xf32>, vector<320x128xf32> -> vector<320x128xf32>
    %c0_60 = arith.constant 0 : index
    %c0_61 = arith.constant 0 : index
    %151 = vector.load %arg16[%c0_60, %c0_61] : memref<64x320xf32, #tpu.memory_space<vmem>>, vector<64x320xf32>
    %152 = arith.mulf %150, %148 : vector<320x128xf32>
    %cst_62 = arith.constant dense<0.000000e+00> : vector<64x128xf32>
    %153 = tpu.matmul %151, %152, %cst_62 {dimension_numbers = #tpu.dot_dimension_numbers<[1], [0], [0], [1], [0, 0, 1, 1], [], []>} : vector<64x320xf32>, vector<320x128xf32>, vector<64x128xf32> -> vector<64x128xf32>
    %c0_63 = arith.constant 0 : index
    %c0_64 = arith.constant 0 : index
    %154 = vector.load %arg18[%c0_63, %c0_64] : memref<18x1xf32, #tpu.memory_space<vmem>>, vector<18x1xf32>
    %c0_65 = arith.constant 0 : index
    %c0_66 = arith.constant 0 : index
    %155 = vector.load %arg17[%c0_65, %c0_66] : memref<16x64xf32, #tpu.memory_space<vmem>>, vector<16x64xf32>
    %cst_67 = arith.constant dense<0.000000e+00> : vector<16x128xf32>
    %156 = tpu.matmul %155, %153, %cst_67 {dimension_numbers = #tpu.dot_dimension_numbers<[1], [0], [0], [1], [0, 0, 1, 1], [], []>} : vector<16x64xf32>, vector<64x128xf32>, vector<16x128xf32> -> vector<16x128xf32>
    %157 = vector.extract_strided_slice %154 {offsets = [0, 0], sizes = [16, 1], strides = [1, 1]} : vector<18x1xf32> to vector<16x1xf32>
    %158 = vector.broadcast %157 : vector<16x1xf32> to vector<16x128xf32>
    %159 = arith.addf %156, %158 : vector<16x128xf32>
    %cst_68 = arith.constant 0.000000e+00 : f32
    %160 = vector.broadcast %cst_68 : f32 to vector<16x128xf32>
    %161 = arith.maximumf %159, %160 : vector<16x128xf32>
    %c0_69 = arith.constant 0 : index
    %c0_70 = arith.constant 0 : index
    %162 = vector.load %arg19[%c0_69, %c0_70] : memref<2x16xf32, #tpu.memory_space<vmem>>, vector<2x16xf32>
    %cst_71 = arith.constant dense<0.000000e+00> : vector<2x128xf32>
    %163 = tpu.matmul %162, %161, %cst_71 {dimension_numbers = #tpu.dot_dimension_numbers<[1], [0], [0], [1], [0, 0, 1, 1], [], []>} : vector<2x16xf32>, vector<16x128xf32>, vector<2x128xf32> -> vector<2x128xf32>
    %164 = vector.extract_strided_slice %154 {offsets = [16, 0], sizes = [2, 1], strides = [1, 1]} : vector<18x1xf32> to vector<2x1xf32>
    %165 = vector.broadcast %164 : vector<2x1xf32> to vector<2x128xf32>
    %166 = arith.addf %163, %165 : vector<2x128xf32>
    %167 = arith.negf %166 : vector<2x128xf32>
    %168 = math.exp %167 : vector<2x128xf32>
    %cst_72 = arith.constant 1.000000e+00 : f32
    %169 = vector.broadcast %cst_72 : f32 to vector<2x128xf32>
    %170 = arith.addf %169, %168 : vector<2x128xf32>
    %171 = arith.divf %169, %170 : vector<2x128xf32>
    %c0_73 = arith.constant 0 : index
    %c0_74 = arith.constant 0 : index
    %172 = vector.load %arg20[%c0_73, %c0_74] : memref<2x128xf32, #tpu.memory_space<vmem>>, vector<2x128xf32>
    tpu.vector_store %arg20[%c0_73, %c0_74], %171 {strides = array<i32>} : memref<2x128xf32, #tpu.memory_space<vmem>>, vector<2x128xf32>,
    return
  }
  func.func @transform_0(%arg0: i32) -> (i32, i32) {
    %c0_i32 = arith.constant 0 : i32
    %c0_i32_0 = arith.constant 0 : i32
    return %c0_i32, %arg0 : i32, i32
  }
  func.func @transform_1(%arg0: i32) -> (i32, i32) {
    %c0_i32 = arith.constant 0 : i32
    %c0_i32_0 = arith.constant 0 : i32
    %c0_i32_1 = arith.constant 0 : i32
    return %c0_i32, %c0_i32_0 : i32, i32
  }
  func.func @transform_2(%arg0: i32) -> (i32, i32) {
    %c0_i32 = arith.constant 0 : i32
    %c0_i32_0 = arith.constant 0 : i32
    %c0_i32_1 = arith.constant 0 : i32
    return %c0_i32, %c0_i32_0 : i32, i32
  }
  func.func @transform_3(%arg0: i32) -> (i32, i32) {
    %c0_i32 = arith.constant 0 : i32
    %c0_i32_0 = arith.constant 0 : i32
    %c0_i32_1 = arith.constant 0 : i32
    return %c0_i32, %c0_i32_0 : i32, i32
  }
  func.func @transform_4(%arg0: i32) -> (i32, i32) {
    %c0_i32 = arith.constant 0 : i32
    %c0_i32_0 = arith.constant 0 : i32
    %c0_i32_1 = arith.constant 0 : i32
    return %c0_i32, %c0_i32_0 : i32, i32
  }
  func.func @transform_5(%arg0: i32) -> (i32, i32) {
    %c0_i32 = arith.constant 0 : i32
    %c0_i32_0 = arith.constant 0 : i32
    %c0_i32_1 = arith.constant 0 : i32
    return %c0_i32, %c0_i32_0 : i32, i32
  }
  func.func @transform_6(%arg0: i32) -> (i32, i32) {
    %c0_i32 = arith.constant 0 : i32
    %c0_i32_0 = arith.constant 0 : i32
    %c0_i32_1 = arith.constant 0 : i32
    return %c0_i32, %c0_i32_0 : i32, i32
  }
  func.func @transform_7(%arg0: i32) -> (i32, i32) {
    %c0_i32 = arith.constant 0 : i32
    %c0_i32_0 = arith.constant 0 : i32
    %c0_i32_1 = arith.constant 0 : i32
    return %c0_i32, %c0_i32_0 : i32, i32
  }
  func.func @transform_8(%arg0: i32) -> (i32, i32) {
    %c0_i32 = arith.constant 0 : i32
    %c0_i32_0 = arith.constant 0 : i32
    %c0_i32_1 = arith.constant 0 : i32
    return %c0_i32, %c0_i32_0 : i32, i32
  }
  func.func @transform_9(%arg0: i32) -> (i32, i32) {
    %c0_i32 = arith.constant 0 : i32
    %c0_i32_0 = arith.constant 0 : i32
    %c0_i32_1 = arith.constant 0 : i32
    return %c0_i32, %c0_i32_0 : i32, i32
  }
  func.func @transform_10(%arg0: i32) -> (i32, i32) {
    %c0_i32 = arith.constant 0 : i32
    %c0_i32_0 = arith.constant 0 : i32
    %c0_i32_1 = arith.constant 0 : i32
    return %c0_i32, %c0_i32_0 : i32, i32
  }
  func.func @transform_11(%arg0: i32) -> (i32, i32) {
    %c0_i32 = arith.constant 0 : i32
    %c0_i32_0 = arith.constant 0 : i32
    %c0_i32_1 = arith.constant 0 : i32
    return %c0_i32, %c0_i32_0 : i32, i32
  }
  func.func @transform_12(%arg0: i32) -> (i32, i32) {
    %c0_i32 = arith.constant 0 : i32
    %c0_i32_0 = arith.constant 0 : i32
    %c0_i32_1 = arith.constant 0 : i32
    return %c0_i32, %c0_i32_0 : i32, i32
  }
  func.func @transform_13(%arg0: i32) -> (i32, i32) {
    %c0_i32 = arith.constant 0 : i32
    %c0_i32_0 = arith.constant 0 : i32
    %c0_i32_1 = arith.constant 0 : i32
    return %c0_i32, %c0_i32_0 : i32, i32
  }
  func.func @transform_14(%arg0: i32) -> (i32, i32) {
    %c0_i32 = arith.constant 0 : i32
    %c0_i32_0 = arith.constant 0 : i32
    %c0_i32_1 = arith.constant 0 : i32
    return %c0_i32, %c0_i32_0 : i32, i32
  }
  func.func @transform_15(%arg0: i32) -> (i32, i32) {
    %c0_i32 = arith.constant 0 : i32
    %c0_i32_0 = arith.constant 0 : i32
    %c0_i32_1 = arith.constant 0 : i32
    return %c0_i32, %c0_i32_0 : i32, i32
  }
  func.func @transform_16(%arg0: i32) -> (i32, i32) {
    %c0_i32 = arith.constant 0 : i32
    %c0_i32_0 = arith.constant 0 : i32
    %c0_i32_1 = arith.constant 0 : i32
    return %c0_i32, %c0_i32_0 : i32, i32
  }
  func.func @transform_17(%arg0: i32) -> (i32, i32) {
    %c0_i32 = arith.constant 0 : i32
    %c0_i32_0 = arith.constant 0 : i32
    %c0_i32_1 = arith.constant 0 : i32
    return %c0_i32, %c0_i32_0 : i32, i32
  }
  func.func @transform_18(%arg0: i32) -> (i32, i32) {
    %c0_i32 = arith.constant 0 : i32
    %c0_i32_0 = arith.constant 0 : i32
    %c0_i32_1 = arith.constant 0 : i32
    return %c0_i32, %c0_i32_0 : i32, i32
  }
  func.func @transform_19(%arg0: i32) -> (i32, i32) {
    %c0_i32 = arith.constant 0 : i32
    %c0_i32_0 = arith.constant 0 : i32
    return %c0_i32, %arg0 : i32, i32
  }
}

</mosaic_0001>

<llo_original>
// kernel: ple_forward.1
$region0: #{ple_forward.1}
  #allocation0 [shape = 'u32[]', space=smem, size = 0x4, offset = 0x4, fixed_abs, tag = 'smem constant byte address 0x4 - core index']
  #allocation1 [shape = 'u32[144,128]{1,0:T(1,128)}', space=vmem, size = 0x12000, scoped, tag = 'internal scratch']
  %s0 = inlined_call_operand.vmem [shape: f32[16,128], index: 0, kind: input, shape index: {}]
  %s1 = inlined_call_operand.vmem [shape: f32[171,16], index: 1, kind: input, shape index: {}]
  %s2 = inlined_call_operand.vmem [shape: f32[651,1], index: 2, kind: input, shape index: {}]
  %s3 = inlined_call_operand.vmem [shape: f32[480,160], index: 3, kind: input, shape index: {}]
  %s4 = inlined_call_operand.vmem [shape: f32[480,11], index: 4, kind: input, shape index: {}]
  %s5 = inlined_call_operand.vmem [shape: f32[96,480], index: 5, kind: input, shape index: {}]
  %s6 = inlined_call_operand.vmem [shape: f32[171,96], index: 6, kind: input, shape index: {}]
  %s7 = inlined_call_operand.vmem [shape: f32[651,1], index: 7, kind: input, shape index: {}]
  %s8 = inlined_call_operand.vmem [shape: f32[480,160], index: 8, kind: input, shape index: {}]
  %s9 = inlined_call_operand.vmem [shape: f32[480,11], index: 9, kind: input, shape index: {}]
  %s10 = inlined_call_operand.vmem [shape: f32[96,480], index: 10, kind: input, shape index: {}]
  %s11 = inlined_call_operand.vmem [shape: f32[171,96], index: 11, kind: input, shape index: {}]
  %s12 = inlined_call_operand.vmem [shape: f32[491,1], index: 12, kind: input, shape index: {}]
  %s13 = inlined_call_operand.vmem [shape: f32[320,160], index: 13, kind: input, shape index: {}]
  %s14 = inlined_call_operand.vmem [shape: f32[320,11], index: 14, kind: input, shape index: {}]
  %s15 = inlined_call_operand.vmem [shape: f32[64,320], index: 15, kind: input, shape index: {}]
  %s16 = inlined_call_operand.vmem [shape: f32[16,64], index: 16, kind: input, shape index: {}]
  %s17 = inlined_call_operand.vmem [shape: f32[18,1], index: 17, kind: input, shape index: {}]
  %s18 = inlined_call_operand.vmem [shape: f32[2,16], index: 18, kind: input, shape index: {}]
  %s19 = inlined_call_operand.vmem [shape: f32[2,128], index: 19, kind: output, shape index: {}]
  %s20 = sld [smem:[#allocation0]]
  $region86: #{ple_forward.1} parent=0
    _
  %s22 = ssub.s32 1, %s20
  %s23 = scalar_select 0, %s22, %s20
  // Predicated region
  $region2: #{ple_forward.1} parent=0 // pred_check
    _
  $region3: #{ple_forward.1} parent=0 // pred_check_branch
    %25 = sbr.rel (0) target = $region5
  $region4: #{ple_forward.1} parent=0 // pred_region
    _
  $region5: #{ple_forward.1} parent=0 // pred_fallthru
    _
  // Predicated region
  $region6: #{ple_forward.1} parent=0 // pred_check
    _
  $region7: #{ple_forward.1} parent=0 // pred_check_branch
    %27 = sbr.rel (0) target = $region9
  $region8: #{ple_forward.1} parent=0 // pred_region
    _
  $region9: #{ple_forward.1} parent=0 // pred_fallthru
    _
  // Predicated region
  $region10: #{ple_forward.1} parent=0 // pred_check
    _
  $region11: #{ple_forward.1} parent=0 // pred_check_branch
    %29 = sbr.rel (0) target = $region13
  $region12: #{ple_forward.1} parent=0 // pred_region
    _
  $region13: #{ple_forward.1} parent=0 // pred_fallthru
    _
  // Predicated region
  $region14: #{ple_forward.1} parent=0 // pred_check
    _
  $region15: #{ple_forward.1} parent=0 // pred_check_branch
    %31 = sbr.rel (0) target = $region17
  $region16: #{ple_forward.1} parent=0 // pred_region
    _
  $region17: #{ple_forward.1} parent=0 // pred_fallthru
    _
  // Predicated region
  $region18: #{ple_forward.1} parent=0 // pred_check
    _
  $region19: #{ple_forward.1} parent=0 // pred_check_branch
    %33 = sbr.rel (0) target = $region21
  $region20: #{ple_forward.1} parent=0 // pred_region
    _
  $region21: #{ple_forward.1} parent=0 // pred_fallthru
    _
  // Predicated region
  $region22: #{ple_forward.1} parent=0 // pred_check
    _
  $region23: #{ple_forward.1} parent=0 // pred_check_branch
    %35 = sbr.rel (0) target = $region25
  $region24: #{ple_forward.1} parent=0 // pred_region
    _
  $region25: #{ple_forward.1} parent=0 // pred_fallthru
    _
  // Predicated region
  $region26: #{ple_forward.1} parent=0 // pred_check
    _
  $region27: #{ple_forward.1} parent=0 // pred_check_branch
    %37 = sbr.rel (0) target = $region29
  $region28: #{ple_forward.1} parent=0 // pred_region
    _
  $region29: #{ple_forward.1} parent=0 // pred_fallthru
    _
  // Predicated region
  $region30: #{ple_forward.1} parent=0 // pred_check
    _
  $region31: #{ple_forward.1} parent=0 // pred_check_branch
    %39 = sbr.rel (0) target = $region33
  $region32: #{ple_forward.1} parent=0 // pred_region
    _
  $region33: #{ple_forward.1} parent=0 // pred_fallthru
    _
  // Predicated region
  $region34: #{ple_forward.1} parent=0 // pred_check
    _
  $region35: #{ple_forward.1} parent=0 // pred_check_branch
    %41 = sbr.rel (0) target = $region37
  $region36: #{ple_forward.1} parent=0 // pred_region
    _
  $region37: #{ple_forward.1} parent=0 // pred_fallthru
    _
  // Predicated region
  $region38: #{ple_forward.1} parent=0 // pred_check
    _
  $region39: #{ple_forward.1} parent=0 // pred_check_branch
    %43 = sbr.rel (0) target = $region41
  $region40: #{ple_forward.1} parent=0 // pred_region
    _
  $region41: #{ple_forward.1} parent=0 // pred_fallthru
    _
  // Predicated region
  $region42: #{ple_forward.1} parent=0 // pred_check
    _
  $region43: #{ple_forward.1} parent=0 // pred_check_branch
    %45 = sbr.rel (0) target = $region45
  $region44: #{ple_forward.1} parent=0 // pred_region
    _
  $region45: #{ple_forward.1} parent=0 // pred_fallthru
    _
  // Predicated region
  $region46: #{ple_forward.1} parent=0 // pred_check
    _
  $region47: #{ple_forward.1} parent=0 // pred_check_branch
    %47 = sbr.rel (0) target = $region49
  $region48: #{ple_forward.1} parent=0 // pred_region
    _
  $region49: #{ple_forward.1} parent=0 // pred_fallthru
    _
  // Predicated region
  $region50: #{ple_forward.1} parent=0 // pred_check
    _
  $region51: #{ple_forward.1} parent=0 // pred_check_branch
    %49 = sbr.rel (0) target = $region53
  $region52: #{ple_forward.1} parent=0 // pred_region
    _
  $region53: #{ple_forward.1} parent=0 // pred_fallthru
    _
  // Predicated region
  $region54: #{ple_forward.1} parent=0 // pred_check
    _
  $region55: #{ple_forward.1} parent=0 // pred_check_branch
    %51 = sbr.rel (0) target = $region57
  $region56: #{ple_forward.1} parent=0 // pred_region
    _
  $region57: #{ple_forward.1} parent=0 // pred_fallthru
    _
  // Predicated region
  $region58: #{ple_forward.1} parent=0 // pred_check
    _
  $region59: #{ple_forward.1} parent=0 // pred_check_branch
    %53 = sbr.rel (0) target = $region61
  $region60: #{ple_forward.1} parent=0 // pred_region
    _
  $region61: #{ple_forward.1} parent=0 // pred_fallthru
    _
  // Predicated region
  $region62: #{ple_forward.1} parent=0 // pred_check
    _
  $region63: #{ple_forward.1} parent=0 // pred_check_branch
    %55 = sbr.rel (0) target = $region65
  $region64: #{ple_forward.1} parent=0 // pred_region
    _
  $region65: #{ple_forward.1} parent=0 // pred_fallthru
    _
  // Predicated region
  $region66: #{ple_forward.1} parent=0 // pred_check
    _
  $region67: #{ple_forward.1} parent=0 // pred_check_branch
    %57 = sbr.rel (0) target = $region69
  $region68: #{ple_forward.1} parent=0 // pred_region
    _
  $region69: #{ple_forward.1} parent=0 // pred_fallthru
    _
  // Predicated region
  $region70: #{ple_forward.1} parent=0 // pred_check
    _
  $region71: #{ple_forward.1} parent=0 // pred_check_branch
    %59 = sbr.rel (0) target = $region73
  $region72: #{ple_forward.1} parent=0 // pred_region
    _
  $region73: #{ple_forward.1} parent=0 // pred_fallthru
    _
  // Predicated region
  $region74: #{ple_forward.1} parent=0 // pred_check
    _
  $region75: #{ple_forward.1} parent=0 // pred_check_branch
    %61 = sbr.rel (0) target = $region77
  $region76: #{ple_forward.1} parent=0 // pred_region
    _
  $region77: #{ple_forward.1} parent=0 // pred_fallthru
    _
  %v62 = vld [vmem:[%s0] sm:$0xff]
  %v63 = vld [vmem:[%s0 + $0x8] sm:$0xff]
  %v64 = vld [vmem:[%s2] sm:$0xff]
  %v65 = vld [vmem:[%s2 + $0x8] sm:$0xff]
  %v66 = vld [vmem:[%s2 + $0x10] sm:$0xff]
  %v67 = vld [vmem:[%s2 + $0x18] sm:$0xff]
  %v68 = vld [vmem:[%s2 + $0x20] sm:$0xff]
  %v69 = vld [vmem:[%s2 + $0x28] sm:$0xff]
  %v70 = vld [vmem:[%s2 + $0x30] sm:$0xff]
  %v71 = vld [vmem:[%s2 + $0x38] sm:$0xff]
  %v72 = vld [vmem:[%s2 + $0x40] sm:$0xff]
  %v73 = vld [vmem:[%s2 + $0x48] sm:$0xff]
  %v74 = vld [vmem:[%s2 + $0x50] sm:$0xff]
  %v75 = vld [vmem:[%s2 + $0x58] sm:$0xff]
  %v76 = vld [vmem:[%s2 + $0x60] sm:$0xff]
  %v77 = vld [vmem:[%s2 + $0x68] sm:$0xff]
  %v78 = vld [vmem:[%s2 + $0x70] sm:$0xff]
  %v79 = vld [vmem:[%s2 + $0x78] sm:$0xff]
  %v80 = vld [vmem:[%s2 + $0x80] sm:$0xff]
  %v81 = vld [vmem:[%s2 + $0x88] sm:$0xff]
  %v82 = vld [vmem:[%s2 + $0x90] sm:$0xff]
  %v83 = vld [vmem:[%s2 + $0x98] sm:$0xff]
  %v84 = vld [vmem:[%s2 + $0xa0] sm:$0xff]
  %v85 = vld [vmem:[%s2 + $0xa8] sm:$0xff]
  %v86 = vld [vmem:[%s2 + $0xb0] sm:$0xff]
  %v87 = vld [vmem:[%s2 + $0xb8] sm:$0xff]
  %v88 = vld [vmem:[%s2 + $0xc0] sm:$0xff]
  %v89 = vld [vmem:[%s2 + $0xc8] sm:$0xff]
  %v90 = vld [vmem:[%s2 + $0xd0] sm:$0xff]
  %v91 = vld [vmem:[%s2 + $0xd8] sm:$0xff]
  %v92 = vld [vmem:[%s2 + $0xe0] sm:$0xff]
  %v93 = vld [vmem:[%s2 + $0xe8] sm:$0xff]
  %v94 = vld [vmem:[%s2 + $0xf0] sm:$0xff]
  %v95 = vld [vmem:[%s2 + $0xf8] sm:$0xff]
  %v96 = vld [vmem:[%s2 + $0x100] sm:$0xff]
  %v97 = vld [vmem:[%s2 + $0x108] sm:$0xff]
  %v98 = vld [vmem:[%s2 + $0x110] sm:$0xff]
  %v99 = vld [vmem:[%s2 + $0x118] sm:$0xff]
  %v100 = vld [vmem:[%s2 + $0x120] sm:$0xff]
  %v101 = vld [vmem:[%s2 + $0x128] sm:$0xff]
  %v102 = vld [vmem:[%s2 + $0x130] sm:$0xff]
  %v103 = vld [vmem:[%s2 + $0x138] sm:$0xff]
  %v104 = vld [vmem:[%s2 + $0x140] sm:$0xff]
  %v105 = vld [vmem:[%s2 + $0x148] sm:$0xff]
  %v106 = vld [vmem:[%s2 + $0x150] sm:$0xff]
  %v107 = vld [vmem:[%s2 + $0x158] sm:$0xff]
  %v108 = vld [vmem:[%s2 + $0x160] sm:$0xff]
  %v109 = vld [vmem:[%s2 + $0x168] sm:$0xff]
  %v110 = vld [vmem:[%s2 + $0x170] sm:$0xff]
  %v111 = vld [vmem:[%s2 + $0x178] sm:$0xff]
  %v112 = vld [vmem:[%s2 + $0x180] sm:$0xff]
  %v113 = vld [vmem:[%s2 + $0x188] sm:$0xff]
  %v114 = vld [vmem:[%s2 + $0x190] sm:$0xff]
  %v115 = vld [vmem:[%s2 + $0x198] sm:$0xff]
  %v116 = vld [vmem:[%s2 + $0x1a0] sm:$0xff]
  %v117 = vld [vmem:[%s2 + $0x1a8] sm:$0xff]
  %v118 = vld [vmem:[%s2 + $0x1b0] sm:$0xff]
  %v119 = vld [vmem:[%s2 + $0x1b8] sm:$0xff]
  %v120 = vld [vmem:[%s2 + $0x1c0] sm:$0xff]
  %v121 = vld [vmem:[%s2 + $0x1c8] sm:$0xff]
  %v122 = vld [vmem:[%s2 + $0x1d0] sm:$0xff]
  %v123 = vld [vmem:[%s2 + $0x1d8] sm:$0xff]
  %v124 = vld [vmem:[%s2 + $0x1e0] sm:$0xff]
  %v125 = vld [vmem:[%s2 + $0x1e8] sm:$0xff]
  %v126 = vld [vmem:[%s2 + $0x1f0] sm:$0xff]
  %v127 = vld [vmem:[%s2 + $0x1f8] sm:$0xff]
  %v128 = vld [vmem:[%s2 + $0x200] sm:$0xff]
  %v129 = vld [vmem:[%s2 + $0x208] sm:$0xff]
  %v130 = vld [vmem:[%s2 + $0x210] sm:$0xff]
  %v131 = vld [vmem:[%s2 + $0x218] sm:$0xff]
  %v132 = vld [vmem:[%s2 + $0x220] sm:$0xff]
  %v133 = vld [vmem:[%s2 + $0x228] sm:$0xff]
  %v134 = vld [vmem:[%s2 + $0x230] sm:$0xff]
  %v135 = vld [vmem:[%s2 + $0x238] sm:$0xff]
  %v136 = vld [vmem:[%s2 + $0x240] sm:$0xff]
  %v137 = vld [vmem:[%s2 + $0x248] sm:$0xff]
  %v138 = vld [vmem:[%s2 + $0x250] sm:$0xff]
  %v139 = vld [vmem:[%s2 + $0x258] sm:$0xff]
  %v140 = vld [vmem:[%s2 + $0x260] sm:$0xff]
  %v141 = vld [vmem:[%s2 + $0x268] sm:$0xff]
  %v142 = vld [vmem:[%s2 + $0x270] sm:$0xff]
  %v143 = vld [vmem:[%s2 + $0x278] sm:$0xff]
  %v144 = vld [vmem:[%s2 + $0x280] sm:$0xff]
  %v145 = vld [vmem:[%s2 + $0x288] sm:$0x7]
  %v146 = vld [vmem:[%s1] sm:$0xff]
  %v147 = vld [vmem:[%s1 + $0x8] sm:$0xff]
  %v148 = vld [vmem:[%s1 + $0x10] sm:$0xff]
  %v149 = vld [vmem:[%s1 + $0x18] sm:$0xff]
  %v150 = vld [vmem:[%s1 + $0x20] sm:$0xff]
  %v151 = vld [vmem:[%s1 + $0x28] sm:$0xff]
  %v152 = vld [vmem:[%s1 + $0x30] sm:$0xff]
  %v153 = vld [vmem:[%s1 + $0x38] sm:$0xff]
  %v154 = vld [vmem:[%s1 + $0x40] sm:$0xff]
  %v155 = vld [vmem:[%s1 + $0x48] sm:$0xff]
  %v156 = vld [vmem:[%s1 + $0x50] sm:$0xff]
  %v157 = vld [vmem:[%s1 + $0x58] sm:$0xff]
  %v158 = vld [vmem:[%s1 + $0x60] sm:$0xff]
  %v159 = vld [vmem:[%s1 + $0x68] sm:$0xff]
  %v160 = vld [vmem:[%s1 + $0x70] sm:$0xff]
  %v161 = vld [vmem:[%s1 + $0x78] sm:$0xff]
  %v162 = vld [vmem:[%s1 + $0x80] sm:$0xff]
  %v163 = vld [vmem:[%s1 + $0x88] sm:$0xff]
  %v164 = vld [vmem:[%s1 + $0x90] sm:$0xff]
  %v165 = vld [vmem:[%s1 + $0x98] sm:$0xff]
  %v166 = vld [vmem:[%s1 + $0xa0] sm:$0xff]
  %v167 = vld [vmem:[%s1 + $0xa8] sm:$0x7]
  %169 = vset.pattern.permute.xlu0 0
  %170 = vperm.xlu0 %169, %v64
  %v171 = vpop.permute.xlu0 %170
  %174 = vset.pattern.permute.xlu0 0
  %175 = vperm.xlu0 %174, %v65
  %v176 = vpop.permute.xlu0 %175
  %179 = vset.pattern.permute.xlu0 0
  %180 = vperm.xlu0 %179, %v66
  %v181 = vpop.permute.xlu0 %180
  %184 = vset.pattern.permute.xlu0 0
  %185 = vperm.xlu0 %184, %v67
  %v186 = vpop.permute.xlu0 %185
  %189 = vset.pattern.permute.xlu0 0
  %190 = vperm.xlu0 %189, %v68
  %v191 = vpop.permute.xlu0 %190
  %194 = vset.pattern.permute.xlu0 0
  %195 = vperm.xlu0 %194, %v69
  %v196 = vpop.permute.xlu0 %195
  %199 = vset.pattern.permute.xlu0 0
  %200 = vperm.xlu0 %199, %v70
  %v201 = vpop.permute.xlu0 %200
  %204 = vset.pattern.permute.xlu0 0
  %205 = vperm.xlu0 %204, %v71
  %v206 = vpop.permute.xlu0 %205
  %209 = vset.pattern.permute.xlu0 0
  %210 = vperm.xlu0 %209, %v72
  %v211 = vpop.permute.xlu0 %210
  %214 = vset.pattern.permute.xlu0 0
  %215 = vperm.xlu0 %214, %v73
  %v216 = vpop.permute.xlu0 %215
  %219 = vset.pattern.permute.xlu0 0
  %220 = vperm.xlu0 %219, %v74
  %v221 = vpop.permute.xlu0 %220
  %224 = vset.pattern.permute.xlu0 0
  %225 = vperm.xlu0 %224, %v75
  %v226 = vpop.permute.xlu0 %225
  %229 = vset.pattern.permute.xlu0 0
  %230 = vperm.xlu0 %229, %v76
  %v231 = vpop.permute.xlu0 %230
  %234 = vset.pattern.permute.xlu0 0
  %235 = vperm.xlu0 %234, %v77
  %v236 = vpop.permute.xlu0 %235
  %239 = vset.pattern.permute.xlu0 0
  %240 = vperm.xlu0 %239, %v78
  %v241 = vpop.permute.xlu0 %240
  %244 = vset.pattern.permute.xlu0 0
  %245 = vperm.xlu0 %244, %v79
  %v246 = vpop.permute.xlu0 %245
  %249 = vset.pattern.permute.xlu0 0
  %250 = vperm.xlu0 %249, %v80
  %v251 = vpop.permute.xlu0 %250
  %254 = vset.pattern.permute.xlu0 0
  %255 = vperm.xlu0 %254, %v81
  %v256 = vpop.permute.xlu0 %255
  %259 = vset.pattern.permute.xlu0 0
  %260 = vperm.xlu0 %259, %v82
  %v261 = vpop.permute.xlu0 %260
  %264 = vset.pattern.permute.xlu0 0
  %265 = vperm.xlu0 %264, %v83
  %v266 = vpop.permute.xlu0 %265
  %269 = vset.pattern.permute.xlu0 0
  %270 = vperm.xlu0 %269, %v84
  %v271 = vpop.permute.xlu0 %270
  %274 = vset.pattern.permute.xlu0 0
  %275 = vperm.xlu0 %274, %v85
  %v276 = vpop.permute.xlu0 %275
  %vm278 = vcmask 130048
  %v280 = vsel %vm278, %v146, 0
  %v283 = vsel %vm278, %v147, 0
  %v286 = vsel %vm278, %v148, 0
  %v289 = vsel %vm278, %v149, 0
  %v292 = vsel %vm278, %v150, 0
  %v295 = vsel %vm278, %v151, 0
  %v298 = vsel %vm278, %v152, 0
  %v301 = vsel %vm278, %v153, 0
  %v304 = vsel %vm278, %v154, 0
  %v307 = vsel %vm278, %v155, 0
  %v310 = vsel %vm278, %v156, 0
  %v313 = vsel %vm278, %v157, 0
  %v316 = vsel %vm278, %v158, 0
  %v319 = vsel %vm278, %v159, 0
  %v322 = vsel %vm278, %v160, 0
  %v325 = vsel %vm278, %v161, 0
  %v328 = vsel %vm278, %v162, 0
  %v331 = vsel %vm278, %v163, 0
  %v334 = vsel %vm278, %v164, 0
  %v337 = vsel %vm278, %v165, 0
  %v340 = vsel %vm278, %v166, 0
  %v343 = vsel %vm278, %v167, 0
  %345 = vmatprep.subr.mxu0 0.0
  %346 = vmatpush1.msra.mxu0 0.0
  %347 = vmatprep.subr.mxu0 0.0
  %348 = vmatpush1.msra.mxu0 0.0
  %349 = vmatprep.subr.mxu0 0.0
  %350 = vmatpush1.msra.mxu0 0.0
  %351 = vmatprep.subr.mxu0 0.0
  %352 = vmatpush1.msra.mxu0 0.0
  %353 = vmatprep.subr.mxu0 0.0
  %354 = vmatpush1.msra.mxu0 0.0
  %355 = vmatprep.subr.mxu0 0.0
  %356 = vmatpush1.msra.mxu0 0.0
  %357 = vmatprep.subr.mxu0 0.0
  %358 = vmatpush1.msra.mxu0 0.0
  %359 = vmatprep.subr.mxu0 0.0
  %360 = vmatpush1.msra.mxu0 0.0
  %361 = vmatprep.subr.mxu0 0.0
  %362 = vmatpush1.msra.mxu0 0.0
  %363 = vmatprep.subr.mxu0 0.0
  %364 = vmatpush1.msra.mxu0 0.0
  %365 = vmatprep.subr.mxu0 0.0
  %366 = vmatpush1.msra.mxu0 0.0
  %367 = vmatprep.subr.mxu0 0.0
  %368 = vmatpush1.msra.mxu0 0.0
  %369 = vmatprep.subr.mxu0 0.0
  %370 = vmatpush1.msra.mxu0 0.0
  %371 = vmatprep.subr.mxu0 0.0
  %372 = vmatpush1.msra.mxu0 0.0
  %373 = vmatprep.subr.mxu0 0.0
  %374 = vmatpush1.msra.mxu0 %v63
  %375 = vmatprep.subr.mxu0 0.0
  %376 = vmatpush1.msra.mxu0 %v62
  %377 = vmatprep.subr.mxu0 0.0
  %378 = vmatpush2.msra.mxu0 0.0
  %379 = vmatprep.subr.mxu0 0.0
  %380 = vmatpush2.msra.mxu0 0.0
  %381 = vmatprep.subr.mxu0 0.0
  %382 = vmatpush2.msra.mxu0 0.0
  %383 = vmatprep.subr.mxu0 0.0
  %384 = vmatpush2.msra.mxu0 0.0
  %385 = vmatprep.subr.mxu0 0.0
  %386 = vmatpush2.msra.mxu0 0.0
  %387 = vmatprep.subr.mxu0 0.0
  %388 = vmatpush2.msra.mxu0 0.0
  %389 = vmatprep.subr.mxu0 0.0
  %390 = vmatpush2.msra.mxu0 0.0
  %391 = vmatprep.subr.mxu0 0.0
  %392 = vmatpush2.msra.mxu0 0.0
  %393 = vmatprep.subr.mxu0 0.0
  %394 = vmatpush2.msra.mxu0 0.0
  %395 = vmatprep.subr.mxu0 0.0
  %396 = vmatpush2.msra.mxu0 0.0
  %397 = vmatprep.subr.mxu0 0.0
  %398 = vmatpush2.msra.mxu0 0.0
  %399 = vmatprep.subr.mxu0 0.0
  %400 = vmatpush2.msra.mxu0 0.0
  %401 = vmatprep.subr.mxu0 0.0
  %402 = vmatpush2.msra.mxu0 0.0
  %403 = vmatprep.subr.mxu0 0.0
  %404 = vmatpush2.msra.mxu0 0.0
  %405 = vmatprep.subr.mxu0 0.0
  %406 = vmatpush2.msra.mxu0 0.0
  %407 = vmatprep.subr.mxu0 0.0
  %408 = vmatpush2.msra.mxu0 0.0
  %409 = vmatprep.mubr.f32.mxu0 0.0
  %410 = vmatmul.mubr.f32.gmra.mxu0 %v280
  %v411 = vpop.f32.mrf.mxu0
  %v412 = vadd.f32 %v171, %v411
  %v413 = vpop.f32.mrf.mxu0
  %414 = vmatprep.mubr.f32.mxu0 0.0
  %415 = vmatmul.mubr.f32.gmra.mxu0 %v283
  %v416 = vpop.f32.mrf.mxu0
  %v417 = vadd.f32 %v176, %v416
  %v418 = vpop.f32.mrf.mxu0
  %419 = vmatprep.mubr.f32.mxu0 0.0
  %420 = vmatmul.mubr.f32.gmra.mxu0 %v286
  %v421 = vpop.f32.mrf.mxu0
  %v422 = vadd.f32 %v181, %v421
  %v423 = vpop.f32.mrf.mxu0
  %424 = vmatprep.mubr.f32.mxu0 0.0
  %425 = vmatmul.mubr.f32.gmra.mxu0 %v289
  %v426 = vpop.f32.mrf.mxu0
  %v427 = vadd.f32 %v186, %v426
  %v428 = vpop.f32.mrf.mxu0
  %429 = vmatprep.mubr.f32.mxu0 0.0
  %430 = vmatmul.mubr.f32.gmra.mxu0 %v292
  %v431 = vpop.f32.mrf.mxu0
  %v432 = vadd.f32 %v191, %v431
  %v433 = vpop.f32.mrf.mxu0
  %434 = vmatprep.mubr.f32.mxu0 0.0
  %435 = vmatmul.mubr.f32.gmra.mxu0 %v295
  %v436 = vpop.f32.mrf.mxu0
  %v437 = vadd.f32 %v196, %v436
  %v438 = vpop.f32.mrf.mxu0
  %439 = vmatprep.mubr.f32.mxu0 0.0
  %440 = vmatmul.mubr.f32.gmra.mxu0 %v298
  %v441 = vpop.f32.mrf.mxu0
  %v442 = vadd.f32 %v201, %v441
  %v443 = vpop.f32.mrf.mxu0
  %444 = vmatprep.mubr.f32.mxu0 0.0
  %445 = vmatmul.mubr.f32.gmra.mxu0 %v301
  %v446 = vpop.f32.mrf.mxu0
  %v447 = vadd.f32 %v206, %v446
  %v448 = vpop.f32.mrf.mxu0
  %449 = vmatprep.mubr.f32.mxu0 0.0
  %450 = vmatmul.mubr.f32.gmra.mxu0 %v304
  %v451 = vpop.f32.mrf.mxu0
  %v452 = vadd.f32 %v211, %v451
  %v453 = vpop.f32.mrf.mxu0
  %454 = vmatprep.mubr.f32.mxu0 0.0
  %455 = vmatmul.mubr.f32.gmra.mxu0 %v307
  %v456 = vpop.f32.mrf.mxu0
  %v457 = vadd.f32 %v216, %v456
  %v458 = vpop.f32.mrf.mxu0
  %459 = vmatprep.mubr.f32.mxu0 0.0
  %460 = vmatmul.mubr.f32.gmra.mxu0 %v310
  %v461 = vpop.f32.mrf.mxu0
  %v462 = vadd.f32 %v221, %v461
  %v463 = vpop.f32.mrf.mxu0
  %464 = vmatprep.mubr.f32.mxu0 0.0
  %465 = vmatmul.mubr.f32.gmra.mxu0 %v313
  %v466 = vpop.f32.mrf.mxu0
  %v467 = vadd.f32 %v226, %v466
  %v468 = vpop.f32.mrf.mxu0
  %469 = vmatprep.mubr.f32.mxu0 0.0
  %470 = vmatmul.mubr.f32.gmra.mxu0 %v316
  %v471 = vpop.f32.mrf.mxu0
  %v472 = vadd.f32 %v231, %v471
  %v473 = vpop.f32.mrf.mxu0
  %474 = vmatprep.mubr.f32.mxu0 0.0
  %475 = vmatmul.mubr.f32.gmra.mxu0 %v319
  %v476 = vpop.f32.mrf.mxu0
  %v477 = vadd.f32 %v236, %v476
  %v478 = vpop.f32.mrf.mxu0
  %479 = vmatprep.mubr.f32.mxu0 0.0
  %480 = vmatmul.mubr.f32.gmra.mxu0 %v322
  %v481 = vpop.f32.mrf.mxu0
  %v482 = vadd.f32 %v241, %v481
  %v483 = vpop.f32.mrf.mxu0
  %484 = vmatprep.mubr.f32.mxu0 0.0
  %485 = vmatmul.mubr.f32.gmra.mxu0 %v325
  %v486 = vpop.f32.mrf.mxu0
  %v487 = vadd.f32 %v246, %v486
  %v488 = vpop.f32.mrf.mxu0
  %489 = vmatprep.mubr.f32.mxu0 0.0
  %490 = vmatmul.mubr.f32.gmra.mxu0 %v328
  %v491 = vpop.f32.mrf.mxu0
  %v492 = vadd.f32 %v251, %v491
  %v493 = vpop.f32.mrf.mxu0
  %494 = vmatprep.mubr.f32.mxu0 0.0
  %495 = vmatmul.mubr.f32.gmra.mxu0 %v331
  %v496 = vpop.f32.mrf.mxu0
  %v497 = vadd.f32 %v256, %v496
  %v498 = vpop.f32.mrf.mxu0
  %499 = vmatprep.mubr.f32.mxu0 0.0
  %500 = vmatmul.mubr.f32.gmra.mxu0 %v334
  %v501 = vpop.f32.mrf.mxu0
  %v502 = vadd.f32 %v261, %v501
  %v503 = vpop.f32.mrf.mxu0
  %504 = vmatprep.mubr.f32.mxu0 0.0
  %505 = vmatmul.mubr.f32.gmra.mxu0 %v337
  %v506 = vpop.f32.mrf.mxu0
  %v507 = vadd.f32 %v266, %v506
  %v508 = vpop.f32.mrf.mxu0
  %509 = vmatprep.mubr.f32.mxu0 0.0
  %510 = vmatmul.mubr.f32.gmra.mxu0 %v340
  %v511 = vpop.f32.mrf.mxu0
  %v512 = vadd.f32 %v271, %v511
  %v513 = vpop.f32.mrf.mxu0
  %514 = vmatprep.mubr.f32.mxu0 0.0
  %515 = vmatmul.mubr.f32.gmra.mxu0 %v343
  %v516 = vpop.f32.mrf.mxu0
  %v517 = vadd.f32 %v276, %v516
  %v518 = vpop.f32.mrf.mxu0
  %519 = vdwg.mxu0
  %v520 = vmax.f32 %v412, 0.0
  %v521 = vmax.f32 %v417, 0.0
  %v522 = vmax.f32 %v422, 0.0
  %v523 = vmax.f32 %v427, 0.0
  %v524 = vmax.f32 %v432, 0.0
  %v525 = vmax.f32 %v437, 0.0
  %v526 = vmax.f32 %v442, 0.0
  %v527 = vmax.f32 %v447, 0.0
  %v528 = vmax.f32 %v452, 0.0
  %v529 = vmax.f32 %v457, 0.0
  %v530 = vmax.f32 %v462, 0.0
  %v531 = vmax.f32 %v467, 0.0
  %v532 = vmax.f32 %v472, 0.0
  %v533 = vmax.f32 %v477, 0.0
  %v534 = vmax.f32 %v482, 0.0
  %v535 = vmax.f32 %v487, 0.0
  %v536 = vmax.f32 %v492, 0.0
  %v537 = vmax.f32 %v497, 0.0
  %v538 = vmax.f32 %v502, 0.0
  %v539 = vmax.f32 %v507, 0.0
  %vm540 = vcmask 1044480
  %v541 = vsel %vm540, %v512, -inf
  %v542 = vrot.slane %v541, 4
  %v543 = vmax.f32 %v541, %v542
  %v544 = vrot.slane %v543, 2
  %v545 = vmax.f32 %v543, %v544
  %v546 = vrot.slane %v545, 1
  %v547 = vmax.f32 %v545, %v546
  %v548 = vsub.f32 %v512, %v547
  %v549 = vmul.f32 %v548, 1.442695
  %v550 = vpow.pop %v549
  %v551 = vsel %vm540, %v550, 0.0
  %v552 = vrot.slane %v551, 4
  %v553 = vadd.f32 %v551, %v552
  %v554 = vrot.slane %v553, 2
  %v555 = vadd.f32 %v553, %v554
  %v556 = vrot.slane %v555, 1
  %v557 = vadd.f32 %v555, %v556
  %v558 = vrcp.pop %v557
  %v559 = vmul.f32 %v550, %v558
  %vm560 = vcmask 1047557
  %v561 = vsel %vm560, %v512, -inf
  %v562 = vrot.slane %v561, 4
  %v563 = vmax.f32 %v561, %v562
  %v564 = vrot.slane %v563, 2
  %v565 = vmax.f32 %v563, %v564
  %v566 = vrot.slane %v565, 1
  %v567 = vmax.f32 %v565, %v566
  %v568 = vsub.f32 %v512, %v567
  %v569 = vmul.f32 %v568, 1.442695
  %v570 = vpow.pop %v569
  %v572 = vrot.slane %v570, 5
  %vm574 = vcmask 1042432
  %v575 = vsel %vm574, %v572, 0.0
  %v576 = vrot.slane %v575, 4
  %v577 = vadd.f32 %v575, %v576
  %v578 = vrot.slane %v577, 2
  %v579 = vadd.f32 %v577, %v578
  %v580 = vrot.slane %v579, 1
  %v581 = vadd.f32 %v579, %v580
  %v582 = vrcp.pop %v581
  %v583 = vmul.f32 %v570, %v582
  %v584 = vsel %vm574, %v517, -inf
  %v585 = vrot.slane %v584, 4
  %v586 = vmax.f32 %v584, %v585
  %v587 = vrot.slane %v586, 2
  %v588 = vmax.f32 %v586, %v587
  %v589 = vrot.slane %v588, 1
  %v590 = vmax.f32 %v588, %v589
  %v591 = vsub.f32 %v517, %v590
  %v592 = vmul.f32 %v591, 1.442695
  %v593 = vpow.pop %v592
  %v594 = vsel %vm574, %v593, 0.0
  %v595 = vrot.slane %v594, 4
  %v596 = vadd.f32 %v594, %v595
  %v597 = vrot.slane %v596, 2
  %v598 = vadd.f32 %v596, %v597
  %v599 = vrot.slane %v598, 1
  %v600 = vadd.f32 %v598, %v599
  %v601 = vrcp.pop %v600
  %v602 = vmul.f32 %v593, %v601
  %v603 = vsel %vm540, %v559, %v583
  %v604 = vld [vmem:[%s3] sm:$0xff]
  %v605 = vld [vmem:[%s3 + $0x8] sm:$0xff]
  %v606 = vld [vmem:[%s3 + $0x10] sm:$0xff]
  %v607 = vld [vmem:[%s3 + $0x18] sm:$0xff]
  %v608 = vld [vmem:[%s3 + $0x20] sm:$0xff]
  %v609 = vld [vmem:[%s3 + $0x28] sm:$0xff]
  %v610 = vld [vmem:[%s3 + $0x30] sm:$0xff]
  %v611 = vld [vmem:[%s3 + $0x38] sm:$0xff]
  %v612 = vld [vmem:[%s3 + $0x40] sm:$0xff]
  %v613 = vld [vmem:[%s3 + $0x48] sm:$0xff]
  %v614 = vld [vmem:[%s3 + $0x50] sm:$0xff]
  %v615 = vld [vmem:[%s3 + $0x58] sm:$0xff]
  %v616 = vld [vmem:[%s3 + $0x60] sm:$0xff]
  %v617 = vld [vmem:[%s3 + $0x68] sm:$0xff]
  %v618 = vld [vmem:[%s3 + $0x70] sm:$0xff]
  %v619 = vld [vmem:[%s3 + $0x78] sm:$0xff]
  %v620 = vld [vmem:[%s3 + $0x80] sm:$0xff]
  %v621 = vld [vmem:[%s3 + $0x88] sm:$0xff]
  %v622 = vld [vmem:[%s3 + $0x90] sm:$0xff]
  %v623 = vld [vmem:[%s3 + $0x98] sm:$0xff]
  %v624 = vld [vmem:[%s3 + $0xa0] sm:$0xff]
  %v625 = vld [vmem:[%s3 + $0xa8] sm:$0xff]
  %v626 = vld [vmem:[%s3 + $0xb0] sm:$0xff]
  %v627 = vld [vmem:[%s3 + $0xb8] sm:$0xff]
  %v628 = vld [vmem:[%s3 + $0xc0] sm:$0xff]
  %v629 = vld [vmem:[%s3 + $0xc8] sm:$0xff]
  %v630 = vld [vmem:[%s3 + $0xd0] sm:$0xff]
  %v631 = vld [vmem:[%s3 + $0xd8] sm:$0xff]
  %v632 = vld [vmem:[%s3 + $0xe0] sm:$0xff]
  %v633 = vld [vmem:[%s3 + $0xe8] sm:$0xff]
  %v634 = vld [vmem:[%s3 + $0xf0] sm:$0xff]
  %v635 = vld [vmem:[%s3 + $0xf8] sm:$0xff]
  %v636 = vld [vmem:[%s3 + $0x100] sm:$0xff]
  %v637 = vld [vmem:[%s3 + $0x108] sm:$0xff]
  %v638 = vld [vmem:[%s3 + $0x110] sm:$0xff]
  %v639 = vld [vmem:[%s3 + $0x118] sm:$0xff]
  %v640 = vld [vmem:[%s3 + $0x120] sm:$0xff]
  %v641 = vld [vmem:[%s3 + $0x128] sm:$0xff]
  %v642 = vld [vmem:[%s3 + $0x130] sm:$0xff]
  %v643 = vld [vmem:[%s3 + $0x138] sm:$0xff]
  %v644 = vld [vmem:[%s3 + $0x140] sm:$0xff]
  %v645 = vld [vmem:[%s3 + $0x148] sm:$0xff]
  %v646 = vld [vmem:[%s3 + $0x150] sm:$0xff]
  %v647 = vld [vmem:[%s3 + $0x158] sm:$0xff]
  %v648 = vld [vmem:[%s3 + $0x160] sm:$0xff]
  %v649 = vld [vmem:[%s3 + $0x168] sm:$0xff]
  %v650 = vld [vmem:[%s3 + $0x170] sm:$0xff]
  %v651 = vld [vmem:[%s3 + $0x178] sm:$0xff]
  %v652 = vld [vmem:[%s3 + $0x180] sm:$0xff]
  %v653 = vld [vmem:[%s3 + $0x188] sm:$0xff]
  %v654 = vld [vmem:[%s3 + $0x190] sm:$0xff]
  %v655 = vld [vmem:[%s3 + $0x198] sm:$0xff]
  %v656 = vld [vmem:[%s3 + $0x1a0] sm:$0xff]
  %v657 = vld [vmem:[%s3 + $0x1a8] sm:$0xff]
  %v658 = vld [vmem:[%s3 + $0x1b0] sm:$0xff]
  %v659 = vld [vmem:[%s3 + $0x1b8] sm:$0xff]
  %v660 = vld [vmem:[%s3 + $0x1c0] sm:$0xff]
  %v661 = vld [vmem:[%s3 + $0x1c8] sm:$0xff]
  %v662 = vld [vmem:[%s3 + $0x1d0] sm:$0xff]
  %v663 = vld [vmem:[%s3 + $0x1d8] sm:$0xff]
  %v664 = vld [vmem:[%s3 + $0x1e0] sm:$0xff]
  %v665 = vld [vmem:[%s3 + $0x1e8] sm:$0xff]
  %v666 = vld [vmem:[%s3 + $0x1f0] sm:$0xff]
  %v667 = vld [vmem:[%s3 + $0x1f8] sm:$0xff]
  %v668 = vld [vmem:[%s3 + $0x200] sm:$0xff]
  %v669 = vld [vmem:[%s3 + $0x208] sm:$0xff]
  %v670 = vld [vmem:[%s3 + $0x210] sm:$0xff]
  %v671 = vld [vmem:[%s3 + $0x218] sm:$0xff]
  %v672 = vld [vmem:[%s3 + $0x220] sm:$0xff]
  %v673 = vld [vmem:[%s3 + $0x228] sm:$0xff]
  %v674 = vld [vmem:[%s3 + $0x230] sm:$0xff]
  %v675 = vld [vmem:[%s3 + $0x238] sm:$0xff]
  %v676 = vld [vmem:[%s3 + $0x240] sm:$0xff]
  %v677 = vld [vmem:[%s3 + $0x248] sm:$0xff]
  %v678 = vld [vmem:[%s3 + $0x250] sm:$0xff]
  %v679 = vld [vmem:[%s3 + $0x258] sm:$0xff]
  %v680 = vld [vmem:[%s3 + $0x260] sm:$0xff]
  %v681 = vld [vmem:[%s3 + $0x268] sm:$0xff]
  %v682 = vld [vmem:[%s3 + $0x270] sm:$0xff]
  %v683 = vld [vmem:[%s3 + $0x278] sm:$0xff]
  %v684 = vld [vmem:[%s3 + $0x280] sm:$0xff]
  %v685 = vld [vmem:[%s3 + $0x288] sm:$0xff]
  %v686 = vld [vmem:[%s3 + $0x290] sm:$0xff]
  %v687 = vld [vmem:[%s3 + $0x298] sm:$0xff]
  %v688 = vld [vmem:[%s3 + $0x2a0] sm:$0xff]
  %v689 = vld [vmem:[%s3 + $0x2a8] sm:$0xff]
  %v690 = vld [vmem:[%s3 + $0x2b0] sm:$0xff]
  %v691 = vld [vmem:[%s3 + $0x2b8] sm:$0xff]
  %v692 = vld [vmem:[%s3 + $0x2c0] sm:$0xff]
  %v693 = vld [vmem:[%s3 + $0x2c8] sm:$0xff]
  %v694 = vld [vmem:[%s3 + $0x2d0] sm:$0xff]
  %v695 = vld [vmem:[%s3 + $0x2d8] sm:$0xff]
  %v696 = vld [vmem:[%s3 + $0x2e0] sm:$0xff]
  %v697 = vld [vmem:[%s3 + $0x2e8] sm:$0xff]
  %v698 = vld [vmem:[%s3 + $0x2f0] sm:$0xff]
  %v699 = vld [vmem:[%s3 + $0x2f8] sm:$0xff]
  %v700 = vld [vmem:[%s3 + $0x300] sm:$0xff]
  %v701 = vld [vmem:[%s3 + $0x308] sm:$0xff]
  %v702 = vld [vmem:[%s3 + $0x310] sm:$0xff]
  %v703 = vld [vmem:[%s3 + $0x318] sm:$0xff]
  %v704 = vld [vmem:[%s3 + $0x320] sm:$0xff]
  %v705 = vld [vmem:[%s3 + $0x328] sm:$0xff]
  %v706 = vld [vmem:[%s3 + $0x330] sm:$0xff]
  %v707 = vld [vmem:[%s3 + $0x338] sm:$0xff]
  %v708 = vld [vmem:[%s3 + $0x340] sm:$0xff]
  %v709 = vld [vmem:[%s3 + $0x348] sm:$0xff]
  %v710 = vld [vmem:[%s3 + $0x350] sm:$0xff]
  %v711 = vld [vmem:[%s3 + $0x358] sm:$0xff]
  %v712 = vld [vmem:[%s3 + $0x360] sm:$0xff]
  %v713 = vld [vmem:[%s3 + $0x368] sm:$0xff]
  %v714 = vld [vmem:[%s3 + $0x370] sm:$0xff]
  %v715 = vld [vmem:[%s3 + $0x378] sm:$0xff]
  %v716 = vld [vmem:[%s3 + $0x380] sm:$0xff]
  %v717 = vld [vmem:[%s3 + $0x388] sm:$0xff]
  %v718 = vld [vmem:[%s3 + $0x390] sm:$0xff]
  %v719 = vld [vmem:[%s3 + $0x398] sm:$0xff]
  %v720 = vld [vmem:[%s3 + $0x3a0] sm:$0xff]
  %v721 = vld [vmem:[%s3 + $0x3a8] sm:$0xff]
  %v722 = vld [vmem:[%s3 + $0x3b0] sm:$0xff]
  %v723 = vld [vmem:[%s3 + $0x3b8] sm:$0xff]
  %725 = vset.pattern.permute.xlu0 0
  %726 = vperm.xlu0 %725, %v86
  %v727 = vpop.permute.xlu0 %726
  %729 = vset.pattern.permute.xlu0 0
  %730 = vperm.xlu0 %729, %v87
  %v731 = vpop.permute.xlu0 %730
  %733 = vset.pattern.permute.xlu0 0
  %734 = vperm.xlu0 %733, %v88
  %v735 = vpop.permute.xlu0 %734
  %737 = vset.pattern.permute.xlu0 0
  %738 = vperm.xlu0 %737, %v89
  %v739 = vpop.permute.xlu0 %738
  %741 = vset.pattern.permute.xlu0 0
  %742 = vperm.xlu0 %741, %v90
  %v743 = vpop.permute.xlu0 %742
  %745 = vset.pattern.permute.xlu0 0
  %746 = vperm.xlu0 %745, %v91
  %v747 = vpop.permute.xlu0 %746
  %749 = vset.pattern.permute.xlu0 0
  %750 = vperm.xlu0 %749, %v92
  %v751 = vpop.permute.xlu0 %750
  %753 = vset.pattern.permute.xlu0 0
  %754 = vperm.xlu0 %753, %v93
  %v755 = vpop.permute.xlu0 %754
  %757 = vset.pattern.permute.xlu0 0
  %758 = vperm.xlu0 %757, %v94
  %v759 = vpop.permute.xlu0 %758
  %761 = vset.pattern.permute.xlu0 0
  %762 = vperm.xlu0 %761, %v95
  %v763 = vpop.permute.xlu0 %762
  %765 = vset.pattern.permute.xlu0 0
  %766 = vperm.xlu0 %765, %v96
  %v767 = vpop.permute.xlu0 %766
  %769 = vset.pattern.permute.xlu0 0
  %770 = vperm.xlu0 %769, %v97
  %v771 = vpop.permute.xlu0 %770
  %773 = vset.pattern.permute.xlu0 0
  %774 = vperm.xlu0 %773, %v98
  %v775 = vpop.permute.xlu0 %774
  %777 = vset.pattern.permute.xlu0 0
  %778 = vperm.xlu0 %777, %v99
  %v779 = vpop.permute.xlu0 %778
  %781 = vset.pattern.permute.xlu0 0
  %782 = vperm.xlu0 %781, %v100
  %v783 = vpop.permute.xlu0 %782
  %785 = vset.pattern.permute.xlu0 0
  %786 = vperm.xlu0 %785, %v101
  %v787 = vpop.permute.xlu0 %786
  %789 = vset.pattern.permute.xlu0 0
  %790 = vperm.xlu0 %789, %v102
  %v791 = vpop.permute.xlu0 %790
  %793 = vset.pattern.permute.xlu0 0
  %794 = vperm.xlu0 %793, %v103
  %v795 = vpop.permute.xlu0 %794
  %797 = vset.pattern.permute.xlu0 0
  %798 = vperm.xlu0 %797, %v104
  %v799 = vpop.permute.xlu0 %798
  %801 = vset.pattern.permute.xlu0 0
  %802 = vperm.xlu0 %801, %v105
  %v803 = vpop.permute.xlu0 %802
  %805 = vset.pattern.permute.xlu0 0
  %806 = vperm.xlu0 %805, %v106
  %v807 = vpop.permute.xlu0 %806
  %809 = vset.pattern.permute.xlu0 0
  %810 = vperm.xlu0 %809, %v107
  %v811 = vpop.permute.xlu0 %810
  %813 = vset.pattern.permute.xlu0 0
  %814 = vperm.xlu0 %813, %v108
  %v815 = vpop.permute.xlu0 %814
  %817 = vset.pattern.permute.xlu0 0
  %818 = vperm.xlu0 %817, %v109
  %v819 = vpop.permute.xlu0 %818
  %821 = vset.pattern.permute.xlu0 0
  %822 = vperm.xlu0 %821, %v110
  %v823 = vpop.permute.xlu0 %822
  %825 = vset.pattern.permute.xlu0 0
  %826 = vperm.xlu0 %825, %v111
  %v827 = vpop.permute.xlu0 %826
  %829 = vset.pattern.permute.xlu0 0
  %830 = vperm.xlu0 %829, %v112
  %v831 = vpop.permute.xlu0 %830
  %833 = vset.pattern.permute.xlu0 0
  %834 = vperm.xlu0 %833, %v113
  %v835 = vpop.permute.xlu0 %834
  %837 = vset.pattern.permute.xlu0 0
  %838 = vperm.xlu0 %837, %v114
  %v839 = vpop.permute.xlu0 %838
  %841 = vset.pattern.permute.xlu0 0
  %842 = vperm.xlu0 %841, %v115
  %v843 = vpop.permute.xlu0 %842
  %845 = vset.pattern.permute.xlu0 0
  %846 = vperm.xlu0 %845, %v116
  %v847 = vpop.permute.xlu0 %846
  %849 = vset.pattern.permute.xlu0 0
  %850 = vperm.xlu0 %849, %v117
  %v851 = vpop.permute.xlu0 %850
  %853 = vset.pattern.permute.xlu0 0
  %854 = vperm.xlu0 %853, %v118
  %v855 = vpop.permute.xlu0 %854
  %857 = vset.pattern.permute.xlu0 0
  %858 = vperm.xlu0 %857, %v119
  %v859 = vpop.permute.xlu0 %858
  %861 = vset.pattern.permute.xlu0 0
  %862 = vperm.xlu0 %861, %v120
  %v863 = vpop.permute.xlu0 %862
  %865 = vset.pattern.permute.xlu0 0
  %866 = vperm.xlu0 %865, %v121
  %v867 = vpop.permute.xlu0 %866
  %869 = vset.pattern.permute.xlu0 0
  %870 = vperm.xlu0 %869, %v122
  %v871 = vpop.permute.xlu0 %870
  %873 = vset.pattern.permute.xlu0 0
  %874 = vperm.xlu0 %873, %v123
  %v875 = vpop.permute.xlu0 %874
  %877 = vset.pattern.permute.xlu0 0
  %878 = vperm.xlu0 %877, %v124
  %v879 = vpop.permute.xlu0 %878
  %881 = vset.pattern.permute.xlu0 0
  %882 = vperm.xlu0 %881, %v125
  %v883 = vpop.permute.xlu0 %882
  %885 = vset.pattern.permute.xlu0 0
  %886 = vperm.xlu0 %885, %v126
  %v887 = vpop.permute.xlu0 %886
  %889 = vset.pattern.permute.xlu0 0
  %890 = vperm.xlu0 %889, %v127
  %v891 = vpop.permute.xlu0 %890
  %893 = vset.pattern.permute.xlu0 0
  %894 = vperm.xlu0 %893, %v128
  %v895 = vpop.permute.xlu0 %894
  %897 = vset.pattern.permute.xlu0 0
  %898 = vperm.xlu0 %897, %v129
  %v899 = vpop.permute.xlu0 %898
  %901 = vset.pattern.permute.xlu0 0
  %902 = vperm.xlu0 %901, %v130
  %v903 = vpop.permute.xlu0 %902
  %905 = vset.pattern.permute.xlu0 0
  %906 = vperm.xlu0 %905, %v131
  %v907 = vpop.permute.xlu0 %906
  %909 = vset.pattern.permute.xlu0 0
  %910 = vperm.xlu0 %909, %v132
  %v911 = vpop.permute.xlu0 %910
  %913 = vset.pattern.permute.xlu0 0
  %914 = vperm.xlu0 %913, %v133
  %v915 = vpop.permute.xlu0 %914
  %917 = vset.pattern.permute.xlu0 0
  %918 = vperm.xlu0 %917, %v134
  %v919 = vpop.permute.xlu0 %918
  %921 = vset.pattern.permute.xlu0 0
  %922 = vperm.xlu0 %921, %v135
  %v923 = vpop.permute.xlu0 %922
  %925 = vset.pattern.permute.xlu0 0
  %926 = vperm.xlu0 %925, %v136
  %v927 = vpop.permute.xlu0 %926
  %929 = vset.pattern.permute.xlu0 0
  %930 = vperm.xlu0 %929, %v137
  %v931 = vpop.permute.xlu0 %930
  %933 = vset.pattern.permute.xlu0 0
  %934 = vperm.xlu0 %933, %v138
  %v935 = vpop.permute.xlu0 %934
  %937 = vset.pattern.permute.xlu0 0
  %938 = vperm.xlu0 %937, %v139
  %v939 = vpop.permute.xlu0 %938
  %941 = vset.pattern.permute.xlu0 0
  %942 = vperm.xlu0 %941, %v140
  %v943 = vpop.permute.xlu0 %942
  %945 = vset.pattern.permute.xlu0 0
  %946 = vperm.xlu0 %945, %v141
  %v947 = vpop.permute.xlu0 %946
  %949 = vset.pattern.permute.xlu0 0
  %950 = vperm.xlu0 %949, %v142
  %v951 = vpop.permute.xlu0 %950
  %953 = vset.pattern.permute.xlu0 0
  %954 = vperm.xlu0 %953, %v143
  %v955 = vpop.permute.xlu0 %954
  %957 = vset.pattern.permute.xlu0 0
  %958 = vperm.xlu0 %957, %v144
  %v959 = vpop.permute.xlu0 %958
  %961 = vset.pattern.permute.xlu0 0
  %962 = vperm.xlu0 %961, %v145
  %v963 = vpop.permute.xlu0 %962
  %v964 = vrot.slane %v276, 3
  %v965 = vrot.slane %v727, 3
  %v966 = vsel %vm540, %v964, %v965
  %v967 = vrot.slane %v731, 3
  %v968 = vsel %vm540, %v965, %v967
  %v969 = vrot.slane %v735, 3
  %v970 = vsel %vm540, %v967, %v969
  %v971 = vrot.slane %v739, 3
  %v972 = vsel %vm540, %v969, %v971
  %v973 = vrot.slane %v743, 3
  %v974 = vsel %vm540, %v971, %v973
  %v975 = vrot.slane %v747, 3
  %v976 = vsel %vm540, %v973, %v975
  %v977 = vrot.slane %v751, 3
  %v978 = vsel %vm540, %v975, %v977
  %v979 = vrot.slane %v755, 3
  %v980 = vsel %vm540, %v977, %v979
  %v981 = vrot.slane %v759, 3
  %v982 = vsel %vm540, %v979, %v981
  %v983 = vrot.slane %v763, 3
  %v984 = vsel %vm540, %v981, %v983
  %v985 = vrot.slane %v767, 3
  %v986 = vsel %vm540, %v983, %v985
  %v987 = vrot.slane %v771, 3
  %v988 = vsel %vm540, %v985, %v987
  %v989 = vrot.slane %v775, 3
  %v990 = vsel %vm540, %v987, %v989
  %v991 = vrot.slane %v779, 3
  %v992 = vsel %vm540, %v989, %v991
  %v993 = vrot.slane %v783, 3
  %v994 = vsel %vm540, %v991, %v993
  %v995 = vrot.slane %v787, 3
  %v996 = vsel %vm540, %v993, %v995
  %v997 = vrot.slane %v791, 3
  %v998 = vsel %vm540, %v995, %v997
  %v999 = vrot.slane %v795, 3
  %v1000 = vsel %vm540, %v997, %v999
  %v1001 = vrot.slane %v799, 3
  %v1002 = vsel %vm540, %v999, %v1001
  %v1003 = vrot.slane %v803, 3
  %v1004 = vsel %vm540, %v1001, %v1003
  %v1005 = vrot.slane %v807, 3
  %v1006 = vsel %vm540, %v1003, %v1005
  %v1007 = vrot.slane %v811, 3
  %v1008 = vsel %vm540, %v1005, %v1007
  %v1009 = vrot.slane %v815, 3
  %v1010 = vsel %vm540, %v1007, %v1009
  %v1011 = vrot.slane %v819, 3
  %v1012 = vsel %vm540, %v1009, %v1011
  %v1013 = vrot.slane %v823, 3
  %v1014 = vsel %vm540, %v1011, %v1013
  %v1015 = vrot.slane %v827, 3
  %v1016 = vsel %vm540, %v1013, %v1015
  %v1017 = vrot.slane %v831, 3
  %v1018 = vsel %vm540, %v1015, %v1017
  %v1019 = vrot.slane %v835, 3
  %v1020 = vsel %vm540, %v1017, %v1019
  %v1021 = vrot.slane %v839, 3
  %v1022 = vsel %vm540, %v1019, %v1021
  %v1023 = vrot.slane %v843, 3
  %v1024 = vsel %vm540, %v1021, %v1023
  %v1025 = vrot.slane %v847, 3
  %v1026 = vsel %vm540, %v1023, %v1025
  %v1027 = vrot.slane %v851, 3
  %v1028 = vsel %vm540, %v1025, %v1027
  %v1029 = vrot.slane %v855, 3
  %v1030 = vsel %vm540, %v1027, %v1029
  %v1031 = vrot.slane %v859, 3
  %v1032 = vsel %vm540, %v1029, %v1031
  %v1033 = vrot.slane %v863, 3
  %v1034 = vsel %vm540, %v1031, %v1033
  %v1035 = vrot.slane %v867, 3
  %v1036 = vsel %vm540, %v1033, %v1035
  %v1037 = vrot.slane %v871, 3
  %v1038 = vsel %vm540, %v1035, %v1037
  %v1039 = vrot.slane %v875, 3
  %v1040 = vsel %vm540, %v1037, %v1039
  %v1041 = vrot.slane %v879, 3
  %v1042 = vsel %vm540, %v1039, %v1041
  %v1043 = vrot.slane %v883, 3
  %v1044 = vsel %vm540, %v1041, %v1043
  %v1045 = vrot.slane %v887, 3
  %v1046 = vsel %vm540, %v1043, %v1045
  %v1047 = vrot.slane %v891, 3
  %v1048 = vsel %vm540, %v1045, %v1047
  %v1049 = vrot.slane %v895, 3
  %v1050 = vsel %vm540, %v1047, %v1049
  %v1051 = vrot.slane %v899, 3
  %v1052 = vsel %vm540, %v1049, %v1051
  %v1053 = vrot.slane %v903, 3
  %v1054 = vsel %vm540, %v1051, %v1053
  %v1055 = vrot.slane %v907, 3
  %v1056 = vsel %vm540, %v1053, %v1055
  %v1057 = vrot.slane %v911, 3
  %v1058 = vsel %vm540, %v1055, %v1057
  %v1059 = vrot.slane %v915, 3
  %v1060 = vsel %vm540, %v1057, %v1059
  %v1061 = vrot.slane %v919, 3
  %v1062 = vsel %vm540, %v1059, %v1061
  %v1063 = vrot.slane %v923, 3
  %v1064 = vsel %vm540, %v1061, %v1063
  %v1065 = vrot.slane %v927, 3
  %v1066 = vsel %vm540, %v1063, %v1065
  %v1067 = vrot.slane %v931, 3
  %v1068 = vsel %vm540, %v1065, %v1067
  %v1069 = vrot.slane %v935, 3
  %v1070 = vsel %vm540, %v1067, %v1069
  %v1071 = vrot.slane %v939, 3
  %v1072 = vsel %vm540, %v1069, %v1071
  %v1073 = vrot.slane %v943, 3
  %v1074 = vsel %vm540, %v1071, %v1073
  %v1075 = vrot.slane %v947, 3
  %v1076 = vsel %vm540, %v1073, %v1075
  %v1077 = vrot.slane %v951, 3
  %v1078 = vsel %vm540, %v1075, %v1077
  %v1079 = vrot.slane %v955, 3
  %v1080 = vsel %vm540, %v1077, %v1079
  %v1081 = vrot.slane %v959, 3
  %v1082 = vsel %vm540, %v1079, %v1081
  %v1083 = vrot.slane %v963, 3
  %v1084 = vsel %vm540, %v1081, %v1083
  %vm1145 = vcmask 261120
  %v1147 = vsel %vm1145, %v605, 0
  %v1150 = vsel %vm1145, %v607, 0
  %v1153 = vsel %vm1145, %v609, 0
  %v1156 = vsel %vm1145, %v611, 0
  %v1159 = vsel %vm1145, %v613, 0
  %v1162 = vsel %vm1145, %v615, 0
  %v1165 = vsel %vm1145, %v617, 0
  %v1168 = vsel %vm1145, %v619, 0
  %v1171 = vsel %vm1145, %v621, 0
  %v1174 = vsel %vm1145, %v623, 0
  %v1177 = vsel %vm1145, %v625, 0
  %v1180 = vsel %vm1145, %v627, 0
  %v1183 = vsel %vm1145, %v629, 0
  %v1186 = vsel %vm1145, %v631, 0
  %v1189 = vsel %vm1145, %v633, 0
  %v1192 = vsel %vm1145, %v635, 0
  %v1195 = vsel %vm1145, %v637, 0
  %v1198 = vsel %vm1145, %v639, 0
  %v1201 = vsel %vm1145, %v641, 0
  %v1204 = vsel %vm1145, %v643, 0
  %v1207 = vsel %vm1145, %v645, 0
  %v1210 = vsel %vm1145, %v647, 0
  %v1213 = vsel %vm1145, %v649, 0
  %v1216 = vsel %vm1145, %v651, 0
  %v1219 = vsel %vm1145, %v653, 0
  %v1222 = vsel %vm1145, %v655, 0
  %v1225 = vsel %vm1145, %v657, 0
  %v1228 = vsel %vm1145, %v659, 0
  %v1231 = vsel %vm1145, %v661, 0
  %v1234 = vsel %vm1145, %v663, 0
  %v1237 = vsel %vm1145, %v665, 0
  %v1240 = vsel %vm1145, %v667, 0
  %v1243 = vsel %vm1145, %v669, 0
  %v1246 = vsel %vm1145, %v671, 0
  %v1249 = vsel %vm1145, %v673, 0
  %v1252 = vsel %vm1145, %v675, 0
  %v1255 = vsel %vm1145, %v677, 0
  %v1258 = vsel %vm1145, %v679, 0
  %v1261 = vsel %vm1145, %v681, 0
  %v1264 = vsel %vm1145, %v683, 0
  %v1267 = vsel %vm1145, %v685, 0
  %v1270 = vsel %vm1145, %v687, 0
  %v1273 = vsel %vm1145, %v689, 0
  %v1276 = vsel %vm1145, %v691, 0
  %v1279 = vsel %vm1145, %v693, 0
  %v1282 = vsel %vm1145, %v695, 0
  %v1285 = vsel %vm1145, %v697, 0
  %v1288 = vsel %vm1145, %v699, 0
  %v1291 = vsel %vm1145, %v701, 0
  %v1294 = vsel %vm1145, %v703, 0
  %v1297 = vsel %vm1145, %v705, 0
  %v1300 = vsel %vm1145, %v707, 0
  %v1303 = vsel %vm1145, %v709, 0
  %v1306 = vsel %vm1145, %v711, 0
  %v1309 = vsel %vm1145, %v713, 0
  %v1312 = vsel %vm1145, %v715, 0
  %v1315 = vsel %vm1145, %v717, 0
  %v1318 = vsel %vm1145, %v719, 0
  %v1321 = vsel %vm1145, %v721, 0
  %v1324 = vsel %vm1145, %v723, 0
  %1326 = vmatprep.subr.mxu0 0.0
  %1327 = vmatpush1.msra.mxu0 %v535
  %1328 = vmatprep.subr.mxu0 0.0
  %1329 = vmatpush1.msra.mxu0 %v534
  %1330 = vmatprep.subr.mxu0 0.0
  %1331 = vmatpush1.msra.mxu0 %v533
  %1332 = vmatprep.subr.mxu0 0.0
  %1333 = vmatpush1.msra.mxu0 %v532
  %1334 = vmatprep.subr.mxu0 0.0
  %1335 = vmatpush1.msra.mxu0 %v531
  %1336 = vmatprep.subr.mxu0 0.0
  %1337 = vmatpush1.msra.mxu0 %v530
  %1338 = vmatprep.subr.mxu0 0.0
  %1339 = vmatpush1.msra.mxu0 %v529
  %1340 = vmatprep.subr.mxu0 0.0
  %1341 = vmatpush1.msra.mxu0 %v528
  %1342 = vmatprep.subr.mxu0 0.0
  %1343 = vmatpush1.msra.mxu0 %v527
  %1344 = vmatprep.subr.mxu0 0.0
  %1345 = vmatpush1.msra.mxu0 %v526
  %1346 = vmatprep.subr.mxu0 0.0
  %1347 = vmatpush1.msra.mxu0 %v525
  %1348 = vmatprep.subr.mxu0 0.0
  %1349 = vmatpush1.msra.mxu0 %v524
  %1350 = vmatprep.subr.mxu0 0.0
  %1351 = vmatpush1.msra.mxu0 %v523
  %1352 = vmatprep.subr.mxu0 0.0
  %1353 = vmatpush1.msra.mxu0 %v522
  %1354 = vmatprep.subr.mxu0 0.0
  %1355 = vmatpush1.msra.mxu0 %v521
  %1356 = vmatprep.subr.mxu0 0.0
  %1357 = vmatpush1.msra.mxu0 %v520
  %1358 = vmatprep.subr.mxu0 0.0
  %1359 = vmatpush2.msra.mxu0 0.0
  %1360 = vmatprep.subr.mxu0 0.0
  %1361 = vmatpush2.msra.mxu0 0.0
  %1362 = vmatprep.subr.mxu0 0.0
  %1363 = vmatpush2.msra.mxu0 0.0
  %1364 = vmatprep.subr.mxu0 0.0
  %1365 = vmatpush2.msra.mxu0 0.0
  %1366 = vmatprep.subr.mxu0 0.0
  %1367 = vmatpush2.msra.mxu0 0.0
  %1368 = vmatprep.subr.mxu0 0.0
  %1369 = vmatpush2.msra.mxu0 0.0
  %1370 = vmatprep.subr.mxu0 0.0
  %1371 = vmatpush2.msra.mxu0 0.0
  %1372 = vmatprep.subr.mxu0 0.0
  %1373 = vmatpush2.msra.mxu0 0.0
  %1374 = vmatprep.subr.mxu0 0.0
  %1375 = vmatpush2.msra.mxu0 0.0
  %1376 = vmatprep.subr.mxu0 0.0
  %1377 = vmatpush2.msra.mxu0 0.0
  %1378 = vmatprep.subr.mxu0 0.0
  %1379 = vmatpush2.msra.mxu0 0.0
  %1380 = vmatprep.subr.mxu0 0.0
  %1381 = vmatpush2.msra.mxu0 0.0
  %1382 = vmatprep.subr.mxu0 0.0
  %1383 = vmatpush2.msra.mxu0 %v539
  %1384 = vmatprep.subr.mxu0 0.0
  %1385 = vmatpush2.msra.mxu0 %v538
  %1386 = vmatprep.subr.mxu0 0.0
  %1387 = vmatpush2.msra.mxu0 %v537
  %1388 = vmatprep.subr.mxu0 0.0
  %1389 = vmatpush2.msra.mxu0 %v536
  %1390 = vmatprep.mubr.f32.mxu0 %v1147
  %1391 = vmatmul.mubr.f32.gmra.mxu0 %v604
  %v1392 = vpop.f32.mrf.mxu0
  %v1393 = vadd.f32 %v966, %v1392
  %v1394 = vpop.f32.mrf.mxu0
  %1395 = vmatprep.mubr.f32.mxu0 %v1150
  %1396 = vmatmul.mubr.f32.gmra.mxu0 %v606
  %v1397 = vpop.f32.mrf.mxu0
  %v1398 = vadd.f32 %v968, %v1397
  %v1399 = vpop.f32.mrf.mxu0
  %1400 = vmatprep.mubr.f32.mxu0 %v1153
  %1401 = vmatmul.mubr.f32.gmra.mxu0 %v608
  %v1402 = vpop.f32.mrf.mxu0
  %v1403 = vadd.f32 %v970, %v1402
  %v1404 = vpop.f32.mrf.mxu0
  %1405 = vmatprep.mubr.f32.mxu0 %v1156
  %1406 = vmatmul.mubr.f32.gmra.mxu0 %v610
  %v1407 = vpop.f32.mrf.mxu0
  %v1408 = vadd.f32 %v972, %v1407
  %v1409 = vpop.f32.mrf.mxu0
  %1410 = vmatprep.mubr.f32.mxu0 %v1159
  %1411 = vmatmul.mubr.f32.gmra.mxu0 %v612
  %v1412 = vpop.f32.mrf.mxu0
  %v1413 = vadd.f32 %v974, %v1412
  %v1414 = vpop.f32.mrf.mxu0
  %1415 = vmatprep.mubr.f32.mxu0 %v1162
  %1416 = vmatmul.mubr.f32.gmra.mxu0 %v614
  %v1417 = vpop.f32.mrf.mxu0
  %v1418 = vadd.f32 %v976, %v1417
  %v1419 = vpop.f32.mrf.mxu0
  %1420 = vmatprep.mubr.f32.mxu0 %v1165
  %1421 = vmatmul.mubr.f32.gmra.mxu0 %v616
  %v1422 = vpop.f32.mrf.mxu0
  %v1423 = vadd.f32 %v978, %v1422
  %v1424 = vpop.f32.mrf.mxu0
  %1425 = vmatprep.mubr.f32.mxu0 %v1168
  %1426 = vmatmul.mubr.f32.gmra.mxu0 %v618
  %v1427 = vpop.f32.mrf.mxu0
  %v1428 = vadd.f32 %v980, %v1427
  %v1429 = vpop.f32.mrf.mxu0
  %1430 = vmatprep.mubr.f32.mxu0 %v1171
  %1431 = vmatmul.mubr.f32.gmra.mxu0 %v620
  %v1432 = vpop.f32.mrf.mxu0
  %v1433 = vadd.f32 %v982, %v1432
  %v1434 = vpop.f32.mrf.mxu0
  %1435 = vmatprep.mubr.f32.mxu0 %v1174
  %1436 = vmatmul.mubr.f32.gmra.mxu0 %v622
  %v1437 = vpop.f32.mrf.mxu0
  %v1438 = vadd.f32 %v984, %v1437
  %v1439 = vpop.f32.mrf.mxu0
  %1440 = vmatprep.mubr.f32.mxu0 %v1177
  %1441 = vmatmul.mubr.f32.gmra.mxu0 %v624
  %v1442 = vpop.f32.mrf.mxu0
  %v1443 = vadd.f32 %v986, %v1442
  %v1444 = vpop.f32.mrf.mxu0
  %1445 = vmatprep.mubr.f32.mxu0 %v1180
  %1446 = vmatmul.mubr.f32.gmra.mxu0 %v626
  %v1447 = vpop.f32.mrf.mxu0
  %v1448 = vadd.f32 %v988, %v1447
  %v1449 = vpop.f32.mrf.mxu0
  %1450 = vmatprep.mubr.f32.mxu0 %v1183
  %1451 = vmatmul.mubr.f32.gmra.mxu0 %v628
  %v1452 = vpop.f32.mrf.mxu0
  %v1453 = vadd.f32 %v990, %v1452
  %v1454 = vpop.f32.mrf.mxu0
  %1455 = vmatprep.mubr.f32.mxu0 %v1186
  %1456 = vmatmul.mubr.f32.gmra.mxu0 %v630
  %v1457 = vpop.f32.mrf.mxu0
  %v1458 = vadd.f32 %v992, %v1457
  %v1459 = vpop.f32.mrf.mxu0
  %1460 = vmatprep.mubr.f32.mxu0 %v1189
  %1461 = vmatmul.mubr.f32.gmra.mxu0 %v632
  %v1462 = vpop.f32.mrf.mxu0
  %v1463 = vadd.f32 %v994, %v1462
  %v1464 = vpop.f32.mrf.mxu0
  %1465 = vmatprep.mubr.f32.mxu0 %v1192
  %1466 = vmatmul.mubr.f32.gmra.mxu0 %v634
  %v1467 = vpop.f32.mrf.mxu0
  %v1468 = vadd.f32 %v996, %v1467
  %v1469 = vpop.f32.mrf.mxu0
  %1470 = vmatprep.mubr.f32.mxu0 %v1195
  %1471 = vmatmul.mubr.f32.gmra.mxu0 %v636
  %v1472 = vpop.f32.mrf.mxu0
  %v1473 = vadd.f32 %v998, %v1472
  %v1474 = vpop.f32.mrf.mxu0
  %1475 = vmatprep.mubr.f32.mxu0 %v1198
  %1476 = vmatmul.mubr.f32.gmra.mxu0 %v638
  %v1477 = vpop.f32.mrf.mxu0
  %v1478 = vadd.f32 %v1000, %v1477
  %v1479 = vpop.f32.mrf.mxu0
  %1480 = vmatprep.mubr.f32.mxu0 %v1201
  %1481 = vmatmul.mubr.f32.gmra.mxu0 %v640
  %v1482 = vpop.f32.mrf.mxu0
  %v1483 = vadd.f32 %v1002, %v1482
  %v1484 = vpop.f32.mrf.mxu0
  %1485 = vmatprep.mubr.f32.mxu0 %v1204
  %1486 = vmatmul.mubr.f32.gmra.mxu0 %v642
  %v1487 = vpop.f32.mrf.mxu0
  %v1488 = vadd.f32 %v1004, %v1487
  %v1489 = vpop.f32.mrf.mxu0
  %1490 = vmatprep.mubr.f32.mxu0 %v1207
  %1491 = vmatmul.mubr.f32.gmra.mxu0 %v644
  %v1492 = vpop.f32.mrf.mxu0
  %v1493 = vadd.f32 %v1006, %v1492
  %v1494 = vpop.f32.mrf.mxu0
  %1495 = vmatprep.mubr.f32.mxu0 %v1210
  %1496 = vmatmul.mubr.f32.gmra.mxu0 %v646
  %v1497 = vpop.f32.mrf.mxu0
  %v1498 = vadd.f32 %v1008, %v1497
  %v1499 = vpop.f32.mrf.mxu0
  %1500 = vmatprep.mubr.f32.mxu0 %v1213
  %1501 = vmatmul.mubr.f32.gmra.mxu0 %v648
  %v1502 = vpop.f32.mrf.mxu0
  %v1503 = vadd.f32 %v1010, %v1502
  %v1504 = vpop.f32.mrf.mxu0
  %1505 = vmatprep.mubr.f32.mxu0 %v1216
  %1506 = vmatmul.mubr.f32.gmra.mxu0 %v650
  %v1507 = vpop.f32.mrf.mxu0
  %v1508 = vadd.f32 %v1012, %v1507
  %v1509 = vpop.f32.mrf.mxu0
  %1510 = vmatprep.mubr.f32.mxu0 %v1219
  %1511 = vmatmul.mubr.f32.gmra.mxu0 %v652
  %v1512 = vpop.f32.mrf.mxu0
  %v1513 = vadd.f32 %v1014, %v1512
  %v1514 = vpop.f32.mrf.mxu0
  %1515 = vmatprep.mubr.f32.mxu0 %v1222
  %1516 = vmatmul.mubr.f32.gmra.mxu0 %v654
  %v1517 = vpop.f32.mrf.mxu0
  %v1518 = vadd.f32 %v1016, %v1517
  %v1519 = vpop.f32.mrf.mxu0
  %1520 = vmatprep.mubr.f32.mxu0 %v1225
  %1521 = vmatmul.mubr.f32.gmra.mxu0 %v656
  %v1522 = vpop.f32.mrf.mxu0
  %v1523 = vadd.f32 %v1018, %v1522
  %v1524 = vpop.f32.mrf.mxu0
  %1525 = vmatprep.mubr.f32.mxu0 %v1228
  %1526 = vmatmul.mubr.f32.gmra.mxu0 %v658
  %v1527 = vpop.f32.mrf.mxu0
  %v1528 = vadd.f32 %v1020, %v1527
  %v1529 = vpop.f32.mrf.mxu0
  %1530 = vmatprep.mubr.f32.mxu0 %v1231
  %1531 = vmatmul.mubr.f32.gmra.mxu0 %v660
  %v1532 = vpop.f32.mrf.mxu0
  %v1533 = vadd.f32 %v1022, %v1532
  %v1534 = vpop.f32.mrf.mxu0
  %1535 = vmatprep.mubr.f32.mxu0 %v1234
  %1536 = vmatmul.mubr.f32.gmra.mxu0 %v662
  %v1537 = vpop.f32.mrf.mxu0
  %v1538 = vadd.f32 %v1024, %v1537
  %v1539 = vpop.f32.mrf.mxu0
  %1540 = vmatprep.mubr.f32.mxu0 %v1237
  %1541 = vmatmul.mubr.f32.gmra.mxu0 %v664
  %v1542 = vpop.f32.mrf.mxu0
  %v1543 = vadd.f32 %v1026, %v1542
  %v1544 = vpop.f32.mrf.mxu0
  %1545 = vmatprep.mubr.f32.mxu0 %v1240
  %1546 = vmatmul.mubr.f32.gmra.mxu0 %v666
  %v1547 = vpop.f32.mrf.mxu0
  %v1548 = vadd.f32 %v1028, %v1547
  %v1549 = vpop.f32.mrf.mxu0
  %1550 = vmatprep.mubr.f32.mxu0 %v1243
  %1551 = vmatmul.mubr.f32.gmra.mxu0 %v668
  %v1552 = vpop.f32.mrf.mxu0
  %v1553 = vadd.f32 %v1030, %v1552
  %v1554 = vpop.f32.mrf.mxu0
  %1555 = vmatprep.mubr.f32.mxu0 %v1246
  %1556 = vmatmul.mubr.f32.gmra.mxu0 %v670
  %v1557 = vpop.f32.mrf.mxu0
  %v1558 = vadd.f32 %v1032, %v1557
  %v1559 = vpop.f32.mrf.mxu0
  %1560 = vmatprep.mubr.f32.mxu0 %v1249
  %1561 = vmatmul.mubr.f32.gmra.mxu0 %v672
  %v1562 = vpop.f32.mrf.mxu0
  %v1563 = vadd.f32 %v1034, %v1562
  %v1564 = vpop.f32.mrf.mxu0
  %1565 = vmatprep.mubr.f32.mxu0 %v1252
  %1566 = vmatmul.mubr.f32.gmra.mxu0 %v674
  %v1567 = vpop.f32.mrf.mxu0
  %v1568 = vadd.f32 %v1036, %v1567
  %v1569 = vpop.f32.mrf.mxu0
  %1570 = vmatprep.mubr.f32.mxu0 %v1255
  %1571 = vmatmul.mubr.f32.gmra.mxu0 %v676
  %v1572 = vpop.f32.mrf.mxu0
  %v1573 = vadd.f32 %v1038, %v1572
  %v1574 = vpop.f32.mrf.mxu0
  %1575 = vmatprep.mubr.f32.mxu0 %v1258
  %1576 = vmatmul.mubr.f32.gmra.mxu0 %v678
  %v1577 = vpop.f32.mrf.mxu0
  %v1578 = vadd.f32 %v1040, %v1577
  %v1579 = vpop.f32.mrf.mxu0
  %1580 = vmatprep.mubr.f32.mxu0 %v1261
  %1581 = vmatmul.mubr.f32.gmra.mxu0 %v680
  %v1582 = vpop.f32.mrf.mxu0
  %v1583 = vadd.f32 %v1042, %v1582
  %v1584 = vpop.f32.mrf.mxu0
  %1585 = vmatprep.mubr.f32.mxu0 %v1264
  %1586 = vmatmul.mubr.f32.gmra.mxu0 %v682
  %v1587 = vpop.f32.mrf.mxu0
  %v1588 = vadd.f32 %v1044, %v1587
  %v1589 = vpop.f32.mrf.mxu0
  %1590 = vmatprep.mubr.f32.mxu0 %v1267
  %1591 = vmatmul.mubr.f32.gmra.mxu0 %v684
  %v1592 = vpop.f32.mrf.mxu0
  %v1593 = vadd.f32 %v1046, %v1592
  %v1594 = vpop.f32.mrf.mxu0
  %1595 = vmatprep.mubr.f32.mxu0 %v1270
  %1596 = vmatmul.mubr.f32.gmra.mxu0 %v686
  %v1597 = vpop.f32.mrf.mxu0
  %v1598 = vadd.f32 %v1048, %v1597
  %v1599 = vpop.f32.mrf.mxu0
  %1600 = vmatprep.mubr.f32.mxu0 %v1273
  %1601 = vmatmul.mubr.f32.gmra.mxu0 %v688
  %v1602 = vpop.f32.mrf.mxu0
  %v1603 = vadd.f32 %v1050, %v1602
  %v1604 = vpop.f32.mrf.mxu0
  %1605 = vmatprep.mubr.f32.mxu0 %v1276
  %1606 = vmatmul.mubr.f32.gmra.mxu0 %v690
  %v1607 = vpop.f32.mrf.mxu0
  %v1608 = vadd.f32 %v1052, %v1607
  %v1609 = vpop.f32.mrf.mxu0
  %1610 = vmatprep.mubr.f32.mxu0 %v1279
  %1611 = vmatmul.mubr.f32.gmra.mxu0 %v692
  %v1612 = vpop.f32.mrf.mxu0
  %v1613 = vadd.f32 %v1054, %v1612
  %v1614 = vpop.f32.mrf.mxu0
  %1615 = vmatprep.mubr.f32.mxu0 %v1282
  %1616 = vmatmul.mubr.f32.gmra.mxu0 %v694
  %v1617 = vpop.f32.mrf.mxu0
  %v1618 = vadd.f32 %v1056, %v1617
  %v1619 = vpop.f32.mrf.mxu0
  %1620 = vmatprep.mubr.f32.mxu0 %v1285
  %1621 = vmatmul.mubr.f32.gmra.mxu0 %v696
  %v1622 = vpop.f32.mrf.mxu0
  %v1623 = vadd.f32 %v1058, %v1622
  %v1624 = vpop.f32.mrf.mxu0
  %1625 = vmatprep.mubr.f32.mxu0 %v1288
  %1626 = vmatmul.mubr.f32.gmra.mxu0 %v698
  %v1627 = vpop.f32.mrf.mxu0
  %v1628 = vadd.f32 %v1060, %v1627
  %v1629 = vpop.f32.mrf.mxu0
  %1630 = vmatprep.mubr.f32.mxu0 %v1291
  %1631 = vmatmul.mubr.f32.gmra.mxu0 %v700
  %v1632 = vpop.f32.mrf.mxu0
  %v1633 = vadd.f32 %v1062, %v1632
  %v1634 = vpop.f32.mrf.mxu0
  %1635 = vmatprep.mubr.f32.mxu0 %v1294
  %1636 = vmatmul.mubr.f32.gmra.mxu0 %v702
  %v1637 = vpop.f32.mrf.mxu0
  %v1638 = vadd.f32 %v1064, %v1637
  %v1639 = vpop.f32.mrf.mxu0
  %1640 = vmatprep.mubr.f32.mxu0 %v1297
  %1641 = vmatmul.mubr.f32.gmra.mxu0 %v704
  %v1642 = vpop.f32.mrf.mxu0
  %v1643 = vadd.f32 %v1066, %v1642
  %v1644 = vpop.f32.mrf.mxu0
  %1645 = vmatprep.mubr.f32.mxu0 %v1300
  %1646 = vmatmul.mubr.f32.gmra.mxu0 %v706
  %v1647 = vpop.f32.mrf.mxu0
  %v1648 = vadd.f32 %v1068, %v1647
  %v1649 = vpop.f32.mrf.mxu0
  %1650 = vmatprep.mubr.f32.mxu0 %v1303
  %1651 = vmatmul.mubr.f32.gmra.mxu0 %v708
  %v1652 = vpop.f32.mrf.mxu0
  %v1653 = vadd.f32 %v1070, %v1652
  %v1654 = vpop.f32.mrf.mxu0
  %1655 = vmatprep.mubr.f32.mxu0 %v1306
  %1656 = vmatmul.mubr.f32.gmra.mxu0 %v710
  %v1657 = vpop.f32.mrf.mxu0
  %v1658 = vadd.f32 %v1072, %v1657
  %v1659 = vpop.f32.mrf.mxu0
  %1660 = vmatprep.mubr.f32.mxu0 %v1309
  %1661 = vmatmul.mubr.f32.gmra.mxu0 %v712
  %v1662 = vpop.f32.mrf.mxu0
  %v1663 = vadd.f32 %v1074, %v1662
  %v1664 = vpop.f32.mrf.mxu0
  %1665 = vmatprep.mubr.f32.mxu0 %v1312
  %1666 = vmatmul.mubr.f32.gmra.mxu0 %v714
  %v1667 = vpop.f32.mrf.mxu0
  %v1668 = vadd.f32 %v1076, %v1667
  %v1669 = vpop.f32.mrf.mxu0
  %1670 = vmatprep.mubr.f32.mxu0 %v1315
  %1671 = vmatmul.mubr.f32.gmra.mxu0 %v716
  %v1672 = vpop.f32.mrf.mxu0
  %v1673 = vadd.f32 %v1078, %v1672
  %v1674 = vpop.f32.mrf.mxu0
  %1675 = vmatprep.mubr.f32.mxu0 %v1318
  %1676 = vmatmul.mubr.f32.gmra.mxu0 %v718
  %v1677 = vpop.f32.mrf.mxu0
  %v1678 = vadd.f32 %v1080, %v1677
  %v1679 = vpop.f32.mrf.mxu0
  %1680 = vmatprep.mubr.f32.mxu0 %v1321
  %1681 = vmatmul.mubr.f32.gmra.mxu0 %v720
  %v1682 = vpop.f32.mrf.mxu0
  %v1683 = vadd.f32 %v1082, %v1682
  %v1684 = vpop.f32.mrf.mxu0
  %1685 = vmatprep.mubr.f32.mxu0 %v1324
  %1686 = vmatmul.mubr.f32.gmra.mxu0 %v722
  %v1687 = vpop.f32.mrf.mxu0
  %v1688 = vadd.f32 %v1084, %v1687
  %v1689 = vpop.f32.mrf.mxu0
  %1690 = vdwg.mxu0
  %v1691 = vld [vmem:[%s4] sm:$0xff]
  %v1692 = vld [vmem:[%s4 + $0x8] sm:$0xff]
  %v1693 = vld [vmem:[%s4 + $0x10] sm:$0xff]
  %v1694 = vld [vmem:[%s4 + $0x18] sm:$0xff]
  %v1695 = vld [vmem:[%s4 + $0x20] sm:$0xff]
  %v1696 = vld [vmem:[%s4 + $0x28] sm:$0xff]
  %v1697 = vld [vmem:[%s4 + $0x30] sm:$0xff]
  %v1698 = vld [vmem:[%s4 + $0x38] sm:$0xff]
  %v1699 = vld [vmem:[%s4 + $0x40] sm:$0xff]
  %v1700 = vld [vmem:[%s4 + $0x48] sm:$0xff]
  %v1701 = vld [vmem:[%s4 + $0x50] sm:$0xff]
  %v1702 = vld [vmem:[%s4 + $0x58] sm:$0xff]
  %v1703 = vld [vmem:[%s4 + $0x60] sm:$0xff]
  %v1704 = vld [vmem:[%s4 + $0x68] sm:$0xff]
  %v1705 = vld [vmem:[%s4 + $0x70] sm:$0xff]
  %v1706 = vld [vmem:[%s4 + $0x78] sm:$0xff]
  %v1707 = vld [vmem:[%s4 + $0x80] sm:$0xff]
  %v1708 = vld [vmem:[%s4 + $0x88] sm:$0xff]
  %v1709 = vld [vmem:[%s4 + $0x90] sm:$0xff]
  %v1710 = vld [vmem:[%s4 + $0x98] sm:$0xff]
  %v1711 = vld [vmem:[%s4 + $0xa0] sm:$0xff]
  %v1712 = vld [vmem:[%s4 + $0xa8] sm:$0xff]
  %v1713 = vld [vmem:[%s4 + $0xb0] sm:$0xff]
  %v1714 = vld [vmem:[%s4 + $0xb8] sm:$0xff]
  %v1715 = vld [vmem:[%s4 + $0xc0] sm:$0xff]
  %v1716 = vld [vmem:[%s4 + $0xc8] sm:$0xff]
  %v1717 = vld [vmem:[%s4 + $0xd0] sm:$0xff]
  %v1718 = vld [vmem:[%s4 + $0xd8] sm:$0xff]
  %v1719 = vld [vmem:[%s4 + $0xe0] sm:$0xff]
  %v1720 = vld [vmem:[%s4 + $0xe8] sm:$0xff]
  %v1721 = vld [vmem:[%s4 + $0xf0] sm:$0xff]
  %v1722 = vld [vmem:[%s4 + $0xf8] sm:$0xff]
  %v1723 = vld [vmem:[%s4 + $0x100] sm:$0xff]
  %v1724 = vld [vmem:[%s4 + $0x108] sm:$0xff]
  %v1725 = vld [vmem:[%s4 + $0x110] sm:$0xff]
  %v1726 = vld [vmem:[%s4 + $0x118] sm:$0xff]
  %v1727 = vld [vmem:[%s4 + $0x120] sm:$0xff]
  %v1728 = vld [vmem:[%s4 + $0x128] sm:$0xff]
  %v1729 = vld [vmem:[%s4 + $0x130] sm:$0xff]
  %v1730 = vld [vmem:[%s4 + $0x138] sm:$0xff]
  %v1731 = vld [vmem:[%s4 + $0x140] sm:$0xff]
  %v1732 = vld [vmem:[%s4 + $0x148] sm:$0xff]
  %v1733 = vld [vmem:[%s4 + $0x150] sm:$0xff]
  %v1734 = vld [vmem:[%s4 + $0x158] sm:$0xff]
  %v1735 = vld [vmem:[%s4 + $0x160] sm:$0xff]
  %v1736 = vld [vmem:[%s4 + $0x168] sm:$0xff]
  %v1737 = vld [vmem:[%s4 + $0x170] sm:$0xff]
  %v1738 = vld [vmem:[%s4 + $0x178] sm:$0xff]
  %v1739 = vld [vmem:[%s4 + $0x180] sm:$0xff]
  %v1740 = vld [vmem:[%s4 + $0x188] sm:$0xff]
  %v1741 = vld [vmem:[%s4 + $0x190] sm:$0xff]
  %v1742 = vld [vmem:[%s4 + $0x198] sm:$0xff]
  %v1743 = vld [vmem:[%s4 + $0x1a0] sm:$0xff]
  %v1744 = vld [vmem:[%s4 + $0x1a8] sm:$0xff]
  %v1745 = vld [vmem:[%s4 + $0x1b0] sm:$0xff]
  %v1746 = vld [vmem:[%s4 + $0x1b8] sm:$0xff]
  %v1747 = vld [vmem:[%s4 + $0x1c0] sm:$0xff]
  %v1748 = vld [vmem:[%s4 + $0x1c8] sm:$0xff]
  %v1749 = vld [vmem:[%s4 + $0x1d0] sm:$0xff]
  %v1750 = vld [vmem:[%s4 + $0x1d8] sm:$0xff]
  %vm1751 = vcmask 89088
  %v1753 = vsel %vm1751, %v1691, 0
  %v1756 = vsel %vm1751, %v1692, 0
  %v1759 = vsel %vm1751, %v1693, 0
  %v1762 = vsel %vm1751, %v1694, 0
  %v1765 = vsel %vm1751, %v1695, 0
  %v1768 = vsel %vm1751, %v1696, 0
  %v1771 = vsel %vm1751, %v1697, 0
  %v1774 = vsel %vm1751, %v1698, 0
  %v1777 = vsel %vm1751, %v1699, 0
  %v1780 = vsel %vm1751, %v1700, 0
  %v1783 = vsel %vm1751, %v1701, 0
  %v1786 = vsel %vm1751, %v1702, 0
  %v1789 = vsel %vm1751, %v1703, 0
  %v1792 = vsel %vm1751, %v1704, 0
  %v1795 = vsel %vm1751, %v1705, 0
  %v1798 = vsel %vm1751, %v1706, 0
  %v1801 = vsel %vm1751, %v1707, 0
  %v1804 = vsel %vm1751, %v1708, 0
  %v1807 = vsel %vm1751, %v1709, 0
  %v1810 = vsel %vm1751, %v1710, 0
  %v1813 = vsel %vm1751, %v1711, 0
  %v1816 = vsel %vm1751, %v1712, 0
  %v1819 = vsel %vm1751, %v1713, 0
  %v1822 = vsel %vm1751, %v1714, 0
  %v1825 = vsel %vm1751, %v1715, 0
  %v1828 = vsel %vm1751, %v1716, 0
  %v1831 = vsel %vm1751, %v1717, 0
  %v1834 = vsel %vm1751, %v1718, 0
  %v1837 = vsel %vm1751, %v1719, 0
  %v1840 = vsel %vm1751, %v1720, 0
  %v1843 = vsel %vm1751, %v1721, 0
  %v1846 = vsel %vm1751, %v1722, 0
  %v1849 = vsel %vm1751, %v1723, 0
  %v1852 = vsel %vm1751, %v1724, 0
  %v1855 = vsel %vm1751, %v1725, 0
  %v1858 = vsel %vm1751, %v1726, 0
  %v1861 = vsel %vm1751, %v1727, 0
  %v1864 = vsel %vm1751, %v1728, 0
  %v1867 = vsel %vm1751, %v1729, 0
  %v1870 = vsel %vm1751, %v1730, 0
  %v1873 = vsel %vm1751, %v1731, 0
  %v1876 = vsel %vm1751, %v1732, 0
  %v1879 = vsel %vm1751, %v1733, 0
  %v1882 = vsel %vm1751, %v1734, 0
  %v1885 = vsel %vm1751, %v1735, 0
  %v1888 = vsel %vm1751, %v1736, 0
  %v1891 = vsel %vm1751, %v1737, 0
  %v1894 = vsel %vm1751, %v1738, 0
  %v1897 = vsel %vm1751, %v1739, 0
  %v1900 = vsel %vm1751, %v1740, 0
  %v1903 = vsel %vm1751, %v1741, 0
  %v1906 = vsel %vm1751, %v1742, 0
  %v1909 = vsel %vm1751, %v1743, 0
  %v1912 = vsel %vm1751, %v1744, 0
  %v1915 = vsel %vm1751, %v1745, 0
  %v1918 = vsel %vm1751, %v1746, 0
  %v1921 = vsel %vm1751, %v1747, 0
  %v1924 = vsel %vm1751, %v1748, 0
  %v1927 = vsel %vm1751, %v1749, 0
  %v1930 = vsel %vm1751, %v1750, 0
  %v1933 = vsel %vm574, %v602, 0
  %1935 = vmatprep.subr.mxu0 0.0
  %1936 = vmatpush1.msra.mxu0 0.0
  %1937 = vmatprep.subr.mxu0 0.0
  %1938 = vmatpush1.msra.mxu0 0.0
  %1939 = vmatprep.subr.mxu0 0.0
  %1940 = vmatpush1.msra.mxu0 0.0
  %1941 = vmatprep.subr.mxu0 0.0
  %1942 = vmatpush1.msra.mxu0 0.0
  %1943 = vmatprep.subr.mxu0 0.0
  %1944 = vmatpush1.msra.mxu0 0.0
  %1945 = vmatprep.subr.mxu0 0.0
  %1946 = vmatpush1.msra.mxu0 0.0
  %1947 = vmatprep.subr.mxu0 0.0
  %1948 = vmatpush1.msra.mxu0 0.0
  %1949 = vmatprep.subr.mxu0 0.0
  %1950 = vmatpush1.msra.mxu0 0.0
  %1951 = vmatprep.subr.mxu0 0.0
  %1952 = vmatpush1.msra.mxu0 0.0
  %1953 = vmatprep.subr.mxu0 0.0
  %1954 = vmatpush1.msra.mxu0 0.0
  %1955 = vmatprep.subr.mxu0 0.0
  %1956 = vmatpush1.msra.mxu0 0.0
  %1957 = vmatprep.subr.mxu0 0.0
  %1958 = vmatpush1.msra.mxu0 0.0
  %1959 = vmatprep.subr.mxu0 0.0
  %1960 = vmatpush1.msra.mxu0 0.0
  %1961 = vmatprep.subr.mxu0 0.0
  %1962 = vmatpush1.msra.mxu0 0.0
  %1963 = vmatprep.subr.mxu0 0.0
  %1964 = vmatpush1.msra.mxu0 %v1933
  %1965 = vmatprep.subr.mxu0 0.0
  %1966 = vmatpush1.msra.mxu0 %v603
  %1967 = vmatprep.subr.mxu0 0.0
  %1968 = vmatpush2.msra.mxu0 0.0
  %1969 = vmatprep.subr.mxu0 0.0
  %1970 = vmatpush2.msra.mxu0 0.0
  %1971 = vmatprep.subr.mxu0 0.0
  %1972 = vmatpush2.msra.mxu0 0.0
  %1973 = vmatprep.subr.mxu0 0.0
  %1974 = vmatpush2.msra.mxu0 0.0
  %1975 = vmatprep.subr.mxu0 0.0
  %1976 = vmatpush2.msra.mxu0 0.0
  %1977 = vmatprep.subr.mxu0 0.0
  %1978 = vmatpush2.msra.mxu0 0.0
  %1979 = vmatprep.subr.mxu0 0.0
  %1980 = vmatpush2.msra.mxu0 0.0
  %1981 = vmatprep.subr.mxu0 0.0
  %1982 = vmatpush2.msra.mxu0 0.0
  %1983 = vmatprep.subr.mxu0 0.0
  %1984 = vmatpush2.msra.mxu0 0.0
  %1985 = vmatprep.subr.mxu0 0.0
  %1986 = vmatpush2.msra.mxu0 0.0
  %1987 = vmatprep.subr.mxu0 0.0
  %1988 = vmatpush2.msra.mxu0 0.0
  %1989 = vmatprep.subr.mxu0 0.0
  %1990 = vmatpush2.msra.mxu0 0.0
  %1991 = vmatprep.subr.mxu0 0.0
  %1992 = vmatpush2.msra.mxu0 0.0
  %1993 = vmatprep.subr.mxu0 0.0
  %1994 = vmatpush2.msra.mxu0 0.0
  %1995 = vmatprep.subr.mxu0 0.0
  %1996 = vmatpush2.msra.mxu0 0.0
  %1997 = vmatprep.subr.mxu0 0.0
  %1998 = vmatpush2.msra.mxu0 0.0
  %1999 = vmatprep.mubr.f32.mxu0 0.0
  %2000 = vmatmul.mubr.f32.gmra.mxu0 %v1753
  %v2001 = vpop.f32.mrf.mxu0
  %v2002 = vadd.f32 0.0, %v2001
  %v2003 = vpop.f32.mrf.mxu0
  %2004 = vmatprep.mubr.f32.mxu0 0.0
  %2005 = vmatmul.mubr.f32.gmra.mxu0 %v1756
  %v2006 = vpop.f32.mrf.mxu0
  %v2007 = vadd.f32 0.0, %v2006
  %v2008 = vpop.f32.mrf.mxu0
  %2009 = vmatprep.mubr.f32.mxu0 0.0
  %2010 = vmatmul.mubr.f32.gmra.mxu0 %v1759
  %v2011 = vpop.f32.mrf.mxu0
  %v2012 = vadd.f32 0.0, %v2011
  %v2013 = vpop.f32.mrf.mxu0
  %2014 = vmatprep.mubr.f32.mxu0 0.0
  %2015 = vmatmul.mubr.f32.gmra.mxu0 %v1762
  %v2016 = vpop.f32.mrf.mxu0
  %v2017 = vadd.f32 0.0, %v2016
  %v2018 = vpop.f32.mrf.mxu0
  %2019 = vmatprep.mubr.f32.mxu0 0.0
  %2020 = vmatmul.mubr.f32.gmra.mxu0 %v1765
  %v2021 = vpop.f32.mrf.mxu0
  %v2022 = vadd.f32 0.0, %v2021
  %v2023 = vpop.f32.mrf.mxu0
  %2024 = vmatprep.mubr.f32.mxu0 0.0
  %2025 = vmatmul.mubr.f32.gmra.mxu0 %v1768
  %v2026 = vpop.f32.mrf.mxu0
  %v2027 = vadd.f32 0.0, %v2026
  %v2028 = vpop.f32.mrf.mxu0
  %2029 = vmatprep.mubr.f32.mxu0 0.0
  %2030 = vmatmul.mubr.f32.gmra.mxu0 %v1771
  %v2031 = vpop.f32.mrf.mxu0
  %v2032 = vadd.f32 0.0, %v2031
  %v2033 = vpop.f32.mrf.mxu0
  %2034 = vmatprep.mubr.f32.mxu0 0.0
  %2035 = vmatmul.mubr.f32.gmra.mxu0 %v1774
  %v2036 = vpop.f32.mrf.mxu0
  %v2037 = vadd.f32 0.0, %v2036
  %v2038 = vpop.f32.mrf.mxu0
  %2039 = vmatprep.mubr.f32.mxu0 0.0
  %2040 = vmatmul.mubr.f32.gmra.mxu0 %v1777
  %v2041 = vpop.f32.mrf.mxu0
  %v2042 = vadd.f32 0.0, %v2041
  %v2043 = vpop.f32.mrf.mxu0
  %2044 = vmatprep.mubr.f32.mxu0 0.0
  %2045 = vmatmul.mubr.f32.gmra.mxu0 %v1780
  %v2046 = vpop.f32.mrf.mxu0
  %v2047 = vadd.f32 0.0, %v2046
  %v2048 = vpop.f32.mrf.mxu0
  %2049 = vmatprep.mubr.f32.mxu0 0.0
  %2050 = vmatmul.mubr.f32.gmra.mxu0 %v1783
  %v2051 = vpop.f32.mrf.mxu0
  %v2052 = vadd.f32 0.0, %v2051
  %v2053 = vpop.f32.mrf.mxu0
  %2054 = vmatprep.mubr.f32.mxu0 0.0
  %2055 = vmatmul.mubr.f32.gmra.mxu0 %v1786
  %v2056 = vpop.f32.mrf.mxu0
  %v2057 = vadd.f32 0.0, %v2056
  %v2058 = vpop.f32.mrf.mxu0
  %2059 = vmatprep.mubr.f32.mxu0 0.0
  %2060 = vmatmul.mubr.f32.gmra.mxu0 %v1789
  %v2061 = vpop.f32.mrf.mxu0
  %v2062 = vadd.f32 0.0, %v2061
  %v2063 = vpop.f32.mrf.mxu0
  %2064 = vmatprep.mubr.f32.mxu0 0.0
  %2065 = vmatmul.mubr.f32.gmra.mxu0 %v1792
  %v2066 = vpop.f32.mrf.mxu0
  %v2067 = vadd.f32 0.0, %v2066
  %v2068 = vpop.f32.mrf.mxu0
  %2069 = vmatprep.mubr.f32.mxu0 0.0
  %2070 = vmatmul.mubr.f32.gmra.mxu0 %v1795
  %v2071 = vpop.f32.mrf.mxu0
  %v2072 = vadd.f32 0.0, %v2071
  %v2073 = vpop.f32.mrf.mxu0
  %2074 = vmatprep.mubr.f32.mxu0 0.0
  %2075 = vmatmul.mubr.f32.gmra.mxu0 %v1798
  %v2076 = vpop.f32.mrf.mxu0
  %v2077 = vadd.f32 0.0, %v2076
  %v2078 = vpop.f32.mrf.mxu0
  %2079 = vmatprep.mubr.f32.mxu0 0.0
  %2080 = vmatmul.mubr.f32.gmra.mxu0 %v1801
  %v2081 = vpop.f32.mrf.mxu0
  %v2082 = vadd.f32 0.0, %v2081
  %v2083 = vpop.f32.mrf.mxu0
  %2084 = vmatprep.mubr.f32.mxu0 0.0
  %2085 = vmatmul.mubr.f32.gmra.mxu0 %v1804
  %v2086 = vpop.f32.mrf.mxu0
  %v2087 = vadd.f32 0.0, %v2086
  %v2088 = vpop.f32.mrf.mxu0
  %2089 = vmatprep.mubr.f32.mxu0 0.0
  %2090 = vmatmul.mubr.f32.gmra.mxu0 %v1807
  %v2091 = vpop.f32.mrf.mxu0
  %v2092 = vadd.f32 0.0, %v2091
  %v2093 = vpop.f32.mrf.mxu0
  %2094 = vmatprep.mubr.f32.mxu0 0.0
  %2095 = vmatmul.mubr.f32.gmra.mxu0 %v1810
  %v2096 = vpop.f32.mrf.mxu0
  %v2097 = vadd.f32 0.0, %v2096
  %v2098 = vpop.f32.mrf.mxu0
  %2099 = vmatprep.mubr.f32.mxu0 0.0
  %2100 = vmatmul.mubr.f32.gmra.mxu0 %v1813
  %v2101 = vpop.f32.mrf.mxu0
  %v2102 = vadd.f32 0.0, %v2101
  %v2103 = vpop.f32.mrf.mxu0
  %2104 = vmatprep.mubr.f32.mxu0 0.0
  %2105 = vmatmul.mubr.f32.gmra.mxu0 %v1816
  %v2106 = vpop.f32.mrf.mxu0
  %v2107 = vadd.f32 0.0, %v2106
  %v2108 = vpop.f32.mrf.mxu0
  %2109 = vmatprep.mubr.f32.mxu0 0.0
  %2110 = vmatmul.mubr.f32.gmra.mxu0 %v1819
  %v2111 = vpop.f32.mrf.mxu0
  %v2112 = vadd.f32 0.0, %v2111
  %v2113 = vpop.f32.mrf.mxu0
  %2114 = vmatprep.mubr.f32.mxu0 0.0
  %2115 = vmatmul.mubr.f32.gmra.mxu0 %v1822
  %v2116 = vpop.f32.mrf.mxu0
  %v2117 = vadd.f32 0.0, %v2116
  %v2118 = vpop.f32.mrf.mxu0
  %2119 = vmatprep.mubr.f32.mxu0 0.0
  %2120 = vmatmul.mubr.f32.gmra.mxu0 %v1825
  %v2121 = vpop.f32.mrf.mxu0
  %v2122 = vadd.f32 0.0, %v2121
  %v2123 = vpop.f32.mrf.mxu0
  %2124 = vmatprep.mubr.f32.mxu0 0.0
  %2125 = vmatmul.mubr.f32.gmra.mxu0 %v1828
  %v2126 = vpop.f32.mrf.mxu0
  %v2127 = vadd.f32 0.0, %v2126
  %v2128 = vpop.f32.mrf.mxu0
  %2129 = vmatprep.mubr.f32.mxu0 0.0
  %2130 = vmatmul.mubr.f32.gmra.mxu0 %v1831
  %v2131 = vpop.f32.mrf.mxu0
  %v2132 = vadd.f32 0.0, %v2131
  %v2133 = vpop.f32.mrf.mxu0
  %2134 = vmatprep.mubr.f32.mxu0 0.0
  %2135 = vmatmul.mubr.f32.gmra.mxu0 %v1834
  %v2136 = vpop.f32.mrf.mxu0
  %v2137 = vadd.f32 0.0, %v2136
  %v2138 = vpop.f32.mrf.mxu0
  %2139 = vmatprep.mubr.f32.mxu0 0.0
  %2140 = vmatmul.mubr.f32.gmra.mxu0 %v1837
  %v2141 = vpop.f32.mrf.mxu0
  %v2142 = vadd.f32 0.0, %v2141
  %v2143 = vpop.f32.mrf.mxu0
  %2144 = vmatprep.mubr.f32.mxu0 0.0
  %2145 = vmatmul.mubr.f32.gmra.mxu0 %v1840
  %v2146 = vpop.f32.mrf.mxu0
  %v2147 = vadd.f32 0.0, %v2146
  %v2148 = vpop.f32.mrf.mxu0
  %2149 = vmatprep.mubr.f32.mxu0 0.0
  %2150 = vmatmul.mubr.f32.gmra.mxu0 %v1843
  %v2151 = vpop.f32.mrf.mxu0
  %v2152 = vadd.f32 0.0, %v2151
  %v2153 = vpop.f32.mrf.mxu0
  %2154 = vmatprep.mubr.f32.mxu0 0.0
  %2155 = vmatmul.mubr.f32.gmra.mxu0 %v1846
  %v2156 = vpop.f32.mrf.mxu0
  %v2157 = vadd.f32 0.0, %v2156
  %v2158 = vpop.f32.mrf.mxu0
  %2159 = vmatprep.mubr.f32.mxu0 0.0
  %2160 = vmatmul.mubr.f32.gmra.mxu0 %v1849
  %v2161 = vpop.f32.mrf.mxu0
  %v2162 = vadd.f32 0.0, %v2161
  %v2163 = vpop.f32.mrf.mxu0
  %2164 = vmatprep.mubr.f32.mxu0 0.0
  %2165 = vmatmul.mubr.f32.gmra.mxu0 %v1852
  %v2166 = vpop.f32.mrf.mxu0
  %v2167 = vadd.f32 0.0, %v2166
  %v2168 = vpop.f32.mrf.mxu0
  %2169 = vmatprep.mubr.f32.mxu0 0.0
  %2170 = vmatmul.mubr.f32.gmra.mxu0 %v1855
  %v2171 = vpop.f32.mrf.mxu0
  %v2172 = vadd.f32 0.0, %v2171
  %v2173 = vpop.f32.mrf.mxu0
  %2174 = vmatprep.mubr.f32.mxu0 0.0
  %2175 = vmatmul.mubr.f32.gmra.mxu0 %v1858
  %v2176 = vpop.f32.mrf.mxu0
  %v2177 = vadd.f32 0.0, %v2176
  %v2178 = vpop.f32.mrf.mxu0
  %2179 = vmatprep.mubr.f32.mxu0 0.0
  %2180 = vmatmul.mubr.f32.gmra.mxu0 %v1861
  %v2181 = vpop.f32.mrf.mxu0
  %v2182 = vadd.f32 0.0, %v2181
  %v2183 = vpop.f32.mrf.mxu0
  %2184 = vmatprep.mubr.f32.mxu0 0.0
  %2185 = vmatmul.mubr.f32.gmra.mxu0 %v1864
  %v2186 = vpop.f32.mrf.mxu0
  %v2187 = vadd.f32 0.0, %v2186
  %v2188 = vpop.f32.mrf.mxu0
  %2189 = vmatprep.mubr.f32.mxu0 0.0
  %2190 = vmatmul.mubr.f32.gmra.mxu0 %v1867
  %v2191 = vpop.f32.mrf.mxu0
  %v2192 = vadd.f32 0.0, %v2191
  %v2193 = vpop.f32.mrf.mxu0
  %2194 = vmatprep.mubr.f32.mxu0 0.0
  %2195 = vmatmul.mubr.f32.gmra.mxu0 %v1870
  %v2196 = vpop.f32.mrf.mxu0
  %v2197 = vadd.f32 0.0, %v2196
  %v2198 = vpop.f32.mrf.mxu0
  %2199 = vmatprep.mubr.f32.mxu0 0.0
  %2200 = vmatmul.mubr.f32.gmra.mxu0 %v1873
  %v2201 = vpop.f32.mrf.mxu0
  %v2202 = vadd.f32 0.0, %v2201
  %v2203 = vpop.f32.mrf.mxu0
  %2204 = vmatprep.mubr.f32.mxu0 0.0
  %2205 = vmatmul.mubr.f32.gmra.mxu0 %v1876
  %v2206 = vpop.f32.mrf.mxu0
  %v2207 = vadd.f32 0.0, %v2206
  %v2208 = vpop.f32.mrf.mxu0
  %2209 = vmatprep.mubr.f32.mxu0 0.0
  %2210 = vmatmul.mubr.f32.gmra.mxu0 %v1879
  %v2211 = vpop.f32.mrf.mxu0
  %v2212 = vadd.f32 0.0, %v2211
  %v2213 = vpop.f32.mrf.mxu0
  %2214 = vmatprep.mubr.f32.mxu0 0.0
  %2215 = vmatmul.mubr.f32.gmra.mxu0 %v1882
  %v2216 = vpop.f32.mrf.mxu0
  %v2217 = vadd.f32 0.0, %v2216
  %v2218 = vpop.f32.mrf.mxu0
  %2219 = vmatprep.mubr.f32.mxu0 0.0
  %2220 = vmatmul.mubr.f32.gmra.mxu0 %v1885
  %v2221 = vpop.f32.mrf.mxu0
  %v2222 = vadd.f32 0.0, %v2221
  %v2223 = vpop.f32.mrf.mxu0
  %2224 = vmatprep.mubr.f32.mxu0 0.0
  %2225 = vmatmul.mubr.f32.gmra.mxu0 %v1888
  %v2226 = vpop.f32.mrf.mxu0
  %v2227 = vadd.f32 0.0, %v2226
  %v2228 = vpop.f32.mrf.mxu0
  %2229 = vmatprep.mubr.f32.mxu0 0.0
  %2230 = vmatmul.mubr.f32.gmra.mxu0 %v1891
  %v2231 = vpop.f32.mrf.mxu0
  %v2232 = vadd.f32 0.0, %v2231
  %v2233 = vpop.f32.mrf.mxu0
  %2234 = vmatprep.mubr.f32.mxu0 0.0
  %2235 = vmatmul.mubr.f32.gmra.mxu0 %v1894
  %v2236 = vpop.f32.mrf.mxu0
  %v2237 = vadd.f32 0.0, %v2236
  %v2238 = vpop.f32.mrf.mxu0
  %2239 = vmatprep.mubr.f32.mxu0 0.0
  %2240 = vmatmul.mubr.f32.gmra.mxu0 %v1897
  %v2241 = vpop.f32.mrf.mxu0
  %v2242 = vadd.f32 0.0, %v2241
  %v2243 = vpop.f32.mrf.mxu0
  %2244 = vmatprep.mubr.f32.mxu0 0.0
  %2245 = vmatmul.mubr.f32.gmra.mxu0 %v1900
  %v2246 = vpop.f32.mrf.mxu0
  %v2247 = vadd.f32 0.0, %v2246
  %v2248 = vpop.f32.mrf.mxu0
  %2249 = vmatprep.mubr.f32.mxu0 0.0
  %2250 = vmatmul.mubr.f32.gmra.mxu0 %v1903
  %v2251 = vpop.f32.mrf.mxu0
  %v2252 = vadd.f32 0.0, %v2251
  %v2253 = vpop.f32.mrf.mxu0
  %2254 = vmatprep.mubr.f32.mxu0 0.0
  %2255 = vmatmul.mubr.f32.gmra.mxu0 %v1906
  %v2256 = vpop.f32.mrf.mxu0
  %v2257 = vadd.f32 0.0, %v2256
  %v2258 = vpop.f32.mrf.mxu0
  %2259 = vmatprep.mubr.f32.mxu0 0.0
  %2260 = vmatmul.mubr.f32.gmra.mxu0 %v1909
  %v2261 = vpop.f32.mrf.mxu0
  %v2262 = vadd.f32 0.0, %v2261
  %v2263 = vpop.f32.mrf.mxu0
  %2264 = vmatprep.mubr.f32.mxu0 0.0
  %2265 = vmatmul.mubr.f32.gmra.mxu0 %v1912
  %v2266 = vpop.f32.mrf.mxu0
  %v2267 = vadd.f32 0.0, %v2266
  %v2268 = vpop.f32.mrf.mxu0
  %2269 = vmatprep.mubr.f32.mxu0 0.0
  %2270 = vmatmul.mubr.f32.gmra.mxu0 %v1915
  %v2271 = vpop.f32.mrf.mxu0
  %v2272 = vadd.f32 0.0, %v2271
  %v2273 = vpop.f32.mrf.mxu0
  %2274 = vmatprep.mubr.f32.mxu0 0.0
  %2275 = vmatmul.mubr.f32.gmra.mxu0 %v1918
  %v2276 = vpop.f32.mrf.mxu0
  %v2277 = vadd.f32 0.0, %v2276
  %v2278 = vpop.f32.mrf.mxu0
  %2279 = vmatprep.mubr.f32.mxu0 0.0
  %2280 = vmatmul.mubr.f32.gmra.mxu0 %v1921
  %v2281 = vpop.f32.mrf.mxu0
  %v2282 = vadd.f32 0.0, %v2281
  %v2283 = vpop.f32.mrf.mxu0
  %2284 = vmatprep.mubr.f32.mxu0 0.0
  %2285 = vmatmul.mubr.f32.gmra.mxu0 %v1924
  %v2286 = vpop.f32.mrf.mxu0
  %v2287 = vadd.f32 0.0, %v2286
  %v2288 = vpop.f32.mrf.mxu0
  %2289 = vmatprep.mubr.f32.mxu0 0.0
  %2290 = vmatmul.mubr.f32.gmra.mxu0 %v1927
  %v2291 = vpop.f32.mrf.mxu0
  %v2292 = vadd.f32 0.0, %v2291
  %v2293 = vpop.f32.mrf.mxu0
  %2294 = vmatprep.mubr.f32.mxu0 0.0
  %2295 = vmatmul.mubr.f32.gmra.mxu0 %v1930
  %v2296 = vpop.f32.mrf.mxu0
  %v2297 = vadd.f32 0.0, %v2296
  %v2298 = vpop.f32.mrf.mxu0
  %2299 = vdwg.mxu0
  %v2300 = vld [vmem:[%s5] sm:$0xff]
  %v2301 = vld [vmem:[%s5 + $0x8] sm:$0xff]
  %v2302 = vld [vmem:[%s5 + $0x10] sm:$0xff]
  %v2303 = vld [vmem:[%s5 + $0x18] sm:$0xff]
  %v2304 = vld [vmem:[%s5 + $0x20] sm:$0xff]
  %v2305 = vld [vmem:[%s5 + $0x28] sm:$0xff]
  %v2306 = vld [vmem:[%s5 + $0x30] sm:$0xff]
  %v2307 = vld [vmem:[%s5 + $0x38] sm:$0xff]
  %v2308 = vld [vmem:[%s5 + $0x40] sm:$0xff]
  %v2309 = vld [vmem:[%s5 + $0x48] sm:$0xff]
  %v2310 = vld [vmem:[%s5 + $0x50] sm:$0xff]
  %v2311 = vld [vmem:[%s5 + $0x58] sm:$0xff]
  %v2312 = vld [vmem:[%s5 + $0x60] sm:$0xff]
  %v2313 = vld [vmem:[%s5 + $0x68] sm:$0xff]
  %v2314 = vld [vmem:[%s5 + $0x70] sm:$0xff]
  %v2315 = vld [vmem:[%s5 + $0x78] sm:$0xff]
  %v2316 = vld [vmem:[%s5 + $0x80] sm:$0xff]
  %v2317 = vld [vmem:[%s5 + $0x88] sm:$0xff]
  %v2318 = vld [vmem:[%s5 + $0x90] sm:$0xff]
  %v2319 = vld [vmem:[%s5 + $0x98] sm:$0xff]
  %v2320 = vld [vmem:[%s5 + $0xa0] sm:$0xff]
  %v2321 = vld [vmem:[%s5 + $0xa8] sm:$0xff]
  %v2322 = vld [vmem:[%s5 + $0xb0] sm:$0xff]
  %v2323 = vld [vmem:[%s5 + $0xb8] sm:$0xff]
  %v2324 = vld [vmem:[%s5 + $0xc0] sm:$0xff]
  %v2325 = vld [vmem:[%s5 + $0xc8] sm:$0xff]
  %v2326 = vld [vmem:[%s5 + $0xd0] sm:$0xff]
  %v2327 = vld [vmem:[%s5 + $0xd8] sm:$0xff]
  %v2328 = vld [vmem:[%s5 + $0xe0] sm:$0xff]
  %v2329 = vld [vmem:[%s5 + $0xe8] sm:$0xff]
  %v2330 = vld [vmem:[%s5 + $0xf0] sm:$0xff]
  %v2331 = vld [vmem:[%s5 + $0xf8] sm:$0xff]
  %v2332 = vld [vmem:[%s5 + $0x100] sm:$0xff]
  %v2333 = vld [vmem:[%s5 + $0x108] sm:$0xff]
  %v2334 = vld [vmem:[%s5 + $0x110] sm:$0xff]
  %v2335 = vld [vmem:[%s5 + $0x118] sm:$0xff]
  %v2336 = vld [vmem:[%s5 + $0x120] sm:$0xff]
  %v2337 = vld [vmem:[%s5 + $0x128] sm:$0xff]
  %v2338 = vld [vmem:[%s5 + $0x130] sm:$0xff]
  %v2339 = vld [vmem:[%s5 + $0x138] sm:$0xff]
  %v2340 = vld [vmem:[%s5 + $0x140] sm:$0xff]
  %v2341 = vld [vmem:[%s5 + $0x148] sm:$0xff]
  %v2342 = vld [vmem:[%s5 + $0x150] sm:$0xff]
  %v2343 = vld [vmem:[%s5 + $0x158] sm:$0xff]
  %v2344 = vld [vmem:[%s5 + $0x160] sm:$0xff]
  %v2345 = vld [vmem:[%s5 + $0x168] sm:$0xff]
  %v2346 = vld [vmem:[%s5 + $0x170] sm:$0xff]
  %v2347 = vld [vmem:[%s5 + $0x178] sm:$0xff]
  %v2348 = vmul.f32 %v2002, %v1393
  %v2349 = vmul.f32 %v2007, %v1398
  %v2350 = vmul.f32 %v2012, %v1403
  %v2351 = vmul.f32 %v2017, %v1408
  %v2352 = vmul.f32 %v2022, %v1413
  %v2353 = vmul.f32 %v2027, %v1418
  %v2354 = vmul.f32 %v2032, %v1423
  %v2355 = vmul.f32 %v2037, %v1428
  %v2356 = vmul.f32 %v2042, %v1433
  %v2357 = vmul.f32 %v2047, %v1438
  %v2358 = vmul.f32 %v2052, %v1443
  %v2359 = vmul.f32 %v2057, %v1448
  %v2360 = vmul.f32 %v2062, %v1453
  %v2361 = vmul.f32 %v2067, %v1458
  %v2362 = vmul.f32 %v2072, %v1463
  %v2363 = vmul.f32 %v2077, %v1468
  %v2364 = vmul.f32 %v2082, %v1473
  %v2365 = vmul.f32 %v2087, %v1478
  %v2366 = vmul.f32 %v2092, %v1483
  %v2367 = vmul.f32 %v2097, %v1488
  %v2368 = vmul.f32 %v2102, %v1493
  %v2369 = vmul.f32 %v2107, %v1498
  %v2370 = vmul.f32 %v2112, %v1503
  %v2371 = vmul.f32 %v2117, %v1508
  %v2372 = vmul.f32 %v2122, %v1513
  %v2373 = vmul.f32 %v2127, %v1518
  %v2374 = vmul.f32 %v2132, %v1523
  %v2375 = vmul.f32 %v2137, %v1528
  %v2376 = vmul.f32 %v2142, %v1533
  %v2377 = vmul.f32 %v2147, %v1538
  %v2378 = vmul.f32 %v2152, %v1543
  %v2379 = vmul.f32 %v2157, %v1548
  %v2380 = vmul.f32 %v2162, %v1553
  %v2381 = vmul.f32 %v2167, %v1558
  %v2382 = vmul.f32 %v2172, %v1563
  %v2383 = vmul.f32 %v2177, %v1568
  %v2384 = vmul.f32 %v2182, %v1573
  %v2385 = vmul.f32 %v2187, %v1578
  %v2386 = vmul.f32 %v2192, %v1583
  %v2387 = vmul.f32 %v2197, %v1588
  %v2388 = vmul.f32 %v2202, %v1593
  %v2389 = vmul.f32 %v2207, %v1598
  %v2390 = vmul.f32 %v2212, %v1603
  %v2391 = vmul.f32 %v2217, %v1608
  %v2392 = vmul.f32 %v2222, %v1613
  %v2393 = vmul.f32 %v2227, %v1618
  %v2394 = vmul.f32 %v2232, %v1623
  %v2395 = vmul.f32 %v2237, %v1628
  %v2396 = vmul.f32 %v2242, %v1633
  %v2397 = vmul.f32 %v2247, %v1638
  %v2398 = vmul.f32 %v2252, %v1643
  %v2399 = vmul.f32 %v2257, %v1648
  %v2400 = vmul.f32 %v2262, %v1653
  %v2401 = vmul.f32 %v2267, %v1658
  %v2402 = vmul.f32 %v2272, %v1663
  %v2403 = vmul.f32 %v2277, %v1668
  %v2404 = vmul.f32 %v2282, %v1673
  %v2405 = vmul.f32 %v2287, %v1678
  %v2406 = vmul.f32 %v2292, %v1683
  %v2407 = vmul.f32 %v2297, %v1688
  %vm2408 = vcmask 785408
  %v2410 = vsel %vm2408, %v2303, 0
  %v2413 = vsel %vm2408, %v2307, 0
  %v2416 = vsel %vm2408, %v2311, 0
  %v2419 = vsel %vm2408, %v2315, 0
  %v2422 = vsel %vm2408, %v2319, 0
  %v2425 = vsel %vm2408, %v2323, 0
  %v2428 = vsel %vm2408, %v2327, 0
  %v2431 = vsel %vm2408, %v2331, 0
  %v2434 = vsel %vm2408, %v2335, 0
  %v2437 = vsel %vm2408, %v2339, 0
  %v2440 = vsel %vm2408, %v2343, 0
  %v2443 = vsel %vm2408, %v2347, 0
  %2445 = vmatprep.subr.mxu0 0.0
  %2446 = vmatpush1.msra.mxu0 %v2363
  %2447 = vmatprep.subr.mxu0 0.0
  %2448 = vmatpush1.msra.mxu0 %v2362
  %2449 = vmatprep.subr.mxu0 0.0
  %2450 = vmatpush1.msra.mxu0 %v2361
  %2451 = vmatprep.subr.mxu0 0.0
  %2452 = vmatpush1.msra.mxu0 %v2360
  %2453 = vmatprep.subr.mxu0 0.0
  %2454 = vmatpush1.msra.mxu0 %v2359
  %2455 = vmatprep.subr.mxu0 0.0
  %2456 = vmatpush1.msra.mxu0 %v2358
  %2457 = vmatprep.subr.mxu0 0.0
  %2458 = vmatpush1.msra.mxu0 %v2357
  %2459 = vmatprep.subr.mxu0 0.0
  %2460 = vmatpush1.msra.mxu0 %v2356
  %2461 = vmatprep.subr.mxu0 0.0
  %2462 = vmatpush1.msra.mxu0 %v2355
  %2463 = vmatprep.subr.mxu0 0.0
  %2464 = vmatpush1.msra.mxu0 %v2354
  %2465 = vmatprep.subr.mxu0 0.0
  %2466 = vmatpush1.msra.mxu0 %v2353
  %2467 = vmatprep.subr.mxu0 0.0
  %2468 = vmatpush1.msra.mxu0 %v2352
  %2469 = vmatprep.subr.mxu0 0.0
  %2470 = vmatpush1.msra.mxu0 %v2351
  %2471 = vmatprep.subr.mxu0 0.0
  %2472 = vmatpush1.msra.mxu0 %v2350
  %2473 = vmatprep.subr.mxu0 0.0
  %2474 = vmatpush1.msra.mxu0 %v2349
  %2475 = vmatprep.subr.mxu0 0.0
  %2476 = vmatpush1.msra.mxu0 %v2348
  %2477 = vmatprep.subr.mxu0 0.0
  %2478 = vmatpush2.msra.mxu0 %v2379
  %2479 = vmatprep.subr.mxu0 0.0
  %2480 = vmatpush2.msra.mxu0 %v2378
  %2481 = vmatprep.subr.mxu0 0.0
  %2482 = vmatpush2.msra.mxu0 %v2377
  %2483 = vmatprep.subr.mxu0 0.0
  %2484 = vmatpush2.msra.mxu0 %v2376
  %2485 = vmatprep.subr.mxu0 0.0
  %2486 = vmatpush2.msra.mxu0 %v2375
  %2487 = vmatprep.subr.mxu0 0.0
  %2488 = vmatpush2.msra.mxu0 %v2374
  %2489 = vmatprep.subr.mxu0 0.0
  %2490 = vmatpush2.msra.mxu0 %v2373
  %2491 = vmatprep.subr.mxu0 0.0
  %2492 = vmatpush2.msra.mxu0 %v2372
  %2493 = vmatprep.subr.mxu0 0.0
  %2494 = vmatpush2.msra.mxu0 %v2371
  %2495 = vmatprep.subr.mxu0 0.0
  %2496 = vmatpush2.msra.mxu0 %v2370
  %2497 = vmatprep.subr.mxu0 0.0
  %2498 = vmatpush2.msra.mxu0 %v2369
  %2499 = vmatprep.subr.mxu0 0.0
  %2500 = vmatpush2.msra.mxu0 %v2368
  %2501 = vmatprep.subr.mxu0 0.0
  %2502 = vmatpush2.msra.mxu0 %v2367
  %2503 = vmatprep.subr.mxu0 0.0
  %2504 = vmatpush2.msra.mxu0 %v2366
  %2505 = vmatprep.subr.mxu0 0.0
  %2506 = vmatpush2.msra.mxu0 %v2365
  %2507 = vmatprep.subr.mxu0 0.0
  %2508 = vmatpush2.msra.mxu0 %v2364
  %2509 = vmatprep.mubr.f32.mxu0 %v2301
  %2510 = vmatmul.mubr.f32.gmra.mxu0 %v2300
  %v2511 = vpop.f32.mrf.mxu0
  %v2512 = vadd.f32 0.0, %v2511
  %v2513 = vpop.f32.mrf.mxu0
  %2514 = vmatprep.mubr.f32.mxu0 %v2305
  %2515 = vmatmul.mubr.f32.gmra.mxu0 %v2304
  %v2516 = vpop.f32.mrf.mxu0
  %v2517 = vadd.f32 0.0, %v2516
  %v2518 = vpop.f32.mrf.mxu0
  %2519 = vmatprep.mubr.f32.mxu0 %v2309
  %2520 = vmatmul.mubr.f32.gmra.mxu0 %v2308
  %v2521 = vpop.f32.mrf.mxu0
  %v2522 = vadd.f32 0.0, %v2521
  %v2523 = vpop.f32.mrf.mxu0
  %2524 = vmatprep.mubr.f32.mxu0 %v2313
  %2525 = vmatmul.mubr.f32.gmra.mxu0 %v2312
  %v2526 = vpop.f32.mrf.mxu0
  %v2527 = vadd.f32 0.0, %v2526
  %v2528 = vpop.f32.mrf.mxu0
  %2529 = vmatprep.mubr.f32.mxu0 %v2317
  %2530 = vmatmul.mubr.f32.gmra.mxu0 %v2316
  %v2531 = vpop.f32.mrf.mxu0
  %v2532 = vadd.f32 0.0, %v2531
  %v2533 = vpop.f32.mrf.mxu0
  %2534 = vmatprep.mubr.f32.mxu0 %v2321
  %2535 = vmatmul.mubr.f32.gmra.mxu0 %v2320
  %v2536 = vpop.f32.mrf.mxu0
  %v2537 = vadd.f32 0.0, %v2536
  %v2538 = vpop.f32.mrf.mxu0
  %2539 = vmatprep.mubr.f32.mxu0 %v2325
  %2540 = vmatmul.mubr.f32.gmra.mxu0 %v2324
  %v2541 = vpop.f32.mrf.mxu0
  %v2542 = vadd.f32 0.0, %v2541
  %v2543 = vpop.f32.mrf.mxu0
  %2544 = vmatprep.mubr.f32.mxu0 %v2329
  %2545 = vmatmul.mubr.f32.gmra.mxu0 %v2328
  %v2546 = vpop.f32.mrf.mxu0
  %v2547 = vadd.f32 0.0, %v2546
  %v2548 = vpop.f32.mrf.mxu0
  %2549 = vmatprep.mubr.f32.mxu0 %v2333
  %2550 = vmatmul.mubr.f32.gmra.mxu0 %v2332
  %v2551 = vpop.f32.mrf.mxu0
  %v2552 = vadd.f32 0.0, %v2551
  %v2553 = vpop.f32.mrf.mxu0
  %2554 = vmatprep.mubr.f32.mxu0 %v2337
  %2555 = vmatmul.mubr.f32.gmra.mxu0 %v2336
  %v2556 = vpop.f32.mrf.mxu0
  %v2557 = vadd.f32 0.0, %v2556
  %v2558 = vpop.f32.mrf.mxu0
  %2559 = vmatprep.mubr.f32.mxu0 %v2341
  %2560 = vmatmul.mubr.f32.gmra.mxu0 %v2340
  %v2561 = vpop.f32.mrf.mxu0
  %v2562 = vadd.f32 0.0, %v2561
  %v2563 = vpop.f32.mrf.mxu0
  %2564 = vmatprep.mubr.f32.mxu0 %v2345
  %2565 = vmatmul.mubr.f32.gmra.mxu0 %v2344
  %v2566 = vpop.f32.mrf.mxu0
  %v2567 = vadd.f32 0.0, %v2566
  %v2568 = vpop.f32.mrf.mxu0
  %2569 = vdwg.mxu0
  %2570 = vmatprep.subr.mxu0 0.0
  %2571 = vmatpush1.msra.mxu0 %v2395
  %2572 = vmatprep.subr.mxu0 0.0
  %2573 = vmatpush1.msra.mxu0 %v2394
  %2574 = vmatprep.subr.mxu0 0.0
  %2575 = vmatpush1.msra.mxu0 %v2393
  %2576 = vmatprep.subr.mxu0 0.0
  %2577 = vmatpush1.msra.mxu0 %v2392
  %2578 = vmatprep.subr.mxu0 0.0
  %2579 = vmatpush1.msra.mxu0 %v2391
  %2580 = vmatprep.subr.mxu0 0.0
  %2581 = vmatpush1.msra.mxu0 %v2390
  %2582 = vmatprep.subr.mxu0 0.0
  %2583 = vmatpush1.msra.mxu0 %v2389
  %2584 = vmatprep.subr.mxu0 0.0
  %2585 = vmatpush1.msra.mxu0 %v2388
  %2586 = vmatprep.subr.mxu0 0.0
  %2587 = vmatpush1.msra.mxu0 %v2387
  %2588 = vmatprep.subr.mxu0 0.0
  %2589 = vmatpush1.msra.mxu0 %v2386
  %2590 = vmatprep.subr.mxu0 0.0
  %2591 = vmatpush1.msra.mxu0 %v2385
  %2592 = vmatprep.subr.mxu0 0.0
  %2593 = vmatpush1.msra.mxu0 %v2384
  %2594 = vmatprep.subr.mxu0 0.0
  %2595 = vmatpush1.msra.mxu0 %v2383
  %2596 = vmatprep.subr.mxu0 0.0
  %2597 = vmatpush1.msra.mxu0 %v2382
  %2598 = vmatprep.subr.mxu0 0.0
  %2599 = vmatpush1.msra.mxu0 %v2381
  %2600 = vmatprep.subr.mxu0 0.0
  %2601 = vmatpush1.msra.mxu0 %v2380
  %2602 = vmatprep.subr.mxu0 0.0
  %2603 = vmatpush2.msra.mxu0 0.0
  %2604 = vmatprep.subr.mxu0 0.0
  %2605 = vmatpush2.msra.mxu0 0.0
  %2606 = vmatprep.subr.mxu0 0.0
  %2607 = vmatpush2.msra.mxu0 0.0
  %2608 = vmatprep.subr.mxu0 0.0
  %2609 = vmatpush2.msra.mxu0 0.0
  %2610 = vmatprep.subr.mxu0 0.0
  %2611 = vmatpush2.msra.mxu0 %v2407
  %2612 = vmatprep.subr.mxu0 0.0
  %2613 = vmatpush2.msra.mxu0 %v2406
  %2614 = vmatprep.subr.mxu0 0.0
  %2615 = vmatpush2.msra.mxu0 %v2405
  %2616 = vmatprep.subr.mxu0 0.0
  %2617 = vmatpush2.msra.mxu0 %v2404
  %2618 = vmatprep.subr.mxu0 0.0
  %2619 = vmatpush2.msra.mxu0 %v2403
  %2620 = vmatprep.subr.mxu0 0.0
  %2621 = vmatpush2.msra.mxu0 %v2402
  %2622 = vmatprep.subr.mxu0 0.0
  %2623 = vmatpush2.msra.mxu0 %v2401
  %2624 = vmatprep.subr.mxu0 0.0
  %2625 = vmatpush2.msra.mxu0 %v2400
  %2626 = vmatprep.subr.mxu0 0.0
  %2627 = vmatpush2.msra.mxu0 %v2399
  %2628 = vmatprep.subr.mxu0 0.0
  %2629 = vmatpush2.msra.mxu0 %v2398
  %2630 = vmatprep.subr.mxu0 0.0
  %2631 = vmatpush2.msra.mxu0 %v2397
  %2632 = vmatprep.subr.mxu0 0.0
  %2633 = vmatpush2.msra.mxu0 %v2396
  %2634 = vmatprep.mubr.f32.mxu0 %v2410
  %2635 = vmatmul.mubr.f32.gmra.mxu0 %v2302
  %v2636 = vpop.f32.mrf.mxu0
  %v2637 = vadd.f32 %v2512, %v2636
  %v2638 = vpop.f32.mrf.mxu0
  %2639 = vmatprep.mubr.f32.mxu0 %v2413
  %2640 = vmatmul.mubr.f32.gmra.mxu0 %v2306
  %v2641 = vpop.f32.mrf.mxu0
  %v2642 = vadd.f32 %v2517, %v2641
  %v2643 = vpop.f32.mrf.mxu0
  %2644 = vmatprep.mubr.f32.mxu0 %v2416
  %2645 = vmatmul.mubr.f32.gmra.mxu0 %v2310
  %v2646 = vpop.f32.mrf.mxu0
  %v2647 = vadd.f32 %v2522, %v2646
  %v2648 = vpop.f32.mrf.mxu0
  %2649 = vmatprep.mubr.f32.mxu0 %v2419
  %2650 = vmatmul.mubr.f32.gmra.mxu0 %v2314
  %v2651 = vpop.f32.mrf.mxu0
  %v2652 = vadd.f32 %v2527, %v2651
  %v2653 = vpop.f32.mrf.mxu0
  %2654 = vmatprep.mubr.f32.mxu0 %v2422
  %2655 = vmatmul.mubr.f32.gmra.mxu0 %v2318
  %v2656 = vpop.f32.mrf.mxu0
  %v2657 = vadd.f32 %v2532, %v2656
  %v2658 = vpop.f32.mrf.mxu0
  %2659 = vmatprep.mubr.f32.mxu0 %v2425
  %2660 = vmatmul.mubr.f32.gmra.mxu0 %v2322
  %v2661 = vpop.f32.mrf.mxu0
  %v2662 = vadd.f32 %v2537, %v2661
  %v2663 = vpop.f32.mrf.mxu0
  %2664 = vmatprep.mubr.f32.mxu0 %v2428
  %2665 = vmatmul.mubr.f32.gmra.mxu0 %v2326
  %v2666 = vpop.f32.mrf.mxu0
  %v2667 = vadd.f32 %v2542, %v2666
  %v2668 = vpop.f32.mrf.mxu0
  %2669 = vmatprep.mubr.f32.mxu0 %v2431
  %2670 = vmatmul.mubr.f32.gmra.mxu0 %v2330
  %v2671 = vpop.f32.mrf.mxu0
  %v2672 = vadd.f32 %v2547, %v2671
  %v2673 = vpop.f32.mrf.mxu0
  %2674 = vmatprep.mubr.f32.mxu0 %v2434
  %2675 = vmatmul.mubr.f32.gmra.mxu0 %v2334
  %v2676 = vpop.f32.mrf.mxu0
  %v2677 = vadd.f32 %v2552, %v2676
  %v2678 = vpop.f32.mrf.mxu0
  %2679 = vmatprep.mubr.f32.mxu0 %v2437
  %2680 = vmatmul.mubr.f32.gmra.mxu0 %v2338
  %v2681 = vpop.f32.mrf.mxu0
  %v2682 = vadd.f32 %v2557, %v2681
  %v2683 = vpop.f32.mrf.mxu0
  %2684 = vmatprep.mubr.f32.mxu0 %v2440
  %2685 = vmatmul.mubr.f32.gmra.mxu0 %v2342
  %v2686 = vpop.f32.mrf.mxu0
  %v2687 = vadd.f32 %v2562, %v2686
  %v2688 = vpop.f32.mrf.mxu0
  %2689 = vmatprep.mubr.f32.mxu0 %v2443
  %2690 = vmatmul.mubr.f32.gmra.mxu0 %v2346
  %v2691 = vpop.f32.mrf.mxu0
  %v2692 = vadd.f32 %v2567, %v2691
  %v2693 = vpop.f32.mrf.mxu0
  %2694 = vdwg.mxu0
  %v2695 = vld [vmem:[%s7] sm:$0xff]
  %v2696 = vld [vmem:[%s7 + $0x8] sm:$0xff]
  %v2697 = vld [vmem:[%s7 + $0x10] sm:$0xff]
  %v2698 = vld [vmem:[%s7 + $0x18] sm:$0xff]
  %v2699 = vld [vmem:[%s7 + $0x20] sm:$0xff]
  %v2700 = vld [vmem:[%s7 + $0x28] sm:$0xff]
  %v2701 = vld [vmem:[%s7 + $0x30] sm:$0xff]
  %v2702 = vld [vmem:[%s7 + $0x38] sm:$0xff]
  %v2703 = vld [vmem:[%s7 + $0x40] sm:$0xff]
  %v2704 = vld [vmem:[%s7 + $0x48] sm:$0xff]
  %v2705 = vld [vmem:[%s7 + $0x50] sm:$0xff]
  %v2706 = vld [vmem:[%s7 + $0x58] sm:$0xff]
  %v2707 = vld [vmem:[%s7 + $0x60] sm:$0xff]
  %v2708 = vld [vmem:[%s7 + $0x68] sm:$0xff]
  %v2709 = vld [vmem:[%s7 + $0x70] sm:$0xff]
  %v2710 = vld [vmem:[%s7 + $0x78] sm:$0xff]
  %v2711 = vld [vmem:[%s7 + $0x80] sm:$0xff]
  %v2712 = vld [vmem:[%s7 + $0x88] sm:$0xff]
  %v2713 = vld [vmem:[%s7 + $0x90] sm:$0xff]
  %v2714 = vld [vmem:[%s7 + $0x98] sm:$0xff]
  %v2715 = vld [vmem:[%s7 + $0xa0] sm:$0xff]
  %v2716 = vld [vmem:[%s7 + $0xa8] sm:$0xff]
  %v2717 = vld [vmem:[%s7 + $0xb0] sm:$0xff]
  %v2718 = vld [vmem:[%s7 + $0xb8] sm:$0xff]
  %v2719 = vld [vmem:[%s7 + $0xc0] sm:$0xff]
  %v2720 = vld [vmem:[%s7 + $0xc8] sm:$0xff]
  %v2721 = vld [vmem:[%s7 + $0xd0] sm:$0xff]
  %v2722 = vld [vmem:[%s7 + $0xd8] sm:$0xff]
  %v2723 = vld [vmem:[%s7 + $0xe0] sm:$0xff]
  %v2724 = vld [vmem:[%s7 + $0xe8] sm:$0xff]
  %v2725 = vld [vmem:[%s7 + $0xf0] sm:$0xff]
  %v2726 = vld [vmem:[%s7 + $0xf8] sm:$0xff]
  %v2727 = vld [vmem:[%s7 + $0x100] sm:$0xff]
  %v2728 = vld [vmem:[%s7 + $0x108] sm:$0xff]
  %v2729 = vld [vmem:[%s7 + $0x110] sm:$0xff]
  %v2730 = vld [vmem:[%s7 + $0x118] sm:$0xff]
  %v2731 = vld [vmem:[%s7 + $0x120] sm:$0xff]
  %v2732 = vld [vmem:[%s7 + $0x128] sm:$0xff]
  %v2733 = vld [vmem:[%s7 + $0x130] sm:$0xff]
  %v2734 = vld [vmem:[%s7 + $0x138] sm:$0xff]
  %v2735 = vld [vmem:[%s7 + $0x140] sm:$0xff]
  %v2736 = vld [vmem:[%s7 + $0x148] sm:$0xff]
  %v2737 = vld [vmem:[%s7 + $0x150] sm:$0xff]
  %v2738 = vld [vmem:[%s7 + $0x158] sm:$0xff]
  %v2739 = vld [vmem:[%s7 + $0x160] sm:$0xff]
  %v2740 = vld [vmem:[%s7 + $0x168] sm:$0xff]
  %v2741 = vld [vmem:[%s7 + $0x170] sm:$0xff]
  %v2742 = vld [vmem:[%s7 + $0x178] sm:$0xff]
  %v2743 = vld [vmem:[%s7 + $0x180] sm:$0xff]
  %v2744 = vld [vmem:[%s7 + $0x188] sm:$0xff]
  %v2745 = vld [vmem:[%s7 + $0x190] sm:$0xff]
  %v2746 = vld [vmem:[%s7 + $0x198] sm:$0xff]
  %v2747 = vld [vmem:[%s7 + $0x1a0] sm:$0xff]
  %v2748 = vld [vmem:[%s7 + $0x1a8] sm:$0xff]
  %v2749 = vld [vmem:[%s7 + $0x1b0] sm:$0xff]
  %v2750 = vld [vmem:[%s7 + $0x1b8] sm:$0xff]
  %v2751 = vld [vmem:[%s7 + $0x1c0] sm:$0xff]
  %v2752 = vld [vmem:[%s7 + $0x1c8] sm:$0xff]
  %v2753 = vld [vmem:[%s7 + $0x1d0] sm:$0xff]
  %v2754 = vld [vmem:[%s7 + $0x1d8] sm:$0xff]
  %v2755 = vld [vmem:[%s7 + $0x1e0] sm:$0xff]
  %v2756 = vld [vmem:[%s7 + $0x1e8] sm:$0xff]
  %v2757 = vld [vmem:[%s7 + $0x1f0] sm:$0xff]
  %v2758 = vld [vmem:[%s7 + $0x1f8] sm:$0xff]
  %v2759 = vld [vmem:[%s7 + $0x200] sm:$0xff]
  %v2760 = vld [vmem:[%s7 + $0x208] sm:$0xff]
  %v2761 = vld [vmem:[%s7 + $0x210] sm:$0xff]
  %v2762 = vld [vmem:[%s7 + $0x218] sm:$0xff]
  %v2763 = vld [vmem:[%s7 + $0x220] sm:$0xff]
  %v2764 = vld [vmem:[%s7 + $0x228] sm:$0xff]
  %v2765 = vld [vmem:[%s7 + $0x230] sm:$0xff]
  %v2766 = vld [vmem:[%s7 + $0x238] sm:$0xff]
  %v2767 = vld [vmem:[%s7 + $0x240] sm:$0xff]
  %v2768 = vld [vmem:[%s7 + $0x248] sm:$0xff]
  %v2769 = vld [vmem:[%s7 + $0x250] sm:$0xff]
  %v2770 = vld [vmem:[%s7 + $0x258] sm:$0xff]
  %v2771 = vld [vmem:[%s7 + $0x260] sm:$0xff]
  %v2772 = vld [vmem:[%s7 + $0x268] sm:$0xff]
  %v2773 = vld [vmem:[%s7 + $0x270] sm:$0xff]
  %v2774 = vld [vmem:[%s7 + $0x278] sm:$0xff]
  %v2775 = vld [vmem:[%s7 + $0x280] sm:$0xff]
  %v2776 = vld [vmem:[%s7 + $0x288] sm:$0x7]
  %v2777 = vld [vmem:[%s6] sm:$0xff]
  %v2778 = vld [vmem:[%s6 + $0x8] sm:$0xff]
  %v2779 = vld [vmem:[%s6 + $0x10] sm:$0xff]
  %v2780 = vld [vmem:[%s6 + $0x18] sm:$0xff]
  %v2781 = vld [vmem:[%s6 + $0x20] sm:$0xff]
  %v2782 = vld [vmem:[%s6 + $0x28] sm:$0xff]
  %v2783 = vld [vmem:[%s6 + $0x30] sm:$0xff]
  %v2784 = vld [vmem:[%s6 + $0x38] sm:$0xff]
  %v2785 = vld [vmem:[%s6 + $0x40] sm:$0xff]
  %v2786 = vld [vmem:[%s6 + $0x48] sm:$0xff]
  %v2787 = vld [vmem:[%s6 + $0x50] sm:$0xff]
  %v2788 = vld [vmem:[%s6 + $0x58] sm:$0xff]
  %v2789 = vld [vmem:[%s6 + $0x60] sm:$0xff]
  %v2790 = vld [vmem:[%s6 + $0x68] sm:$0xff]
  %v2791 = vld [vmem:[%s6 + $0x70] sm:$0xff]
  %v2792 = vld [vmem:[%s6 + $0x78] sm:$0xff]
  %v2793 = vld [vmem:[%s6 + $0x80] sm:$0xff]
  %v2794 = vld [vmem:[%s6 + $0x88] sm:$0xff]
  %v2795 = vld [vmem:[%s6 + $0x90] sm:$0xff]
  %v2796 = vld [vmem:[%s6 + $0x98] sm:$0xff]
  %v2797 = vld [vmem:[%s6 + $0xa0] sm:$0xff]
  %v2798 = vld [vmem:[%s6 + $0xa8] sm:$0x7]
  %2800 = vset.pattern.permute.xlu0 0
  %2801 = vperm.xlu0 %2800, %v2695
  %v2802 = vpop.permute.xlu0 %2801
  %2805 = vset.pattern.permute.xlu0 0
  %2806 = vperm.xlu0 %2805, %v2696
  %v2807 = vpop.permute.xlu0 %2806
  %2810 = vset.pattern.permute.xlu0 0
  %2811 = vperm.xlu0 %2810, %v2697
  %v2812 = vpop.permute.xlu0 %2811
  %2815 = vset.pattern.permute.xlu0 0
  %2816 = vperm.xlu0 %2815, %v2698
  %v2817 = vpop.permute.xlu0 %2816
  %2820 = vset.pattern.permute.xlu0 0
  %2821 = vperm.xlu0 %2820, %v2699
  %v2822 = vpop.permute.xlu0 %2821
  %2825 = vset.pattern.permute.xlu0 0
  %2826 = vperm.xlu0 %2825, %v2700
  %v2827 = vpop.permute.xlu0 %2826
  %2830 = vset.pattern.permute.xlu0 0
  %2831 = vperm.xlu0 %2830, %v2701
  %v2832 = vpop.permute.xlu0 %2831
  %2835 = vset.pattern.permute.xlu0 0
  %2836 = vperm.xlu0 %2835, %v2702
  %v2837 = vpop.permute.xlu0 %2836
  %2840 = vset.pattern.permute.xlu0 0
  %2841 = vperm.xlu0 %2840, %v2703
  %v2842 = vpop.permute.xlu0 %2841
  %2845 = vset.pattern.permute.xlu0 0
  %2846 = vperm.xlu0 %2845, %v2704
  %v2847 = vpop.permute.xlu0 %2846
  %2850 = vset.pattern.permute.xlu0 0
  %2851 = vperm.xlu0 %2850, %v2705
  %v2852 = vpop.permute.xlu0 %2851
  %2855 = vset.pattern.permute.xlu0 0
  %2856 = vperm.xlu0 %2855, %v2706
  %v2857 = vpop.permute.xlu0 %2856
  %2860 = vset.pattern.permute.xlu0 0
  %2861 = vperm.xlu0 %2860, %v2707
  %v2862 = vpop.permute.xlu0 %2861
  %2865 = vset.pattern.permute.xlu0 0
  %2866 = vperm.xlu0 %2865, %v2708
  %v2867 = vpop.permute.xlu0 %2866
  %2870 = vset.pattern.permute.xlu0 0
  %2871 = vperm.xlu0 %2870, %v2709
  %v2872 = vpop.permute.xlu0 %2871
  %2875 = vset.pattern.permute.xlu0 0
  %2876 = vperm.xlu0 %2875, %v2710
  %v2877 = vpop.permute.xlu0 %2876
  %2880 = vset.pattern.permute.xlu0 0
  %2881 = vperm.xlu0 %2880, %v2711
  %v2882 = vpop.permute.xlu0 %2881
  %2885 = vset.pattern.permute.xlu0 0
  %2886 = vperm.xlu0 %2885, %v2712
  %v2887 = vpop.permute.xlu0 %2886
  %2890 = vset.pattern.permute.xlu0 0
  %2891 = vperm.xlu0 %2890, %v2713
  %v2892 = vpop.permute.xlu0 %2891
  %2895 = vset.pattern.permute.xlu0 0
  %2896 = vperm.xlu0 %2895, %v2714
  %v2897 = vpop.permute.xlu0 %2896
  %2900 = vset.pattern.permute.xlu0 0
  %2901 = vperm.xlu0 %2900, %v2715
  %v2902 = vpop.permute.xlu0 %2901
  %2905 = vset.pattern.permute.xlu0 0
  %2906 = vperm.xlu0 %2905, %v2716
  %v2907 = vpop.permute.xlu0 %2906
  %v2910 = vsel %vm2408, %v2777, 0
  %v2913 = vsel %vm2408, %v2778, 0
  %v2916 = vsel %vm2408, %v2779, 0
  %v2919 = vsel %vm2408, %v2780, 0
  %v2922 = vsel %vm2408, %v2781, 0
  %v2925 = vsel %vm2408, %v2782, 0
  %v2928 = vsel %vm2408, %v2783, 0
  %v2931 = vsel %vm2408, %v2784, 0
  %v2934 = vsel %vm2408, %v2785, 0
  %v2937 = vsel %vm2408, %v2786, 0
  %v2940 = vsel %vm2408, %v2787, 0
  %v2943 = vsel %vm2408, %v2788, 0
  %v2946 = vsel %vm2408, %v2789, 0
  %v2949 = vsel %vm2408, %v2790, 0
  %v2952 = vsel %vm2408, %v2791, 0
  %v2955 = vsel %vm2408, %v2792, 0
  %v2958 = vsel %vm2408, %v2793, 0
  %v2961 = vsel %vm2408, %v2794, 0
  %v2964 = vsel %vm2408, %v2795, 0
  %v2967 = vsel %vm2408, %v2796, 0
  %v2970 = vsel %vm2408, %v2797, 0
  %v2973 = vsel %vm2408, %v2798, 0
  %2975 = vmatprep.subr.mxu0 0.0
  %2976 = vmatpush1.msra.mxu0 0.0
  %2977 = vmatprep.subr.mxu0 0.0
  %2978 = vmatpush1.msra.mxu0 0.0
  %2979 = vmatprep.subr.mxu0 0.0
  %2980 = vmatpush1.msra.mxu0 0.0
  %2981 = vmatprep.subr.mxu0 0.0
  %2982 = vmatpush1.msra.mxu0 0.0
  %2983 = vmatprep.subr.mxu0 0.0
  %2984 = vmatpush1.msra.mxu0 %v2692
  %2985 = vmatprep.subr.mxu0 0.0
  %2986 = vmatpush1.msra.mxu0 %v2687
  %2987 = vmatprep.subr.mxu0 0.0
  %2988 = vmatpush1.msra.mxu0 %v2682
  %2989 = vmatprep.subr.mxu0 0.0
  %2990 = vmatpush1.msra.mxu0 %v2677
  %2991 = vmatprep.subr.mxu0 0.0
  %2992 = vmatpush1.msra.mxu0 %v2672
  %2993 = vmatprep.subr.mxu0 0.0
  %2994 = vmatpush1.msra.mxu0 %v2667
  %2995 = vmatprep.subr.mxu0 0.0
  %2996 = vmatpush1.msra.mxu0 %v2662
  %2997 = vmatprep.subr.mxu0 0.0
  %2998 = vmatpush1.msra.mxu0 %v2657
  %2999 = vmatprep.subr.mxu0 0.0
  %3000 = vmatpush1.msra.mxu0 %v2652
  %3001 = vmatprep.subr.mxu0 0.0
  %3002 = vmatpush1.msra.mxu0 %v2647
  %3003 = vmatprep.subr.mxu0 0.0
  %3004 = vmatpush1.msra.mxu0 %v2642
  %3005 = vmatprep.subr.mxu0 0.0
  %3006 = vmatpush1.msra.mxu0 %v2637
  %3007 = vmatprep.subr.mxu0 0.0
  %3008 = vmatpush2.msra.mxu0 0.0
  %3009 = vmatprep.subr.mxu0 0.0
  %3010 = vmatpush2.msra.mxu0 0.0
  %3011 = vmatprep.subr.mxu0 0.0
  %3012 = vmatpush2.msra.mxu0 0.0
  %3013 = vmatprep.subr.mxu0 0.0
  %3014 = vmatpush2.msra.mxu0 0.0
  %3015 = vmatprep.subr.mxu0 0.0
  %3016 = vmatpush2.msra.mxu0 0.0
  %3017 = vmatprep.subr.mxu0 0.0
  %3018 = vmatpush2.msra.mxu0 0.0
  %3019 = vmatprep.subr.mxu0 0.0
  %3020 = vmatpush2.msra.mxu0 0.0
  %3021 = vmatprep.subr.mxu0 0.0
  %3022 = vmatpush2.msra.mxu0 0.0
  %3023 = vmatprep.subr.mxu0 0.0
  %3024 = vmatpush2.msra.mxu0 0.0
  %3025 = vmatprep.subr.mxu0 0.0
  %3026 = vmatpush2.msra.mxu0 0.0
  %3027 = vmatprep.subr.mxu0 0.0
  %3028 = vmatpush2.msra.mxu0 0.0
  %3029 = vmatprep.subr.mxu0 0.0
  %3030 = vmatpush2.msra.mxu0 0.0
  %3031 = vmatprep.subr.mxu0 0.0
  %3032 = vmatpush2.msra.mxu0 0.0
  %3033 = vmatprep.subr.mxu0 0.0
  %3034 = vmatpush2.msra.mxu0 0.0
  %3035 = vmatprep.subr.mxu0 0.0
  %3036 = vmatpush2.msra.mxu0 0.0
  %3037 = vmatprep.subr.mxu0 0.0
  %3038 = vmatpush2.msra.mxu0 0.0
  %3039 = vmatprep.mubr.f32.mxu0 0.0
  %3040 = vmatmul.mubr.f32.gmra.mxu0 %v2910
  %v3041 = vpop.f32.mrf.mxu0
  %v3042 = vadd.f32 %v2802, %v3041
  %v3043 = vpop.f32.mrf.mxu0
  %3044 = vmatprep.mubr.f32.mxu0 0.0
  %3045 = vmatmul.mubr.f32.gmra.mxu0 %v2913
  %v3046 = vpop.f32.mrf.mxu0
  %v3047 = vadd.f32 %v2807, %v3046
  %v3048 = vpop.f32.mrf.mxu0
  %3049 = vmatprep.mubr.f32.mxu0 0.0
  %3050 = vmatmul.mubr.f32.gmra.mxu0 %v2916
  %v3051 = vpop.f32.mrf.mxu0
  %v3052 = vadd.f32 %v2812, %v3051
  %v3053 = vpop.f32.mrf.mxu0
  %3054 = vmatprep.mubr.f32.mxu0 0.0
  %3055 = vmatmul.mubr.f32.gmra.mxu0 %v2919
  %v3056 = vpop.f32.mrf.mxu0
  %v3057 = vadd.f32 %v2817, %v3056
  %v3058 = vpop.f32.mrf.mxu0
  %3059 = vmatprep.mubr.f32.mxu0 0.0
  %3060 = vmatmul.mubr.f32.gmra.mxu0 %v2922
  %v3061 = vpop.f32.mrf.mxu0
  %v3062 = vadd.f32 %v2822, %v3061
  %v3063 = vpop.f32.mrf.mxu0
  %3064 = vmatprep.mubr.f32.mxu0 0.0
  %3065 = vmatmul.mubr.f32.gmra.mxu0 %v2925
  %v3066 = vpop.f32.mrf.mxu0
  %v3067 = vadd.f32 %v2827, %v3066
  %v3068 = vpop.f32.mrf.mxu0
  %3069 = vmatprep.mubr.f32.mxu0 0.0
  %3070 = vmatmul.mubr.f32.gmra.mxu0 %v2928
  %v3071 = vpop.f32.mrf.mxu0
  %v3072 = vadd.f32 %v2832, %v3071
  %v3073 = vpop.f32.mrf.mxu0
  %3074 = vmatprep.mubr.f32.mxu0 0.0
  %3075 = vmatmul.mubr.f32.gmra.mxu0 %v2931
  %v3076 = vpop.f32.mrf.mxu0
  %v3077 = vadd.f32 %v2837, %v3076
  %v3078 = vpop.f32.mrf.mxu0
  %3079 = vmatprep.mubr.f32.mxu0 0.0
  %3080 = vmatmul.mubr.f32.gmra.mxu0 %v2934
  %v3081 = vpop.f32.mrf.mxu0
  %v3082 = vadd.f32 %v2842, %v3081
  %v3083 = vpop.f32.mrf.mxu0
  %3084 = vmatprep.mubr.f32.mxu0 0.0
  %3085 = vmatmul.mubr.f32.gmra.mxu0 %v2937
  %v3086 = vpop.f32.mrf.mxu0
  %v3087 = vadd.f32 %v2847, %v3086
  %v3088 = vpop.f32.mrf.mxu0
  %3089 = vmatprep.mubr.f32.mxu0 0.0
  %3090 = vmatmul.mubr.f32.gmra.mxu0 %v2940
  %v3091 = vpop.f32.mrf.mxu0
  %v3092 = vadd.f32 %v2852, %v3091
  %v3093 = vpop.f32.mrf.mxu0
  %3094 = vmatprep.mubr.f32.mxu0 0.0
  %3095 = vmatmul.mubr.f32.gmra.mxu0 %v2943
  %v3096 = vpop.f32.mrf.mxu0
  %v3097 = vadd.f32 %v2857, %v3096
  %v3098 = vpop.f32.mrf.mxu0
  %3099 = vmatprep.mubr.f32.mxu0 0.0
  %3100 = vmatmul.mubr.f32.gmra.mxu0 %v2946
  %v3101 = vpop.f32.mrf.mxu0
  %v3102 = vadd.f32 %v2862, %v3101
  %v3103 = vpop.f32.mrf.mxu0
  %3104 = vmatprep.mubr.f32.mxu0 0.0
  %3105 = vmatmul.mubr.f32.gmra.mxu0 %v2949
  %v3106 = vpop.f32.mrf.mxu0
  %v3107 = vadd.f32 %v2867, %v3106
  %v3108 = vpop.f32.mrf.mxu0
  %3109 = vmatprep.mubr.f32.mxu0 0.0
  %3110 = vmatmul.mubr.f32.gmra.mxu0 %v2952
  %v3111 = vpop.f32.mrf.mxu0
  %v3112 = vadd.f32 %v2872, %v3111
  %v3113 = vpop.f32.mrf.mxu0
  %3114 = vmatprep.mubr.f32.mxu0 0.0
  %3115 = vmatmul.mubr.f32.gmra.mxu0 %v2955
  %v3116 = vpop.f32.mrf.mxu0
  %v3117 = vadd.f32 %v2877, %v3116
  %v3118 = vpop.f32.mrf.mxu0
  %3119 = vmatprep.mubr.f32.mxu0 0.0
  %3120 = vmatmul.mubr.f32.gmra.mxu0 %v2958
  %v3121 = vpop.f32.mrf.mxu0
  %v3122 = vadd.f32 %v2882, %v3121
  %v3123 = vpop.f32.mrf.mxu0
  %3124 = vmatprep.mubr.f32.mxu0 0.0
  %3125 = vmatmul.mubr.f32.gmra.mxu0 %v2961
  %v3126 = vpop.f32.mrf.mxu0
  %v3127 = vadd.f32 %v2887, %v3126
  %v3128 = vpop.f32.mrf.mxu0
  %3129 = vmatprep.mubr.f32.mxu0 0.0
  %3130 = vmatmul.mubr.f32.gmra.mxu0 %v2964
  %v3131 = vpop.f32.mrf.mxu0
  %v3132 = vadd.f32 %v2892, %v3131
  %v3133 = vpop.f32.mrf.mxu0
  %3134 = vmatprep.mubr.f32.mxu0 0.0
  %3135 = vmatmul.mubr.f32.gmra.mxu0 %v2967
  %v3136 = vpop.f32.mrf.mxu0
  %v3137 = vadd.f32 %v2897, %v3136
  %v3138 = vpop.f32.mrf.mxu0
  %3139 = vmatprep.mubr.f32.mxu0 0.0
  %3140 = vmatmul.mubr.f32.gmra.mxu0 %v2970
  %v3141 = vpop.f32.mrf.mxu0
  %v3142 = vadd.f32 %v2902, %v3141
  %v3143 = vpop.f32.mrf.mxu0
  %3144 = vmatprep.mubr.f32.mxu0 0.0
  %3145 = vmatmul.mubr.f32.gmra.mxu0 %v2973
  %v3146 = vpop.f32.mrf.mxu0
  %v3147 = vadd.f32 %v2907, %v3146
  %v3148 = vpop.f32.mrf.mxu0
  %3149 = vdwg.mxu0
  %v3150 = vmax.f32 %v3042, 0.0
  %v3151 = vmax.f32 %v3047, 0.0
  %v3152 = vmax.f32 %v3052, 0.0
  %v3153 = vmax.f32 %v3057, 0.0
  %v3154 = vmax.f32 %v3062, 0.0
  %v3155 = vmax.f32 %v3067, 0.0
  %v3156 = vmax.f32 %v3072, 0.0
  %v3157 = vmax.f32 %v3077, 0.0
  %v3158 = vmax.f32 %v3082, 0.0
  %v3159 = vmax.f32 %v3087, 0.0
  %v3160 = vmax.f32 %v3092, 0.0
  %v3161 = vmax.f32 %v3097, 0.0
  %v3162 = vmax.f32 %v3102, 0.0
  %v3163 = vmax.f32 %v3107, 0.0
  %v3164 = vmax.f32 %v3112, 0.0
  %v3165 = vmax.f32 %v3117, 0.0
  %v3166 = vmax.f32 %v3122, 0.0
  %v3167 = vmax.f32 %v3127, 0.0
  %v3168 = vmax.f32 %v3132, 0.0
  %v3169 = vmax.f32 %v3137, 0.0
  %v3170 = vsel %vm540, %v3142, -inf
  %v3171 = vrot.slane %v3170, 4
  %v3172 = vmax.f32 %v3170, %v3171
  %v3173 = vrot.slane %v3172, 2
  %v3174 = vmax.f32 %v3172, %v3173
  %v3175 = vrot.slane %v3174, 1
  %v3176 = vmax.f32 %v3174, %v3175
  %v3177 = vsub.f32 %v3142, %v3176
  %v3178 = vmul.f32 %v3177, 1.442695
  %v3179 = vpow.pop %v3178
  %v3180 = vsel %vm540, %v3179, 0.0
  %v3181 = vrot.slane %v3180, 4
  %v3182 = vadd.f32 %v3180, %v3181
  %v3183 = vrot.slane %v3182, 2
  %v3184 = vadd.f32 %v3182, %v3183
  %v3185 = vrot.slane %v3184, 1
  %v3186 = vadd.f32 %v3184, %v3185
  %v3187 = vrcp.pop %v3186
  %v3188 = vmul.f32 %v3179, %v3187
  %v3189 = vsel %vm560, %v3142, -inf
  %v3190 = vrot.slane %v3189, 4
  %v3191 = vmax.f32 %v3189, %v3190
  %v3192 = vrot.slane %v3191, 2
  %v3193 = vmax.f32 %v3191, %v3192
  %v3194 = vrot.slane %v3193, 1
  %v3195 = vmax.f32 %v3193, %v3194
  %v3196 = vsub.f32 %v3142, %v3195
  %v3197 = vmul.f32 %v3196, 1.442695
  %v3198 = vpow.pop %v3197
  %v3200 = vrot.slane %v3198, 5
  %v3202 = vsel %vm574, %v3200, 0.0
  %v3203 = vrot.slane %v3202, 4
  %v3204 = vadd.f32 %v3202, %v3203
  %v3205 = vrot.slane %v3204, 2
  %v3206 = vadd.f32 %v3204, %v3205
  %v3207 = vrot.slane %v3206, 1
  %v3208 = vadd.f32 %v3206, %v3207
  %v3209 = vrcp.pop %v3208
  %v3210 = vmul.f32 %v3198, %v3209
  %v3211 = vsel %vm574, %v3147, -inf
  %v3212 = vrot.slane %v3211, 4
  %v3213 = vmax.f32 %v3211, %v3212
  %v3214 = vrot.slane %v3213, 2
  %v3215 = vmax.f32 %v3213, %v3214
  %v3216 = vrot.slane %v3215, 1
  %v3217 = vmax.f32 %v3215, %v3216
  %v3218 = vsub.f32 %v3147, %v3217
  %v3219 = vmul.f32 %v3218, 1.442695
  %v3220 = vpow.pop %v3219
  %v3221 = vsel %vm574, %v3220, 0.0
  %v3222 = vrot.slane %v3221, 4
  %v3223 = vadd.f32 %v3221, %v3222
  %v3224 = vrot.slane %v3223, 2
  %v3225 = vadd.f32 %v3223, %v3224
  %v3226 = vrot.slane %v3225, 1
  %v3227 = vadd.f32 %v3225, %v3226
  %v3228 = vrcp.pop %v3227
  %v3229 = vmul.f32 %v3220, %v3228
  %v3230 = vsel %vm540, %v3188, %v3210
  %v3231 = vld [vmem:[%s8] sm:$0xff]
  %v3232 = vld [vmem:[%s8 + $0x8] sm:$0xff]
  %v3233 = vld [vmem:[%s8 + $0x10] sm:$0xff]
  %v3234 = vld [vmem:[%s8 + $0x18] sm:$0xff]
  %v3235 = vld [vmem:[%s8 + $0x20] sm:$0xff]
  %v3236 = vld [vmem:[%s8 + $0x28] sm:$0xff]
  %v3237 = vld [vmem:[%s8 + $0x30] sm:$0xff]
  %v3238 = vld [vmem:[%s8 + $0x38] sm:$0xff]
  %v3239 = vld [vmem:[%s8 + $0x40] sm:$0xff]
  %v3240 = vld [vmem:[%s8 + $0x48] sm:$0xff]
  %v3241 = vld [vmem:[%s8 + $0x50] sm:$0xff]
  %v3242 = vld [vmem:[%s8 + $0x58] sm:$0xff]
  %v3243 = vld [vmem:[%s8 + $0x60] sm:$0xff]
  %v3244 = vld [vmem:[%s8 + $0x68] sm:$0xff]
  %v3245 = vld [vmem:[%s8 + $0x70] sm:$0xff]
  %v3246 = vld [vmem:[%s8 + $0x78] sm:$0xff]
  %v3247 = vld [vmem:[%s8 + $0x80] sm:$0xff]
  %v3248 = vld [vmem:[%s8 + $0x88] sm:$0xff]
  %v3249 = vld [vmem:[%s8 + $0x90] sm:$0xff]
  %v3250 = vld [vmem:[%s8 + $0x98] sm:$0xff]
  %v3251 = vld [vmem:[%s8 + $0xa0] sm:$0xff]
  %v3252 = vld [vmem:[%s8 + $0xa8] sm:$0xff]
  %v3253 = vld [vmem:[%s8 + $0xb0] sm:$0xff]
  %v3254 = vld [vmem:[%s8 + $0xb8] sm:$0xff]
  %v3255 = vld [vmem:[%s8 + $0xc0] sm:$0xff]
  %v3256 = vld [vmem:[%s8 + $0xc8] sm:$0xff]
  %v3257 = vld [vmem:[%s8 + $0xd0] sm:$0xff]
  %v3258 = vld [vmem:[%s8 + $0xd8] sm:$0xff]
  %v3259 = vld [vmem:[%s8 + $0xe0] sm:$0xff]
  %v3260 = vld [vmem:[%s8 + $0xe8] sm:$0xff]
  %v3261 = vld [vmem:[%s8 + $0xf0] sm:$0xff]
  %v3262 = vld [vmem:[%s8 + $0xf8] sm:$0xff]
  %v3263 = vld [vmem:[%s8 + $0x100] sm:$0xff]
  %v3264 = vld [vmem:[%s8 + $0x108] sm:$0xff]
  %v3265 = vld [vmem:[%s8 + $0x110] sm:$0xff]
  %v3266 = vld [vmem:[%s8 + $0x118] sm:$0xff]
  %v3267 = vld [vmem:[%s8 + $0x120] sm:$0xff]
  %v3268 = vld [vmem:[%s8 + $0x128] sm:$0xff]
  %v3269 = vld [vmem:[%s8 + $0x130] sm:$0xff]
  %v3270 = vld [vmem:[%s8 + $0x138] sm:$0xff]
  %v3271 = vld [vmem:[%s8 + $0x140] sm:$0xff]
  %v3272 = vld [vmem:[%s8 + $0x148] sm:$0xff]
  %v3273 = vld [vmem:[%s8 + $0x150] sm:$0xff]
  %v3274 = vld [vmem:[%s8 + $0x158] sm:$0xff]
  %v3275 = vld [vmem:[%s8 + $0x160] sm:$0xff]
  %v3276 = vld [vmem:[%s8 + $0x168] sm:$0xff]
  %v3277 = vld [vmem:[%s8 + $0x170] sm:$0xff]
  %v3278 = vld [vmem:[%s8 + $0x178] sm:$0xff]
  %v3279 = vld [vmem:[%s8 + $0x180] sm:$0xff]
  %v3280 = vld [vmem:[%s8 + $0x188] sm:$0xff]
  %v3281 = vld [vmem:[%s8 + $0x190] sm:$0xff]
  %v3282 = vld [vmem:[%s8 + $0x198] sm:$0xff]
  %v3283 = vld [vmem:[%s8 + $0x1a0] sm:$0xff]
  %v3284 = vld [vmem:[%s8 + $0x1a8] sm:$0xff]
  %v3285 = vld [vmem:[%s8 + $0x1b0] sm:$0xff]
  %v3286 = vld [vmem:[%s8 + $0x1b8] sm:$0xff]
  %v3287 = vld [vmem:[%s8 + $0x1c0] sm:$0xff]
  %v3288 = vld [vmem:[%s8 + $0x1c8] sm:$0xff]
  %v3289 = vld [vmem:[%s8 + $0x1d0] sm:$0xff]
  %v3290 = vld [vmem:[%s8 + $0x1d8] sm:$0xff]
  %v3291 = vld [vmem:[%s8 + $0x1e0] sm:$0xff]
  %v3292 = vld [vmem:[%s8 + $0x1e8] sm:$0xff]
  %v3293 = vld [vmem:[%s8 + $0x1f0] sm:$0xff]
  %v3294 = vld [vmem:[%s8 + $0x1f8] sm:$0xff]
  %v3295 = vld [vmem:[%s8 + $0x200] sm:$0xff]
  %v3296 = vld [vmem:[%s8 + $0x208] sm:$0xff]
  %v3297 = vld [vmem:[%s8 + $0x210] sm:$0xff]
  %v3298 = vld [vmem:[%s8 + $0x218] sm:$0xff]
  %v3299 = vld [vmem:[%s8 + $0x220] sm:$0xff]
  %v3300 = vld [vmem:[%s8 + $0x228] sm:$0xff]
  %v3301 = vld [vmem:[%s8 + $0x230] sm:$0xff]
  %v3302 = vld [vmem:[%s8 + $0x238] sm:$0xff]
  %v3303 = vld [vmem:[%s8 + $0x240] sm:$0xff]
  %v3304 = vld [vmem:[%s8 + $0x248] sm:$0xff]
  %v3305 = vld [vmem:[%s8 + $0x250] sm:$0xff]
  %v3306 = vld [vmem:[%s8 + $0x258] sm:$0xff]
  %v3307 = vld [vmem:[%s8 + $0x260] sm:$0xff]
  %v3308 = vld [vmem:[%s8 + $0x268] sm:$0xff]
  %v3309 = vld [vmem:[%s8 + $0x270] sm:$0xff]
  %v3310 = vld [vmem:[%s8 + $0x278] sm:$0xff]
  %v3311 = vld [vmem:[%s8 + $0x280] sm:$0xff]
  %v3312 = vld [vmem:[%s8 + $0x288] sm:$0xff]
  %v3313 = vld [vmem:[%s8 + $0x290] sm:$0xff]
  %v3314 = vld [vmem:[%s8 + $0x298] sm:$0xff]
  %v3315 = vld [vmem:[%s8 + $0x2a0] sm:$0xff]
  %v3316 = vld [vmem:[%s8 + $0x2a8] sm:$0xff]
  %v3317 = vld [vmem:[%s8 + $0x2b0] sm:$0xff]
  %v3318 = vld [vmem:[%s8 + $0x2b8] sm:$0xff]
  %v3319 = vld [vmem:[%s8 + $0x2c0] sm:$0xff]
  %v3320 = vld [vmem:[%s8 + $0x2c8] sm:$0xff]
  %v3321 = vld [vmem:[%s8 + $0x2d0] sm:$0xff]
  %v3322 = vld [vmem:[%s8 + $0x2d8] sm:$0xff]
  %v3323 = vld [vmem:[%s8 + $0x2e0] sm:$0xff]
  %v3324 = vld [vmem:[%s8 + $0x2e8] sm:$0xff]
  %v3325 = vld [vmem:[%s8 + $0x2f0] sm:$0xff]
  %v3326 = vld [vmem:[%s8 + $0x2f8] sm:$0xff]
  %v3327 = vld [vmem:[%s8 + $0x300] sm:$0xff]
  %v3328 = vld [vmem:[%s8 + $0x308] sm:$0xff]
  %v3329 = vld [vmem:[%s8 + $0x310] sm:$0xff]
  %v3330 = vld [vmem:[%s8 + $0x318] sm:$0xff]
  %v3331 = vld [vmem:[%s8 + $0x320] sm:$0xff]
  %v3332 = vld [vmem:[%s8 + $0x328] sm:$0xff]
  %v3333 = vld [vmem:[%s8 + $0x330] sm:$0xff]
  %v3334 = vld [vmem:[%s8 + $0x338] sm:$0xff]
  %v3335 = vld [vmem:[%s8 + $0x340] sm:$0xff]
  %v3336 = vld [vmem:[%s8 + $0x348] sm:$0xff]
  %v3337 = vld [vmem:[%s8 + $0x350] sm:$0xff]
  %v3338 = vld [vmem:[%s8 + $0x358] sm:$0xff]
  %v3339 = vld [vmem:[%s8 + $0x360] sm:$0xff]
  %v3340 = vld [vmem:[%s8 + $0x368] sm:$0xff]
  %v3341 = vld [vmem:[%s8 + $0x370] sm:$0xff]
  %v3342 = vld [vmem:[%s8 + $0x378] sm:$0xff]
  %v3343 = vld [vmem:[%s8 + $0x380] sm:$0xff]
  %v3344 = vld [vmem:[%s8 + $0x388] sm:$0xff]
  %v3345 = vld [vmem:[%s8 + $0x390] sm:$0xff]
  %v3346 = vld [vmem:[%s8 + $0x398] sm:$0xff]
  %v3347 = vld [vmem:[%s8 + $0x3a0] sm:$0xff]
  %v3348 = vld [vmem:[%s8 + $0x3a8] sm:$0xff]
  %v3349 = vld [vmem:[%s8 + $0x3b0] sm:$0xff]
  %v3350 = vld [vmem:[%s8 + $0x3b8] sm:$0xff]
  %3352 = vset.pattern.permute.xlu0 0
  %3353 = vperm.xlu0 %3352, %v2717
  %v3354 = vpop.permute.xlu0 %3353
  %3356 = vset.pattern.permute.xlu0 0
  %3357 = vperm.xlu0 %3356, %v2718
  %v3358 = vpop.permute.xlu0 %3357
  %3360 = vset.pattern.permute.xlu0 0
  %3361 = vperm.xlu0 %3360, %v2719
  %v3362 = vpop.permute.xlu0 %3361
  %3364 = vset.pattern.permute.xlu0 0
  %3365 = vperm.xlu0 %3364, %v2720
  %v3366 = vpop.permute.xlu0 %3365
  %3368 = vset.pattern.permute.xlu0 0
  %3369 = vperm.xlu0 %3368, %v2721
  %v3370 = vpop.permute.xlu0 %3369
  %3372 = vset.pattern.permute.xlu0 0
  %3373 = vperm.xlu0 %3372, %v2722
  %v3374 = vpop.permute.xlu0 %3373
  %3376 = vset.pattern.permute.xlu0 0
  %3377 = vperm.xlu0 %3376, %v2723
  %v3378 = vpop.permute.xlu0 %3377
  %3380 = vset.pattern.permute.xlu0 0
  %3381 = vperm.xlu0 %3380, %v2724
  %v3382 = vpop.permute.xlu0 %3381
  %3384 = vset.pattern.permute.xlu0 0
  %3385 = vperm.xlu0 %3384, %v2725
  %v3386 = vpop.permute.xlu0 %3385
  %3388 = vset.pattern.permute.xlu0 0
  %3389 = vperm.xlu0 %3388, %v2726
  %v3390 = vpop.permute.xlu0 %3389
  %3392 = vset.pattern.permute.xlu0 0
  %3393 = vperm.xlu0 %3392, %v2727
  %v3394 = vpop.permute.xlu0 %3393
  %3396 = vset.pattern.permute.xlu0 0
  %3397 = vperm.xlu0 %3396, %v2728
  %v3398 = vpop.permute.xlu0 %3397
  %3400 = vset.pattern.permute.xlu0 0
  %3401 = vperm.xlu0 %3400, %v2729
  %v3402 = vpop.permute.xlu0 %3401
  %3404 = vset.pattern.permute.xlu0 0
  %3405 = vperm.xlu0 %3404, %v2730
  %v3406 = vpop.permute.xlu0 %3405
  %3408 = vset.pattern.permute.xlu0 0
  %3409 = vperm.xlu0 %3408, %v2731
  %v3410 = vpop.permute.xlu0 %3409
  %3412 = vset.pattern.permute.xlu0 0
  %3413 = vperm.xlu0 %3412, %v2732
  %v3414 = vpop.permute.xlu0 %3413
  %3416 = vset.pattern.permute.xlu0 0
  %3417 = vperm.xlu0 %3416, %v2733
  %v3418 = vpop.permute.xlu0 %3417
  %3420 = vset.pattern.permute.xlu0 0
  %3421 = vperm.xlu0 %3420, %v2734
  %v3422 = vpop.permute.xlu0 %3421
  %3424 = vset.pattern.permute.xlu0 0
  %3425 = vperm.xlu0 %3424, %v2735
  %v3426 = vpop.permute.xlu0 %3425
  %3428 = vset.pattern.permute.xlu0 0
  %3429 = vperm.xlu0 %3428, %v2736
  %v3430 = vpop.permute.xlu0 %3429
  %3432 = vset.pattern.permute.xlu0 0
  %3433 = vperm.xlu0 %3432, %v2737
  %v3434 = vpop.permute.xlu0 %3433
  %3436 = vset.pattern.permute.xlu0 0
  %3437 = vperm.xlu0 %3436, %v2738
  %v3438 = vpop.permute.xlu0 %3437
  %3440 = vset.pattern.permute.xlu0 0
  %3441 = vperm.xlu0 %3440, %v2739
  %v3442 = vpop.permute.xlu0 %3441
  %3444 = vset.pattern.permute.xlu0 0
  %3445 = vperm.xlu0 %3444, %v2740
  %v3446 = vpop.permute.xlu0 %3445
  %3448 = vset.pattern.permute.xlu0 0
  %3449 = vperm.xlu0 %3448, %v2741
  %v3450 = vpop.permute.xlu0 %3449
  %3452 = vset.pattern.permute.xlu0 0
  %3453 = vperm.xlu0 %3452, %v2742
  %v3454 = vpop.permute.xlu0 %3453
  %3456 = vset.pattern.permute.xlu0 0
  %3457 = vperm.xlu0 %3456, %v2743
  %v3458 = vpop.permute.xlu0 %3457
  %3460 = vset.pattern.permute.xlu0 0
  %3461 = vperm.xlu0 %3460, %v2744
  %v3462 = vpop.permute.xlu0 %3461
  %3464 = vset.pattern.permute.xlu0 0
  %3465 = vperm.xlu0 %3464, %v2745
  %v3466 = vpop.permute.xlu0 %3465
  %3468 = vset.pattern.permute.xlu0 0
  %3469 = vperm.xlu0 %3468, %v2746
  %v3470 = vpop.permute.xlu0 %3469
  %3472 = vset.pattern.permute.xlu0 0
  %3473 = vperm.xlu0 %3472, %v2747
  %v3474 = vpop.permute.xlu0 %3473
  %3476 = vset.pattern.permute.xlu0 0
  %3477 = vperm.xlu0 %3476, %v2748
  %v3478 = vpop.permute.xlu0 %3477
  %3480 = vset.pattern.permute.xlu0 0
  %3481 = vperm.xlu0 %3480, %v2749
  %v3482 = vpop.permute.xlu0 %3481
  %3484 = vset.pattern.permute.xlu0 0
  %3485 = vperm.xlu0 %3484, %v2750
  %v3486 = vpop.permute.xlu0 %3485
  %3488 = vset.pattern.permute.xlu0 0
  %3489 = vperm.xlu0 %3488, %v2751
  %v3490 = vpop.permute.xlu0 %3489
  %3492 = vset.pattern.permute.xlu0 0
  %3493 = vperm.xlu0 %3492, %v2752
  %v3494 = vpop.permute.xlu0 %3493
  %3496 = vset.pattern.permute.xlu0 0
  %3497 = vperm.xlu0 %3496, %v2753
  %v3498 = vpop.permute.xlu0 %3497
  %3500 = vset.pattern.permute.xlu0 0
  %3501 = vperm.xlu0 %3500, %v2754
  %v3502 = vpop.permute.xlu0 %3501
  %3504 = vset.pattern.permute.xlu0 0
  %3505 = vperm.xlu0 %3504, %v2755
  %v3506 = vpop.permute.xlu0 %3505
  %3508 = vset.pattern.permute.xlu0 0
  %3509 = vperm.xlu0 %3508, %v2756
  %v3510 = vpop.permute.xlu0 %3509
  %3512 = vset.pattern.permute.xlu0 0
  %3513 = vperm.xlu0 %3512, %v2757
  %v3514 = vpop.permute.xlu0 %3513
  %3516 = vset.pattern.permute.xlu0 0
  %3517 = vperm.xlu0 %3516, %v2758
  %v3518 = vpop.permute.xlu0 %3517
  %3520 = vset.pattern.permute.xlu0 0
  %3521 = vperm.xlu0 %3520, %v2759
  %v3522 = vpop.permute.xlu0 %3521
  %3524 = vset.pattern.permute.xlu0 0
  %3525 = vperm.xlu0 %3524, %v2760
  %v3526 = vpop.permute.xlu0 %3525
  %3528 = vset.pattern.permute.xlu0 0
  %3529 = vperm.xlu0 %3528, %v2761
  %v3530 = vpop.permute.xlu0 %3529
  %3532 = vset.pattern.permute.xlu0 0
  %3533 = vperm.xlu0 %3532, %v2762
  %v3534 = vpop.permute.xlu0 %3533
  %3536 = vset.pattern.permute.xlu0 0
  %3537 = vperm.xlu0 %3536, %v2763
  %v3538 = vpop.permute.xlu0 %3537
  %3540 = vset.pattern.permute.xlu0 0
  %3541 = vperm.xlu0 %3540, %v2764
  %v3542 = vpop.permute.xlu0 %3541
  %3544 = vset.pattern.permute.xlu0 0
  %3545 = vperm.xlu0 %3544, %v2765
  %v3546 = vpop.permute.xlu0 %3545
  %3548 = vset.pattern.permute.xlu0 0
  %3549 = vperm.xlu0 %3548, %v2766
  %v3550 = vpop.permute.xlu0 %3549
  %3552 = vset.pattern.permute.xlu0 0
  %3553 = vperm.xlu0 %3552, %v2767
  %v3554 = vpop.permute.xlu0 %3553
  %3556 = vset.pattern.permute.xlu0 0
  %3557 = vperm.xlu0 %3556, %v2768
  %v3558 = vpop.permute.xlu0 %3557
  %3560 = vset.pattern.permute.xlu0 0
  %3561 = vperm.xlu0 %3560, %v2769
  %v3562 = vpop.permute.xlu0 %3561
  %3564 = vset.pattern.permute.xlu0 0
  %3565 = vperm.xlu0 %3564, %v2770
  %v3566 = vpop.permute.xlu0 %3565
  %3568 = vset.pattern.permute.xlu0 0
  %3569 = vperm.xlu0 %3568, %v2771
  %v3570 = vpop.permute.xlu0 %3569
  %3572 = vset.pattern.permute.xlu0 0
  %3573 = vperm.xlu0 %3572, %v2772
  %v3574 = vpop.permute.xlu0 %3573
  %3576 = vset.pattern.permute.xlu0 0
  %3577 = vperm.xlu0 %3576, %v2773
  %v3578 = vpop.permute.xlu0 %3577
  %3580 = vset.pattern.permute.xlu0 0
  %3581 = vperm.xlu0 %3580, %v2774
  %v3582 = vpop.permute.xlu0 %3581
  %3584 = vset.pattern.permute.xlu0 0
  %3585 = vperm.xlu0 %3584, %v2775
  %v3586 = vpop.permute.xlu0 %3585
  %3588 = vset.pattern.permute.xlu0 0
  %3589 = vperm.xlu0 %3588, %v2776
  %v3590 = vpop.permute.xlu0 %3589
  %v3591 = vrot.slane %v2907, 3
  %v3592 = vrot.slane %v3354, 3
  %v3593 = vsel %vm540, %v3591, %v3592
  %v3594 = vrot.slane %v3358, 3
  %v3595 = vsel %vm540, %v3592, %v3594
  %v3596 = vrot.slane %v3362, 3
  %v3597 = vsel %vm540, %v3594, %v3596
  %v3598 = vrot.slane %v3366, 3
  %v3599 = vsel %vm540, %v3596, %v3598
  %v3600 = vrot.slane %v3370, 3
  %v3601 = vsel %vm540, %v3598, %v3600
  %v3602 = vrot.slane %v3374, 3
  %v3603 = vsel %vm540, %v3600, %v3602
  %v3604 = vrot.slane %v3378, 3
  %v3605 = vsel %vm540, %v3602, %v3604
  %v3606 = vrot.slane %v3382, 3
  %v3607 = vsel %vm540, %v3604, %v3606
  %v3608 = vrot.slane %v3386, 3
  %v3609 = vsel %vm540, %v3606, %v3608
  %v3610 = vrot.slane %v3390, 3
  %v3611 = vsel %vm540, %v3608, %v3610
  %v3612 = vrot.slane %v3394, 3
  %v3613 = vsel %vm540, %v3610, %v3612
  %v3614 = vrot.slane %v3398, 3
  %v3615 = vsel %vm540, %v3612, %v3614
  %v3616 = vrot.slane %v3402, 3
  %v3617 = vsel %vm540, %v3614, %v3616
  %v3618 = vrot.slane %v3406, 3
  %v3619 = vsel %vm540, %v3616, %v3618
  %v3620 = vrot.slane %v3410, 3
  %v3621 = vsel %vm540, %v3618, %v3620
  %v3622 = vrot.slane %v3414, 3
  %v3623 = vsel %vm540, %v3620, %v3622
  %v3624 = vrot.slane %v3418, 3
  %v3625 = vsel %vm540, %v3622, %v3624
  %v3626 = vrot.slane %v3422, 3
  %v3627 = vsel %vm540, %v3624, %v3626
  %v3628 = vrot.slane %v3426, 3
  %v3629 = vsel %vm540, %v3626, %v3628
  %v3630 = vrot.slane %v3430, 3
  %v3631 = vsel %vm540, %v3628, %v3630
  %v3632 = vrot.slane %v3434, 3
  %v3633 = vsel %vm540, %v3630, %v3632
  %v3634 = vrot.slane %v3438, 3
  %v3635 = vsel %vm540, %v3632, %v3634
  %v3636 = vrot.slane %v3442, 3
  %v3637 = vsel %vm540, %v3634, %v3636
  %v3638 = vrot.slane %v3446, 3
  %v3639 = vsel %vm540, %v3636, %v3638
  %v3640 = vrot.slane %v3450, 3
  %v3641 = vsel %vm540, %v3638, %v3640
  %v3642 = vrot.slane %v3454, 3
  %v3643 = vsel %vm540, %v3640, %v3642
  %v3644 = vrot.slane %v3458, 3
  %v3645 = vsel %vm540, %v3642, %v3644
  %v3646 = vrot.slane %v3462, 3
  %v3647 = vsel %vm540, %v3644, %v3646
  %v3648 = vrot.slane %v3466, 3
  %v3649 = vsel %vm540, %v3646, %v3648
  %v3650 = vrot.slane %v3470, 3
  %v3651 = vsel %vm540, %v3648, %v3650
  %v3652 = vrot.slane %v3474, 3
  %v3653 = vsel %vm540, %v3650, %v3652
  %v3654 = vrot.slane %v3478, 3
  %v3655 = vsel %vm540, %v3652, %v3654
  %v3656 = vrot.slane %v3482, 3
  %v3657 = vsel %vm540, %v3654, %v3656
  %v3658 = vrot.slane %v3486, 3
  %v3659 = vsel %vm540, %v3656, %v3658
  %v3660 = vrot.slane %v3490, 3
  %v3661 = vsel %vm540, %v3658, %v3660
  %v3662 = vrot.slane %v3494, 3
  %v3663 = vsel %vm540, %v3660, %v3662
  %v3664 = vrot.slane %v3498, 3
  %v3665 = vsel %vm540, %v3662, %v3664
  %v3666 = vrot.slane %v3502, 3
  %v3667 = vsel %vm540, %v3664, %v3666
  %v3668 = vrot.slane %v3506, 3
  %v3669 = vsel %vm540, %v3666, %v3668
  %v3670 = vrot.slane %v3510, 3
  %v3671 = vsel %vm540, %v3668, %v3670
  %v3672 = vrot.slane %v3514, 3
  %v3673 = vsel %vm540, %v3670, %v3672
  %v3674 = vrot.slane %v3518, 3
  %v3675 = vsel %vm540, %v3672, %v3674
  %v3676 = vrot.slane %v3522, 3
  %v3677 = vsel %vm540, %v3674, %v3676
  %v3678 = vrot.slane %v3526, 3
  %v3679 = vsel %vm540, %v3676, %v3678
  %v3680 = vrot.slane %v3530, 3
  %v3681 = vsel %vm540, %v3678, %v3680
  %v3682 = vrot.slane %v3534, 3
  %v3683 = vsel %vm540, %v3680, %v3682
  %v3684 = vrot.slane %v3538, 3
  %v3685 = vsel %vm540, %v3682, %v3684
  %v3686 = vrot.slane %v3542, 3
  %v3687 = vsel %vm540, %v3684, %v3686
  %v3688 = vrot.slane %v3546, 3
  %v3689 = vsel %vm540, %v3686, %v3688
  %v3690 = vrot.slane %v3550, 3
  %v3691 = vsel %vm540, %v3688, %v3690
  %v3692 = vrot.slane %v3554, 3
  %v3693 = vsel %vm540, %v3690, %v3692
  %v3694 = vrot.slane %v3558, 3
  %v3695 = vsel %vm540, %v3692, %v3694
  %v3696 = vrot.slane %v3562, 3
  %v3697 = vsel %vm540, %v3694, %v3696
  %v3698 = vrot.slane %v3566, 3
  %v3699 = vsel %vm540, %v3696, %v3698
  %v3700 = vrot.slane %v3570, 3
  %v3701 = vsel %vm540, %v3698, %v3700
  %v3702 = vrot.slane %v3574, 3
  %v3703 = vsel %vm540, %v3700, %v3702
  %v3704 = vrot.slane %v3578, 3
  %v3705 = vsel %vm540, %v3702, %v3704
  %v3706 = vrot.slane %v3582, 3
  %v3707 = vsel %vm540, %v3704, %v3706
  %v3708 = vrot.slane %v3586, 3
  %v3709 = vsel %vm540, %v3706, %v3708
  %v3710 = vrot.slane %v3590, 3
  %v3711 = vsel %vm540, %v3708, %v3710
  %v3773 = vsel %vm1145, %v3232, 0
  %v3776 = vsel %vm1145, %v3234, 0
  %v3779 = vsel %vm1145, %v3236, 0
  %v3782 = vsel %vm1145, %v3238, 0
  %v3785 = vsel %vm1145, %v3240, 0
  %v3788 = vsel %vm1145, %v3242, 0
  %v3791 = vsel %vm1145, %v3244, 0
  %v3794 = vsel %vm1145, %v3246, 0
  %v3797 = vsel %vm1145, %v3248, 0
  %v3800 = vsel %vm1145, %v3250, 0
  %v3803 = vsel %vm1145, %v3252, 0
  %v3806 = vsel %vm1145, %v3254, 0
  %v3809 = vsel %vm1145, %v3256, 0
  %v3812 = vsel %vm1145, %v3258, 0
  %v3815 = vsel %vm1145, %v3260, 0
  %v3818 = vsel %vm1145, %v3262, 0
  %v3821 = vsel %vm1145, %v3264, 0
  %v3824 = vsel %vm1145, %v3266, 0
  %v3827 = vsel %vm1145, %v3268, 0
  %v3830 = vsel %vm1145, %v3270, 0
  %v3833 = vsel %vm1145, %v3272, 0
  %v3836 = vsel %vm1145, %v3274, 0
  %v3839 = vsel %vm1145, %v3276, 0
  %v3842 = vsel %vm1145, %v3278, 0
  %v3845 = vsel %vm1145, %v3280, 0
  %v3848 = vsel %vm1145, %v3282, 0
  %v3851 = vsel %vm1145, %v3284, 0
  %v3854 = vsel %vm1145, %v3286, 0
  %v3857 = vsel %vm1145, %v3288, 0
  %v3860 = vsel %vm1145, %v3290, 0
  %v3863 = vsel %vm1145, %v3292, 0
  %v3866 = vsel %vm1145, %v3294, 0
  %v3869 = vsel %vm1145, %v3296, 0
  %v3872 = vsel %vm1145, %v3298, 0
  %v3875 = vsel %vm1145, %v3300, 0
  %v3878 = vsel %vm1145, %v3302, 0
  %v3881 = vsel %vm1145, %v3304, 0
  %v3884 = vsel %vm1145, %v3306, 0
  %v3887 = vsel %vm1145, %v3308, 0
  %v3890 = vsel %vm1145, %v3310, 0
  %v3893 = vsel %vm1145, %v3312, 0
  %v3896 = vsel %vm1145, %v3314, 0
  %v3899 = vsel %vm1145, %v3316, 0
  %v3902 = vsel %vm1145, %v3318, 0
  %v3905 = vsel %vm1145, %v3320, 0
  %v3908 = vsel %vm1145, %v3322, 0
  %v3911 = vsel %vm1145, %v3324, 0
  %v3914 = vsel %vm1145, %v3326, 0
  %v3917 = vsel %vm1145, %v3328, 0
  %v3920 = vsel %vm1145, %v3330, 0
  %v3923 = vsel %vm1145, %v3332, 0
  %v3926 = vsel %vm1145, %v3334, 0
  %v3929 = vsel %vm1145, %v3336, 0
  %v3932 = vsel %vm1145, %v3338, 0
  %v3935 = vsel %vm1145, %v3340, 0
  %v3938 = vsel %vm1145, %v3342, 0
  %v3941 = vsel %vm1145, %v3344, 0
  %v3944 = vsel %vm1145, %v3346, 0
  %v3947 = vsel %vm1145, %v3348, 0
  %v3950 = vsel %vm1145, %v3350, 0
  %3952 = vmatprep.subr.mxu0 0.0
  %3953 = vmatpush1.msra.mxu0 %v3165
  %3954 = vmatprep.subr.mxu0 0.0
  %3955 = vmatpush1.msra.mxu0 %v3164
  %3956 = vmatprep.subr.mxu0 0.0
  %3957 = vmatpush1.msra.mxu0 %v3163
  %3958 = vmatprep.subr.mxu0 0.0
  %3959 = vmatpush1.msra.mxu0 %v3162
  %3960 = vmatprep.subr.mxu0 0.0
  %3961 = vmatpush1.msra.mxu0 %v3161
  %3962 = vmatprep.subr.mxu0 0.0
  %3963 = vmatpush1.msra.mxu0 %v3160
  %3964 = vmatprep.subr.mxu0 0.0
  %3965 = vmatpush1.msra.mxu0 %v3159
  %3966 = vmatprep.subr.mxu0 0.0
  %3967 = vmatpush1.msra.mxu0 %v3158
  %3968 = vmatprep.subr.mxu0 0.0
  %3969 = vmatpush1.msra.mxu0 %v3157
  %3970 = vmatprep.subr.mxu0 0.0
  %3971 = vmatpush1.msra.mxu0 %v3156
  %3972 = vmatprep.subr.mxu0 0.0
  %3973 = vmatpush1.msra.mxu0 %v3155
  %3974 = vmatprep.subr.mxu0 0.0
  %3975 = vmatpush1.msra.mxu0 %v3154
  %3976 = vmatprep.subr.mxu0 0.0
  %3977 = vmatpush1.msra.mxu0 %v3153
  %3978 = vmatprep.subr.mxu0 0.0
  %3979 = vmatpush1.msra.mxu0 %v3152
  %3980 = vmatprep.subr.mxu0 0.0
  %3981 = vmatpush1.msra.mxu0 %v3151
  %3982 = vmatprep.subr.mxu0 0.0
  %3983 = vmatpush1.msra.mxu0 %v3150
  %3984 = vmatprep.subr.mxu0 0.0
  %3985 = vmatpush2.msra.mxu0 0.0
  %3986 = vmatprep.subr.mxu0 0.0
  %3987 = vmatpush2.msra.mxu0 0.0
  %3988 = vmatprep.subr.mxu0 0.0
  %3989 = vmatpush2.msra.mxu0 0.0
  %3990 = vmatprep.subr.mxu0 0.0
  %3991 = vmatpush2.msra.mxu0 0.0
  %3992 = vmatprep.subr.mxu0 0.0
  %3993 = vmatpush2.msra.mxu0 0.0
  %3994 = vmatprep.subr.mxu0 0.0
  %3995 = vmatpush2.msra.mxu0 0.0
  %3996 = vmatprep.subr.mxu0 0.0
  %3997 = vmatpush2.msra.mxu0 0.0
  %3998 = vmatprep.subr.mxu0 0.0
  %3999 = vmatpush2.msra.mxu0 0.0
  %4000 = vmatprep.subr.mxu0 0.0
  %4001 = vmatpush2.msra.mxu0 0.0
  %4002 = vmatprep.subr.mxu0 0.0
  %4003 = vmatpush2.msra.mxu0 0.0
  %4004 = vmatprep.subr.mxu0 0.0
  %4005 = vmatpush2.msra.mxu0 0.0
  %4006 = vmatprep.subr.mxu0 0.0
  %4007 = vmatpush2.msra.mxu0 0.0
  %4008 = vmatprep.subr.mxu0 0.0
  %4009 = vmatpush2.msra.mxu0 %v3169
  %4010 = vmatprep.subr.mxu0 0.0
  %4011 = vmatpush2.msra.mxu0 %v3168
  %4012 = vmatprep.subr.mxu0 0.0
  %4013 = vmatpush2.msra.mxu0 %v3167
  %4014 = vmatprep.subr.mxu0 0.0
  %4015 = vmatpush2.msra.mxu0 %v3166
  %4016 = vmatprep.mubr.f32.mxu0 %v3773
  %4017 = vmatmul.mubr.f32.gmra.mxu0 %v3231
  %v4018 = vpop.f32.mrf.mxu0
  %v4019 = vadd.f32 %v3593, %v4018
  %v4020 = vpop.f32.mrf.mxu0
  %4021 = vmatprep.mubr.f32.mxu0 %v3776
  %4022 = vmatmul.mubr.f32.gmra.mxu0 %v3233
  %v4023 = vpop.f32.mrf.mxu0
  %v4024 = vadd.f32 %v3595, %v4023
  %v4025 = vpop.f32.mrf.mxu0
  %4026 = vmatprep.mubr.f32.mxu0 %v3779
  %4027 = vmatmul.mubr.f32.gmra.mxu0 %v3235
  %v4028 = vpop.f32.mrf.mxu0
  %v4029 = vadd.f32 %v3597, %v4028
  %v4030 = vpop.f32.mrf.mxu0
  %4031 = vmatprep.mubr.f32.mxu0 %v3782
  %4032 = vmatmul.mubr.f32.gmra.mxu0 %v3237
  %v4033 = vpop.f32.mrf.mxu0
  %v4034 = vadd.f32 %v3599, %v4033
  %v4035 = vpop.f32.mrf.mxu0
  %4036 = vmatprep.mubr.f32.mxu0 %v3785
  %4037 = vmatmul.mubr.f32.gmra.mxu0 %v3239
  %v4038 = vpop.f32.mrf.mxu0
  %v4039 = vadd.f32 %v3601, %v4038
  %v4040 = vpop.f32.mrf.mxu0
  %4041 = vmatprep.mubr.f32.mxu0 %v3788
  %4042 = vmatmul.mubr.f32.gmra.mxu0 %v3241
  %v4043 = vpop.f32.mrf.mxu0
  %v4044 = vadd.f32 %v3603, %v4043
  %v4045 = vpop.f32.mrf.mxu0
  %4046 = vmatprep.mubr.f32.mxu0 %v3791
  %4047 = vmatmul.mubr.f32.gmra.mxu0 %v3243
  %v4048 = vpop.f32.mrf.mxu0
  %v4049 = vadd.f32 %v3605, %v4048
  %v4050 = vpop.f32.mrf.mxu0
  %4051 = vmatprep.mubr.f32.mxu0 %v3794
  %4052 = vmatmul.mubr.f32.gmra.mxu0 %v3245
  %v4053 = vpop.f32.mrf.mxu0
  %v4054 = vadd.f32 %v3607, %v4053
  %v4055 = vpop.f32.mrf.mxu0
  %4056 = vmatprep.mubr.f32.mxu0 %v3797
  %4057 = vmatmul.mubr.f32.gmra.mxu0 %v3247
  %v4058 = vpop.f32.mrf.mxu0
  %v4059 = vadd.f32 %v3609, %v4058
  %v4060 = vpop.f32.mrf.mxu0
  %4061 = vmatprep.mubr.f32.mxu0 %v3800
  %4062 = vmatmul.mubr.f32.gmra.mxu0 %v3249
  %v4063 = vpop.f32.mrf.mxu0
  %v4064 = vadd.f32 %v3611, %v4063
  %v4065 = vpop.f32.mrf.mxu0
  %4066 = vmatprep.mubr.f32.mxu0 %v3803
  %4067 = vmatmul.mubr.f32.gmra.mxu0 %v3251
  %v4068 = vpop.f32.mrf.mxu0
  %v4069 = vadd.f32 %v3613, %v4068
  %v4070 = vpop.f32.mrf.mxu0
  %4071 = vmatprep.mubr.f32.mxu0 %v3806
  %4072 = vmatmul.mubr.f32.gmra.mxu0 %v3253
  %v4073 = vpop.f32.mrf.mxu0
  %v4074 = vadd.f32 %v3615, %v4073
  %v4075 = vpop.f32.mrf.mxu0
  %4076 = vmatprep.mubr.f32.mxu0 %v3809
  %4077 = vmatmul.mubr.f32.gmra.mxu0 %v3255
  %v4078 = vpop.f32.mrf.mxu0
  %v4079 = vadd.f32 %v3617, %v4078
  %v4080 = vpop.f32.mrf.mxu0
  %4081 = vmatprep.mubr.f32.mxu0 %v3812
  %4082 = vmatmul.mubr.f32.gmra.mxu0 %v3257
  %v4083 = vpop.f32.mrf.mxu0
  %v4084 = vadd.f32 %v3619, %v4083
  %v4085 = vpop.f32.mrf.mxu0
  %4086 = vmatprep.mubr.f32.mxu0 %v3815
  %4087 = vmatmul.mubr.f32.gmra.mxu0 %v3259
  %v4088 = vpop.f32.mrf.mxu0
  %v4089 = vadd.f32 %v3621, %v4088
  %v4090 = vpop.f32.mrf.mxu0
  %4091 = vmatprep.mubr.f32.mxu0 %v3818
  %4092 = vmatmul.mubr.f32.gmra.mxu0 %v3261
  %v4093 = vpop.f32.mrf.mxu0
  %v4094 = vadd.f32 %v3623, %v4093
  %v4095 = vpop.f32.mrf.mxu0
  %4096 = vmatprep.mubr.f32.mxu0 %v3821
  %4097 = vmatmul.mubr.f32.gmra.mxu0 %v3263
  %v4098 = vpop.f32.mrf.mxu0
  %v4099 = vadd.f32 %v3625, %v4098
  %v4100 = vpop.f32.mrf.mxu0
  %4101 = vmatprep.mubr.f32.mxu0 %v3824
  %4102 = vmatmul.mubr.f32.gmra.mxu0 %v3265
  %v4103 = vpop.f32.mrf.mxu0
  %v4104 = vadd.f32 %v3627, %v4103
  %v4105 = vpop.f32.mrf.mxu0
  %4106 = vmatprep.mubr.f32.mxu0 %v3827
  %4107 = vmatmul.mubr.f32.gmra.mxu0 %v3267
  %v4108 = vpop.f32.mrf.mxu0
  %v4109 = vadd.f32 %v3629, %v4108
  %v4110 = vpop.f32.mrf.mxu0
  %4111 = vmatprep.mubr.f32.mxu0 %v3830
  %4112 = vmatmul.mubr.f32.gmra.mxu0 %v3269
  %v4113 = vpop.f32.mrf.mxu0
  %v4114 = vadd.f32 %v3631, %v4113
  %v4115 = vpop.f32.mrf.mxu0
  %4116 = vmatprep.mubr.f32.mxu0 %v3833
  %4117 = vmatmul.mubr.f32.gmra.mxu0 %v3271
  %v4118 = vpop.f32.mrf.mxu0
  %v4119 = vadd.f32 %v3633, %v4118
  %v4120 = vpop.f32.mrf.mxu0
  %4121 = vmatprep.mubr.f32.mxu0 %v3836
  %4122 = vmatmul.mubr.f32.gmra.mxu0 %v3273
  %v4123 = vpop.f32.mrf.mxu0
  %v4124 = vadd.f32 %v3635, %v4123
  %v4125 = vpop.f32.mrf.mxu0
  %4126 = vmatprep.mubr.f32.mxu0 %v3839
  %4127 = vmatmul.mubr.f32.gmra.mxu0 %v3275
  %v4128 = vpop.f32.mrf.mxu0
  %v4129 = vadd.f32 %v3637, %v4128
  %v4130 = vpop.f32.mrf.mxu0
  %4131 = vmatprep.mubr.f32.mxu0 %v3842
  %4132 = vmatmul.mubr.f32.gmra.mxu0 %v3277
  %v4133 = vpop.f32.mrf.mxu0
  %v4134 = vadd.f32 %v3639, %v4133
  %v4135 = vpop.f32.mrf.mxu0
  %4136 = vmatprep.mubr.f32.mxu0 %v3845
  %4137 = vmatmul.mubr.f32.gmra.mxu0 %v3279
  %v4138 = vpop.f32.mrf.mxu0
  %v4139 = vadd.f32 %v3641, %v4138
  %v4140 = vpop.f32.mrf.mxu0
  %4141 = vmatprep.mubr.f32.mxu0 %v3848
  %4142 = vmatmul.mubr.f32.gmra.mxu0 %v3281
  %v4143 = vpop.f32.mrf.mxu0
  %v4144 = vadd.f32 %v3643, %v4143
  %v4145 = vpop.f32.mrf.mxu0
  %4146 = vmatprep.mubr.f32.mxu0 %v3851
  %4147 = vmatmul.mubr.f32.gmra.mxu0 %v3283
  %v4148 = vpop.f32.mrf.mxu0
  %v4149 = vadd.f32 %v3645, %v4148
  %v4150 = vpop.f32.mrf.mxu0
  %4151 = vmatprep.mubr.f32.mxu0 %v3854
  %4152 = vmatmul.mubr.f32.gmra.mxu0 %v3285
  %v4153 = vpop.f32.mrf.mxu0
  %v4154 = vadd.f32 %v3647, %v4153
  %v4155 = vpop.f32.mrf.mxu0
  %4156 = vmatprep.mubr.f32.mxu0 %v3857
  %4157 = vmatmul.mubr.f32.gmra.mxu0 %v3287
  %v4158 = vpop.f32.mrf.mxu0
  %v4159 = vadd.f32 %v3649, %v4158
  %v4160 = vpop.f32.mrf.mxu0
  %4161 = vmatprep.mubr.f32.mxu0 %v3860
  %4162 = vmatmul.mubr.f32.gmra.mxu0 %v3289
  %v4163 = vpop.f32.mrf.mxu0
  %v4164 = vadd.f32 %v3651, %v4163
  %v4165 = vpop.f32.mrf.mxu0
  %4166 = vmatprep.mubr.f32.mxu0 %v3863
  %4167 = vmatmul.mubr.f32.gmra.mxu0 %v3291
  %v4168 = vpop.f32.mrf.mxu0
  %v4169 = vadd.f32 %v3653, %v4168
  %v4170 = vpop.f32.mrf.mxu0
  %4171 = vmatprep.mubr.f32.mxu0 %v3866
  %4172 = vmatmul.mubr.f32.gmra.mxu0 %v3293
  %v4173 = vpop.f32.mrf.mxu0
  %v4174 = vadd.f32 %v3655, %v4173
  %v4175 = vpop.f32.mrf.mxu0
  %4176 = vmatprep.mubr.f32.mxu0 %v3869
  %4177 = vmatmul.mubr.f32.gmra.mxu0 %v3295
  %v4178 = vpop.f32.mrf.mxu0
  %v4179 = vadd.f32 %v3657, %v4178
  %v4180 = vpop.f32.mrf.mxu0
  %4181 = vmatprep.mubr.f32.mxu0 %v3872
  %4182 = vmatmul.mubr.f32.gmra.mxu0 %v3297
  %v4183 = vpop.f32.mrf.mxu0
  %v4184 = vadd.f32 %v3659, %v4183
  %v4185 = vpop.f32.mrf.mxu0
  %4186 = vmatprep.mubr.f32.mxu0 %v3875
  %4187 = vmatmul.mubr.f32.gmra.mxu0 %v3299
  %v4188 = vpop.f32.mrf.mxu0
  %v4189 = vadd.f32 %v3661, %v4188
  %v4190 = vpop.f32.mrf.mxu0
  %4191 = vmatprep.mubr.f32.mxu0 %v3878
  %4192 = vmatmul.mubr.f32.gmra.mxu0 %v3301
  %v4193 = vpop.f32.mrf.mxu0
  %v4194 = vadd.f32 %v3663, %v4193
  %v4195 = vpop.f32.mrf.mxu0
  %4196 = vmatprep.mubr.f32.mxu0 %v3881
  %4197 = vmatmul.mubr.f32.gmra.mxu0 %v3303
  %v4198 = vpop.f32.mrf.mxu0
  %v4199 = vadd.f32 %v3665, %v4198
  %v4200 = vpop.f32.mrf.mxu0
  %4201 = vmatprep.mubr.f32.mxu0 %v3884
  %4202 = vmatmul.mubr.f32.gmra.mxu0 %v3305
  %v4203 = vpop.f32.mrf.mxu0
  %v4204 = vadd.f32 %v3667, %v4203
  %v4205 = vpop.f32.mrf.mxu0
  %4206 = vmatprep.mubr.f32.mxu0 %v3887
  %4207 = vmatmul.mubr.f32.gmra.mxu0 %v3307
  %v4208 = vpop.f32.mrf.mxu0
  %v4209 = vadd.f32 %v3669, %v4208
  %v4210 = vpop.f32.mrf.mxu0
  %4211 = vmatprep.mubr.f32.mxu0 %v3890
  %4212 = vmatmul.mubr.f32.gmra.mxu0 %v3309
  %v4213 = vpop.f32.mrf.mxu0
  %v4214 = vadd.f32 %v3671, %v4213
  %v4215 = vpop.f32.mrf.mxu0
  %4216 = vmatprep.mubr.f32.mxu0 %v3893
  %4217 = vmatmul.mubr.f32.gmra.mxu0 %v3311
  %v4218 = vpop.f32.mrf.mxu0
  %v4219 = vadd.f32 %v3673, %v4218
  %v4220 = vpop.f32.mrf.mxu0
  %4221 = vmatprep.mubr.f32.mxu0 %v3896
  %4222 = vmatmul.mubr.f32.gmra.mxu0 %v3313
  %v4223 = vpop.f32.mrf.mxu0
  %v4224 = vadd.f32 %v3675, %v4223
  %v4225 = vpop.f32.mrf.mxu0
  %4226 = vmatprep.mubr.f32.mxu0 %v3899
  %4227 = vmatmul.mubr.f32.gmra.mxu0 %v3315
  %v4228 = vpop.f32.mrf.mxu0
  %v4229 = vadd.f32 %v3677, %v4228
  %v4230 = vpop.f32.mrf.mxu0
  %4231 = vmatprep.mubr.f32.mxu0 %v3902
  %4232 = vmatmul.mubr.f32.gmra.mxu0 %v3317
  %v4233 = vpop.f32.mrf.mxu0
  %v4234 = vadd.f32 %v3679, %v4233
  %v4235 = vpop.f32.mrf.mxu0
  %4236 = vmatprep.mubr.f32.mxu0 %v3905
  %4237 = vmatmul.mubr.f32.gmra.mxu0 %v3319
  %v4238 = vpop.f32.mrf.mxu0
  %v4239 = vadd.f32 %v3681, %v4238
  %v4240 = vpop.f32.mrf.mxu0
  %4241 = vmatprep.mubr.f32.mxu0 %v3908
  %4242 = vmatmul.mubr.f32.gmra.mxu0 %v3321
  %v4243 = vpop.f32.mrf.mxu0
  %v4244 = vadd.f32 %v3683, %v4243
  %v4245 = vpop.f32.mrf.mxu0
  %4246 = vmatprep.mubr.f32.mxu0 %v3911
  %4247 = vmatmul.mubr.f32.gmra.mxu0 %v3323
  %v4248 = vpop.f32.mrf.mxu0
  %v4249 = vadd.f32 %v3685, %v4248
  %v4250 = vpop.f32.mrf.mxu0
  %4251 = vmatprep.mubr.f32.mxu0 %v3914
  %4252 = vmatmul.mubr.f32.gmra.mxu0 %v3325
  %v4253 = vpop.f32.mrf.mxu0
  %v4254 = vadd.f32 %v3687, %v4253
  %v4255 = vpop.f32.mrf.mxu0
  %4256 = vmatprep.mubr.f32.mxu0 %v3917
  %4257 = vmatmul.mubr.f32.gmra.mxu0 %v3327
  %v4258 = vpop.f32.mrf.mxu0
  %v4259 = vadd.f32 %v3689, %v4258
  %v4260 = vpop.f32.mrf.mxu0
  %4261 = vmatprep.mubr.f32.mxu0 %v3920
  %4262 = vmatmul.mubr.f32.gmra.mxu0 %v3329
  %v4263 = vpop.f32.mrf.mxu0
  %v4264 = vadd.f32 %v3691, %v4263
  %v4265 = vpop.f32.mrf.mxu0
  %4266 = vmatprep.mubr.f32.mxu0 %v3923
  %4267 = vmatmul.mubr.f32.gmra.mxu0 %v3331
  %v4268 = vpop.f32.mrf.mxu0
  %v4269 = vadd.f32 %v3693, %v4268
  %v4270 = vpop.f32.mrf.mxu0
  %4271 = vmatprep.mubr.f32.mxu0 %v3926
  %4272 = vmatmul.mubr.f32.gmra.mxu0 %v3333
  %v4273 = vpop.f32.mrf.mxu0
  %v4274 = vadd.f32 %v3695, %v4273
  %v4275 = vpop.f32.mrf.mxu0
  %4276 = vmatprep.mubr.f32.mxu0 %v3929
  %4277 = vmatmul.mubr.f32.gmra.mxu0 %v3335
  %v4278 = vpop.f32.mrf.mxu0
  %v4279 = vadd.f32 %v3697, %v4278
  %v4280 = vpop.f32.mrf.mxu0
  %4281 = vmatprep.mubr.f32.mxu0 %v3932
  %4282 = vmatmul.mubr.f32.gmra.mxu0 %v3337
  %v4283 = vpop.f32.mrf.mxu0
  %v4284 = vadd.f32 %v3699, %v4283
  %v4285 = vpop.f32.mrf.mxu0
  %4286 = vmatprep.mubr.f32.mxu0 %v3935
  %4287 = vmatmul.mubr.f32.gmra.mxu0 %v3339
  %v4288 = vpop.f32.mrf.mxu0
  %v4289 = vadd.f32 %v3701, %v4288
  %v4290 = vpop.f32.mrf.mxu0
  %4291 = vmatprep.mubr.f32.mxu0 %v3938
  %4292 = vmatmul.mubr.f32.gmra.mxu0 %v3341
  %v4293 = vpop.f32.mrf.mxu0
  %v4294 = vadd.f32 %v3703, %v4293
  %v4295 = vpop.f32.mrf.mxu0
  %4296 = vmatprep.mubr.f32.mxu0 %v3941
  %4297 = vmatmul.mubr.f32.gmra.mxu0 %v3343
  %v4298 = vpop.f32.mrf.mxu0
  %v4299 = vadd.f32 %v3705, %v4298
  %v4300 = vpop.f32.mrf.mxu0
  %4301 = vmatprep.mubr.f32.mxu0 %v3944
  %4302 = vmatmul.mubr.f32.gmra.mxu0 %v3345
  %v4303 = vpop.f32.mrf.mxu0
  %v4304 = vadd.f32 %v3707, %v4303
  %v4305 = vpop.f32.mrf.mxu0
  %4306 = vmatprep.mubr.f32.mxu0 %v3947
  %4307 = vmatmul.mubr.f32.gmra.mxu0 %v3347
  %v4308 = vpop.f32.mrf.mxu0
  %v4309 = vadd.f32 %v3709, %v4308
  %v4310 = vpop.f32.mrf.mxu0
  %4311 = vmatprep.mubr.f32.mxu0 %v3950
  %4312 = vmatmul.mubr.f32.gmra.mxu0 %v3349
  %v4313 = vpop.f32.mrf.mxu0
  %v4314 = vadd.f32 %v3711, %v4313
  %v4315 = vpop.f32.mrf.mxu0
  %4316 = vdwg.mxu0
  %v4317 = vld [vmem:[%s9] sm:$0xff]
  %v4318 = vld [vmem:[%s9 + $0x8] sm:$0xff]
  %v4319 = vld [vmem:[%s9 + $0x10] sm:$0xff]
  %v4320 = vld [vmem:[%s9 + $0x18] sm:$0xff]
  %v4321 = vld [vmem:[%s9 + $0x20] sm:$0xff]
  %v4322 = vld [vmem:[%s9 + $0x28] sm:$0xff]
  %v4323 = vld [vmem:[%s9 + $0x30] sm:$0xff]
  %v4324 = vld [vmem:[%s9 + $0x38] sm:$0xff]
  %v4325 = vld [vmem:[%s9 + $0x40] sm:$0xff]
  %v4326 = vld [vmem:[%s9 + $0x48] sm:$0xff]
  %v4327 = vld [vmem:[%s9 + $0x50] sm:$0xff]
  %v4328 = vld [vmem:[%s9 + $0x58] sm:$0xff]
  %v4329 = vld [vmem:[%s9 + $0x60] sm:$0xff]
  %v4330 = vld [vmem:[%s9 + $0x68] sm:$0xff]
  %v4331 = vld [vmem:[%s9 + $0x70] sm:$0xff]
  %v4332 = vld [vmem:[%s9 + $0x78] sm:$0xff]
  %v4333 = vld [vmem:[%s9 + $0x80] sm:$0xff]
  %v4334 = vld [vmem:[%s9 + $0x88] sm:$0xff]
  %v4335 = vld [vmem:[%s9 + $0x90] sm:$0xff]
  %v4336 = vld [vmem:[%s9 + $0x98] sm:$0xff]
  %v4337 = vld [vmem:[%s9 + $0xa0] sm:$0xff]
  %v4338 = vld [vmem:[%s9 + $0xa8] sm:$0xff]
  %v4339 = vld [vmem:[%s9 + $0xb0] sm:$0xff]
  %v4340 = vld [vmem:[%s9 + $0xb8] sm:$0xff]
  %v4341 = vld [vmem:[%s9 + $0xc0] sm:$0xff]
  %v4342 = vld [vmem:[%s9 + $0xc8] sm:$0xff]
  %v4343 = vld [vmem:[%s9 + $0xd0] sm:$0xff]
  %v4344 = vld [vmem:[%s9 + $0xd8] sm:$0xff]
  %v4345 = vld [vmem:[%s9 + $0xe0] sm:$0xff]
  %v4346 = vld [vmem:[%s9 + $0xe8] sm:$0xff]
  %v4347 = vld [vmem:[%s9 + $0xf0] sm:$0xff]
  %v4348 = vld [vmem:[%s9 + $0xf8] sm:$0xff]
  %v4349 = vld [vmem:[%s9 + $0x100] sm:$0xff]
  %v4350 = vld [vmem:[%s9 + $0x108] sm:$0xff]
  %v4351 = vld [vmem:[%s9 + $0x110] sm:$0xff]
  %v4352 = vld [vmem:[%s9 + $0x118] sm:$0xff]
  %v4353 = vld [vmem:[%s9 + $0x120] sm:$0xff]
  %v4354 = vld [vmem:[%s9 + $0x128] sm:$0xff]
  %v4355 = vld [vmem:[%s9 + $0x130] sm:$0xff]
  %v4356 = vld [vmem:[%s9 + $0x138] sm:$0xff]
  %v4357 = vld [vmem:[%s9 + $0x140] sm:$0xff]
  %v4358 = vld [vmem:[%s9 + $0x148] sm:$0xff]
  %v4359 = vld [vmem:[%s9 + $0x150] sm:$0xff]
  %v4360 = vld [vmem:[%s9 + $0x158] sm:$0xff]
  %v4361 = vld [vmem:[%s9 + $0x160] sm:$0xff]
  %v4362 = vld [vmem:[%s9 + $0x168] sm:$0xff]
  %v4363 = vld [vmem:[%s9 + $0x170] sm:$0xff]
  %v4364 = vld [vmem:[%s9 + $0x178] sm:$0xff]
  %v4365 = vld [vmem:[%s9 + $0x180] sm:$0xff]
  %v4366 = vld [vmem:[%s9 + $0x188] sm:$0xff]
  %v4367 = vld [vmem:[%s9 + $0x190] sm:$0xff]
  %v4368 = vld [vmem:[%s9 + $0x198] sm:$0xff]
  %v4369 = vld [vmem:[%s9 + $0x1a0] sm:$0xff]
  %v4370 = vld [vmem:[%s9 + $0x1a8] sm:$0xff]
  %v4371 = vld [vmem:[%s9 + $0x1b0] sm:$0xff]
  %v4372 = vld [vmem:[%s9 + $0x1b8] sm:$0xff]
  %v4373 = vld [vmem:[%s9 + $0x1c0] sm:$0xff]
  %v4374 = vld [vmem:[%s9 + $0x1c8] sm:$0xff]
  %v4375 = vld [vmem:[%s9 + $0x1d0] sm:$0xff]
  %v4376 = vld [vmem:[%s9 + $0x1d8] sm:$0xff]
  %v4378 = vsel %vm1751, %v4317, 0
  %v4381 = vsel %vm1751, %v4318, 0
  %v4384 = vsel %vm1751, %v4319, 0
  %v4387 = vsel %vm1751, %v4320, 0
  %v4390 = vsel %vm1751, %v4321, 0
  %v4393 = vsel %vm1751, %v4322, 0
  %v4396 = vsel %vm1751, %v4323, 0
  %v4399 = vsel %vm1751, %v4324, 0
  %v4402 = vsel %vm1751, %v4325, 0
  %v4405 = vsel %vm1751, %v4326, 0
  %v4408 = vsel %vm1751, %v4327, 0
  %v4411 = vsel %vm1751, %v4328, 0
  %v4414 = vsel %vm1751, %v4329, 0
  %v4417 = vsel %vm1751, %v4330, 0
  %v4420 = vsel %vm1751, %v4331, 0
  %v4423 = vsel %vm1751, %v4332, 0
  %v4426 = vsel %vm1751, %v4333, 0
  %v4429 = vsel %vm1751, %v4334, 0
  %v4432 = vsel %vm1751, %v4335, 0
  %v4435 = vsel %vm1751, %v4336, 0
  %v4438 = vsel %vm1751, %v4337, 0
  %v4441 = vsel %vm1751, %v4338, 0
  %v4444 = vsel %vm1751, %v4339, 0
  %v4447 = vsel %vm1751, %v4340, 0
  %v4450 = vsel %vm1751, %v4341, 0
  %v4453 = vsel %vm1751, %v4342, 0
  %v4456 = vsel %vm1751, %v4343, 0
  %v4459 = vsel %vm1751, %v4344, 0
  %v4462 = vsel %vm1751, %v4345, 0
  %v4465 = vsel %vm1751, %v4346, 0
  %v4468 = vsel %vm1751, %v4347, 0
  %v4471 = vsel %vm1751, %v4348, 0
  %v4474 = vsel %vm1751, %v4349, 0
  %v4477 = vsel %vm1751, %v4350, 0
  %v4480 = vsel %vm1751, %v4351, 0
  %v4483 = vsel %vm1751, %v4352, 0
  %v4486 = vsel %vm1751, %v4353, 0
  %v4489 = vsel %vm1751, %v4354, 0
  %v4492 = vsel %vm1751, %v4355, 0
  %v4495 = vsel %vm1751, %v4356, 0
  %v4498 = vsel %vm1751, %v4357, 0
  %v4501 = vsel %vm1751, %v4358, 0
  %v4504 = vsel %vm1751, %v4359, 0
  %v4507 = vsel %vm1751, %v4360, 0
  %v4510 = vsel %vm1751, %v4361, 0
  %v4513 = vsel %vm1751, %v4362, 0
  %v4516 = vsel %vm1751, %v4363, 0
  %v4519 = vsel %vm1751, %v4364, 0
  %v4522 = vsel %vm1751, %v4365, 0
  %v4525 = vsel %vm1751, %v4366, 0
  %v4528 = vsel %vm1751, %v4367, 0
  %v4531 = vsel %vm1751, %v4368, 0
  %v4534 = vsel %vm1751, %v4369, 0
  %v4537 = vsel %vm1751, %v4370, 0
  %v4540 = vsel %vm1751, %v4371, 0
  %v4543 = vsel %vm1751, %v4372, 0
  %v4546 = vsel %vm1751, %v4373, 0
  %v4549 = vsel %vm1751, %v4374, 0
  %v4552 = vsel %vm1751, %v4375, 0
  %v4555 = vsel %vm1751, %v4376, 0
  %v4558 = vsel %vm574, %v3229, 0
  %4560 = vmatprep.subr.mxu0 0.0
  %4561 = vmatpush1.msra.mxu0 0.0
  %4562 = vmatprep.subr.mxu0 0.0
  %4563 = vmatpush1.msra.mxu0 0.0
  %4564 = vmatprep.subr.mxu0 0.0
  %4565 = vmatpush1.msra.mxu0 0.0
  %4566 = vmatprep.subr.mxu0 0.0
  %4567 = vmatpush1.msra.mxu0 0.0
  %4568 = vmatprep.subr.mxu0 0.0
  %4569 = vmatpush1.msra.mxu0 0.0
  %4570 = vmatprep.subr.mxu0 0.0
  %4571 = vmatpush1.msra.mxu0 0.0
  %4572 = vmatprep.subr.mxu0 0.0
  %4573 = vmatpush1.msra.mxu0 0.0
  %4574 = vmatprep.subr.mxu0 0.0
  %4575 = vmatpush1.msra.mxu0 0.0
  %4576 = vmatprep.subr.mxu0 0.0
  %4577 = vmatpush1.msra.mxu0 0.0
  %4578 = vmatprep.subr.mxu0 0.0
  %4579 = vmatpush1.msra.mxu0 0.0
  %4580 = vmatprep.subr.mxu0 0.0
  %4581 = vmatpush1.msra.mxu0 0.0
  %4582 = vmatprep.subr.mxu0 0.0
  %4583 = vmatpush1.msra.mxu0 0.0
  %4584 = vmatprep.subr.mxu0 0.0
  %4585 = vmatpush1.msra.mxu0 0.0
  %4586 = vmatprep.subr.mxu0 0.0
  %4587 = vmatpush1.msra.mxu0 0.0
  %4588 = vmatprep.subr.mxu0 0.0
  %4589 = vmatpush1.msra.mxu0 %v4558
  %4590 = vmatprep.subr.mxu0 0.0
  %4591 = vmatpush1.msra.mxu0 %v3230
  %4592 = vmatprep.subr.mxu0 0.0
  %4593 = vmatpush2.msra.mxu0 0.0
  %4594 = vmatprep.subr.mxu0 0.0
  %4595 = vmatpush2.msra.mxu0 0.0
  %4596 = vmatprep.subr.mxu0 0.0
  %4597 = vmatpush2.msra.mxu0 0.0
  %4598 = vmatprep.subr.mxu0 0.0
  %4599 = vmatpush2.msra.mxu0 0.0
  %4600 = vmatprep.subr.mxu0 0.0
  %4601 = vmatpush2.msra.mxu0 0.0
  %4602 = vmatprep.subr.mxu0 0.0
  %4603 = vmatpush2.msra.mxu0 0.0
  %4604 = vmatprep.subr.mxu0 0.0
  %4605 = vmatpush2.msra.mxu0 0.0
  %4606 = vmatprep.subr.mxu0 0.0
  %4607 = vmatpush2.msra.mxu0 0.0
  %4608 = vmatprep.subr.mxu0 0.0
  %4609 = vmatpush2.msra.mxu0 0.0
  %4610 = vmatprep.subr.mxu0 0.0
  %4611 = vmatpush2.msra.mxu0 0.0
  %4612 = vmatprep.subr.mxu0 0.0
  %4613 = vmatpush2.msra.mxu0 0.0
  %4614 = vmatprep.subr.mxu0 0.0
  %4615 = vmatpush2.msra.mxu0 0.0
  %4616 = vmatprep.subr.mxu0 0.0
  %4617 = vmatpush2.msra.mxu0 0.0
  %4618 = vmatprep.subr.mxu0 0.0
  %4619 = vmatpush2.msra.mxu0 0.0
  %4620 = vmatprep.subr.mxu0 0.0
  %4621 = vmatpush2.msra.mxu0 0.0
  %4622 = vmatprep.subr.mxu0 0.0
  %4623 = vmatpush2.msra.mxu0 0.0
  %4624 = vmatprep.mubr.f32.mxu0 0.0
  %4625 = vmatmul.mubr.f32.gmra.mxu0 %v4378
  %v4626 = vpop.f32.mrf.mxu0
  %v4627 = vadd.f32 0.0, %v4626
  %v4628 = vpop.f32.mrf.mxu0
  %4629 = vmatprep.mubr.f32.mxu0 0.0
  %4630 = vmatmul.mubr.f32.gmra.mxu0 %v4381
  %v4631 = vpop.f32.mrf.mxu0
  %v4632 = vadd.f32 0.0, %v4631
  %v4633 = vpop.f32.mrf.mxu0
  %4634 = vmatprep.mubr.f32.mxu0 0.0
  %4635 = vmatmul.mubr.f32.gmra.mxu0 %v4384
  %v4636 = vpop.f32.mrf.mxu0
  %v4637 = vadd.f32 0.0, %v4636
  %v4638 = vpop.f32.mrf.mxu0
  %4639 = vmatprep.mubr.f32.mxu0 0.0
  %4640 = vmatmul.mubr.f32.gmra.mxu0 %v4387
  %v4641 = vpop.f32.mrf.mxu0
  %v4642 = vadd.f32 0.0, %v4641
  %v4643 = vpop.f32.mrf.mxu0
  %4644 = vmatprep.mubr.f32.mxu0 0.0
  %4645 = vmatmul.mubr.f32.gmra.mxu0 %v4390
  %v4646 = vpop.f32.mrf.mxu0
  %v4647 = vadd.f32 0.0, %v4646
  %v4648 = vpop.f32.mrf.mxu0
  %4649 = vmatprep.mubr.f32.mxu0 0.0
  %4650 = vmatmul.mubr.f32.gmra.mxu0 %v4393
  %v4651 = vpop.f32.mrf.mxu0
  %v4652 = vadd.f32 0.0, %v4651
  %v4653 = vpop.f32.mrf.mxu0
  %4654 = vmatprep.mubr.f32.mxu0 0.0
  %4655 = vmatmul.mubr.f32.gmra.mxu0 %v4396
  %v4656 = vpop.f32.mrf.mxu0
  %v4657 = vadd.f32 0.0, %v4656
  %v4658 = vpop.f32.mrf.mxu0
  %4659 = vmatprep.mubr.f32.mxu0 0.0
  %4660 = vmatmul.mubr.f32.gmra.mxu0 %v4399
  %v4661 = vpop.f32.mrf.mxu0
  %v4662 = vadd.f32 0.0, %v4661
  %v4663 = vpop.f32.mrf.mxu0
  %4664 = vmatprep.mubr.f32.mxu0 0.0
  %4665 = vmatmul.mubr.f32.gmra.mxu0 %v4402
  %v4666 = vpop.f32.mrf.mxu0
  %v4667 = vadd.f32 0.0, %v4666
  %v4668 = vpop.f32.mrf.mxu0
  %4669 = vmatprep.mubr.f32.mxu0 0.0
  %4670 = vmatmul.mubr.f32.gmra.mxu0 %v4405
  %v4671 = vpop.f32.mrf.mxu0
  %v4672 = vadd.f32 0.0, %v4671
  %v4673 = vpop.f32.mrf.mxu0
  %4674 = vmatprep.mubr.f32.mxu0 0.0
  %4675 = vmatmul.mubr.f32.gmra.mxu0 %v4408
  %v4676 = vpop.f32.mrf.mxu0
  %v4677 = vadd.f32 0.0, %v4676
  %v4678 = vpop.f32.mrf.mxu0
  %4679 = vmatprep.mubr.f32.mxu0 0.0
  %4680 = vmatmul.mubr.f32.gmra.mxu0 %v4411
  %v4681 = vpop.f32.mrf.mxu0
  %v4682 = vadd.f32 0.0, %v4681
  %v4683 = vpop.f32.mrf.mxu0
  %4684 = vmatprep.mubr.f32.mxu0 0.0
  %4685 = vmatmul.mubr.f32.gmra.mxu0 %v4414
  %v4686 = vpop.f32.mrf.mxu0
  %v4687 = vadd.f32 0.0, %v4686
  %v4688 = vpop.f32.mrf.mxu0
  %4689 = vmatprep.mubr.f32.mxu0 0.0
  %4690 = vmatmul.mubr.f32.gmra.mxu0 %v4417
  %v4691 = vpop.f32.mrf.mxu0
  %v4692 = vadd.f32 0.0, %v4691
  %v4693 = vpop.f32.mrf.mxu0
  %4694 = vmatprep.mubr.f32.mxu0 0.0
  %4695 = vmatmul.mubr.f32.gmra.mxu0 %v4420
  %v4696 = vpop.f32.mrf.mxu0
  %v4697 = vadd.f32 0.0, %v4696
  %v4698 = vpop.f32.mrf.mxu0
  %4699 = vmatprep.mubr.f32.mxu0 0.0
  %4700 = vmatmul.mubr.f32.gmra.mxu0 %v4423
  %v4701 = vpop.f32.mrf.mxu0
  %v4702 = vadd.f32 0.0, %v4701
  %v4703 = vpop.f32.mrf.mxu0
  %4704 = vmatprep.mubr.f32.mxu0 0.0
  %4705 = vmatmul.mubr.f32.gmra.mxu0 %v4426
  %v4706 = vpop.f32.mrf.mxu0
  %v4707 = vadd.f32 0.0, %v4706
  %v4708 = vpop.f32.mrf.mxu0
  %4709 = vmatprep.mubr.f32.mxu0 0.0
  %4710 = vmatmul.mubr.f32.gmra.mxu0 %v4429
  %v4711 = vpop.f32.mrf.mxu0
  %v4712 = vadd.f32 0.0, %v4711
  %v4713 = vpop.f32.mrf.mxu0
  %4714 = vmatprep.mubr.f32.mxu0 0.0
  %4715 = vmatmul.mubr.f32.gmra.mxu0 %v4432
  %v4716 = vpop.f32.mrf.mxu0
  %v4717 = vadd.f32 0.0, %v4716
  %v4718 = vpop.f32.mrf.mxu0
  %4719 = vmatprep.mubr.f32.mxu0 0.0
  %4720 = vmatmul.mubr.f32.gmra.mxu0 %v4435
  %v4721 = vpop.f32.mrf.mxu0
  %v4722 = vadd.f32 0.0, %v4721
  %v4723 = vpop.f32.mrf.mxu0
  %4724 = vmatprep.mubr.f32.mxu0 0.0
  %4725 = vmatmul.mubr.f32.gmra.mxu0 %v4438
  %v4726 = vpop.f32.mrf.mxu0
  %v4727 = vadd.f32 0.0, %v4726
  %v4728 = vpop.f32.mrf.mxu0
  %4729 = vmatprep.mubr.f32.mxu0 0.0
  %4730 = vmatmul.mubr.f32.gmra.mxu0 %v4441
  %v4731 = vpop.f32.mrf.mxu0
  %v4732 = vadd.f32 0.0, %v4731
  %v4733 = vpop.f32.mrf.mxu0
  %4734 = vmatprep.mubr.f32.mxu0 0.0
  %4735 = vmatmul.mubr.f32.gmra.mxu0 %v4444
  %v4736 = vpop.f32.mrf.mxu0
  %v4737 = vadd.f32 0.0, %v4736
  %v4738 = vpop.f32.mrf.mxu0
  %4739 = vmatprep.mubr.f32.mxu0 0.0
  %4740 = vmatmul.mubr.f32.gmra.mxu0 %v4447
  %v4741 = vpop.f32.mrf.mxu0
  %v4742 = vadd.f32 0.0, %v4741
  %v4743 = vpop.f32.mrf.mxu0
  %4744 = vmatprep.mubr.f32.mxu0 0.0
  %4745 = vmatmul.mubr.f32.gmra.mxu0 %v4450
  %v4746 = vpop.f32.mrf.mxu0
  %v4747 = vadd.f32 0.0, %v4746
  %v4748 = vpop.f32.mrf.mxu0
  %4749 = vmatprep.mubr.f32.mxu0 0.0
  %4750 = vmatmul.mubr.f32.gmra.mxu0 %v4453
  %v4751 = vpop.f32.mrf.mxu0
  %v4752 = vadd.f32 0.0, %v4751
  %v4753 = vpop.f32.mrf.mxu0
  %4754 = vmatprep.mubr.f32.mxu0 0.0
  %4755 = vmatmul.mubr.f32.gmra.mxu0 %v4456
  %v4756 = vpop.f32.mrf.mxu0
  %v4757 = vadd.f32 0.0, %v4756
  %v4758 = vpop.f32.mrf.mxu0
  %4759 = vmatprep.mubr.f32.mxu0 0.0
  %4760 = vmatmul.mubr.f32.gmra.mxu0 %v4459
  %v4761 = vpop.f32.mrf.mxu0
  %v4762 = vadd.f32 0.0, %v4761
  %v4763 = vpop.f32.mrf.mxu0
  %4764 = vmatprep.mubr.f32.mxu0 0.0
  %4765 = vmatmul.mubr.f32.gmra.mxu0 %v4462
  %v4766 = vpop.f32.mrf.mxu0
  %v4767 = vadd.f32 0.0, %v4766
  %v4768 = vpop.f32.mrf.mxu0
  %4769 = vmatprep.mubr.f32.mxu0 0.0
  %4770 = vmatmul.mubr.f32.gmra.mxu0 %v4465
  %v4771 = vpop.f32.mrf.mxu0
  %v4772 = vadd.f32 0.0, %v4771
  %v4773 = vpop.f32.mrf.mxu0
  %4774 = vmatprep.mubr.f32.mxu0 0.0
  %4775 = vmatmul.mubr.f32.gmra.mxu0 %v4468
  %v4776 = vpop.f32.mrf.mxu0
  %v4777 = vadd.f32 0.0, %v4776
  %v4778 = vpop.f32.mrf.mxu0
  %4779 = vmatprep.mubr.f32.mxu0 0.0
  %4780 = vmatmul.mubr.f32.gmra.mxu0 %v4471
  %v4781 = vpop.f32.mrf.mxu0
  %v4782 = vadd.f32 0.0, %v4781
  %v4783 = vpop.f32.mrf.mxu0
  %4784 = vmatprep.mubr.f32.mxu0 0.0
  %4785 = vmatmul.mubr.f32.gmra.mxu0 %v4474
  %v4786 = vpop.f32.mrf.mxu0
  %v4787 = vadd.f32 0.0, %v4786
  %v4788 = vpop.f32.mrf.mxu0
  %4789 = vmatprep.mubr.f32.mxu0 0.0
  %4790 = vmatmul.mubr.f32.gmra.mxu0 %v4477
  %v4791 = vpop.f32.mrf.mxu0
  %v4792 = vadd.f32 0.0, %v4791
  %v4793 = vpop.f32.mrf.mxu0
  %4794 = vmatprep.mubr.f32.mxu0 0.0
  %4795 = vmatmul.mubr.f32.gmra.mxu0 %v4480
  %v4796 = vpop.f32.mrf.mxu0
  %v4797 = vadd.f32 0.0, %v4796
  %v4798 = vpop.f32.mrf.mxu0
  %4799 = vmatprep.mubr.f32.mxu0 0.0
  %4800 = vmatmul.mubr.f32.gmra.mxu0 %v4483
  %v4801 = vpop.f32.mrf.mxu0
  %v4802 = vadd.f32 0.0, %v4801
  %v4803 = vpop.f32.mrf.mxu0
  %4804 = vmatprep.mubr.f32.mxu0 0.0
  %4805 = vmatmul.mubr.f32.gmra.mxu0 %v4486
  %v4806 = vpop.f32.mrf.mxu0
  %v4807 = vadd.f32 0.0, %v4806
  %v4808 = vpop.f32.mrf.mxu0
  %4809 = vmatprep.mubr.f32.mxu0 0.0
  %4810 = vmatmul.mubr.f32.gmra.mxu0 %v4489
  %v4811 = vpop.f32.mrf.mxu0
  %v4812 = vadd.f32 0.0, %v4811
  %v4813 = vpop.f32.mrf.mxu0
  %4814 = vmatprep.mubr.f32.mxu0 0.0
  %4815 = vmatmul.mubr.f32.gmra.mxu0 %v4492
  %v4816 = vpop.f32.mrf.mxu0
  %v4817 = vadd.f32 0.0, %v4816
  %v4818 = vpop.f32.mrf.mxu0
  %4819 = vmatprep.mubr.f32.mxu0 0.0
  %4820 = vmatmul.mubr.f32.gmra.mxu0 %v4495
  %v4821 = vpop.f32.mrf.mxu0
  %v4822 = vadd.f32 0.0, %v4821
  %v4823 = vpop.f32.mrf.mxu0
  %4824 = vmatprep.mubr.f32.mxu0 0.0
  %4825 = vmatmul.mubr.f32.gmra.mxu0 %v4498
  %v4826 = vpop.f32.mrf.mxu0
  %v4827 = vadd.f32 0.0, %v4826
  %v4828 = vpop.f32.mrf.mxu0
  %4829 = vmatprep.mubr.f32.mxu0 0.0
  %4830 = vmatmul.mubr.f32.gmra.mxu0 %v4501
  %v4831 = vpop.f32.mrf.mxu0
  %v4832 = vadd.f32 0.0, %v4831
  %v4833 = vpop.f32.mrf.mxu0
  %4834 = vmatprep.mubr.f32.mxu0 0.0
  %4835 = vmatmul.mubr.f32.gmra.mxu0 %v4504
  %v4836 = vpop.f32.mrf.mxu0
  %v4837 = vadd.f32 0.0, %v4836
  %v4838 = vpop.f32.mrf.mxu0
  %4839 = vmatprep.mubr.f32.mxu0 0.0
  %4840 = vmatmul.mubr.f32.gmra.mxu0 %v4507
  %v4841 = vpop.f32.mrf.mxu0
  %v4842 = vadd.f32 0.0, %v4841
  %v4843 = vpop.f32.mrf.mxu0
  %4844 = vmatprep.mubr.f32.mxu0 0.0
  %4845 = vmatmul.mubr.f32.gmra.mxu0 %v4510
  %v4846 = vpop.f32.mrf.mxu0
  %v4847 = vadd.f32 0.0, %v4846
  %v4848 = vpop.f32.mrf.mxu0
  %4849 = vmatprep.mubr.f32.mxu0 0.0
  %4850 = vmatmul.mubr.f32.gmra.mxu0 %v4513
  %v4851 = vpop.f32.mrf.mxu0
  %v4852 = vadd.f32 0.0, %v4851
  %v4853 = vpop.f32.mrf.mxu0
  %4854 = vmatprep.mubr.f32.mxu0 0.0
  %4855 = vmatmul.mubr.f32.gmra.mxu0 %v4516
  %v4856 = vpop.f32.mrf.mxu0
  %v4857 = vadd.f32 0.0, %v4856
  %v4858 = vpop.f32.mrf.mxu0
  %4859 = vmatprep.mubr.f32.mxu0 0.0
  %4860 = vmatmul.mubr.f32.gmra.mxu0 %v4519
  %v4861 = vpop.f32.mrf.mxu0
  %v4862 = vadd.f32 0.0, %v4861
  %v4863 = vpop.f32.mrf.mxu0
  %4864 = vmatprep.mubr.f32.mxu0 0.0
  %4865 = vmatmul.mubr.f32.gmra.mxu0 %v4522
  %v4866 = vpop.f32.mrf.mxu0
  %v4867 = vadd.f32 0.0, %v4866
  %v4868 = vpop.f32.mrf.mxu0
  %4869 = vmatprep.mubr.f32.mxu0 0.0
  %4870 = vmatmul.mubr.f32.gmra.mxu0 %v4525
  %v4871 = vpop.f32.mrf.mxu0
  %v4872 = vadd.f32 0.0, %v4871
  %v4873 = vpop.f32.mrf.mxu0
  %4874 = vmatprep.mubr.f32.mxu0 0.0
  %4875 = vmatmul.mubr.f32.gmra.mxu0 %v4528
  %v4876 = vpop.f32.mrf.mxu0
  %v4877 = vadd.f32 0.0, %v4876
  %v4878 = vpop.f32.mrf.mxu0
  %4879 = vmatprep.mubr.f32.mxu0 0.0
  %4880 = vmatmul.mubr.f32.gmra.mxu0 %v4531
  %v4881 = vpop.f32.mrf.mxu0
  %v4882 = vadd.f32 0.0, %v4881
  %v4883 = vpop.f32.mrf.mxu0
  %4884 = vmatprep.mubr.f32.mxu0 0.0
  %4885 = vmatmul.mubr.f32.gmra.mxu0 %v4534
  %v4886 = vpop.f32.mrf.mxu0
  %v4887 = vadd.f32 0.0, %v4886
  %v4888 = vpop.f32.mrf.mxu0
  %4889 = vmatprep.mubr.f32.mxu0 0.0
  %4890 = vmatmul.mubr.f32.gmra.mxu0 %v4537
  %v4891 = vpop.f32.mrf.mxu0
  %v4892 = vadd.f32 0.0, %v4891
  %v4893 = vpop.f32.mrf.mxu0
  %4894 = vmatprep.mubr.f32.mxu0 0.0
  %4895 = vmatmul.mubr.f32.gmra.mxu0 %v4540
  %v4896 = vpop.f32.mrf.mxu0
  %v4897 = vadd.f32 0.0, %v4896
  %v4898 = vpop.f32.mrf.mxu0
  %4899 = vmatprep.mubr.f32.mxu0 0.0
  %4900 = vmatmul.mubr.f32.gmra.mxu0 %v4543
  %v4901 = vpop.f32.mrf.mxu0
  %v4902 = vadd.f32 0.0, %v4901
  %v4903 = vpop.f32.mrf.mxu0
  %4904 = vmatprep.mubr.f32.mxu0 0.0
  %4905 = vmatmul.mubr.f32.gmra.mxu0 %v4546
  %v4906 = vpop.f32.mrf.mxu0
  %v4907 = vadd.f32 0.0, %v4906
  %v4908 = vpop.f32.mrf.mxu0
  %4909 = vmatprep.mubr.f32.mxu0 0.0
  %4910 = vmatmul.mubr.f32.gmra.mxu0 %v4549
  %v4911 = vpop.f32.mrf.mxu0
  %v4912 = vadd.f32 0.0, %v4911
  %v4913 = vpop.f32.mrf.mxu0
  %4914 = vmatprep.mubr.f32.mxu0 0.0
  %4915 = vmatmul.mubr.f32.gmra.mxu0 %v4552
  %v4916 = vpop.f32.mrf.mxu0
  %v4917 = vadd.f32 0.0, %v4916
  %v4918 = vpop.f32.mrf.mxu0
  %4919 = vmatprep.mubr.f32.mxu0 0.0
  %4920 = vmatmul.mubr.f32.gmra.mxu0 %v4555
  %v4921 = vpop.f32.mrf.mxu0
  %v4922 = vadd.f32 0.0, %v4921
  %v4923 = vpop.f32.mrf.mxu0
  %4924 = vdwg.mxu0
  %v4925 = vld [vmem:[%s10] sm:$0xff]
  %v4926 = vld [vmem:[%s10 + $0x8] sm:$0xff]
  %v4927 = vld [vmem:[%s10 + $0x10] sm:$0xff]
  %v4928 = vld [vmem:[%s10 + $0x18] sm:$0xff]
  %v4929 = vld [vmem:[%s10 + $0x20] sm:$0xff]
  %v4930 = vld [vmem:[%s10 + $0x28] sm:$0xff]
  %v4931 = vld [vmem:[%s10 + $0x30] sm:$0xff]
  %v4932 = vld [vmem:[%s10 + $0x38] sm:$0xff]
  %v4933 = vld [vmem:[%s10 + $0x40] sm:$0xff]
  %v4934 = vld [vmem:[%s10 + $0x48] sm:$0xff]
  %v4935 = vld [vmem:[%s10 + $0x50] sm:$0xff]
  %v4936 = vld [vmem:[%s10 + $0x58] sm:$0xff]
  %v4937 = vld [vmem:[%s10 + $0x60] sm:$0xff]
  %v4938 = vld [vmem:[%s10 + $0x68] sm:$0xff]
  %v4939 = vld [vmem:[%s10 + $0x70] sm:$0xff]
  %v4940 = vld [vmem:[%s10 + $0x78] sm:$0xff]
  %v4941 = vld [vmem:[%s10 + $0x80] sm:$0xff]
  %v4942 = vld [vmem:[%s10 + $0x88] sm:$0xff]
  %v4943 = vld [vmem:[%s10 + $0x90] sm:$0xff]
  %v4944 = vld [vmem:[%s10 + $0x98] sm:$0xff]
  %v4945 = vld [vmem:[%s10 + $0xa0] sm:$0xff]
  %v4946 = vld [vmem:[%s10 + $0xa8] sm:$0xff]
  %v4947 = vld [vmem:[%s10 + $0xb0] sm:$0xff]
  %v4948 = vld [vmem:[%s10 + $0xb8] sm:$0xff]
  %v4949 = vld [vmem:[%s10 + $0xc0] sm:$0xff]
  %v4950 = vld [vmem:[%s10 + $0xc8] sm:$0xff]
  %v4951 = vld [vmem:[%s10 + $0xd0] sm:$0xff]
  %v4952 = vld [vmem:[%s10 + $0xd8] sm:$0xff]
  %v4953 = vld [vmem:[%s10 + $0xe0] sm:$0xff]
  %v4954 = vld [vmem:[%s10 + $0xe8] sm:$0xff]
  %v4955 = vld [vmem:[%s10 + $0xf0] sm:$0xff]
  %v4956 = vld [vmem:[%s10 + $0xf8] sm:$0xff]
  %v4957 = vld [vmem:[%s10 + $0x100] sm:$0xff]
  %v4958 = vld [vmem:[%s10 + $0x108] sm:$0xff]
  %v4959 = vld [vmem:[%s10 + $0x110] sm:$0xff]
  %v4960 = vld [vmem:[%s10 + $0x118] sm:$0xff]
  %v4961 = vld [vmem:[%s10 + $0x120] sm:$0xff]
  %v4962 = vld [vmem:[%s10 + $0x128] sm:$0xff]
  %v4963 = vld [vmem:[%s10 + $0x130] sm:$0xff]
  %v4964 = vld [vmem:[%s10 + $0x138] sm:$0xff]
  %v4965 = vld [vmem:[%s10 + $0x140] sm:$0xff]
  %v4966 = vld [vmem:[%s10 + $0x148] sm:$0xff]
  %v4967 = vld [vmem:[%s10 + $0x150] sm:$0xff]
  %v4968 = vld [vmem:[%s10 + $0x158] sm:$0xff]
  %v4969 = vld [vmem:[%s10 + $0x160] sm:$0xff]
  %v4970 = vld [vmem:[%s10 + $0x168] sm:$0xff]
  %v4971 = vld [vmem:[%s10 + $0x170] sm:$0xff]
  %v4972 = vld [vmem:[%s10 + $0x178] sm:$0xff]
  %v4973 = vmul.f32 %v4627, %v4019
  %v4974 = vmul.f32 %v4632, %v4024
  %v4975 = vmul.f32 %v4637, %v4029
  %v4976 = vmul.f32 %v4642, %v4034
  %v4977 = vmul.f32 %v4647, %v4039
  %v4978 = vmul.f32 %v4652, %v4044
  %v4979 = vmul.f32 %v4657, %v4049
  %v4980 = vmul.f32 %v4662, %v4054
  %v4981 = vmul.f32 %v4667, %v4059
  %v4982 = vmul.f32 %v4672, %v4064
  %v4983 = vmul.f32 %v4677, %v4069
  %v4984 = vmul.f32 %v4682, %v4074
  %v4985 = vmul.f32 %v4687, %v4079
  %v4986 = vmul.f32 %v4692, %v4084
  %v4987 = vmul.f32 %v4697, %v4089
  %v4988 = vmul.f32 %v4702, %v4094
  %v4989 = vmul.f32 %v4707, %v4099
  %v4990 = vmul.f32 %v4712, %v4104
  %v4991 = vmul.f32 %v4717, %v4109
  %v4992 = vmul.f32 %v4722, %v4114
  %v4993 = vmul.f32 %v4727, %v4119
  %v4994 = vmul.f32 %v4732, %v4124
  %v4995 = vmul.f32 %v4737, %v4129
  %v4996 = vmul.f32 %v4742, %v4134
  %v4997 = vmul.f32 %v4747, %v4139
  %v4998 = vmul.f32 %v4752, %v4144
  %v4999 = vmul.f32 %v4757, %v4149
  %v5000 = vmul.f32 %v4762, %v4154
  %v5001 = vmul.f32 %v4767, %v4159
  %v5002 = vmul.f32 %v4772, %v4164
  %v5003 = vmul.f32 %v4777, %v4169
  %v5004 = vmul.f32 %v4782, %v4174
  %v5005 = vmul.f32 %v4787, %v4179
  %v5006 = vmul.f32 %v4792, %v4184
  %v5007 = vmul.f32 %v4797, %v4189
  %v5008 = vmul.f32 %v4802, %v4194
  %v5009 = vmul.f32 %v4807, %v4199
  %v5010 = vmul.f32 %v4812, %v4204
  %v5011 = vmul.f32 %v4817, %v4209
  %v5012 = vmul.f32 %v4822, %v4214
  %v5013 = vmul.f32 %v4827, %v4219
  %v5014 = vmul.f32 %v4832, %v4224
  %v5015 = vmul.f32 %v4837, %v4229
  %v5016 = vmul.f32 %v4842, %v4234
  %v5017 = vmul.f32 %v4847, %v4239
  %v5018 = vmul.f32 %v4852, %v4244
  %v5019 = vmul.f32 %v4857, %v4249
  %v5020 = vmul.f32 %v4862, %v4254
  %v5021 = vmul.f32 %v4867, %v4259
  %v5022 = vmul.f32 %v4872, %v4264
  %v5023 = vmul.f32 %v4877, %v4269
  %v5024 = vmul.f32 %v4882, %v4274
  %v5025 = vmul.f32 %v4887, %v4279
  %v5026 = vmul.f32 %v4892, %v4284
  %v5027 = vmul.f32 %v4897, %v4289
  %v5028 = vmul.f32 %v4902, %v4294
  %v5029 = vmul.f32 %v4907, %v4299
  %v5030 = vmul.f32 %v4912, %v4304
  %v5031 = vmul.f32 %v4917, %v4309
  %v5032 = vmul.f32 %v4922, %v4314
  %v5034 = vsel %vm2408, %v4928, 0
  %v5037 = vsel %vm2408, %v4932, 0
  %v5040 = vsel %vm2408, %v4936, 0
  %v5043 = vsel %vm2408, %v4940, 0
  %v5046 = vsel %vm2408, %v4944, 0
  %v5049 = vsel %vm2408, %v4948, 0
  %v5052 = vsel %vm2408, %v4952, 0
  %v5055 = vsel %vm2408, %v4956, 0
  %v5058 = vsel %vm2408, %v4960, 0
  %v5061 = vsel %vm2408, %v4964, 0
  %v5064 = vsel %vm2408, %v4968, 0
  %v5067 = vsel %vm2408, %v4972, 0
  %5069 = vmatprep.subr.mxu0 0.0
  %5070 = vmatpush1.msra.mxu0 %v4988
  %5071 = vmatprep.subr.mxu0 0.0
  %5072 = vmatpush1.msra.mxu0 %v4987
  %5073 = vmatprep.subr.mxu0 0.0
  %5074 = vmatpush1.msra.mxu0 %v4986
  %5075 = vmatprep.subr.mxu0 0.0
  %5076 = vmatpush1.msra.mxu0 %v4985
  %5077 = vmatprep.subr.mxu0 0.0
  %5078 = vmatpush1.msra.mxu0 %v4984
  %5079 = vmatprep.subr.mxu0 0.0
  %5080 = vmatpush1.msra.mxu0 %v4983
  %5081 = vmatprep.subr.mxu0 0.0
  %5082 = vmatpush1.msra.mxu0 %v4982
  %5083 = vmatprep.subr.mxu0 0.0
  %5084 = vmatpush1.msra.mxu0 %v4981
  %5085 = vmatprep.subr.mxu0 0.0
  %5086 = vmatpush1.msra.mxu0 %v4980
  %5087 = vmatprep.subr.mxu0 0.0
  %5088 = vmatpush1.msra.mxu0 %v4979
  %5089 = vmatprep.subr.mxu0 0.0
  %5090 = vmatpush1.msra.mxu0 %v4978
  %5091 = vmatprep.subr.mxu0 0.0
  %5092 = vmatpush1.msra.mxu0 %v4977
  %5093 = vmatprep.subr.mxu0 0.0
  %5094 = vmatpush1.msra.mxu0 %v4976
  %5095 = vmatprep.subr.mxu0 0.0
  %5096 = vmatpush1.msra.mxu0 %v4975
  %5097 = vmatprep.subr.mxu0 0.0
  %5098 = vmatpush1.msra.mxu0 %v4974
  %5099 = vmatprep.subr.mxu0 0.0
  %5100 = vmatpush1.msra.mxu0 %v4973
  %5101 = vmatprep.subr.mxu0 0.0
  %5102 = vmatpush2.msra.mxu0 %v5004
  %5103 = vmatprep.subr.mxu0 0.0
  %5104 = vmatpush2.msra.mxu0 %v5003
  %5105 = vmatprep.subr.mxu0 0.0
  %5106 = vmatpush2.msra.mxu0 %v5002
  %5107 = vmatprep.subr.mxu0 0.0
  %5108 = vmatpush2.msra.mxu0 %v5001
  %5109 = vmatprep.subr.mxu0 0.0
  %5110 = vmatpush2.msra.mxu0 %v5000
  %5111 = vmatprep.subr.mxu0 0.0
  %5112 = vmatpush2.msra.mxu0 %v4999
  %5113 = vmatprep.subr.mxu0 0.0
  %5114 = vmatpush2.msra.mxu0 %v4998
  %5115 = vmatprep.subr.mxu0 0.0
  %5116 = vmatpush2.msra.mxu0 %v4997
  %5117 = vmatprep.subr.mxu0 0.0
  %5118 = vmatpush2.msra.mxu0 %v4996
  %5119 = vmatprep.subr.mxu0 0.0
  %5120 = vmatpush2.msra.mxu0 %v4995
  %5121 = vmatprep.subr.mxu0 0.0
  %5122 = vmatpush2.msra.mxu0 %v4994
  %5123 = vmatprep.subr.mxu0 0.0
  %5124 = vmatpush2.msra.mxu0 %v4993
  %5125 = vmatprep.subr.mxu0 0.0
  %5126 = vmatpush2.msra.mxu0 %v4992
  %5127 = vmatprep.subr.mxu0 0.0
  %5128 = vmatpush2.msra.mxu0 %v4991
  %5129 = vmatprep.subr.mxu0 0.0
  %5130 = vmatpush2.msra.mxu0 %v4990
  %5131 = vmatprep.subr.mxu0 0.0
  %5132 = vmatpush2.msra.mxu0 %v4989
  %5133 = vmatprep.mubr.f32.mxu0 %v4926
  %5134 = vmatmul.mubr.f32.gmra.mxu0 %v4925
  %v5135 = vpop.f32.mrf.mxu0
  %v5136 = vadd.f32 0.0, %v5135
  %v5137 = vpop.f32.mrf.mxu0
  %5138 = vmatprep.mubr.f32.mxu0 %v4930
  %5139 = vmatmul.mubr.f32.gmra.mxu0 %v4929
  %v5140 = vpop.f32.mrf.mxu0
  %v5141 = vadd.f32 0.0, %v5140
  %v5142 = vpop.f32.mrf.mxu0
  %5143 = vmatprep.mubr.f32.mxu0 %v4934
  %5144 = vmatmul.mubr.f32.gmra.mxu0 %v4933
  %v5145 = vpop.f32.mrf.mxu0
  %v5146 = vadd.f32 0.0, %v5145
  %v5147 = vpop.f32.mrf.mxu0
  %5148 = vmatprep.mubr.f32.mxu0 %v4938
  %5149 = vmatmul.mubr.f32.gmra.mxu0 %v4937
  %v5150 = vpop.f32.mrf.mxu0
  %v5151 = vadd.f32 0.0, %v5150
  %v5152 = vpop.f32.mrf.mxu0
  %5153 = vmatprep.mubr.f32.mxu0 %v4942
  %5154 = vmatmul.mubr.f32.gmra.mxu0 %v4941
  %v5155 = vpop.f32.mrf.mxu0
  %v5156 = vadd.f32 0.0, %v5155
  %v5157 = vpop.f32.mrf.mxu0
  %5158 = vmatprep.mubr.f32.mxu0 %v4946
  %5159 = vmatmul.mubr.f32.gmra.mxu0 %v4945
  %v5160 = vpop.f32.mrf.mxu0
  %v5161 = vadd.f32 0.0, %v5160
  %v5162 = vpop.f32.mrf.mxu0
  %5163 = vmatprep.mubr.f32.mxu0 %v4950
  %5164 = vmatmul.mubr.f32.gmra.mxu0 %v4949
  %v5165 = vpop.f32.mrf.mxu0
  %v5166 = vadd.f32 0.0, %v5165
  %v5167 = vpop.f32.mrf.mxu0
  %5168 = vmatprep.mubr.f32.mxu0 %v4954
  %5169 = vmatmul.mubr.f32.gmra.mxu0 %v4953
  %v5170 = vpop.f32.mrf.mxu0
  %v5171 = vadd.f32 0.0, %v5170
  %v5172 = vpop.f32.mrf.mxu0
  %5173 = vmatprep.mubr.f32.mxu0 %v4958
  %5174 = vmatmul.mubr.f32.gmra.mxu0 %v4957
  %v5175 = vpop.f32.mrf.mxu0
  %v5176 = vadd.f32 0.0, %v5175
  %v5177 = vpop.f32.mrf.mxu0
  %5178 = vmatprep.mubr.f32.mxu0 %v4962
  %5179 = vmatmul.mubr.f32.gmra.mxu0 %v4961
  %v5180 = vpop.f32.mrf.mxu0
  %v5181 = vadd.f32 0.0, %v5180
  %v5182 = vpop.f32.mrf.mxu0
  %5183 = vmatprep.mubr.f32.mxu0 %v4966
  %5184 = vmatmul.mubr.f32.gmra.mxu0 %v4965
  %v5185 = vpop.f32.mrf.mxu0
  %v5186 = vadd.f32 0.0, %v5185
  %v5187 = vpop.f32.mrf.mxu0
  %5188 = vmatprep.mubr.f32.mxu0 %v4970
  %5189 = vmatmul.mubr.f32.gmra.mxu0 %v4969
  %v5190 = vpop.f32.mrf.mxu0
  %v5191 = vadd.f32 0.0, %v5190
  %v5192 = vpop.f32.mrf.mxu0
  %5193 = vdwg.mxu0
  %5194 = vmatprep.subr.mxu0 0.0
  %5195 = vmatpush1.msra.mxu0 %v5020
  %5196 = vmatprep.subr.mxu0 0.0
  %5197 = vmatpush1.msra.mxu0 %v5019
  %5198 = vmatprep.subr.mxu0 0.0
  %5199 = vmatpush1.msra.mxu0 %v5018
  %5200 = vmatprep.subr.mxu0 0.0
  %5201 = vmatpush1.msra.mxu0 %v5017
  %5202 = vmatprep.subr.mxu0 0.0
  %5203 = vmatpush1.msra.mxu0 %v5016
  %5204 = vmatprep.subr.mxu0 0.0
  %5205 = vmatpush1.msra.mxu0 %v5015
  %5206 = vmatprep.subr.mxu0 0.0
  %5207 = vmatpush1.msra.mxu0 %v5014
  %5208 = vmatprep.subr.mxu0 0.0
  %5209 = vmatpush1.msra.mxu0 %v5013
  %5210 = vmatprep.subr.mxu0 0.0
  %5211 = vmatpush1.msra.mxu0 %v5012
  %5212 = vmatprep.subr.mxu0 0.0
  %5213 = vmatpush1.msra.mxu0 %v5011
  %5214 = vmatprep.subr.mxu0 0.0
  %5215 = vmatpush1.msra.mxu0 %v5010
  %5216 = vmatprep.subr.mxu0 0.0
  %5217 = vmatpush1.msra.mxu0 %v5009
  %5218 = vmatprep.subr.mxu0 0.0
  %5219 = vmatpush1.msra.mxu0 %v5008
  %5220 = vmatprep.subr.mxu0 0.0
  %5221 = vmatpush1.msra.mxu0 %v5007
  %5222 = vmatprep.subr.mxu0 0.0
  %5223 = vmatpush1.msra.mxu0 %v5006
  %5224 = vmatprep.subr.mxu0 0.0
  %5225 = vmatpush1.msra.mxu0 %v5005
  %5226 = vmatprep.subr.mxu0 0.0
  %5227 = vmatpush2.msra.mxu0 0.0
  %5228 = vmatprep.subr.mxu0 0.0
  %5229 = vmatpush2.msra.mxu0 0.0
  %5230 = vmatprep.subr.mxu0 0.0
  %5231 = vmatpush2.msra.mxu0 0.0
  %5232 = vmatprep.subr.mxu0 0.0
  %5233 = vmatpush2.msra.mxu0 0.0
  %5234 = vmatprep.subr.mxu0 0.0
  %5235 = vmatpush2.msra.mxu0 %v5032
  %5236 = vmatprep.subr.mxu0 0.0
  %5237 = vmatpush2.msra.mxu0 %v5031
  %5238 = vmatprep.subr.mxu0 0.0
  %5239 = vmatpush2.msra.mxu0 %v5030
  %5240 = vmatprep.subr.mxu0 0.0
  %5241 = vmatpush2.msra.mxu0 %v5029
  %5242 = vmatprep.subr.mxu0 0.0
  %5243 = vmatpush2.msra.mxu0 %v5028
  %5244 = vmatprep.subr.mxu0 0.0
  %5245 = vmatpush2.msra.mxu0 %v5027
  %5246 = vmatprep.subr.mxu0 0.0
  %5247 = vmatpush2.msra.mxu0 %v5026
  %5248 = vmatprep.subr.mxu0 0.0
  %5249 = vmatpush2.msra.mxu0 %v5025
  %5250 = vmatprep.subr.mxu0 0.0
  %5251 = vmatpush2.msra.mxu0 %v5024
  %5252 = vmatprep.subr.mxu0 0.0
  %5253 = vmatpush2.msra.mxu0 %v5023
  %5254 = vmatprep.subr.mxu0 0.0
  %5255 = vmatpush2.msra.mxu0 %v5022
  %5256 = vmatprep.subr.mxu0 0.0
  %5257 = vmatpush2.msra.mxu0 %v5021
  %5258 = vmatprep.mubr.f32.mxu0 %v5034
  %5259 = vmatmul.mubr.f32.gmra.mxu0 %v4927
  %v5260 = vpop.f32.mrf.mxu0
  %v5261 = vadd.f32 %v5136, %v5260
  %v5262 = vpop.f32.mrf.mxu0
  %5263 = vmatprep.mubr.f32.mxu0 %v5037
  %5264 = vmatmul.mubr.f32.gmra.mxu0 %v4931
  %v5265 = vpop.f32.mrf.mxu0
  %v5266 = vadd.f32 %v5141, %v5265
  %v5267 = vpop.f32.mrf.mxu0
  %5268 = vmatprep.mubr.f32.mxu0 %v5040
  %5269 = vmatmul.mubr.f32.gmra.mxu0 %v4935
  %v5270 = vpop.f32.mrf.mxu0
  %v5271 = vadd.f32 %v5146, %v5270
  %v5272 = vpop.f32.mrf.mxu0
  %5273 = vmatprep.mubr.f32.mxu0 %v5043
  %5274 = vmatmul.mubr.f32.gmra.mxu0 %v4939
  %v5275 = vpop.f32.mrf.mxu0
  %v5276 = vadd.f32 %v5151, %v5275
  %v5277 = vpop.f32.mrf.mxu0
  %5278 = vmatprep.mubr.f32.mxu0 %v5046
  %5279 = vmatmul.mubr.f32.gmra.mxu0 %v4943
  %v5280 = vpop.f32.mrf.mxu0
  %v5281 = vadd.f32 %v5156, %v5280
  %v5282 = vpop.f32.mrf.mxu0
  %5283 = vmatprep.mubr.f32.mxu0 %v5049
  %5284 = vmatmul.mubr.f32.gmra.mxu0 %v4947
  %v5285 = vpop.f32.mrf.mxu0
  %v5286 = vadd.f32 %v5161, %v5285
  %v5287 = vpop.f32.mrf.mxu0
  %5288 = vmatprep.mubr.f32.mxu0 %v5052
  %5289 = vmatmul.mubr.f32.gmra.mxu0 %v4951
  %v5290 = vpop.f32.mrf.mxu0
  %v5291 = vadd.f32 %v5166, %v5290
  %v5292 = vpop.f32.mrf.mxu0
  %5293 = vmatprep.mubr.f32.mxu0 %v5055
  %5294 = vmatmul.mubr.f32.gmra.mxu0 %v4955
  %v5295 = vpop.f32.mrf.mxu0
  %v5296 = vadd.f32 %v5171, %v5295
  %v5297 = vpop.f32.mrf.mxu0
  %5298 = vmatprep.mubr.f32.mxu0 %v5058
  %5299 = vmatmul.mubr.f32.gmra.mxu0 %v4959
  %v5300 = vpop.f32.mrf.mxu0
  %v5301 = vadd.f32 %v5176, %v5300
  %v5302 = vpop.f32.mrf.mxu0
  %5303 = vmatprep.mubr.f32.mxu0 %v5061
  %5304 = vmatmul.mubr.f32.gmra.mxu0 %v4963
  %v5305 = vpop.f32.mrf.mxu0
  %v5306 = vadd.f32 %v5181, %v5305
  %v5307 = vpop.f32.mrf.mxu0
  %5308 = vmatprep.mubr.f32.mxu0 %v5064
  %5309 = vmatmul.mubr.f32.gmra.mxu0 %v4967
  %v5310 = vpop.f32.mrf.mxu0
  %v5311 = vadd.f32 %v5186, %v5310
  %v5312 = vpop.f32.mrf.mxu0
  %5313 = vmatprep.mubr.f32.mxu0 %v5067
  %5314 = vmatmul.mubr.f32.gmra.mxu0 %v4971
  %v5315 = vpop.f32.mrf.mxu0
  %v5316 = vadd.f32 %v5191, %v5315
  %v5317 = vpop.f32.mrf.mxu0
  %5318 = vdwg.mxu0
  %v5319 = vld [vmem:[%s12] sm:$0xff]
  %v5320 = vld [vmem:[%s12 + $0x8] sm:$0xff]
  %v5321 = vld [vmem:[%s12 + $0x10] sm:$0xff]
  %v5322 = vld [vmem:[%s12 + $0x18] sm:$0xff]
  %v5323 = vld [vmem:[%s12 + $0x20] sm:$0xff]
  %v5324 = vld [vmem:[%s12 + $0x28] sm:$0xff]
  %v5325 = vld [vmem:[%s12 + $0x30] sm:$0xff]
  %v5326 = vld [vmem:[%s12 + $0x38] sm:$0xff]
  %v5327 = vld [vmem:[%s12 + $0x40] sm:$0xff]
  %v5328 = vld [vmem:[%s12 + $0x48] sm:$0xff]
  %v5329 = vld [vmem:[%s12 + $0x50] sm:$0xff]
  %v5330 = vld [vmem:[%s12 + $0x58] sm:$0xff]
  %v5331 = vld [vmem:[%s12 + $0x60] sm:$0xff]
  %v5332 = vld [vmem:[%s12 + $0x68] sm:$0xff]
  %v5333 = vld [vmem:[%s12 + $0x70] sm:$0xff]
  %v5334 = vld [vmem:[%s12 + $0x78] sm:$0xff]
  %v5335 = vld [vmem:[%s12 + $0x80] sm:$0xff]
  %v5336 = vld [vmem:[%s12 + $0x88] sm:$0xff]
  %v5337 = vld [vmem:[%s12 + $0x90] sm:$0xff]
  %v5338 = vld [vmem:[%s12 + $0x98] sm:$0xff]
  %v5339 = vld [vmem:[%s12 + $0xa0] sm:$0xff]
  %v5340 = vld [vmem:[%s12 + $0xa8] sm:$0xff]
  %v5341 = vld [vmem:[%s12 + $0xb0] sm:$0xff]
  %v5342 = vld [vmem:[%s12 + $0xb8] sm:$0xff]
  %v5343 = vld [vmem:[%s12 + $0xc0] sm:$0xff]
  %v5344 = vld [vmem:[%s12 + $0xc8] sm:$0xff]
  %v5345 = vld [vmem:[%s12 + $0xd0] sm:$0xff]
  %v5346 = vld [vmem:[%s12 + $0xd8] sm:$0xff]
  %v5347 = vld [vmem:[%s12 + $0xe0] sm:$0xff]
  %v5348 = vld [vmem:[%s12 + $0xe8] sm:$0xff]
  %v5349 = vld [vmem:[%s12 + $0xf0] sm:$0xff]
  %v5350 = vld [vmem:[%s12 + $0xf8] sm:$0xff]
  %v5351 = vld [vmem:[%s12 + $0x100] sm:$0xff]
  %v5352 = vld [vmem:[%s12 + $0x108] sm:$0xff]
  %v5353 = vld [vmem:[%s12 + $0x110] sm:$0xff]
  %v5354 = vld [vmem:[%s12 + $0x118] sm:$0xff]
  %v5355 = vld [vmem:[%s12 + $0x120] sm:$0xff]
  %v5356 = vld [vmem:[%s12 + $0x128] sm:$0xff]
  %v5357 = vld [vmem:[%s12 + $0x130] sm:$0xff]
  %v5358 = vld [vmem:[%s12 + $0x138] sm:$0xff]
  %v5359 = vld [vmem:[%s12 + $0x140] sm:$0xff]
  %v5360 = vld [vmem:[%s12 + $0x148] sm:$0xff]
  %v5361 = vld [vmem:[%s12 + $0x150] sm:$0xff]
  %v5362 = vld [vmem:[%s12 + $0x158] sm:$0xff]
  %v5363 = vld [vmem:[%s12 + $0x160] sm:$0xff]
  %v5364 = vld [vmem:[%s12 + $0x168] sm:$0xff]
  %v5365 = vld [vmem:[%s12 + $0x170] sm:$0xff]
  %v5366 = vld [vmem:[%s12 + $0x178] sm:$0xff]
  %v5367 = vld [vmem:[%s12 + $0x180] sm:$0xff]
  %v5368 = vld [vmem:[%s12 + $0x188] sm:$0xff]
  %v5369 = vld [vmem:[%s12 + $0x190] sm:$0xff]
  %v5370 = vld [vmem:[%s12 + $0x198] sm:$0xff]
  %v5371 = vld [vmem:[%s12 + $0x1a0] sm:$0xff]
  %v5372 = vld [vmem:[%s12 + $0x1a8] sm:$0xff]
  %v5373 = vld [vmem:[%s12 + $0x1b0] sm:$0xff]
  %v5374 = vld [vmem:[%s12 + $0x1b8] sm:$0xff]
  %v5375 = vld [vmem:[%s12 + $0x1c0] sm:$0xff]
  %v5376 = vld [vmem:[%s12 + $0x1c8] sm:$0xff]
  %v5377 = vld [vmem:[%s12 + $0x1d0] sm:$0xff]
  %v5378 = vld [vmem:[%s12 + $0x1d8] sm:$0xff]
  %v5379 = vld [vmem:[%s12 + $0x1e0] sm:$0xff]
  %v5380 = vld [vmem:[%s12 + $0x1e8] sm:$0x7]
  %v5381 = vld [vmem:[%s11] sm:$0xff]
  %v5382 = vld [vmem:[%s11 + $0x8] sm:$0xff]
  %v5383 = vld [vmem:[%s11 + $0x10] sm:$0xff]
  %v5384 = vld [vmem:[%s11 + $0x18] sm:$0xff]
  %v5385 = vld [vmem:[%s11 + $0x20] sm:$0xff]
  %v5386 = vld [vmem:[%s11 + $0x28] sm:$0xff]
  %v5387 = vld [vmem:[%s11 + $0x30] sm:$0xff]
  %v5388 = vld [vmem:[%s11 + $0x38] sm:$0xff]
  %v5389 = vld [vmem:[%s11 + $0x40] sm:$0xff]
  %v5390 = vld [vmem:[%s11 + $0x48] sm:$0xff]
  %v5391 = vld [vmem:[%s11 + $0x50] sm:$0xff]
  %v5392 = vld [vmem:[%s11 + $0x58] sm:$0xff]
  %v5393 = vld [vmem:[%s11 + $0x60] sm:$0xff]
  %v5394 = vld [vmem:[%s11 + $0x68] sm:$0xff]
  %v5395 = vld [vmem:[%s11 + $0x70] sm:$0xff]
  %v5396 = vld [vmem:[%s11 + $0x78] sm:$0xff]
  %v5397 = vld [vmem:[%s11 + $0x80] sm:$0xff]
  %v5398 = vld [vmem:[%s11 + $0x88] sm:$0xff]
  %v5399 = vld [vmem:[%s11 + $0x90] sm:$0xff]
  %v5400 = vld [vmem:[%s11 + $0x98] sm:$0xff]
  %v5401 = vld [vmem:[%s11 + $0xa0] sm:$0xff]
  %v5402 = vld [vmem:[%s11 + $0xa8] sm:$0x7]
  %5404 = vset.pattern.permute.xlu0 0
  %5405 = vperm.xlu0 %5404, %v5319
  %v5406 = vpop.permute.xlu0 %5405
  %5409 = vset.pattern.permute.xlu0 0
  %5410 = vperm.xlu0 %5409, %v5320
  %v5411 = vpop.permute.xlu0 %5410
  %5414 = vset.pattern.permute.xlu0 0
  %5415 = vperm.xlu0 %5414, %v5321
  %v5416 = vpop.permute.xlu0 %5415
  %5419 = vset.pattern.permute.xlu0 0
  %5420 = vperm.xlu0 %5419, %v5322
  %v5421 = vpop.permute.xlu0 %5420
  %5424 = vset.pattern.permute.xlu0 0
  %5425 = vperm.xlu0 %5424, %v5323
  %v5426 = vpop.permute.xlu0 %5425
  %5429 = vset.pattern.permute.xlu0 0
  %5430 = vperm.xlu0 %5429, %v5324
  %v5431 = vpop.permute.xlu0 %5430
  %5434 = vset.pattern.permute.xlu0 0
  %5435 = vperm.xlu0 %5434, %v5325
  %v5436 = vpop.permute.xlu0 %5435
  %5439 = vset.pattern.permute.xlu0 0
  %5440 = vperm.xlu0 %5439, %v5326
  %v5441 = vpop.permute.xlu0 %5440
  %5444 = vset.pattern.permute.xlu0 0
  %5445 = vperm.xlu0 %5444, %v5327
  %v5446 = vpop.permute.xlu0 %5445
  %5449 = vset.pattern.permute.xlu0 0
  %5450 = vperm.xlu0 %5449, %v5328
  %v5451 = vpop.permute.xlu0 %5450
  %5454 = vset.pattern.permute.xlu0 0
  %5455 = vperm.xlu0 %5454, %v5329
  %v5456 = vpop.permute.xlu0 %5455
  %5459 = vset.pattern.permute.xlu0 0
  %5460 = vperm.xlu0 %5459, %v5330
  %v5461 = vpop.permute.xlu0 %5460
  %5464 = vset.pattern.permute.xlu0 0
  %5465 = vperm.xlu0 %5464, %v5331
  %v5466 = vpop.permute.xlu0 %5465
  %5469 = vset.pattern.permute.xlu0 0
  %5470 = vperm.xlu0 %5469, %v5332
  %v5471 = vpop.permute.xlu0 %5470
  %5474 = vset.pattern.permute.xlu0 0
  %5475 = vperm.xlu0 %5474, %v5333
  %v5476 = vpop.permute.xlu0 %5475
  %5479 = vset.pattern.permute.xlu0 0
  %5480 = vperm.xlu0 %5479, %v5334
  %v5481 = vpop.permute.xlu0 %5480
  %5484 = vset.pattern.permute.xlu0 0
  %5485 = vperm.xlu0 %5484, %v5335
  %v5486 = vpop.permute.xlu0 %5485
  %5489 = vset.pattern.permute.xlu0 0
  %5490 = vperm.xlu0 %5489, %v5336
  %v5491 = vpop.permute.xlu0 %5490
  %5494 = vset.pattern.permute.xlu0 0
  %5495 = vperm.xlu0 %5494, %v5337
  %v5496 = vpop.permute.xlu0 %5495
  %5499 = vset.pattern.permute.xlu0 0
  %5500 = vperm.xlu0 %5499, %v5338
  %v5501 = vpop.permute.xlu0 %5500
  %5504 = vset.pattern.permute.xlu0 0
  %5505 = vperm.xlu0 %5504, %v5339
  %v5506 = vpop.permute.xlu0 %5505
  %5509 = vset.pattern.permute.xlu0 0
  %5510 = vperm.xlu0 %5509, %v5340
  %v5511 = vpop.permute.xlu0 %5510
  %v5514 = vsel %vm2408, %v5381, 0
  %v5517 = vsel %vm2408, %v5382, 0
  %v5520 = vsel %vm2408, %v5383, 0
  %v5523 = vsel %vm2408, %v5384, 0
  %v5526 = vsel %vm2408, %v5385, 0
  %v5529 = vsel %vm2408, %v5386, 0
  %v5532 = vsel %vm2408, %v5387, 0
  %v5535 = vsel %vm2408, %v5388, 0
  %v5538 = vsel %vm2408, %v5389, 0
  %v5541 = vsel %vm2408, %v5390, 0
  %v5544 = vsel %vm2408, %v5391, 0
  %v5547 = vsel %vm2408, %v5392, 0
  %v5550 = vsel %vm2408, %v5393, 0
  %v5553 = vsel %vm2408, %v5394, 0
  %v5556 = vsel %vm2408, %v5395, 0
  %v5559 = vsel %vm2408, %v5396, 0
  %v5562 = vsel %vm2408, %v5397, 0
  %v5565 = vsel %vm2408, %v5398, 0
  %v5568 = vsel %vm2408, %v5399, 0
  %v5571 = vsel %vm2408, %v5400, 0
  %v5574 = vsel %vm2408, %v5401, 0
  %v5577 = vsel %vm2408, %v5402, 0
  %5579 = vmatprep.subr.mxu0 0.0
  %5580 = vmatpush1.msra.mxu0 0.0
  %5581 = vmatprep.subr.mxu0 0.0
  %5582 = vmatpush1.msra.mxu0 0.0
  %5583 = vmatprep.subr.mxu0 0.0
  %5584 = vmatpush1.msra.mxu0 0.0
  %5585 = vmatprep.subr.mxu0 0.0
  %5586 = vmatpush1.msra.mxu0 0.0
  %5587 = vmatprep.subr.mxu0 0.0
  %5588 = vmatpush1.msra.mxu0 %v5316
  %5589 = vmatprep.subr.mxu0 0.0
  %5590 = vmatpush1.msra.mxu0 %v5311
  %5591 = vmatprep.subr.mxu0 0.0
  %5592 = vmatpush1.msra.mxu0 %v5306
  %5593 = vmatprep.subr.mxu0 0.0
  %5594 = vmatpush1.msra.mxu0 %v5301
  %5595 = vmatprep.subr.mxu0 0.0
  %5596 = vmatpush1.msra.mxu0 %v5296
  %5597 = vmatprep.subr.mxu0 0.0
  %5598 = vmatpush1.msra.mxu0 %v5291
  %5599 = vmatprep.subr.mxu0 0.0
  %5600 = vmatpush1.msra.mxu0 %v5286
  %5601 = vmatprep.subr.mxu0 0.0
  %5602 = vmatpush1.msra.mxu0 %v5281
  %5603 = vmatprep.subr.mxu0 0.0
  %5604 = vmatpush1.msra.mxu0 %v5276
  %5605 = vmatprep.subr.mxu0 0.0
  %5606 = vmatpush1.msra.mxu0 %v5271
  %5607 = vmatprep.subr.mxu0 0.0
  %5608 = vmatpush1.msra.mxu0 %v5266
  %5609 = vmatprep.subr.mxu0 0.0
  %5610 = vmatpush1.msra.mxu0 %v5261
  %5611 = vmatprep.subr.mxu0 0.0
  %5612 = vmatpush2.msra.mxu0 0.0
  %5613 = vmatprep.subr.mxu0 0.0
  %5614 = vmatpush2.msra.mxu0 0.0
  %5615 = vmatprep.subr.mxu0 0.0
  %5616 = vmatpush2.msra.mxu0 0.0
  %5617 = vmatprep.subr.mxu0 0.0
  %5618 = vmatpush2.msra.mxu0 0.0
  %5619 = vmatprep.subr.mxu0 0.0
  %5620 = vmatpush2.msra.mxu0 0.0
  %5621 = vmatprep.subr.mxu0 0.0
  %5622 = vmatpush2.msra.mxu0 0.0
  %5623 = vmatprep.subr.mxu0 0.0
  %5624 = vmatpush2.msra.mxu0 0.0
  %5625 = vmatprep.subr.mxu0 0.0
  %5626 = vmatpush2.msra.mxu0 0.0
  %5627 = vmatprep.subr.mxu0 0.0
  %5628 = vmatpush2.msra.mxu0 0.0
  %5629 = vmatprep.subr.mxu0 0.0
  %5630 = vmatpush2.msra.mxu0 0.0
  %5631 = vmatprep.subr.mxu0 0.0
  %5632 = vmatpush2.msra.mxu0 0.0
  %5633 = vmatprep.subr.mxu0 0.0
  %5634 = vmatpush2.msra.mxu0 0.0
  %5635 = vmatprep.subr.mxu0 0.0
  %5636 = vmatpush2.msra.mxu0 0.0
  %5637 = vmatprep.subr.mxu0 0.0
  %5638 = vmatpush2.msra.mxu0 0.0
  %5639 = vmatprep.subr.mxu0 0.0
  %5640 = vmatpush2.msra.mxu0 0.0
  %5641 = vmatprep.subr.mxu0 0.0
  %5642 = vmatpush2.msra.mxu0 0.0
  %5643 = vmatprep.mubr.f32.mxu0 0.0
  %5644 = vmatmul.mubr.f32.gmra.mxu0 %v5514
  %v5645 = vpop.f32.mrf.mxu0
  %v5646 = vadd.f32 %v5406, %v5645
  %v5647 = vpop.f32.mrf.mxu0
  %5648 = vmatprep.mubr.f32.mxu0 0.0
  %5649 = vmatmul.mubr.f32.gmra.mxu0 %v5517
  %v5650 = vpop.f32.mrf.mxu0
  %v5651 = vadd.f32 %v5411, %v5650
  %v5652 = vpop.f32.mrf.mxu0
  %5653 = vmatprep.mubr.f32.mxu0 0.0
  %5654 = vmatmul.mubr.f32.gmra.mxu0 %v5520
  %v5655 = vpop.f32.mrf.mxu0
  %v5656 = vadd.f32 %v5416, %v5655
  %v5657 = vpop.f32.mrf.mxu0
  %5658 = vmatprep.mubr.f32.mxu0 0.0
  %5659 = vmatmul.mubr.f32.gmra.mxu0 %v5523
  %v5660 = vpop.f32.mrf.mxu0
  %v5661 = vadd.f32 %v5421, %v5660
  %v5662 = vpop.f32.mrf.mxu0
  %5663 = vmatprep.mubr.f32.mxu0 0.0
  %5664 = vmatmul.mubr.f32.gmra.mxu0 %v5526
  %v5665 = vpop.f32.mrf.mxu0
  %v5666 = vadd.f32 %v5426, %v5665
  %v5667 = vpop.f32.mrf.mxu0
  %5668 = vmatprep.mubr.f32.mxu0 0.0
  %5669 = vmatmul.mubr.f32.gmra.mxu0 %v5529
  %v5670 = vpop.f32.mrf.mxu0
  %v5671 = vadd.f32 %v5431, %v5670
  %v5672 = vpop.f32.mrf.mxu0
  %5673 = vmatprep.mubr.f32.mxu0 0.0
  %5674 = vmatmul.mubr.f32.gmra.mxu0 %v5532
  %v5675 = vpop.f32.mrf.mxu0
  %v5676 = vadd.f32 %v5436, %v5675
  %v5677 = vpop.f32.mrf.mxu0
  %5678 = vmatprep.mubr.f32.mxu0 0.0
  %5679 = vmatmul.mubr.f32.gmra.mxu0 %v5535
  %v5680 = vpop.f32.mrf.mxu0
  %v5681 = vadd.f32 %v5441, %v5680
  %v5682 = vpop.f32.mrf.mxu0
  %5683 = vmatprep.mubr.f32.mxu0 0.0
  %5684 = vmatmul.mubr.f32.gmra.mxu0 %v5538
  %v5685 = vpop.f32.mrf.mxu0
  %v5686 = vadd.f32 %v5446, %v5685
  %v5687 = vpop.f32.mrf.mxu0
  %5688 = vmatprep.mubr.f32.mxu0 0.0
  %5689 = vmatmul.mubr.f32.gmra.mxu0 %v5541
  %v5690 = vpop.f32.mrf.mxu0
  %v5691 = vadd.f32 %v5451, %v5690
  %v5692 = vpop.f32.mrf.mxu0
  %5693 = vmatprep.mubr.f32.mxu0 0.0
  %5694 = vmatmul.mubr.f32.gmra.mxu0 %v5544
  %v5695 = vpop.f32.mrf.mxu0
  %v5696 = vadd.f32 %v5456, %v5695
  %v5697 = vpop.f32.mrf.mxu0
  %5698 = vmatprep.mubr.f32.mxu0 0.0
  %5699 = vmatmul.mubr.f32.gmra.mxu0 %v5547
  %v5700 = vpop.f32.mrf.mxu0
  %v5701 = vadd.f32 %v5461, %v5700
  %v5702 = vpop.f32.mrf.mxu0
  %5703 = vmatprep.mubr.f32.mxu0 0.0
  %5704 = vmatmul.mubr.f32.gmra.mxu0 %v5550
  %v5705 = vpop.f32.mrf.mxu0
  %v5706 = vadd.f32 %v5466, %v5705
  %v5707 = vpop.f32.mrf.mxu0
  %5708 = vmatprep.mubr.f32.mxu0 0.0
  %5709 = vmatmul.mubr.f32.gmra.mxu0 %v5553
  %v5710 = vpop.f32.mrf.mxu0
  %v5711 = vadd.f32 %v5471, %v5710
  %v5712 = vpop.f32.mrf.mxu0
  %5713 = vmatprep.mubr.f32.mxu0 0.0
  %5714 = vmatmul.mubr.f32.gmra.mxu0 %v5556
  %v5715 = vpop.f32.mrf.mxu0
  %v5716 = vadd.f32 %v5476, %v5715
  %v5717 = vpop.f32.mrf.mxu0
  %5718 = vmatprep.mubr.f32.mxu0 0.0
  %5719 = vmatmul.mubr.f32.gmra.mxu0 %v5559
  %v5720 = vpop.f32.mrf.mxu0
  %v5721 = vadd.f32 %v5481, %v5720
  %v5722 = vpop.f32.mrf.mxu0
  %5723 = vmatprep.mubr.f32.mxu0 0.0
  %5724 = vmatmul.mubr.f32.gmra.mxu0 %v5562
  %v5725 = vpop.f32.mrf.mxu0
  %v5726 = vadd.f32 %v5486, %v5725
  %v5727 = vpop.f32.mrf.mxu0
  %5728 = vmatprep.mubr.f32.mxu0 0.0
  %5729 = vmatmul.mubr.f32.gmra.mxu0 %v5565
  %v5730 = vpop.f32.mrf.mxu0
  %v5731 = vadd.f32 %v5491, %v5730
  %v5732 = vpop.f32.mrf.mxu0
  %5733 = vmatprep.mubr.f32.mxu0 0.0
  %5734 = vmatmul.mubr.f32.gmra.mxu0 %v5568
  %v5735 = vpop.f32.mrf.mxu0
  %v5736 = vadd.f32 %v5496, %v5735
  %v5737 = vpop.f32.mrf.mxu0
  %5738 = vmatprep.mubr.f32.mxu0 0.0
  %5739 = vmatmul.mubr.f32.gmra.mxu0 %v5571
  %v5740 = vpop.f32.mrf.mxu0
  %v5741 = vadd.f32 %v5501, %v5740
  %v5742 = vpop.f32.mrf.mxu0
  %5743 = vmatprep.mubr.f32.mxu0 0.0
  %5744 = vmatmul.mubr.f32.gmra.mxu0 %v5574
  %v5745 = vpop.f32.mrf.mxu0
  %v5746 = vadd.f32 %v5506, %v5745
  %v5747 = vpop.f32.mrf.mxu0
  %5748 = vmatprep.mubr.f32.mxu0 0.0
  %5749 = vmatmul.mubr.f32.gmra.mxu0 %v5577
  %v5750 = vpop.f32.mrf.mxu0
  %v5751 = vadd.f32 %v5511, %v5750
  %v5752 = vpop.f32.mrf.mxu0
  %5753 = vdwg.mxu0
  %v5754 = vmax.f32 %v5646, 0.0
  %v5755 = vmax.f32 %v5651, 0.0
  %v5756 = vmax.f32 %v5656, 0.0
  %v5757 = vmax.f32 %v5661, 0.0
  %v5758 = vmax.f32 %v5666, 0.0
  %v5759 = vmax.f32 %v5671, 0.0
  %v5760 = vmax.f32 %v5676, 0.0
  %v5761 = vmax.f32 %v5681, 0.0
  %v5762 = vmax.f32 %v5686, 0.0
  %v5763 = vmax.f32 %v5691, 0.0
  %v5764 = vmax.f32 %v5696, 0.0
  %v5765 = vmax.f32 %v5701, 0.0
  %v5766 = vmax.f32 %v5706, 0.0
  %v5767 = vmax.f32 %v5711, 0.0
  %v5768 = vmax.f32 %v5716, 0.0
  %v5769 = vmax.f32 %v5721, 0.0
  %v5770 = vmax.f32 %v5726, 0.0
  %v5771 = vmax.f32 %v5731, 0.0
  %v5772 = vmax.f32 %v5736, 0.0
  %v5773 = vmax.f32 %v5741, 0.0
  %v5774 = vsel %vm540, %v5746, -inf
  %v5775 = vrot.slane %v5774, 4
  %v5776 = vmax.f32 %v5774, %v5775
  %v5777 = vrot.slane %v5776, 2
  %v5778 = vmax.f32 %v5776, %v5777
  %v5779 = vrot.slane %v5778, 1
  %v5780 = vmax.f32 %v5778, %v5779
  %v5781 = vsub.f32 %v5746, %v5780
  %v5782 = vmul.f32 %v5781, 1.442695
  %v5783 = vpow.pop %v5782
  %v5784 = vsel %vm540, %v5783, 0.0
  %v5785 = vrot.slane %v5784, 4
  %v5786 = vadd.f32 %v5784, %v5785
  %v5787 = vrot.slane %v5786, 2
  %v5788 = vadd.f32 %v5786, %v5787
  %v5789 = vrot.slane %v5788, 1
  %v5790 = vadd.f32 %v5788, %v5789
  %v5791 = vrcp.pop %v5790
  %v5792 = vmul.f32 %v5783, %v5791
  %v5793 = vsel %vm560, %v5746, -inf
  %v5794 = vrot.slane %v5793, 4
  %v5795 = vmax.f32 %v5793, %v5794
  %v5796 = vrot.slane %v5795, 2
  %v5797 = vmax.f32 %v5795, %v5796
  %v5798 = vrot.slane %v5797, 1
  %v5799 = vmax.f32 %v5797, %v5798
  %v5800 = vsub.f32 %v5746, %v5799
  %v5801 = vmul.f32 %v5800, 1.442695
  %v5802 = vpow.pop %v5801
  %v5804 = vrot.slane %v5802, 5
  %v5806 = vsel %vm574, %v5804, 0.0
  %v5807 = vrot.slane %v5806, 4
  %v5808 = vadd.f32 %v5806, %v5807
  %v5809 = vrot.slane %v5808, 2
  %v5810 = vadd.f32 %v5808, %v5809
  %v5811 = vrot.slane %v5810, 1
  %v5812 = vadd.f32 %v5810, %v5811
  %v5813 = vrcp.pop %v5812
  %v5814 = vmul.f32 %v5802, %v5813
  %v5815 = vsel %vm574, %v5751, -inf
  %v5816 = vrot.slane %v5815, 4
  %v5817 = vmax.f32 %v5815, %v5816
  %v5818 = vrot.slane %v5817, 2
  %v5819 = vmax.f32 %v5817, %v5818
  %v5820 = vrot.slane %v5819, 1
  %v5821 = vmax.f32 %v5819, %v5820
  %v5822 = vsub.f32 %v5751, %v5821
  %v5823 = vmul.f32 %v5822, 1.442695
  %v5824 = vpow.pop %v5823
  %v5825 = vsel %vm574, %v5824, 0.0
  %v5826 = vrot.slane %v5825, 4
  %v5827 = vadd.f32 %v5825, %v5826
  %v5828 = vrot.slane %v5827, 2
  %v5829 = vadd.f32 %v5827, %v5828
  %v5830 = vrot.slane %v5829, 1
  %v5831 = vadd.f32 %v5829, %v5830
  %v5832 = vrcp.pop %v5831
  %v5833 = vmul.f32 %v5824, %v5832
  %v5834 = vsel %vm540, %v5792, %v5814
  %v5835 = vld [vmem:[%s13] sm:$0xff]
  %v5836 = vld [vmem:[%s13 + $0x8] sm:$0xff]
  %v5837 = vld [vmem:[%s13 + $0x10] sm:$0xff]
  %v5838 = vld [vmem:[%s13 + $0x18] sm:$0xff]
  %v5839 = vld [vmem:[%s13 + $0x20] sm:$0xff]
  %v5840 = vld [vmem:[%s13 + $0x28] sm:$0xff]
  %v5841 = vld [vmem:[%s13 + $0x30] sm:$0xff]
  %v5842 = vld [vmem:[%s13 + $0x38] sm:$0xff]
  %v5843 = vld [vmem:[%s13 + $0x40] sm:$0xff]
  %v5844 = vld [vmem:[%s13 + $0x48] sm:$0xff]
  %v5845 = vld [vmem:[%s13 + $0x50] sm:$0xff]
  %v5846 = vld [vmem:[%s13 + $0x58] sm:$0xff]
  %v5847 = vld [vmem:[%s13 + $0x60] sm:$0xff]
  %v5848 = vld [vmem:[%s13 + $0x68] sm:$0xff]
  %v5849 = vld [vmem:[%s13 + $0x70] sm:$0xff]
  %v5850 = vld [vmem:[%s13 + $0x78] sm:$0xff]
  %v5851 = vld [vmem:[%s13 + $0x80] sm:$0xff]
  %v5852 = vld [vmem:[%s13 + $0x88] sm:$0xff]
  %v5853 = vld [vmem:[%s13 + $0x90] sm:$0xff]
  %v5854 = vld [vmem:[%s13 + $0x98] sm:$0xff]
  %v5855 = vld [vmem:[%s13 + $0xa0] sm:$0xff]
  %v5856 = vld [vmem:[%s13 + $0xa8] sm:$0xff]
  %v5857 = vld [vmem:[%s13 + $0xb0] sm:$0xff]
  %v5858 = vld [vmem:[%s13 + $0xb8] sm:$0xff]
  %v5859 = vld [vmem:[%s13 + $0xc0] sm:$0xff]
  %v5860 = vld [vmem:[%s13 + $0xc8] sm:$0xff]
  %v5861 = vld [vmem:[%s13 + $0xd0] sm:$0xff]
  %v5862 = vld [vmem:[%s13 + $0xd8] sm:$0xff]
  %v5863 = vld [vmem:[%s13 + $0xe0] sm:$0xff]
  %v5864 = vld [vmem:[%s13 + $0xe8] sm:$0xff]
  %v5865 = vld [vmem:[%s13 + $0xf0] sm:$0xff]
  %v5866 = vld [vmem:[%s13 + $0xf8] sm:$0xff]
  %v5867 = vld [vmem:[%s13 + $0x100] sm:$0xff]
  %v5868 = vld [vmem:[%s13 + $0x108] sm:$0xff]
  %v5869 = vld [vmem:[%s13 + $0x110] sm:$0xff]
  %v5870 = vld [vmem:[%s13 + $0x118] sm:$0xff]
  %v5871 = vld [vmem:[%s13 + $0x120] sm:$0xff]
  %v5872 = vld [vmem:[%s13 + $0x128] sm:$0xff]
  %v5873 = vld [vmem:[%s13 + $0x130] sm:$0xff]
  %v5874 = vld [vmem:[%s13 + $0x138] sm:$0xff]
  %v5875 = vld [vmem:[%s13 + $0x140] sm:$0xff]
  %v5876 = vld [vmem:[%s13 + $0x148] sm:$0xff]
  %v5877 = vld [vmem:[%s13 + $0x150] sm:$0xff]
  %v5878 = vld [vmem:[%s13 + $0x158] sm:$0xff]
  %v5879 = vld [vmem:[%s13 + $0x160] sm:$0xff]
  %v5880 = vld [vmem:[%s13 + $0x168] sm:$0xff]
  %v5881 = vld [vmem:[%s13 + $0x170] sm:$0xff]
  %v5882 = vld [vmem:[%s13 + $0x178] sm:$0xff]
  %v5883 = vld [vmem:[%s13 + $0x180] sm:$0xff]
  %v5884 = vld [vmem:[%s13 + $0x188] sm:$0xff]
  %v5885 = vld [vmem:[%s13 + $0x190] sm:$0xff]
  %v5886 = vld [vmem:[%s13 + $0x198] sm:$0xff]
  %v5887 = vld [vmem:[%s13 + $0x1a0] sm:$0xff]
  %v5888 = vld [vmem:[%s13 + $0x1a8] sm:$0xff]
  %v5889 = vld [vmem:[%s13 + $0x1b0] sm:$0xff]
  %v5890 = vld [vmem:[%s13 + $0x1b8] sm:$0xff]
  %v5891 = vld [vmem:[%s13 + $0x1c0] sm:$0xff]
  %v5892 = vld [vmem:[%s13 + $0x1c8] sm:$0xff]
  %v5893 = vld [vmem:[%s13 + $0x1d0] sm:$0xff]
  %v5894 = vld [vmem:[%s13 + $0x1d8] sm:$0xff]
  %v5895 = vld [vmem:[%s13 + $0x1e0] sm:$0xff]
  %v5896 = vld [vmem:[%s13 + $0x1e8] sm:$0xff]
  %v5897 = vld [vmem:[%s13 + $0x1f0] sm:$0xff]
  %v5898 = vld [vmem:[%s13 + $0x1f8] sm:$0xff]
  %v5899 = vld [vmem:[%s13 + $0x200] sm:$0xff]
  %v5900 = vld [vmem:[%s13 + $0x208] sm:$0xff]
  %v5901 = vld [vmem:[%s13 + $0x210] sm:$0xff]
  %v5902 = vld [vmem:[%s13 + $0x218] sm:$0xff]
  %v5903 = vld [vmem:[%s13 + $0x220] sm:$0xff]
  %v5904 = vld [vmem:[%s13 + $0x228] sm:$0xff]
  %v5905 = vld [vmem:[%s13 + $0x230] sm:$0xff]
  %v5906 = vld [vmem:[%s13 + $0x238] sm:$0xff]
  %v5907 = vld [vmem:[%s13 + $0x240] sm:$0xff]
  %v5908 = vld [vmem:[%s13 + $0x248] sm:$0xff]
  %v5909 = vld [vmem:[%s13 + $0x250] sm:$0xff]
  %v5910 = vld [vmem:[%s13 + $0x258] sm:$0xff]
  %v5911 = vld [vmem:[%s13 + $0x260] sm:$0xff]
  %v5912 = vld [vmem:[%s13 + $0x268] sm:$0xff]
  %v5913 = vld [vmem:[%s13 + $0x270] sm:$0xff]
  %v5914 = vld [vmem:[%s13 + $0x278] sm:$0xff]
  %5916 = vset.pattern.permute.xlu0 0
  %5917 = vperm.xlu0 %5916, %v5341
  %v5918 = vpop.permute.xlu0 %5917
  %5920 = vset.pattern.permute.xlu0 0
  %5921 = vperm.xlu0 %5920, %v5342
  %v5922 = vpop.permute.xlu0 %5921
  %5924 = vset.pattern.permute.xlu0 0
  %5925 = vperm.xlu0 %5924, %v5343
  %v5926 = vpop.permute.xlu0 %5925
  %5928 = vset.pattern.permute.xlu0 0
  %5929 = vperm.xlu0 %5928, %v5344
  %v5930 = vpop.permute.xlu0 %5929
  %5932 = vset.pattern.permute.xlu0 0
  %5933 = vperm.xlu0 %5932, %v5345
  %v5934 = vpop.permute.xlu0 %5933
  %5936 = vset.pattern.permute.xlu0 0
  %5937 = vperm.xlu0 %5936, %v5346
  %v5938 = vpop.permute.xlu0 %5937
  %5940 = vset.pattern.permute.xlu0 0
  %5941 = vperm.xlu0 %5940, %v5347
  %v5942 = vpop.permute.xlu0 %5941
  %5944 = vset.pattern.permute.xlu0 0
  %5945 = vperm.xlu0 %5944, %v5348
  %v5946 = vpop.permute.xlu0 %5945
  %5948 = vset.pattern.permute.xlu0 0
  %5949 = vperm.xlu0 %5948, %v5349
  %v5950 = vpop.permute.xlu0 %5949
  %5952 = vset.pattern.permute.xlu0 0
  %5953 = vperm.xlu0 %5952, %v5350
  %v5954 = vpop.permute.xlu0 %5953
  %5956 = vset.pattern.permute.xlu0 0
  %5957 = vperm.xlu0 %5956, %v5351
  %v5958 = vpop.permute.xlu0 %5957
  %5960 = vset.pattern.permute.xlu0 0
  %5961 = vperm.xlu0 %5960, %v5352
  %v5962 = vpop.permute.xlu0 %5961
  %5964 = vset.pattern.permute.xlu0 0
  %5965 = vperm.xlu0 %5964, %v5353
  %v5966 = vpop.permute.xlu0 %5965
  %5968 = vset.pattern.permute.xlu0 0
  %5969 = vperm.xlu0 %5968, %v5354
  %v5970 = vpop.permute.xlu0 %5969
  %5972 = vset.pattern.permute.xlu0 0
  %5973 = vperm.xlu0 %5972, %v5355
  %v5974 = vpop.permute.xlu0 %5973
  %5976 = vset.pattern.permute.xlu0 0
  %5977 = vperm.xlu0 %5976, %v5356
  %v5978 = vpop.permute.xlu0 %5977
  %5980 = vset.pattern.permute.xlu0 0
  %5981 = vperm.xlu0 %5980, %v5357
  %v5982 = vpop.permute.xlu0 %5981
  %5984 = vset.pattern.permute.xlu0 0
  %5985 = vperm.xlu0 %5984, %v5358
  %v5986 = vpop.permute.xlu0 %5985
  %5988 = vset.pattern.permute.xlu0 0
  %5989 = vperm.xlu0 %5988, %v5359
  %v5990 = vpop.permute.xlu0 %5989
  %5992 = vset.pattern.permute.xlu0 0
  %5993 = vperm.xlu0 %5992, %v5360
  %v5994 = vpop.permute.xlu0 %5993
  %5996 = vset.pattern.permute.xlu0 0
  %5997 = vperm.xlu0 %5996, %v5361
  %v5998 = vpop.permute.xlu0 %5997
  %6000 = vset.pattern.permute.xlu0 0
  %6001 = vperm.xlu0 %6000, %v5362
  %v6002 = vpop.permute.xlu0 %6001
  %6004 = vset.pattern.permute.xlu0 0
  %6005 = vperm.xlu0 %6004, %v5363
  %v6006 = vpop.permute.xlu0 %6005
  %6008 = vset.pattern.permute.xlu0 0
  %6009 = vperm.xlu0 %6008, %v5364
  %v6010 = vpop.permute.xlu0 %6009
  %6012 = vset.pattern.permute.xlu0 0
  %6013 = vperm.xlu0 %6012, %v5365
  %v6014 = vpop.permute.xlu0 %6013
  %6016 = vset.pattern.permute.xlu0 0
  %6017 = vperm.xlu0 %6016, %v5366
  %v6018 = vpop.permute.xlu0 %6017
  %6020 = vset.pattern.permute.xlu0 0
  %6021 = vperm.xlu0 %6020, %v5367
  %v6022 = vpop.permute.xlu0 %6021
  %6024 = vset.pattern.permute.xlu0 0
  %6025 = vperm.xlu0 %6024, %v5368
  %v6026 = vpop.permute.xlu0 %6025
  %6028 = vset.pattern.permute.xlu0 0
  %6029 = vperm.xlu0 %6028, %v5369
  %v6030 = vpop.permute.xlu0 %6029
  %6032 = vset.pattern.permute.xlu0 0
  %6033 = vperm.xlu0 %6032, %v5370
  %v6034 = vpop.permute.xlu0 %6033
  %6036 = vset.pattern.permute.xlu0 0
  %6037 = vperm.xlu0 %6036, %v5371
  %v6038 = vpop.permute.xlu0 %6037
  %6040 = vset.pattern.permute.xlu0 0
  %6041 = vperm.xlu0 %6040, %v5372
  %v6042 = vpop.permute.xlu0 %6041
  %6044 = vset.pattern.permute.xlu0 0
  %6045 = vperm.xlu0 %6044, %v5373
  %v6046 = vpop.permute.xlu0 %6045
  %6048 = vset.pattern.permute.xlu0 0
  %6049 = vperm.xlu0 %6048, %v5374
  %v6050 = vpop.permute.xlu0 %6049
  %6052 = vset.pattern.permute.xlu0 0
  %6053 = vperm.xlu0 %6052, %v5375
  %v6054 = vpop.permute.xlu0 %6053
  %6056 = vset.pattern.permute.xlu0 0
  %6057 = vperm.xlu0 %6056, %v5376
  %v6058 = vpop.permute.xlu0 %6057
  %6060 = vset.pattern.permute.xlu0 0
  %6061 = vperm.xlu0 %6060, %v5377
  %v6062 = vpop.permute.xlu0 %6061
  %6064 = vset.pattern.permute.xlu0 0
  %6065 = vperm.xlu0 %6064, %v5378
  %v6066 = vpop.permute.xlu0 %6065
  %6068 = vset.pattern.permute.xlu0 0
  %6069 = vperm.xlu0 %6068, %v5379
  %v6070 = vpop.permute.xlu0 %6069
  %6072 = vset.pattern.permute.xlu0 0
  %6073 = vperm.xlu0 %6072, %v5380
  %v6074 = vpop.permute.xlu0 %6073
  %v6075 = vrot.slane %v5511, 3
  %v6076 = vrot.slane %v5918, 3
  %v6077 = vsel %vm540, %v6075, %v6076
  %v6078 = vrot.slane %v5922, 3
  %v6079 = vsel %vm540, %v6076, %v6078
  %v6080 = vrot.slane %v5926, 3
  %v6081 = vsel %vm540, %v6078, %v6080
  %v6082 = vrot.slane %v5930, 3
  %v6083 = vsel %vm540, %v6080, %v6082
  %v6084 = vrot.slane %v5934, 3
  %v6085 = vsel %vm540, %v6082, %v6084
  %v6086 = vrot.slane %v5938, 3
  %v6087 = vsel %vm540, %v6084, %v6086
  %v6088 = vrot.slane %v5942, 3
  %v6089 = vsel %vm540, %v6086, %v6088
  %v6090 = vrot.slane %v5946, 3
  %v6091 = vsel %vm540, %v6088, %v6090
  %v6092 = vrot.slane %v5950, 3
  %v6093 = vsel %vm540, %v6090, %v6092
  %v6094 = vrot.slane %v5954, 3
  %v6095 = vsel %vm540, %v6092, %v6094
  %v6096 = vrot.slane %v5958, 3
  %v6097 = vsel %vm540, %v6094, %v6096
  %v6098 = vrot.slane %v5962, 3
  %v6099 = vsel %vm540, %v6096, %v6098
  %v6100 = vrot.slane %v5966, 3
  %v6101 = vsel %vm540, %v6098, %v6100
  %v6102 = vrot.slane %v5970, 3
  %v6103 = vsel %vm540, %v6100, %v6102
  %v6104 = vrot.slane %v5974, 3
  %v6105 = vsel %vm540, %v6102, %v6104
  %v6106 = vrot.slane %v5978, 3
  %v6107 = vsel %vm540, %v6104, %v6106
  %v6108 = vrot.slane %v5982, 3
  %v6109 = vsel %vm540, %v6106, %v6108
  %v6110 = vrot.slane %v5986, 3
  %v6111 = vsel %vm540, %v6108, %v6110
  %v6112 = vrot.slane %v5990, 3
  %v6113 = vsel %vm540, %v6110, %v6112
  %v6114 = vrot.slane %v5994, 3
  %v6115 = vsel %vm540, %v6112, %v6114
  %v6116 = vrot.slane %v5998, 3
  %v6117 = vsel %vm540, %v6114, %v6116
  %v6118 = vrot.slane %v6002, 3
  %v6119 = vsel %vm540, %v6116, %v6118
  %v6120 = vrot.slane %v6006, 3
  %v6121 = vsel %vm540, %v6118, %v6120
  %v6122 = vrot.slane %v6010, 3
  %v6123 = vsel %vm540, %v6120, %v6122
  %v6124 = vrot.slane %v6014, 3
  %v6125 = vsel %vm540, %v6122, %v6124
  %v6126 = vrot.slane %v6018, 3
  %v6127 = vsel %vm540, %v6124, %v6126
  %v6128 = vrot.slane %v6022, 3
  %v6129 = vsel %vm540, %v6126, %v6128
  %v6130 = vrot.slane %v6026, 3
  %v6131 = vsel %vm540, %v6128, %v6130
  %v6132 = vrot.slane %v6030, 3
  %v6133 = vsel %vm540, %v6130, %v6132
  %v6134 = vrot.slane %v6034, 3
  %v6135 = vsel %vm540, %v6132, %v6134
  %v6136 = vrot.slane %v6038, 3
  %v6137 = vsel %vm540, %v6134, %v6136
  %v6138 = vrot.slane %v6042, 3
  %v6139 = vsel %vm540, %v6136, %v6138
  %v6140 = vrot.slane %v6046, 3
  %v6141 = vsel %vm540, %v6138, %v6140
  %v6142 = vrot.slane %v6050, 3
  %v6143 = vsel %vm540, %v6140, %v6142
  %v6144 = vrot.slane %v6054, 3
  %v6145 = vsel %vm540, %v6142, %v6144
  %v6146 = vrot.slane %v6058, 3
  %v6147 = vsel %vm540, %v6144, %v6146
  %v6148 = vrot.slane %v6062, 3
  %v6149 = vsel %vm540, %v6146, %v6148
  %v6150 = vrot.slane %v6066, 3
  %v6151 = vsel %vm540, %v6148, %v6150
  %v6152 = vrot.slane %v6070, 3
  %v6153 = vsel %vm540, %v6150, %v6152
  %v6154 = vrot.slane %v6074, 3
  %v6155 = vsel %vm540, %v6152, %v6154
  %v6197 = vsel %vm1145, %v5836, 0
  %v6200 = vsel %vm1145, %v5838, 0
  %v6203 = vsel %vm1145, %v5840, 0
  %v6206 = vsel %vm1145, %v5842, 0
  %v6209 = vsel %vm1145, %v5844, 0
  %v6212 = vsel %vm1145, %v5846, 0
  %v6215 = vsel %vm1145, %v5848, 0
  %v6218 = vsel %vm1145, %v5850, 0
  %v6221 = vsel %vm1145, %v5852, 0
  %v6224 = vsel %vm1145, %v5854, 0
  %v6227 = vsel %vm1145, %v5856, 0
  %v6230 = vsel %vm1145, %v5858, 0
  %v6233 = vsel %vm1145, %v5860, 0
  %v6236 = vsel %vm1145, %v5862, 0
  %v6239 = vsel %vm1145, %v5864, 0
  %v6242 = vsel %vm1145, %v5866, 0
  %v6245 = vsel %vm1145, %v5868, 0
  %v6248 = vsel %vm1145, %v5870, 0
  %v6251 = vsel %vm1145, %v5872, 0
  %v6254 = vsel %vm1145, %v5874, 0
  %v6257 = vsel %vm1145, %v5876, 0
  %v6260 = vsel %vm1145, %v5878, 0
  %v6263 = vsel %vm1145, %v5880, 0
  %v6266 = vsel %vm1145, %v5882, 0
  %v6269 = vsel %vm1145, %v5884, 0
  %v6272 = vsel %vm1145, %v5886, 0
  %v6275 = vsel %vm1145, %v5888, 0
  %v6278 = vsel %vm1145, %v5890, 0
  %v6281 = vsel %vm1145, %v5892, 0
  %v6284 = vsel %vm1145, %v5894, 0
  %v6287 = vsel %vm1145, %v5896, 0
  %v6290 = vsel %vm1145, %v5898, 0
  %v6293 = vsel %vm1145, %v5900, 0
  %v6296 = vsel %vm1145, %v5902, 0
  %v6299 = vsel %vm1145, %v5904, 0
  %v6302 = vsel %vm1145, %v5906, 0
  %v6305 = vsel %vm1145, %v5908, 0
  %v6308 = vsel %vm1145, %v5910, 0
  %v6311 = vsel %vm1145, %v5912, 0
  %v6314 = vsel %vm1145, %v5914, 0
  %6316 = vmatprep.subr.mxu0 0.0
  %6317 = vmatpush1.msra.mxu0 %v5769
  %6318 = vmatprep.subr.mxu0 0.0
  %6319 = vmatpush1.msra.mxu0 %v5768
  %6320 = vmatprep.subr.mxu0 0.0
  %6321 = vmatpush1.msra.mxu0 %v5767
  %6322 = vmatprep.subr.mxu0 0.0
  %6323 = vmatpush1.msra.mxu0 %v5766
  %6324 = vmatprep.subr.mxu0 0.0
  %6325 = vmatpush1.msra.mxu0 %v5765
  %6326 = vmatprep.subr.mxu0 0.0
  %6327 = vmatpush1.msra.mxu0 %v5764
  %6328 = vmatprep.subr.mxu0 0.0
  %6329 = vmatpush1.msra.mxu0 %v5763
  %6330 = vmatprep.subr.mxu0 0.0
  %6331 = vmatpush1.msra.mxu0 %v5762
  %6332 = vmatprep.subr.mxu0 0.0
  %6333 = vmatpush1.msra.mxu0 %v5761
  %6334 = vmatprep.subr.mxu0 0.0
  %6335 = vmatpush1.msra.mxu0 %v5760
  %6336 = vmatprep.subr.mxu0 0.0
  %6337 = vmatpush1.msra.mxu0 %v5759
  %6338 = vmatprep.subr.mxu0 0.0
  %6339 = vmatpush1.msra.mxu0 %v5758
  %6340 = vmatprep.subr.mxu0 0.0
  %6341 = vmatpush1.msra.mxu0 %v5757
  %6342 = vmatprep.subr.mxu0 0.0
  %6343 = vmatpush1.msra.mxu0 %v5756
  %6344 = vmatprep.subr.mxu0 0.0
  %6345 = vmatpush1.msra.mxu0 %v5755
  %6346 = vmatprep.subr.mxu0 0.0
  %6347 = vmatpush1.msra.mxu0 %v5754
  %6348 = vmatprep.subr.mxu0 0.0
  %6349 = vmatpush2.msra.mxu0 0.0
  %6350 = vmatprep.subr.mxu0 0.0
  %6351 = vmatpush2.msra.mxu0 0.0
  %6352 = vmatprep.subr.mxu0 0.0
  %6353 = vmatpush2.msra.mxu0 0.0
  %6354 = vmatprep.subr.mxu0 0.0
  %6355 = vmatpush2.msra.mxu0 0.0
  %6356 = vmatprep.subr.mxu0 0.0
  %6357 = vmatpush2.msra.mxu0 0.0
  %6358 = vmatprep.subr.mxu0 0.0
  %6359 = vmatpush2.msra.mxu0 0.0
  %6360 = vmatprep.subr.mxu0 0.0
  %6361 = vmatpush2.msra.mxu0 0.0
  %6362 = vmatprep.subr.mxu0 0.0
  %6363 = vmatpush2.msra.mxu0 0.0
  %6364 = vmatprep.subr.mxu0 0.0
  %6365 = vmatpush2.msra.mxu0 0.0
  %6366 = vmatprep.subr.mxu0 0.0
  %6367 = vmatpush2.msra.mxu0 0.0
  %6368 = vmatprep.subr.mxu0 0.0
  %6369 = vmatpush2.msra.mxu0 0.0
  %6370 = vmatprep.subr.mxu0 0.0
  %6371 = vmatpush2.msra.mxu0 0.0
  %6372 = vmatprep.subr.mxu0 0.0
  %6373 = vmatpush2.msra.mxu0 %v5773
  %6374 = vmatprep.subr.mxu0 0.0
  %6375 = vmatpush2.msra.mxu0 %v5772
  %6376 = vmatprep.subr.mxu0 0.0
  %6377 = vmatpush2.msra.mxu0 %v5771
  %6378 = vmatprep.subr.mxu0 0.0
  %6379 = vmatpush2.msra.mxu0 %v5770
  %6380 = vmatprep.mubr.f32.mxu0 %v6197
  %6381 = vmatmul.mubr.f32.gmra.mxu0 %v5835
  %v6382 = vpop.f32.mrf.mxu0
  %v6383 = vadd.f32 %v6077, %v6382
  %v6384 = vpop.f32.mrf.mxu0
  %6385 = vmatprep.mubr.f32.mxu0 %v6200
  %6386 = vmatmul.mubr.f32.gmra.mxu0 %v5837
  %v6387 = vpop.f32.mrf.mxu0
  %v6388 = vadd.f32 %v6079, %v6387
  %v6389 = vpop.f32.mrf.mxu0
  %6390 = vmatprep.mubr.f32.mxu0 %v6203
  %6391 = vmatmul.mubr.f32.gmra.mxu0 %v5839
  %v6392 = vpop.f32.mrf.mxu0
  %v6393 = vadd.f32 %v6081, %v6392
  %v6394 = vpop.f32.mrf.mxu0
  %6395 = vmatprep.mubr.f32.mxu0 %v6206
  %6396 = vmatmul.mubr.f32.gmra.mxu0 %v5841
  %v6397 = vpop.f32.mrf.mxu0
  %v6398 = vadd.f32 %v6083, %v6397
  %v6399 = vpop.f32.mrf.mxu0
  %6400 = vmatprep.mubr.f32.mxu0 %v6209
  %6401 = vmatmul.mubr.f32.gmra.mxu0 %v5843
  %v6402 = vpop.f32.mrf.mxu0
  %v6403 = vadd.f32 %v6085, %v6402
  %v6404 = vpop.f32.mrf.mxu0
  %6405 = vmatprep.mubr.f32.mxu0 %v6212
  %6406 = vmatmul.mubr.f32.gmra.mxu0 %v5845
  %v6407 = vpop.f32.mrf.mxu0
  %v6408 = vadd.f32 %v6087, %v6407
  %v6409 = vpop.f32.mrf.mxu0
  %6410 = vmatprep.mubr.f32.mxu0 %v6215
  %6411 = vmatmul.mubr.f32.gmra.mxu0 %v5847
  %v6412 = vpop.f32.mrf.mxu0
  %v6413 = vadd.f32 %v6089, %v6412
  %v6414 = vpop.f32.mrf.mxu0
  %6415 = vmatprep.mubr.f32.mxu0 %v6218
  %6416 = vmatmul.mubr.f32.gmra.mxu0 %v5849
  %v6417 = vpop.f32.mrf.mxu0
  %v6418 = vadd.f32 %v6091, %v6417
  %v6419 = vpop.f32.mrf.mxu0
  %6420 = vmatprep.mubr.f32.mxu0 %v6221
  %6421 = vmatmul.mubr.f32.gmra.mxu0 %v5851
  %v6422 = vpop.f32.mrf.mxu0
  %v6423 = vadd.f32 %v6093, %v6422
  %v6424 = vpop.f32.mrf.mxu0
  %6425 = vmatprep.mubr.f32.mxu0 %v6224
  %6426 = vmatmul.mubr.f32.gmra.mxu0 %v5853
  %v6427 = vpop.f32.mrf.mxu0
  %v6428 = vadd.f32 %v6095, %v6427
  %v6429 = vpop.f32.mrf.mxu0
  %6430 = vmatprep.mubr.f32.mxu0 %v6227
  %6431 = vmatmul.mubr.f32.gmra.mxu0 %v5855
  %v6432 = vpop.f32.mrf.mxu0
  %v6433 = vadd.f32 %v6097, %v6432
  %v6434 = vpop.f32.mrf.mxu0
  %6435 = vmatprep.mubr.f32.mxu0 %v6230
  %6436 = vmatmul.mubr.f32.gmra.mxu0 %v5857
  %v6437 = vpop.f32.mrf.mxu0
  %v6438 = vadd.f32 %v6099, %v6437
  %v6439 = vpop.f32.mrf.mxu0
  %6440 = vmatprep.mubr.f32.mxu0 %v6233
  %6441 = vmatmul.mubr.f32.gmra.mxu0 %v5859
  %v6442 = vpop.f32.mrf.mxu0
  %v6443 = vadd.f32 %v6101, %v6442
  %v6444 = vpop.f32.mrf.mxu0
  %6445 = vmatprep.mubr.f32.mxu0 %v6236
  %6446 = vmatmul.mubr.f32.gmra.mxu0 %v5861
  %v6447 = vpop.f32.mrf.mxu0
  %v6448 = vadd.f32 %v6103, %v6447
  %v6449 = vpop.f32.mrf.mxu0
  %6450 = vmatprep.mubr.f32.mxu0 %v6239
  %6451 = vmatmul.mubr.f32.gmra.mxu0 %v5863
  %v6452 = vpop.f32.mrf.mxu0
  %v6453 = vadd.f32 %v6105, %v6452
  %v6454 = vpop.f32.mrf.mxu0
  %6455 = vmatprep.mubr.f32.mxu0 %v6242
  %6456 = vmatmul.mubr.f32.gmra.mxu0 %v5865
  %v6457 = vpop.f32.mrf.mxu0
  %v6458 = vadd.f32 %v6107, %v6457
  %v6459 = vpop.f32.mrf.mxu0
  %6460 = vmatprep.mubr.f32.mxu0 %v6245
  %6461 = vmatmul.mubr.f32.gmra.mxu0 %v5867
  %v6462 = vpop.f32.mrf.mxu0
  %v6463 = vadd.f32 %v6109, %v6462
  %v6464 = vpop.f32.mrf.mxu0
  %6465 = vmatprep.mubr.f32.mxu0 %v6248
  %6466 = vmatmul.mubr.f32.gmra.mxu0 %v5869
  %v6467 = vpop.f32.mrf.mxu0
  %v6468 = vadd.f32 %v6111, %v6467
  %v6469 = vpop.f32.mrf.mxu0
  %6470 = vmatprep.mubr.f32.mxu0 %v6251
  %6471 = vmatmul.mubr.f32.gmra.mxu0 %v5871
  %v6472 = vpop.f32.mrf.mxu0
  %v6473 = vadd.f32 %v6113, %v6472
  %v6474 = vpop.f32.mrf.mxu0
  %6475 = vmatprep.mubr.f32.mxu0 %v6254
  %6476 = vmatmul.mubr.f32.gmra.mxu0 %v5873
  %v6477 = vpop.f32.mrf.mxu0
  %v6478 = vadd.f32 %v6115, %v6477
  %v6479 = vpop.f32.mrf.mxu0
  %6480 = vmatprep.mubr.f32.mxu0 %v6257
  %6481 = vmatmul.mubr.f32.gmra.mxu0 %v5875
  %v6482 = vpop.f32.mrf.mxu0
  %v6483 = vadd.f32 %v6117, %v6482
  %v6484 = vpop.f32.mrf.mxu0
  %6485 = vmatprep.mubr.f32.mxu0 %v6260
  %6486 = vmatmul.mubr.f32.gmra.mxu0 %v5877
  %v6487 = vpop.f32.mrf.mxu0
  %v6488 = vadd.f32 %v6119, %v6487
  %v6489 = vpop.f32.mrf.mxu0
  %6490 = vmatprep.mubr.f32.mxu0 %v6263
  %6491 = vmatmul.mubr.f32.gmra.mxu0 %v5879
  %v6492 = vpop.f32.mrf.mxu0
  %v6493 = vadd.f32 %v6121, %v6492
  %v6494 = vpop.f32.mrf.mxu0
  %6495 = vmatprep.mubr.f32.mxu0 %v6266
  %6496 = vmatmul.mubr.f32.gmra.mxu0 %v5881
  %v6497 = vpop.f32.mrf.mxu0
  %v6498 = vadd.f32 %v6123, %v6497
  %v6499 = vpop.f32.mrf.mxu0
  %6500 = vmatprep.mubr.f32.mxu0 %v6269
  %6501 = vmatmul.mubr.f32.gmra.mxu0 %v5883
  %v6502 = vpop.f32.mrf.mxu0
  %v6503 = vadd.f32 %v6125, %v6502
  %v6504 = vpop.f32.mrf.mxu0
  %6505 = vmatprep.mubr.f32.mxu0 %v6272
  %6506 = vmatmul.mubr.f32.gmra.mxu0 %v5885
  %v6507 = vpop.f32.mrf.mxu0
  %v6508 = vadd.f32 %v6127, %v6507
  %v6509 = vpop.f32.mrf.mxu0
  %6510 = vmatprep.mubr.f32.mxu0 %v6275
  %6511 = vmatmul.mubr.f32.gmra.mxu0 %v5887
  %v6512 = vpop.f32.mrf.mxu0
  %v6513 = vadd.f32 %v6129, %v6512
  %v6514 = vpop.f32.mrf.mxu0
  %6515 = vmatprep.mubr.f32.mxu0 %v6278
  %6516 = vmatmul.mubr.f32.gmra.mxu0 %v5889
  %v6517 = vpop.f32.mrf.mxu0
  %v6518 = vadd.f32 %v6131, %v6517
  %v6519 = vpop.f32.mrf.mxu0
  %6520 = vmatprep.mubr.f32.mxu0 %v6281
  %6521 = vmatmul.mubr.f32.gmra.mxu0 %v5891
  %v6522 = vpop.f32.mrf.mxu0
  %v6523 = vadd.f32 %v6133, %v6522
  %v6524 = vpop.f32.mrf.mxu0
  %6525 = vmatprep.mubr.f32.mxu0 %v6284
  %6526 = vmatmul.mubr.f32.gmra.mxu0 %v5893
  %v6527 = vpop.f32.mrf.mxu0
  %v6528 = vadd.f32 %v6135, %v6527
  %v6529 = vpop.f32.mrf.mxu0
  %6530 = vmatprep.mubr.f32.mxu0 %v6287
  %6531 = vmatmul.mubr.f32.gmra.mxu0 %v5895
  %v6532 = vpop.f32.mrf.mxu0
  %v6533 = vadd.f32 %v6137, %v6532
  %v6534 = vpop.f32.mrf.mxu0
  %6535 = vmatprep.mubr.f32.mxu0 %v6290
  %6536 = vmatmul.mubr.f32.gmra.mxu0 %v5897
  %v6537 = vpop.f32.mrf.mxu0
  %v6538 = vadd.f32 %v6139, %v6537
  %v6539 = vpop.f32.mrf.mxu0
  %6540 = vmatprep.mubr.f32.mxu0 %v6293
  %6541 = vmatmul.mubr.f32.gmra.mxu0 %v5899
  %v6542 = vpop.f32.mrf.mxu0
  %v6543 = vadd.f32 %v6141, %v6542
  %v6544 = vpop.f32.mrf.mxu0
  %6545 = vmatprep.mubr.f32.mxu0 %v6296
  %6546 = vmatmul.mubr.f32.gmra.mxu0 %v5901
  %v6547 = vpop.f32.mrf.mxu0
  %v6548 = vadd.f32 %v6143, %v6547
  %v6549 = vpop.f32.mrf.mxu0
  %6550 = vmatprep.mubr.f32.mxu0 %v6299
  %6551 = vmatmul.mubr.f32.gmra.mxu0 %v5903
  %v6552 = vpop.f32.mrf.mxu0
  %v6553 = vadd.f32 %v6145, %v6552
  %v6554 = vpop.f32.mrf.mxu0
  %6555 = vmatprep.mubr.f32.mxu0 %v6302
  %6556 = vmatmul.mubr.f32.gmra.mxu0 %v5905
  %v6557 = vpop.f32.mrf.mxu0
  %v6558 = vadd.f32 %v6147, %v6557
  %v6559 = vpop.f32.mrf.mxu0
  %6560 = vmatprep.mubr.f32.mxu0 %v6305
  %6561 = vmatmul.mubr.f32.gmra.mxu0 %v5907
  %v6562 = vpop.f32.mrf.mxu0
  %v6563 = vadd.f32 %v6149, %v6562
  %v6564 = vpop.f32.mrf.mxu0
  %6565 = vmatprep.mubr.f32.mxu0 %v6308
  %6566 = vmatmul.mubr.f32.gmra.mxu0 %v5909
  %v6567 = vpop.f32.mrf.mxu0
  %v6568 = vadd.f32 %v6151, %v6567
  %v6569 = vpop.f32.mrf.mxu0
  %6570 = vmatprep.mubr.f32.mxu0 %v6311
  %6571 = vmatmul.mubr.f32.gmra.mxu0 %v5911
  %v6572 = vpop.f32.mrf.mxu0
  %v6573 = vadd.f32 %v6153, %v6572
  %v6574 = vpop.f32.mrf.mxu0
  %6575 = vmatprep.mubr.f32.mxu0 %v6314
  %6576 = vmatmul.mubr.f32.gmra.mxu0 %v5913
  %v6577 = vpop.f32.mrf.mxu0
  %v6578 = vadd.f32 %v6155, %v6577
  %v6579 = vpop.f32.mrf.mxu0
  %6580 = vdwg.mxu0
  %v6581 = vld [vmem:[%s14] sm:$0xff]
  %v6582 = vld [vmem:[%s14 + $0x8] sm:$0xff]
  %v6583 = vld [vmem:[%s14 + $0x10] sm:$0xff]
  %v6584 = vld [vmem:[%s14 + $0x18] sm:$0xff]
  %v6585 = vld [vmem:[%s14 + $0x20] sm:$0xff]
  %v6586 = vld [vmem:[%s14 + $0x28] sm:$0xff]
  %v6587 = vld [vmem:[%s14 + $0x30] sm:$0xff]
  %v6588 = vld [vmem:[%s14 + $0x38] sm:$0xff]
  %v6589 = vld [vmem:[%s14 + $0x40] sm:$0xff]
  %v6590 = vld [vmem:[%s14 + $0x48] sm:$0xff]
  %v6591 = vld [vmem:[%s14 + $0x50] sm:$0xff]
  %v6592 = vld [vmem:[%s14 + $0x58] sm:$0xff]
  %v6593 = vld [vmem:[%s14 + $0x60] sm:$0xff]
  %v6594 = vld [vmem:[%s14 + $0x68] sm:$0xff]
  %v6595 = vld [vmem:[%s14 + $0x70] sm:$0xff]
  %v6596 = vld [vmem:[%s14 + $0x78] sm:$0xff]
  %v6597 = vld [vmem:[%s14 + $0x80] sm:$0xff]
  %v6598 = vld [vmem:[%s14 + $0x88] sm:$0xff]
  %v6599 = vld [vmem:[%s14 + $0x90] sm:$0xff]
  %v6600 = vld [vmem:[%s14 + $0x98] sm:$0xff]
  %v6601 = vld [vmem:[%s14 + $0xa0] sm:$0xff]
  %v6602 = vld [vmem:[%s14 + $0xa8] sm:$0xff]
  %v6603 = vld [vmem:[%s14 + $0xb0] sm:$0xff]
  %v6604 = vld [vmem:[%s14 + $0xb8] sm:$0xff]
  %v6605 = vld [vmem:[%s14 + $0xc0] sm:$0xff]
  %v6606 = vld [vmem:[%s14 + $0xc8] sm:$0xff]
  %v6607 = vld [vmem:[%s14 + $0xd0] sm:$0xff]
  %v6608 = vld [vmem:[%s14 + $0xd8] sm:$0xff]
  %v6609 = vld [vmem:[%s14 + $0xe0] sm:$0xff]
  %v6610 = vld [vmem:[%s14 + $0xe8] sm:$0xff]
  %v6611 = vld [vmem:[%s14 + $0xf0] sm:$0xff]
  %v6612 = vld [vmem:[%s14 + $0xf8] sm:$0xff]
  %v6613 = vld [vmem:[%s14 + $0x100] sm:$0xff]
  %v6614 = vld [vmem:[%s14 + $0x108] sm:$0xff]
  %v6615 = vld [vmem:[%s14 + $0x110] sm:$0xff]
  %v6616 = vld [vmem:[%s14 + $0x118] sm:$0xff]
  %v6617 = vld [vmem:[%s14 + $0x120] sm:$0xff]
  %v6618 = vld [vmem:[%s14 + $0x128] sm:$0xff]
  %v6619 = vld [vmem:[%s14 + $0x130] sm:$0xff]
  %v6620 = vld [vmem:[%s14 + $0x138] sm:$0xff]
  %v6622 = vsel %vm1751, %v6581, 0
  %v6625 = vsel %vm1751, %v6582, 0
  %v6628 = vsel %vm1751, %v6583, 0
  %v6631 = vsel %vm1751, %v6584, 0
  %v6634 = vsel %vm1751, %v6585, 0
  %v6637 = vsel %vm1751, %v6586, 0
  %v6640 = vsel %vm1751, %v6587, 0
  %v6643 = vsel %vm1751, %v6588, 0
  %v6646 = vsel %vm1751, %v6589, 0
  %v6649 = vsel %vm1751, %v6590, 0
  %v6652 = vsel %vm1751, %v6591, 0
  %v6655 = vsel %vm1751, %v6592, 0
  %v6658 = vsel %vm1751, %v6593, 0
  %v6661 = vsel %vm1751, %v6594, 0
  %v6664 = vsel %vm1751, %v6595, 0
  %v6667 = vsel %vm1751, %v6596, 0
  %v6670 = vsel %vm1751, %v6597, 0
  %v6673 = vsel %vm1751, %v6598, 0
  %v6676 = vsel %vm1751, %v6599, 0
  %v6679 = vsel %vm1751, %v6600, 0
  %v6682 = vsel %vm1751, %v6601, 0
  %v6685 = vsel %vm1751, %v6602, 0
  %v6688 = vsel %vm1751, %v6603, 0
  %v6691 = vsel %vm1751, %v6604, 0
  %v6694 = vsel %vm1751, %v6605, 0
  %v6697 = vsel %vm1751, %v6606, 0
  %v6700 = vsel %vm1751, %v6607, 0
  %v6703 = vsel %vm1751, %v6608, 0
  %v6706 = vsel %vm1751, %v6609, 0
  %v6709 = vsel %vm1751, %v6610, 0
  %v6712 = vsel %vm1751, %v6611, 0
  %v6715 = vsel %vm1751, %v6612, 0
  %v6718 = vsel %vm1751, %v6613, 0
  %v6721 = vsel %vm1751, %v6614, 0
  %v6724 = vsel %vm1751, %v6615, 0
  %v6727 = vsel %vm1751, %v6616, 0
  %v6730 = vsel %vm1751, %v6617, 0
  %v6733 = vsel %vm1751, %v6618, 0
  %v6736 = vsel %vm1751, %v6619, 0
  %v6739 = vsel %vm1751, %v6620, 0
  %v6742 = vsel %vm574, %v5833, 0
  %6744 = vmatprep.subr.mxu0 0.0
  %6745 = vmatpush1.msra.mxu0 0.0
  %6746 = vmatprep.subr.mxu0 0.0
  %6747 = vmatpush1.msra.mxu0 0.0
  %6748 = vmatprep.subr.mxu0 0.0
  %6749 = vmatpush1.msra.mxu0 0.0
  %6750 = vmatprep.subr.mxu0 0.0
  %6751 = vmatpush1.msra.mxu0 0.0
  %6752 = vmatprep.subr.mxu0 0.0
  %6753 = vmatpush1.msra.mxu0 0.0
  %6754 = vmatprep.subr.mxu0 0.0
  %6755 = vmatpush1.msra.mxu0 0.0
  %6756 = vmatprep.subr.mxu0 0.0
  %6757 = vmatpush1.msra.mxu0 0.0
  %6758 = vmatprep.subr.mxu0 0.0
  %6759 = vmatpush1.msra.mxu0 0.0
  %6760 = vmatprep.subr.mxu0 0.0
  %6761 = vmatpush1.msra.mxu0 0.0
  %6762 = vmatprep.subr.mxu0 0.0
  %6763 = vmatpush1.msra.mxu0 0.0
  %6764 = vmatprep.subr.mxu0 0.0
  %6765 = vmatpush1.msra.mxu0 0.0
  %6766 = vmatprep.subr.mxu0 0.0
  %6767 = vmatpush1.msra.mxu0 0.0
  %6768 = vmatprep.subr.mxu0 0.0
  %6769 = vmatpush1.msra.mxu0 0.0
  %6770 = vmatprep.subr.mxu0 0.0
  %6771 = vmatpush1.msra.mxu0 0.0
  %6772 = vmatprep.subr.mxu0 0.0
  %6773 = vmatpush1.msra.mxu0 %v6742
  %6774 = vmatprep.subr.mxu0 0.0
  %6775 = vmatpush1.msra.mxu0 %v5834
  %6776 = vmatprep.subr.mxu0 0.0
  %6777 = vmatpush2.msra.mxu0 0.0
  %6778 = vmatprep.subr.mxu0 0.0
  %6779 = vmatpush2.msra.mxu0 0.0
  %6780 = vmatprep.subr.mxu0 0.0
  %6781 = vmatpush2.msra.mxu0 0.0
  %6782 = vmatprep.subr.mxu0 0.0
  %6783 = vmatpush2.msra.mxu0 0.0
  %6784 = vmatprep.subr.mxu0 0.0
  %6785 = vmatpush2.msra.mxu0 0.0
  %6786 = vmatprep.subr.mxu0 0.0
  %6787 = vmatpush2.msra.mxu0 0.0
  %6788 = vmatprep.subr.mxu0 0.0
  %6789 = vmatpush2.msra.mxu0 0.0
  %6790 = vmatprep.subr.mxu0 0.0
  %6791 = vmatpush2.msra.mxu0 0.0
  %6792 = vmatprep.subr.mxu0 0.0
  %6793 = vmatpush2.msra.mxu0 0.0
  %6794 = vmatprep.subr.mxu0 0.0
  %6795 = vmatpush2.msra.mxu0 0.0
  %6796 = vmatprep.subr.mxu0 0.0
  %6797 = vmatpush2.msra.mxu0 0.0
  %6798 = vmatprep.subr.mxu0 0.0
  %6799 = vmatpush2.msra.mxu0 0.0
  %6800 = vmatprep.subr.mxu0 0.0
  %6801 = vmatpush2.msra.mxu0 0.0
  %6802 = vmatprep.subr.mxu0 0.0
  %6803 = vmatpush2.msra.mxu0 0.0
  %6804 = vmatprep.subr.mxu0 0.0
  %6805 = vmatpush2.msra.mxu0 0.0
  %6806 = vmatprep.subr.mxu0 0.0
  %6807 = vmatpush2.msra.mxu0 0.0
  %6808 = vmatprep.mubr.f32.mxu0 0.0
  %6809 = vmatmul.mubr.f32.gmra.mxu0 %v6622
  %v6810 = vpop.f32.mrf.mxu0
  %v6811 = vadd.f32 0.0, %v6810
  %v6812 = vpop.f32.mrf.mxu0
  %6813 = vmatprep.mubr.f32.mxu0 0.0
  %6814 = vmatmul.mubr.f32.gmra.mxu0 %v6625
  %v6815 = vpop.f32.mrf.mxu0
  %v6816 = vadd.f32 0.0, %v6815
  %v6817 = vpop.f32.mrf.mxu0
  %6818 = vmatprep.mubr.f32.mxu0 0.0
  %6819 = vmatmul.mubr.f32.gmra.mxu0 %v6628
  %v6820 = vpop.f32.mrf.mxu0
  %v6821 = vadd.f32 0.0, %v6820
  %v6822 = vpop.f32.mrf.mxu0
  %6823 = vmatprep.mubr.f32.mxu0 0.0
  %6824 = vmatmul.mubr.f32.gmra.mxu0 %v6631
  %v6825 = vpop.f32.mrf.mxu0
  %v6826 = vadd.f32 0.0, %v6825
  %v6827 = vpop.f32.mrf.mxu0
  %6828 = vmatprep.mubr.f32.mxu0 0.0
  %6829 = vmatmul.mubr.f32.gmra.mxu0 %v6634
  %v6830 = vpop.f32.mrf.mxu0
  %v6831 = vadd.f32 0.0, %v6830
  %v6832 = vpop.f32.mrf.mxu0
  %6833 = vmatprep.mubr.f32.mxu0 0.0
  %6834 = vmatmul.mubr.f32.gmra.mxu0 %v6637
  %v6835 = vpop.f32.mrf.mxu0
  %v6836 = vadd.f32 0.0, %v6835
  %v6837 = vpop.f32.mrf.mxu0
  %6838 = vmatprep.mubr.f32.mxu0 0.0
  %6839 = vmatmul.mubr.f32.gmra.mxu0 %v6640
  %v6840 = vpop.f32.mrf.mxu0
  %v6841 = vadd.f32 0.0, %v6840
  %v6842 = vpop.f32.mrf.mxu0
  %6843 = vmatprep.mubr.f32.mxu0 0.0
  %6844 = vmatmul.mubr.f32.gmra.mxu0 %v6643
  %v6845 = vpop.f32.mrf.mxu0
  %v6846 = vadd.f32 0.0, %v6845
  %v6847 = vpop.f32.mrf.mxu0
  %6848 = vmatprep.mubr.f32.mxu0 0.0
  %6849 = vmatmul.mubr.f32.gmra.mxu0 %v6646
  %v6850 = vpop.f32.mrf.mxu0
  %v6851 = vadd.f32 0.0, %v6850
  %v6852 = vpop.f32.mrf.mxu0
  %6853 = vmatprep.mubr.f32.mxu0 0.0
  %6854 = vmatmul.mubr.f32.gmra.mxu0 %v6649
  %v6855 = vpop.f32.mrf.mxu0
  %v6856 = vadd.f32 0.0, %v6855
  %v6857 = vpop.f32.mrf.mxu0
  %6858 = vmatprep.mubr.f32.mxu0 0.0
  %6859 = vmatmul.mubr.f32.gmra.mxu0 %v6652
  %v6860 = vpop.f32.mrf.mxu0
  %v6861 = vadd.f32 0.0, %v6860
  %v6862 = vpop.f32.mrf.mxu0
  %6863 = vmatprep.mubr.f32.mxu0 0.0
  %6864 = vmatmul.mubr.f32.gmra.mxu0 %v6655
  %v6865 = vpop.f32.mrf.mxu0
  %v6866 = vadd.f32 0.0, %v6865
  %v6867 = vpop.f32.mrf.mxu0
  %6868 = vmatprep.mubr.f32.mxu0 0.0
  %6869 = vmatmul.mubr.f32.gmra.mxu0 %v6658
  %v6870 = vpop.f32.mrf.mxu0
  %v6871 = vadd.f32 0.0, %v6870
  %v6872 = vpop.f32.mrf.mxu0
  %6873 = vmatprep.mubr.f32.mxu0 0.0
  %6874 = vmatmul.mubr.f32.gmra.mxu0 %v6661
  %v6875 = vpop.f32.mrf.mxu0
  %v6876 = vadd.f32 0.0, %v6875
  %v6877 = vpop.f32.mrf.mxu0
  %6878 = vmatprep.mubr.f32.mxu0 0.0
  %6879 = vmatmul.mubr.f32.gmra.mxu0 %v6664
  %v6880 = vpop.f32.mrf.mxu0
  %v6881 = vadd.f32 0.0, %v6880
  %v6882 = vpop.f32.mrf.mxu0
  %6883 = vmatprep.mubr.f32.mxu0 0.0
  %6884 = vmatmul.mubr.f32.gmra.mxu0 %v6667
  %v6885 = vpop.f32.mrf.mxu0
  %v6886 = vadd.f32 0.0, %v6885
  %v6887 = vpop.f32.mrf.mxu0
  %6888 = vmatprep.mubr.f32.mxu0 0.0
  %6889 = vmatmul.mubr.f32.gmra.mxu0 %v6670
  %v6890 = vpop.f32.mrf.mxu0
  %v6891 = vadd.f32 0.0, %v6890
  %v6892 = vpop.f32.mrf.mxu0
  %6893 = vmatprep.mubr.f32.mxu0 0.0
  %6894 = vmatmul.mubr.f32.gmra.mxu0 %v6673
  %v6895 = vpop.f32.mrf.mxu0
  %v6896 = vadd.f32 0.0, %v6895
  %v6897 = vpop.f32.mrf.mxu0
  %6898 = vmatprep.mubr.f32.mxu0 0.0
  %6899 = vmatmul.mubr.f32.gmra.mxu0 %v6676
  %v6900 = vpop.f32.mrf.mxu0
  %v6901 = vadd.f32 0.0, %v6900
  %v6902 = vpop.f32.mrf.mxu0
  %6903 = vmatprep.mubr.f32.mxu0 0.0
  %6904 = vmatmul.mubr.f32.gmra.mxu0 %v6679
  %v6905 = vpop.f32.mrf.mxu0
  %v6906 = vadd.f32 0.0, %v6905
  %v6907 = vpop.f32.mrf.mxu0
  %6908 = vmatprep.mubr.f32.mxu0 0.0
  %6909 = vmatmul.mubr.f32.gmra.mxu0 %v6682
  %v6910 = vpop.f32.mrf.mxu0
  %v6911 = vadd.f32 0.0, %v6910
  %v6912 = vpop.f32.mrf.mxu0
  %6913 = vmatprep.mubr.f32.mxu0 0.0
  %6914 = vmatmul.mubr.f32.gmra.mxu0 %v6685
  %v6915 = vpop.f32.mrf.mxu0
  %v6916 = vadd.f32 0.0, %v6915
  %v6917 = vpop.f32.mrf.mxu0
  %6918 = vmatprep.mubr.f32.mxu0 0.0
  %6919 = vmatmul.mubr.f32.gmra.mxu0 %v6688
  %v6920 = vpop.f32.mrf.mxu0
  %v6921 = vadd.f32 0.0, %v6920
  %v6922 = vpop.f32.mrf.mxu0
  %6923 = vmatprep.mubr.f32.mxu0 0.0
  %6924 = vmatmul.mubr.f32.gmra.mxu0 %v6691
  %v6925 = vpop.f32.mrf.mxu0
  %v6926 = vadd.f32 0.0, %v6925
  %v6927 = vpop.f32.mrf.mxu0
  %6928 = vmatprep.mubr.f32.mxu0 0.0
  %6929 = vmatmul.mubr.f32.gmra.mxu0 %v6694
  %v6930 = vpop.f32.mrf.mxu0
  %v6931 = vadd.f32 0.0, %v6930
  %v6932 = vpop.f32.mrf.mxu0
  %6933 = vmatprep.mubr.f32.mxu0 0.0
  %6934 = vmatmul.mubr.f32.gmra.mxu0 %v6697
  %v6935 = vpop.f32.mrf.mxu0
  %v6936 = vadd.f32 0.0, %v6935
  %v6937 = vpop.f32.mrf.mxu0
  %6938 = vmatprep.mubr.f32.mxu0 0.0
  %6939 = vmatmul.mubr.f32.gmra.mxu0 %v6700
  %v6940 = vpop.f32.mrf.mxu0
  %v6941 = vadd.f32 0.0, %v6940
  %v6942 = vpop.f32.mrf.mxu0
  %6943 = vmatprep.mubr.f32.mxu0 0.0
  %6944 = vmatmul.mubr.f32.gmra.mxu0 %v6703
  %v6945 = vpop.f32.mrf.mxu0
  %v6946 = vadd.f32 0.0, %v6945
  %v6947 = vpop.f32.mrf.mxu0
  %6948 = vmatprep.mubr.f32.mxu0 0.0
  %6949 = vmatmul.mubr.f32.gmra.mxu0 %v6706
  %v6950 = vpop.f32.mrf.mxu0
  %v6951 = vadd.f32 0.0, %v6950
  %v6952 = vpop.f32.mrf.mxu0
  %6953 = vmatprep.mubr.f32.mxu0 0.0
  %6954 = vmatmul.mubr.f32.gmra.mxu0 %v6709
  %v6955 = vpop.f32.mrf.mxu0
  %v6956 = vadd.f32 0.0, %v6955
  %v6957 = vpop.f32.mrf.mxu0
  %6958 = vmatprep.mubr.f32.mxu0 0.0
  %6959 = vmatmul.mubr.f32.gmra.mxu0 %v6712
  %v6960 = vpop.f32.mrf.mxu0
  %v6961 = vadd.f32 0.0, %v6960
  %v6962 = vpop.f32.mrf.mxu0
  %6963 = vmatprep.mubr.f32.mxu0 0.0
  %6964 = vmatmul.mubr.f32.gmra.mxu0 %v6715
  %v6965 = vpop.f32.mrf.mxu0
  %v6966 = vadd.f32 0.0, %v6965
  %v6967 = vpop.f32.mrf.mxu0
  %6968 = vmatprep.mubr.f32.mxu0 0.0
  %6969 = vmatmul.mubr.f32.gmra.mxu0 %v6718
  %v6970 = vpop.f32.mrf.mxu0
  %v6971 = vadd.f32 0.0, %v6970
  %v6972 = vpop.f32.mrf.mxu0
  %6973 = vmatprep.mubr.f32.mxu0 0.0
  %6974 = vmatmul.mubr.f32.gmra.mxu0 %v6721
  %v6975 = vpop.f32.mrf.mxu0
  %v6976 = vadd.f32 0.0, %v6975
  %v6977 = vpop.f32.mrf.mxu0
  %6978 = vmatprep.mubr.f32.mxu0 0.0
  %6979 = vmatmul.mubr.f32.gmra.mxu0 %v6724
  %v6980 = vpop.f32.mrf.mxu0
  %v6981 = vadd.f32 0.0, %v6980
  %v6982 = vpop.f32.mrf.mxu0
  %6983 = vmatprep.mubr.f32.mxu0 0.0
  %6984 = vmatmul.mubr.f32.gmra.mxu0 %v6727
  %v6985 = vpop.f32.mrf.mxu0
  %v6986 = vadd.f32 0.0, %v6985
  %v6987 = vpop.f32.mrf.mxu0
  %6988 = vmatprep.mubr.f32.mxu0 0.0
  %6989 = vmatmul.mubr.f32.gmra.mxu0 %v6730
  %v6990 = vpop.f32.mrf.mxu0
  %v6991 = vadd.f32 0.0, %v6990
  %v6992 = vpop.f32.mrf.mxu0
  %6993 = vmatprep.mubr.f32.mxu0 0.0
  %6994 = vmatmul.mubr.f32.gmra.mxu0 %v6733
  %v6995 = vpop.f32.mrf.mxu0
  %v6996 = vadd.f32 0.0, %v6995
  %v6997 = vpop.f32.mrf.mxu0
  %6998 = vmatprep.mubr.f32.mxu0 0.0
  %6999 = vmatmul.mubr.f32.gmra.mxu0 %v6736
  %v7000 = vpop.f32.mrf.mxu0
  %v7001 = vadd.f32 0.0, %v7000
  %v7002 = vpop.f32.mrf.mxu0
  %7003 = vmatprep.mubr.f32.mxu0 0.0
  %7004 = vmatmul.mubr.f32.gmra.mxu0 %v6739
  %v7005 = vpop.f32.mrf.mxu0
  %v7006 = vadd.f32 0.0, %v7005
  %v7007 = vpop.f32.mrf.mxu0
  %7008 = vdwg.mxu0
  %v7009 = vld [vmem:[%s15] sm:$0xff]
  %v7010 = vld [vmem:[%s15 + $0x8] sm:$0xff]
  %v7011 = vld [vmem:[%s15 + $0x10] sm:$0xff]
  %v7012 = vld [vmem:[%s15 + $0x18] sm:$0xff]
  %v7013 = vld [vmem:[%s15 + $0x20] sm:$0xff]
  %v7014 = vld [vmem:[%s15 + $0x28] sm:$0xff]
  %v7015 = vld [vmem:[%s15 + $0x30] sm:$0xff]
  %v7016 = vld [vmem:[%s15 + $0x38] sm:$0xff]
  %v7017 = vld [vmem:[%s15 + $0x40] sm:$0xff]
  %v7018 = vld [vmem:[%s15 + $0x48] sm:$0xff]
  %v7019 = vld [vmem:[%s15 + $0x50] sm:$0xff]
  %v7020 = vld [vmem:[%s15 + $0x58] sm:$0xff]
  %v7021 = vld [vmem:[%s15 + $0x60] sm:$0xff]
  %v7022 = vld [vmem:[%s15 + $0x68] sm:$0xff]
  %v7023 = vld [vmem:[%s15 + $0x70] sm:$0xff]
  %v7024 = vld [vmem:[%s15 + $0x78] sm:$0xff]
  %v7025 = vld [vmem:[%s15 + $0x80] sm:$0xff]
  %v7026 = vld [vmem:[%s15 + $0x88] sm:$0xff]
  %v7027 = vld [vmem:[%s15 + $0x90] sm:$0xff]
  %v7028 = vld [vmem:[%s15 + $0x98] sm:$0xff]
  %v7029 = vld [vmem:[%s15 + $0xa0] sm:$0xff]
  %v7030 = vld [vmem:[%s15 + $0xa8] sm:$0xff]
  %v7031 = vld [vmem:[%s15 + $0xb0] sm:$0xff]
  %v7032 = vld [vmem:[%s15 + $0xb8] sm:$0xff]
  %v7033 = vmul.f32 %v6811, %v6383
  %v7034 = vmul.f32 %v6816, %v6388
  %v7035 = vmul.f32 %v6821, %v6393
  %v7036 = vmul.f32 %v6826, %v6398
  %v7037 = vmul.f32 %v6831, %v6403
  %v7038 = vmul.f32 %v6836, %v6408
  %v7039 = vmul.f32 %v6841, %v6413
  %v7040 = vmul.f32 %v6846, %v6418
  %v7041 = vmul.f32 %v6851, %v6423
  %v7042 = vmul.f32 %v6856, %v6428
  %v7043 = vmul.f32 %v6861, %v6433
  %v7044 = vmul.f32 %v6866, %v6438
  %v7045 = vmul.f32 %v6871, %v6443
  %v7046 = vmul.f32 %v6876, %v6448
  %v7047 = vmul.f32 %v6881, %v6453
  %v7048 = vmul.f32 %v6886, %v6458
  %v7049 = vmul.f32 %v6891, %v6463
  %v7050 = vmul.f32 %v6896, %v6468
  %v7051 = vmul.f32 %v6901, %v6473
  %v7052 = vmul.f32 %v6906, %v6478
  %v7053 = vmul.f32 %v6911, %v6483
  %v7054 = vmul.f32 %v6916, %v6488
  %v7055 = vmul.f32 %v6921, %v6493
  %v7056 = vmul.f32 %v6926, %v6498
  %v7057 = vmul.f32 %v6931, %v6503
  %v7058 = vmul.f32 %v6936, %v6508
  %v7059 = vmul.f32 %v6941, %v6513
  %v7060 = vmul.f32 %v6946, %v6518
  %v7061 = vmul.f32 %v6951, %v6523
  %v7062 = vmul.f32 %v6956, %v6528
  %v7063 = vmul.f32 %v6961, %v6533
  %v7064 = vmul.f32 %v6966, %v6538
  %v7065 = vmul.f32 %v6971, %v6543
  %v7066 = vmul.f32 %v6976, %v6548
  %v7067 = vmul.f32 %v6981, %v6553
  %v7068 = vmul.f32 %v6986, %v6558
  %v7069 = vmul.f32 %v6991, %v6563
  %v7070 = vmul.f32 %v6996, %v6568
  %v7071 = vmul.f32 %v7001, %v6573
  %v7072 = vmul.f32 %v7006, %v6578
  %vm7073 = vcmask 523264
  %v7075 = vsel %vm7073, %v7011, 0
  %v7078 = vsel %vm7073, %v7014, 0
  %v7081 = vsel %vm7073, %v7017, 0
  %v7084 = vsel %vm7073, %v7020, 0
  %v7087 = vsel %vm7073, %v7023, 0
  %v7090 = vsel %vm7073, %v7026, 0
  %v7093 = vsel %vm7073, %v7029, 0
  %v7096 = vsel %vm7073, %v7032, 0
  %7098 = vmatprep.subr.mxu0 0.0
  %7099 = vmatpush1.msra.mxu0 %v7048
  %7100 = vmatprep.subr.mxu0 0.0
  %7101 = vmatpush1.msra.mxu0 %v7047
  %7102 = vmatprep.subr.mxu0 0.0
  %7103 = vmatpush1.msra.mxu0 %v7046
  %7104 = vmatprep.subr.mxu0 0.0
  %7105 = vmatpush1.msra.mxu0 %v7045
  %7106 = vmatprep.subr.mxu0 0.0
  %7107 = vmatpush1.msra.mxu0 %v7044
  %7108 = vmatprep.subr.mxu0 0.0
  %7109 = vmatpush1.msra.mxu0 %v7043
  %7110 = vmatprep.subr.mxu0 0.0
  %7111 = vmatpush1.msra.mxu0 %v7042
  %7112 = vmatprep.subr.mxu0 0.0
  %7113 = vmatpush1.msra.mxu0 %v7041
  %7114 = vmatprep.subr.mxu0 0.0
  %7115 = vmatpush1.msra.mxu0 %v7040
  %7116 = vmatprep.subr.mxu0 0.0
  %7117 = vmatpush1.msra.mxu0 %v7039
  %7118 = vmatprep.subr.mxu0 0.0
  %7119 = vmatpush1.msra.mxu0 %v7038
  %7120 = vmatprep.subr.mxu0 0.0
  %7121 = vmatpush1.msra.mxu0 %v7037
  %7122 = vmatprep.subr.mxu0 0.0
  %7123 = vmatpush1.msra.mxu0 %v7036
  %7124 = vmatprep.subr.mxu0 0.0
  %7125 = vmatpush1.msra.mxu0 %v7035
  %7126 = vmatprep.subr.mxu0 0.0
  %7127 = vmatpush1.msra.mxu0 %v7034
  %7128 = vmatprep.subr.mxu0 0.0
  %7129 = vmatpush1.msra.mxu0 %v7033
  %7130 = vmatprep.subr.mxu0 0.0
  %7131 = vmatpush2.msra.mxu0 %v7064
  %7132 = vmatprep.subr.mxu0 0.0
  %7133 = vmatpush2.msra.mxu0 %v7063
  %7134 = vmatprep.subr.mxu0 0.0
  %7135 = vmatpush2.msra.mxu0 %v7062
  %7136 = vmatprep.subr.mxu0 0.0
  %7137 = vmatpush2.msra.mxu0 %v7061
  %7138 = vmatprep.subr.mxu0 0.0
  %7139 = vmatpush2.msra.mxu0 %v7060
  %7140 = vmatprep.subr.mxu0 0.0
  %7141 = vmatpush2.msra.mxu0 %v7059
  %7142 = vmatprep.subr.mxu0 0.0
  %7143 = vmatpush2.msra.mxu0 %v7058
  %7144 = vmatprep.subr.mxu0 0.0
  %7145 = vmatpush2.msra.mxu0 %v7057
  %7146 = vmatprep.subr.mxu0 0.0
  %7147 = vmatpush2.msra.mxu0 %v7056
  %7148 = vmatprep.subr.mxu0 0.0
  %7149 = vmatpush2.msra.mxu0 %v7055
  %7150 = vmatprep.subr.mxu0 0.0
  %7151 = vmatpush2.msra.mxu0 %v7054
  %7152 = vmatprep.subr.mxu0 0.0
  %7153 = vmatpush2.msra.mxu0 %v7053
  %7154 = vmatprep.subr.mxu0 0.0
  %7155 = vmatpush2.msra.mxu0 %v7052
  %7156 = vmatprep.subr.mxu0 0.0
  %7157 = vmatpush2.msra.mxu0 %v7051
  %7158 = vmatprep.subr.mxu0 0.0
  %7159 = vmatpush2.msra.mxu0 %v7050
  %7160 = vmatprep.subr.mxu0 0.0
  %7161 = vmatpush2.msra.mxu0 %v7049
  %7162 = vmatprep.mubr.f32.mxu0 %v7010
  %7163 = vmatmul.mubr.f32.gmra.mxu0 %v7009
  %v7164 = vpop.f32.mrf.mxu0
  %v7165 = vadd.f32 0.0, %v7164
  %v7166 = vpop.f32.mrf.mxu0
  %7167 = vmatprep.mubr.f32.mxu0 %v7013
  %7168 = vmatmul.mubr.f32.gmra.mxu0 %v7012
  %v7169 = vpop.f32.mrf.mxu0
  %v7170 = vadd.f32 0.0, %v7169
  %v7171 = vpop.f32.mrf.mxu0
  %7172 = vmatprep.mubr.f32.mxu0 %v7016
  %7173 = vmatmul.mubr.f32.gmra.mxu0 %v7015
  %v7174 = vpop.f32.mrf.mxu0
  %v7175 = vadd.f32 0.0, %v7174
  %v7176 = vpop.f32.mrf.mxu0
  %7177 = vmatprep.mubr.f32.mxu0 %v7019
  %7178 = vmatmul.mubr.f32.gmra.mxu0 %v7018
  %v7179 = vpop.f32.mrf.mxu0
  %v7180 = vadd.f32 0.0, %v7179
  %v7181 = vpop.f32.mrf.mxu0
  %7182 = vmatprep.mubr.f32.mxu0 %v7022
  %7183 = vmatmul.mubr.f32.gmra.mxu0 %v7021
  %v7184 = vpop.f32.mrf.mxu0
  %v7185 = vadd.f32 0.0, %v7184
  %v7186 = vpop.f32.mrf.mxu0
  %7187 = vmatprep.mubr.f32.mxu0 %v7025
  %7188 = vmatmul.mubr.f32.gmra.mxu0 %v7024
  %v7189 = vpop.f32.mrf.mxu0
  %v7190 = vadd.f32 0.0, %v7189
  %v7191 = vpop.f32.mrf.mxu0
  %7192 = vmatprep.mubr.f32.mxu0 %v7028
  %7193 = vmatmul.mubr.f32.gmra.mxu0 %v7027
  %v7194 = vpop.f32.mrf.mxu0
  %v7195 = vadd.f32 0.0, %v7194
  %v7196 = vpop.f32.mrf.mxu0
  %7197 = vmatprep.mubr.f32.mxu0 %v7031
  %7198 = vmatmul.mubr.f32.gmra.mxu0 %v7030
  %v7199 = vpop.f32.mrf.mxu0
  %v7200 = vadd.f32 0.0, %v7199
  %v7201 = vpop.f32.mrf.mxu0
  %7202 = vdwg.mxu0
  %7203 = vmatprep.subr.mxu0 0.0
  %7204 = vmatpush1.msra.mxu0 0.0
  %7205 = vmatprep.subr.mxu0 0.0
  %7206 = vmatpush1.msra.mxu0 0.0
  %7207 = vmatprep.subr.mxu0 0.0
  %7208 = vmatpush1.msra.mxu0 0.0
  %7209 = vmatprep.subr.mxu0 0.0
  %7210 = vmatpush1.msra.mxu0 0.0
  %7211 = vmatprep.subr.mxu0 0.0
  %7212 = vmatpush1.msra.mxu0 0.0
  %7213 = vmatprep.subr.mxu0 0.0
  %7214 = vmatpush1.msra.mxu0 0.0
  %7215 = vmatprep.subr.mxu0 0.0
  %7216 = vmatpush1.msra.mxu0 0.0
  %7217 = vmatprep.subr.mxu0 0.0
  %7218 = vmatpush1.msra.mxu0 0.0
  %7219 = vmatprep.subr.mxu0 0.0
  %7220 = vmatpush1.msra.mxu0 %v7072
  %7221 = vmatprep.subr.mxu0 0.0
  %7222 = vmatpush1.msra.mxu0 %v7071
  %7223 = vmatprep.subr.mxu0 0.0
  %7224 = vmatpush1.msra.mxu0 %v7070
  %7225 = vmatprep.subr.mxu0 0.0
  %7226 = vmatpush1.msra.mxu0 %v7069
  %7227 = vmatprep.subr.mxu0 0.0
  %7228 = vmatpush1.msra.mxu0 %v7068
  %7229 = vmatprep.subr.mxu0 0.0
  %7230 = vmatpush1.msra.mxu0 %v7067
  %7231 = vmatprep.subr.mxu0 0.0
  %7232 = vmatpush1.msra.mxu0 %v7066
  %7233 = vmatprep.subr.mxu0 0.0
  %7234 = vmatpush1.msra.mxu0 %v7065
  %7235 = vmatprep.subr.mxu0 0.0
  %7236 = vmatpush2.msra.mxu0 0.0
  %7237 = vmatprep.subr.mxu0 0.0
  %7238 = vmatpush2.msra.mxu0 0.0
  %7239 = vmatprep.subr.mxu0 0.0
  %7240 = vmatpush2.msra.mxu0 0.0
  %7241 = vmatprep.subr.mxu0 0.0
  %7242 = vmatpush2.msra.mxu0 0.0
  %7243 = vmatprep.subr.mxu0 0.0
  %7244 = vmatpush2.msra.mxu0 0.0
  %7245 = vmatprep.subr.mxu0 0.0
  %7246 = vmatpush2.msra.mxu0 0.0
  %7247 = vmatprep.subr.mxu0 0.0
  %7248 = vmatpush2.msra.mxu0 0.0
  %7249 = vmatprep.subr.mxu0 0.0
  %7250 = vmatpush2.msra.mxu0 0.0
  %7251 = vmatprep.subr.mxu0 0.0
  %7252 = vmatpush2.msra.mxu0 0.0
  %7253 = vmatprep.subr.mxu0 0.0
  %7254 = vmatpush2.msra.mxu0 0.0
  %7255 = vmatprep.subr.mxu0 0.0
  %7256 = vmatpush2.msra.mxu0 0.0
  %7257 = vmatprep.subr.mxu0 0.0
  %7258 = vmatpush2.msra.mxu0 0.0
  %7259 = vmatprep.subr.mxu0 0.0
  %7260 = vmatpush2.msra.mxu0 0.0
  %7261 = vmatprep.subr.mxu0 0.0
  %7262 = vmatpush2.msra.mxu0 0.0
  %7263 = vmatprep.subr.mxu0 0.0
  %7264 = vmatpush2.msra.mxu0 0.0
  %7265 = vmatprep.subr.mxu0 0.0
  %7266 = vmatpush2.msra.mxu0 0.0
  %7267 = vmatprep.mubr.f32.mxu0 0.0
  %7268 = vmatmul.mubr.f32.gmra.mxu0 %v7075
  %v7269 = vpop.f32.mrf.mxu0
  %v7270 = vadd.f32 %v7165, %v7269
  %v7271 = vpop.f32.mrf.mxu0
  %7272 = vmatprep.mubr.f32.mxu0 0.0
  %7273 = vmatmul.mubr.f32.gmra.mxu0 %v7078
  %v7274 = vpop.f32.mrf.mxu0
  %v7275 = vadd.f32 %v7170, %v7274
  %v7276 = vpop.f32.mrf.mxu0
  %7277 = vmatprep.mubr.f32.mxu0 0.0
  %7278 = vmatmul.mubr.f32.gmra.mxu0 %v7081
  %v7279 = vpop.f32.mrf.mxu0
  %v7280 = vadd.f32 %v7175, %v7279
  %v7281 = vpop.f32.mrf.mxu0
  %7282 = vmatprep.mubr.f32.mxu0 0.0
  %7283 = vmatmul.mubr.f32.gmra.mxu0 %v7084
  %v7284 = vpop.f32.mrf.mxu0
  %v7285 = vadd.f32 %v7180, %v7284
  %v7286 = vpop.f32.mrf.mxu0
  %7287 = vmatprep.mubr.f32.mxu0 0.0
  %7288 = vmatmul.mubr.f32.gmra.mxu0 %v7087
  %v7289 = vpop.f32.mrf.mxu0
  %v7290 = vadd.f32 %v7185, %v7289
  %v7291 = vpop.f32.mrf.mxu0
  %7292 = vmatprep.mubr.f32.mxu0 0.0
  %7293 = vmatmul.mubr.f32.gmra.mxu0 %v7090
  %v7294 = vpop.f32.mrf.mxu0
  %v7295 = vadd.f32 %v7190, %v7294
  %v7296 = vpop.f32.mrf.mxu0
  %7297 = vmatprep.mubr.f32.mxu0 0.0
  %7298 = vmatmul.mubr.f32.gmra.mxu0 %v7093
  %v7299 = vpop.f32.mrf.mxu0
  %v7300 = vadd.f32 %v7195, %v7299
  %v7301 = vpop.f32.mrf.mxu0
  %7302 = vmatprep.mubr.f32.mxu0 0.0
  %7303 = vmatmul.mubr.f32.gmra.mxu0 %v7096
  %v7304 = vpop.f32.mrf.mxu0
  %v7305 = vadd.f32 %v7200, %v7304
  %v7306 = vpop.f32.mrf.mxu0
  %7307 = vdwg.mxu0
  %v7308 = vld [vmem:[%s17] sm:$0xff]
  %v7309 = vld [vmem:[%s17 + $0x8] sm:$0xff]
  %v7310 = vld [vmem:[%s17 + $0x10] sm:$0x3]
  %v7311 = vld [vmem:[%s16] sm:$0xff]
  %v7312 = vld [vmem:[%s16 + $0x8] sm:$0xff]
  %7314 = vset.pattern.permute.xlu0 0
  %7315 = vperm.xlu0 %7314, %v7308
  %v7316 = vpop.permute.xlu0 %7315
  %7319 = vset.pattern.permute.xlu0 0
  %7320 = vperm.xlu0 %7319, %v7309
  %v7321 = vpop.permute.xlu0 %7320
  %v7324 = vsel %vm7073, %v7311, 0
  %v7327 = vsel %vm7073, %v7312, 0
  %7329 = vmatprep.subr.mxu0 0.0
  %7330 = vmatpush1.msra.mxu0 0.0
  %7331 = vmatprep.subr.mxu0 0.0
  %7332 = vmatpush1.msra.mxu0 0.0
  %7333 = vmatprep.subr.mxu0 0.0
  %7334 = vmatpush1.msra.mxu0 0.0
  %7335 = vmatprep.subr.mxu0 0.0
  %7336 = vmatpush1.msra.mxu0 0.0
  %7337 = vmatprep.subr.mxu0 0.0
  %7338 = vmatpush1.msra.mxu0 0.0
  %7339 = vmatprep.subr.mxu0 0.0
  %7340 = vmatpush1.msra.mxu0 0.0
  %7341 = vmatprep.subr.mxu0 0.0
  %7342 = vmatpush1.msra.mxu0 0.0
  %7343 = vmatprep.subr.mxu0 0.0
  %7344 = vmatpush1.msra.mxu0 0.0
  %7345 = vmatprep.subr.mxu0 0.0
  %7346 = vmatpush1.msra.mxu0 %v7305
  %7347 = vmatprep.subr.mxu0 0.0
  %7348 = vmatpush1.msra.mxu0 %v7300
  %7349 = vmatprep.subr.mxu0 0.0
  %7350 = vmatpush1.msra.mxu0 %v7295
  %7351 = vmatprep.subr.mxu0 0.0
  %7352 = vmatpush1.msra.mxu0 %v7290
  %7353 = vmatprep.subr.mxu0 0.0
  %7354 = vmatpush1.msra.mxu0 %v7285
  %7355 = vmatprep.subr.mxu0 0.0
  %7356 = vmatpush1.msra.mxu0 %v7280
  %7357 = vmatprep.subr.mxu0 0.0
  %7358 = vmatpush1.msra.mxu0 %v7275
  %7359 = vmatprep.subr.mxu0 0.0
  %7360 = vmatpush1.msra.mxu0 %v7270
  %7361 = vmatprep.subr.mxu0 0.0
  %7362 = vmatpush2.msra.mxu0 0.0
  %7363 = vmatprep.subr.mxu0 0.0
  %7364 = vmatpush2.msra.mxu0 0.0
  %7365 = vmatprep.subr.mxu0 0.0
  %7366 = vmatpush2.msra.mxu0 0.0
  %7367 = vmatprep.subr.mxu0 0.0
  %7368 = vmatpush2.msra.mxu0 0.0
  %7369 = vmatprep.subr.mxu0 0.0
  %7370 = vmatpush2.msra.mxu0 0.0
  %7371 = vmatprep.subr.mxu0 0.0
  %7372 = vmatpush2.msra.mxu0 0.0
  %7373 = vmatprep.subr.mxu0 0.0
  %7374 = vmatpush2.msra.mxu0 0.0
  %7375 = vmatprep.subr.mxu0 0.0
  %7376 = vmatpush2.msra.mxu0 0.0
  %7377 = vmatprep.subr.mxu0 0.0
  %7378 = vmatpush2.msra.mxu0 0.0
  %7379 = vmatprep.subr.mxu0 0.0
  %7380 = vmatpush2.msra.mxu0 0.0
  %7381 = vmatprep.subr.mxu0 0.0
  %7382 = vmatpush2.msra.mxu0 0.0
  %7383 = vmatprep.subr.mxu0 0.0
  %7384 = vmatpush2.msra.mxu0 0.0
  %7385 = vmatprep.subr.mxu0 0.0
  %7386 = vmatpush2.msra.mxu0 0.0
  %7387 = vmatprep.subr.mxu0 0.0
  %7388 = vmatpush2.msra.mxu0 0.0
  %7389 = vmatprep.subr.mxu0 0.0
  %7390 = vmatpush2.msra.mxu0 0.0
  %7391 = vmatprep.subr.mxu0 0.0
  %7392 = vmatpush2.msra.mxu0 0.0
  %7393 = vmatprep.mubr.f32.mxu0 0.0
  %7394 = vmatmul.mubr.f32.gmra.mxu0 %v7324
  %v7395 = vpop.f32.mrf.mxu0
  %v7396 = vadd.f32 %v7316, %v7395
  %v7397 = vpop.f32.mrf.mxu0
  %7398 = vmatprep.mubr.f32.mxu0 0.0
  %7399 = vmatmul.mubr.f32.gmra.mxu0 %v7327
  %v7400 = vpop.f32.mrf.mxu0
  %v7401 = vadd.f32 %v7321, %v7400
  %v7402 = vpop.f32.mrf.mxu0
  %7403 = vdwg.mxu0
  %v7404 = vmax.f32 %v7396, 0.0
  %v7405 = vmax.f32 %v7401, 0.0
  %v7406 = vld [vmem:[%s18] sm:$0x3]
  %7408 = vset.pattern.permute.xlu0 0
  %7409 = vperm.xlu0 %7408, %v7310
  %v7410 = vpop.permute.xlu0 %7409
  %v7413 = vsel %vm278, %v7406, 0
  %7415 = vmatprep.subr.mxu0 0.0
  %7416 = vmatpush1.msra.mxu0 0.0
  %7417 = vmatprep.subr.mxu0 0.0
  %7418 = vmatpush1.msra.mxu0 0.0
  %7419 = vmatprep.subr.mxu0 0.0
  %7420 = vmatpush1.msra.mxu0 0.0
  %7421 = vmatprep.subr.mxu0 0.0
  %7422 = vmatpush1.msra.mxu0 0.0
  %7423 = vmatprep.subr.mxu0 0.0
  %7424 = vmatpush1.msra.mxu0 0.0
  %7425 = vmatprep.subr.mxu0 0.0
  %7426 = vmatpush1.msra.mxu0 0.0
  %7427 = vmatprep.subr.mxu0 0.0
  %7428 = vmatpush1.msra.mxu0 0.0
  %7429 = vmatprep.subr.mxu0 0.0
  %7430 = vmatpush1.msra.mxu0 0.0
  %7431 = vmatprep.subr.mxu0 0.0
  %7432 = vmatpush1.msra.mxu0 0.0
  %7433 = vmatprep.subr.mxu0 0.0
  %7434 = vmatpush1.msra.mxu0 0.0
  %7435 = vmatprep.subr.mxu0 0.0
  %7436 = vmatpush1.msra.mxu0 0.0
  %7437 = vmatprep.subr.mxu0 0.0
  %7438 = vmatpush1.msra.mxu0 0.0
  %7439 = vmatprep.subr.mxu0 0.0
  %7440 = vmatpush1.msra.mxu0 0.0
  %7441 = vmatprep.subr.mxu0 0.0
  %7442 = vmatpush1.msra.mxu0 0.0
  %7443 = vmatprep.subr.mxu0 0.0
  %7444 = vmatpush1.msra.mxu0 %v7405
  %7445 = vmatprep.subr.mxu0 0.0
  %7446 = vmatpush1.msra.mxu0 %v7404
  %7447 = vmatprep.subr.mxu0 0.0
  %7448 = vmatpush2.msra.mxu0 0.0
  %7449 = vmatprep.subr.mxu0 0.0
  %7450 = vmatpush2.msra.mxu0 0.0
  %7451 = vmatprep.subr.mxu0 0.0
  %7452 = vmatpush2.msra.mxu0 0.0
  %7453 = vmatprep.subr.mxu0 0.0
  %7454 = vmatpush2.msra.mxu0 0.0
  %7455 = vmatprep.subr.mxu0 0.0
  %7456 = vmatpush2.msra.mxu0 0.0
  %7457 = vmatprep.subr.mxu0 0.0
  %7458 = vmatpush2.msra.mxu0 0.0
  %7459 = vmatprep.subr.mxu0 0.0
  %7460 = vmatpush2.msra.mxu0 0.0
  %7461 = vmatprep.subr.mxu0 0.0
  %7462 = vmatpush2.msra.mxu0 0.0
  %7463 = vmatprep.subr.mxu0 0.0
  %7464 = vmatpush2.msra.mxu0 0.0
  %7465 = vmatprep.subr.mxu0 0.0
  %7466 = vmatpush2.msra.mxu0 0.0
  %7467 = vmatprep.subr.mxu0 0.0
  %7468 = vmatpush2.msra.mxu0 0.0
  %7469 = vmatprep.subr.mxu0 0.0
  %7470 = vmatpush2.msra.mxu0 0.0
  %7471 = vmatprep.subr.mxu0 0.0
  %7472 = vmatpush2.msra.mxu0 0.0
  %7473 = vmatprep.subr.mxu0 0.0
  %7474 = vmatpush2.msra.mxu0 0.0
  %7475 = vmatprep.subr.mxu0 0.0
  %7476 = vmatpush2.msra.mxu0 0.0
  %7477 = vmatprep.subr.mxu0 0.0
  %7478 = vmatpush2.msra.mxu0 0.0
  %7479 = vmatprep.mubr.f32.mxu0 0.0
  %7480 = vmatmul.mubr.f32.gmra.mxu0 %v7413
  %v7481 = vpop.f32.mrf.mxu0
  %v7482 = vadd.f32 %v7410, %v7481
  %v7483 = vpop.f32.mrf.mxu0
  %7484 = vdwg.mxu0
  %v7485 = vxor.u32 %v7482, 2147483648
  %v7486 = vmul.f32 %v7485, 1.442695
  %v7487 = vpow.pop %v7486
  %v7488 = vadd.f32 %v7487, 1.0
  %v7489 = vrcp.pop %v7488
  %v7490 = vmul.f32 1.0, %v7489
  %7491 = vst [vmem:[%s19] sm:$0x3] %v7490
  // Predicated region
  $region78: #{ple_forward.1} parent=0 // pred_check
    _
  $region79: #{ple_forward.1} parent=0 // pred_check_branch
    %7493 = sbr.rel (0) target = $region81
  $region80: #{ple_forward.1} parent=0 // pred_region
    _
  $region81: #{ple_forward.1} parent=0 // pred_fallthru
    _
  // Predicated region
  $region82: #{ple_forward.1} parent=0 // pred_check
    _
  $region83: #{ple_forward.1} parent=0 // pred_check_branch
    %7495 = sbr.rel (0) target = $region85
  $region84: #{ple_forward.1} parent=0 // pred_region
    _
  $region85: #{ple_forward.1} parent=0 // pred_fallthru
    _

</llo_original>
